<compile_context>
chip_gen: v7x
topology: tpu7x:2x2x1
jax: 0.10.0
libtpu: 0.0.40
codegen_flags: <defaults>
</compile_context>

<pallas_src>
import numpy as np

import jax
import jax.numpy as jnp
from jax.experimental import pallas as pl
from jax.experimental.pallas import tpu as pltpu


# Flat-padded geometry per conv stage: WP = padded width, R = WP*WP interior
# rows, T = R + 2*(WP+1) rows including the zero halo used by the tap shifts.
_WP1, _R1, _T1 = 30, 900, 962   # conv1: 28x28 -> pad 30x30
_WP2, _R2, _T2 = 16, 256, 290   # conv2: 14x14 -> pad 16x16
_WP3, _R3, _T3 = 9, 81, 101     # conv3:  7x7  -> pad  9x9


def _pool_scatter_matrix(wp, next_wp):
    """0/1 matrix that selects the 2x2-pooled rows of a flat (wp x wp) conv
    output (after the two shifted combine steps) and scatters them into the
    next stage's zero-padded flat layout (with halo).  next_wp=None -> plain
    (Ho*Wo, R') selection (used after the last conv)."""
    h = wp - 2
    ho = h // 2
    rprime = wp * wp - wp - 1
    rows = ho * ho if next_wp is None else next_wp * next_wp + 2 * (next_wp + 1)
    m = np.zeros((rows, rprime), np.float32)
    for i in range(ho):
        for j in range(ho):
            src = (2 * i + 1) * wp + (2 * j + 1)
            dst = (i * ho + j) if next_wp is None else \
                (next_wp + 1) + (i + 1) * next_wp + (j + 1)
            m[dst, src] = 1.0
    return m


# ------------------------------ Pallas kernel -------------------------------

def _convnet_kernel(x_ref, w1_ref, b1_ref, w2_ref, b2_ref, w3_ref, b3_ref,
                    ps1_ref, ps2_ref, s3_ref,
                    f1_ref, fb1_ref, f2_ref, fb2_ref, ow_ref, ob_ref,
                    o_ref):
    f32 = jnp.float32

    # ---- stage 1: Conv2d(1,32,3,1,1) [VPU shift-accumulate] + ReLU + AvgPool ----
    x = x_ref[0]                                   # (1, 962) zero-halo'd flat 30x30 image
    acc1 = jnp.zeros((32, _R1), f32)               # channels on sublanes, spatial on lanes
    for dh in range(3):
        for dw in range(3):
            tap = dh * 3 + dw
            off = dh * _WP1 + dw
            acc1 = acc1 + w1_ref[:, tap:tap + 1] * x[:, off:off + _R1]
    acc1 = jnp.maximum(acc1 + b1_ref[...], 0.0)
    t = acc1[:, :-1] + acc1[:, 1:]                 # pool combine along flat spatial
    u1 = (t[:, :-_WP1] + t[:, _WP1:]) * 0.25       # (32, 869)
    xf2 = jnp.dot(u1, ps1_ref[...], preferred_element_type=f32)   # (32, 290) pooled+padded

    # ---- stage 2: Conv2d(32,64,3,1,1) [MXU] + ReLU + MaxPool ----
    acc2 = jnp.zeros((64, _R2), f32)
    for dh in range(3):
        for dw in range(3):
            tap = dh * 3 + dw
            off = dh * _WP2 + dw
            acc2 = acc2 + jnp.dot(w2_ref[tap], xf2[:, off:off + _R2],
                                  preferred_element_type=f32)
    acc2 = jnp.maximum(acc2 + b2_ref[...], 0.0)
    t = jnp.maximum(acc2[:, :-1], acc2[:, 1:])
    u2 = jnp.maximum(t[:, :-_WP2], t[:, _WP2:])    # (64, 239)
    xf3 = jnp.dot(u2, ps2_ref[...], preferred_element_type=f32)   # (64, 101)

    # ---- stage 3: Conv2d(64,64,3,1,1) [MXU] + ReLU + MaxPool ----
    acc3 = jnp.zeros((64, _R3), f32)
    for dh in range(3):
        for dw in range(3):
            tap = dh * 3 + dw
            off = dh * _WP3 + dw
            acc3 = acc3 + jnp.dot(w3_ref[tap], xf3[:, off:off + _R3],
                                  preferred_element_type=f32)
    acc3 = jnp.maximum(acc3 + b3_ref[...], 0.0)
    t = jnp.maximum(acc3[:, :-1], acc3[:, 1:])
    u3 = jnp.maximum(t[:, :-_WP3], t[:, _WP3:])    # (64, 71)
    p3 = jnp.dot(u3, s3_ref[...], preferred_element_type=f32)     # (64, 9)  [c, i*3+j]

    # ---- fused FC head: Linear(576,128)+ReLU, Linear(128,64)+ReLU, Linear(64,10) ----
    # fc1 is applied per spatial position p (avoids any in-kernel flatten/reshape);
    # f1_ref[p][o, c] == fc1_w[o, c*9 + p]  ==> matches torch's x.view(N, -1) order.
    h1 = fb1_ref[...]
    for p in range(9):
        h1 = h1 + jnp.dot(f1_ref[p], p3[:, p:p + 1], preferred_element_type=f32)
    h1 = jnp.maximum(h1, 0.0)                                                 # (128, 1)
    h2 = jnp.maximum(jnp.dot(f2_ref[...], h1, preferred_element_type=f32)
                     + fb2_ref[...], 0.0)                                     # (64, 1)
    o_ref[0] = jnp.dot(ow_ref[...], h2, preferred_element_type=f32) + ob_ref[...]


# ------------------------- parameter / input plumbing ------------------------

def init_params(key):
    ks = jax.random.split(key, 12)

    def w(k, shape, fan_in):
        return jax.random.normal(k, shape, jnp.float32) * float(np.sqrt(2.0 / fan_in))

    return {
        "conv1_w": w(ks[0], (32, 1, 3, 3), 9),
        "conv1_b": 0.05 * jax.random.normal(ks[1], (32,), jnp.float32),
        "conv2_w": w(ks[2], (64, 32, 3, 3), 32 * 9),
        "conv2_b": 0.05 * jax.random.normal(ks[3], (64,), jnp.float32),
        "conv3_w": w(ks[4], (64, 64, 3, 3), 64 * 9),
        "conv3_b": 0.05 * jax.random.normal(ks[5], (64,), jnp.float32),
        "fc1_w": w(ks[6], (128, 576), 576),    # torch Linear layout: (out, in)
        "fc1_b": 0.05 * jax.random.normal(ks[7], (128,), jnp.float32),
        "fc2_w": w(ks[8], (64, 128), 128),
        "fc2_b": 0.05 * jax.random.normal(ks[9], (64,), jnp.float32),
        "out_w": w(ks[10], (10, 64), 64),
        "out_b": 0.05 * jax.random.normal(ks[11], (10,), jnp.float32),
    }


def prepare_params(p):
    """One-time (outside jit) conversion of torch-layout params into
    matmul-ready kernel operands, plus the constant pool/pad selection matrices."""
    prep = {
        "w1": jnp.asarray(p["conv1_w"]).reshape(32, 9),                        # [cout, tap]
        "b1": jnp.asarray(p["conv1_b"]).reshape(32, 1),
        "w2": jnp.transpose(jnp.asarray(p["conv2_w"]), (2, 3, 0, 1)).reshape(9, 64, 32),
        "b2": jnp.asarray(p["conv2_b"]).reshape(64, 1),
        "w3": jnp.transpose(jnp.asarray(p["conv3_w"]), (2, 3, 0, 1)).reshape(9, 64, 64),
        "b3": jnp.asarray(p["conv3_b"]).reshape(64, 1),
        "f1": jnp.transpose(jnp.asarray(p["fc1_w"]).reshape(128, 64, 9), (2, 0, 1)),
        "fb1": jnp.asarray(p["fc1_b"]).reshape(128, 1),
        "f2": jnp.asarray(p["fc2_w"]),                                         # (64, 128)
        "fb2": jnp.asarray(p["fc2_b"]).reshape(64, 1),
        "ow": jnp.asarray(p["out_w"]),                                         # (10, 64)
        "ob": jnp.asarray(p["out_b"]).reshape(10, 1),
        "ps1": jnp.asarray(_pool_scatter_matrix(_WP1, _WP2).T),                # (869, 290)
        "ps2": jnp.asarray(_pool_scatter_matrix(_WP2, _WP3).T),                # (239, 101)
        "s3": jnp.asarray(_pool_scatter_matrix(_WP3, None).T),                 # (71, 9)
    }
    return {k: v.astype(jnp.float32) for k, v in prep.items()}


def _const_spec(shape):
    idx = (0,) * len(shape)
    return pl.BlockSpec(shape, lambda n: idx)


def conv_net_forward(x, prep):
    assert x.shape[1:] == (1, 28, 28), "fc expects 576 = 64*3*3 features (MNIST 1x28x28)"
    n = x.shape[0]
    # Tiny XLA prep: pad the image and lay it out as the zero-halo'd flat row the
    # kernel consumes (a few KB -- nothing like the old 9x im2col blow-up).
    xi = x.reshape(n, 28, 28).astype(jnp.float32)
    xp = jnp.pad(xi, ((0, 0), (1, 1), (1, 1)))           # (N, 30, 30)
    xf = jnp.pad(xp.reshape(n, 1, _R1), ((0, 0), (0, 0), (_WP1 + 1, _WP1 + 1)))  # (N,1,962)

    out = pl.pallas_call(
        _convnet_kernel,
        out_shape=jax.ShapeDtypeStruct((n, 10, 1), jnp.float32),
        grid=(n,),
        in_specs=[
            pl.BlockSpec((1, 1, _T1), lambda i: (i, 0, 0)),   # one image per grid step
            _const_spec((32, 9)), _const_spec((32, 1)),
            _const_spec((9, 64, 32)), _const_spec((64, 1)),
            _const_spec((9, 64, 64)), _const_spec((64, 1)),
            _const_spec((869, 290)), _const_spec((239, 101)), _const_spec((71, 9)),
            _const_spec((9, 128, 64)), _const_spec((128, 1)),
            _const_spec((64, 128)), _const_spec((64, 1)),
            _const_spec((10, 64)), _const_spec((10, 1)),
        ],
        out_specs=pl.BlockSpec((1, 10, 1), lambda i: (i, 0, 0)),
        compiler_params=pltpu.CompilerParams(
            dimension_semantics=("parallel",),        # megacore-shard the batch (v7x)
            vmem_limit_bytes=32 * 1024 * 1024),       # explicit cap; ~6 MiB actually used
    )(xf, prep["w1"], prep["b1"], prep["w2"], prep["b2"], prep["w3"], prep["b3"],
      prep["ps1"], prep["ps2"], prep["s3"],
      prep["f1"], prep["fb1"], prep["f2"], prep["fb2"], prep["ow"], prep["ob"])
    return out.reshape(n, 10)


# ------------------------------ reference check ------------------------------

def _reference_forward(x, p):
    hi = jax.lax.Precision.HIGHEST

    def conv(x, w, b):
        y = jax.lax.conv_general_dilated(
            x, w, window_strides=(1, 1), padding=((1, 1), (1, 1)),
            dimension_numbers=("NCHW", "OIHW", "NCHW"), precision=hi)
        return jax.nn.relu(y + b.reshape(1, -1, 1, 1))

    def avgpool(x):
        return jax.lax.reduce_window(x, 0.0, jax.lax.add,
                                     (1, 1, 2, 2), (1, 1, 2, 2), "VALID") * 0.25

    def maxpool(x):
        return jax.lax.reduce_window(x, -jnp.inf, jax.lax.max,
                                     (1, 1, 2, 2), (1, 1, 2, 2), "VALID")

    x = avgpool(conv(x, p["conv1_w"], p["conv1_b"]))
    x = maxpool(conv(x, p["conv2_w"], p["conv2_b"]))
    x = maxpool(conv(x, p["conv3_w"], p["conv3_b"]))
    x = x.reshape(x.shape[0], -1)
    x = jax.nn.relu(jnp.matmul(x, p["fc1_w"].T, precision=hi) + p["fc1_b"])
    x = jax.nn.relu(jnp.matmul(x, p["fc2_w"].T, precision=hi) + p["fc2_b"])
    return jnp.matmul(x, p["out_w"].T, precision=hi) + p["out_b"]


if __name__ == "__main__":
    key = jax.random.PRNGKey(0)
    k_param, k_x = jax.random.split(key)
    params = init_params(k_param)
    prep = prepare_params(params)                 # one-time, outside jit
    x = jax.random.normal(k_x, (2, 1, 28, 28), jnp.float32)

    fwd = jax.jit(conv_net_forward)
    out = fwd(x, prep)
    jax.block_until_ready(out)
    assert out.shape == (2, 10) and out.dtype == jnp.float32

    ref = _reference_forward(x, params)
    np.testing.assert_allclose(np.asarray(out), np.asarray(ref), rtol=5e-2, atol=5e-3)
    print("KERNEL_OK")
</pallas_src>

<mosaic_0001>
module attributes {stable_mosaic.version = 11 : i64} {
  func.func @_convnet_kernel(%arg0: i32, %arg1: memref<1x1x962xf32, #tpu.memory_space<vmem>>, %arg2: memref<32x9xf32, #tpu.memory_space<vmem>>, %arg3: memref<32x1xf32, #tpu.memory_space<vmem>>, %arg4: memref<9x64x32xf32, #tpu.memory_space<vmem>>, %arg5: memref<64x1xf32, #tpu.memory_space<vmem>>, %arg6: memref<9x64x64xf32, #tpu.memory_space<vmem>>, %arg7: memref<64x1xf32, #tpu.memory_space<vmem>>, %arg8: memref<869x290xf32, #tpu.memory_space<vmem>>, %arg9: memref<239x101xf32, #tpu.memory_space<vmem>>, %arg10: memref<71x9xf32, #tpu.memory_space<vmem>>, %arg11: memref<9x128x64xf32, #tpu.memory_space<vmem>>, %arg12: memref<128x1xf32, #tpu.memory_space<vmem>>, %arg13: memref<64x128xf32, #tpu.memory_space<vmem>>, %arg14: memref<64x1xf32, #tpu.memory_space<vmem>>, %arg15: memref<10x64xf32, #tpu.memory_space<vmem>>, %arg16: memref<10x1xf32, #tpu.memory_space<vmem>>, %arg17: memref<1x10x1xf32, #tpu.memory_space<vmem>>) attributes {dimension_semantics = [#tpu.dimension_semantics<parallel>], iteration_bounds = array<i64: 2>, scalar_prefetch = 0 : i64, scratch_operands = 0 : i64, tpu.core_type = #tpu.core_type<tc>, window_params = [{transform_indices = @transform_0, window_bounds = array<i64: 1, 1, 962>}, {pipeline_mode = #tpu.pipeline_mode<synchronous>, transform_indices = @transform_1, window_bounds = array<i64: 32, 9>}, {pipeline_mode = #tpu.pipeline_mode<synchronous>, transform_indices = @transform_2, window_bounds = array<i64: 32, 1>}, {pipeline_mode = #tpu.pipeline_mode<synchronous>, transform_indices = @transform_3, window_bounds = array<i64: 9, 64, 32>}, {pipeline_mode = #tpu.pipeline_mode<synchronous>, transform_indices = @transform_4, window_bounds = array<i64: 64, 1>}, {pipeline_mode = #tpu.pipeline_mode<synchronous>, transform_indices = @transform_5, window_bounds = array<i64: 9, 64, 64>}, {pipeline_mode = #tpu.pipeline_mode<synchronous>, transform_indices = @transform_6, window_bounds = array<i64: 64, 1>}, {pipeline_mode = #tpu.pipeline_mode<synchronous>, transform_indices = @transform_7, window_bounds = array<i64: 869, 290>}, {pipeline_mode = #tpu.pipeline_mode<synchronous>, transform_indices = @transform_8, window_bounds = array<i64: 239, 101>}, {pipeline_mode = #tpu.pipeline_mode<synchronous>, transform_indices = @transform_9, window_bounds = array<i64: 71, 9>}, {pipeline_mode = #tpu.pipeline_mode<synchronous>, transform_indices = @transform_10, window_bounds = array<i64: 9, 128, 64>}, {pipeline_mode = #tpu.pipeline_mode<synchronous>, transform_indices = @transform_11, window_bounds = array<i64: 128, 1>}, {pipeline_mode = #tpu.pipeline_mode<synchronous>, transform_indices = @transform_12, window_bounds = array<i64: 64, 128>}, {pipeline_mode = #tpu.pipeline_mode<synchronous>, transform_indices = @transform_13, window_bounds = array<i64: 64, 1>}, {pipeline_mode = #tpu.pipeline_mode<synchronous>, transform_indices = @transform_14, window_bounds = array<i64: 10, 64>}, {pipeline_mode = #tpu.pipeline_mode<synchronous>, transform_indices = @transform_15, window_bounds = array<i64: 10, 1>}, {transform_indices = @transform_16, window_bounds = array<i64: 1, 10, 1>}]} {
    %c0 = arith.constant 0 : index
    %c0_0 = arith.constant 0 : index
    %c0_1 = arith.constant 0 : index
    %0 = vector.load %arg1[%c0, %c0_0, %c0_1] : memref<1x1x962xf32, #tpu.memory_space<vmem>>, vector<1x1x962xf32>
    %1 = vector.shape_cast %0 : vector<1x1x962xf32> to vector<1x962xf32>
    %cst = arith.constant 0.000000e+00 : f32
    %2 = vector.broadcast %cst : f32 to vector<32x900xf32>
    %c0_2 = arith.constant 0 : index
    %c0_3 = arith.constant 0 : index
    %3 = vector.load %arg2[%c0_2, %c0_3] : memref<32x9xf32, #tpu.memory_space<vmem>>, vector<32x1xf32>
    %4 = vector.extract_strided_slice %1 {offsets = [0, 0], sizes = [1, 900], strides = [1, 1]} : vector<1x962xf32> to vector<1x900xf32>
    %5 = vector.broadcast %3 : vector<32x1xf32> to vector<32x900xf32>
    %6 = vector.broadcast %4 : vector<1x900xf32> to vector<32x900xf32>
    %7 = arith.mulf %5, %6 : vector<32x900xf32>
    %8 = arith.addf %2, %7 : vector<32x900xf32>
    %c0_4 = arith.constant 0 : index
    %c1 = arith.constant 1 : index
    %9 = vector.load %arg2[%c0_4, %c1] : memref<32x9xf32, #tpu.memory_space<vmem>>, vector<32x1xf32>
    %10 = vector.extract_strided_slice %1 {offsets = [0, 1], sizes = [1, 900], strides = [1, 1]} : vector<1x962xf32> to vector<1x900xf32>
    %11 = vector.broadcast %9 : vector<32x1xf32> to vector<32x900xf32>
    %12 = vector.broadcast %10 : vector<1x900xf32> to vector<32x900xf32>
    %13 = arith.mulf %11, %12 : vector<32x900xf32>
    %14 = arith.addf %8, %13 : vector<32x900xf32>
    %c0_5 = arith.constant 0 : index
    %c2 = arith.constant 2 : index
    %15 = vector.load %arg2[%c0_5, %c2] : memref<32x9xf32, #tpu.memory_space<vmem>>, vector<32x1xf32>
    %16 = vector.extract_strided_slice %1 {offsets = [0, 2], sizes = [1, 900], strides = [1, 1]} : vector<1x962xf32> to vector<1x900xf32>
    %17 = vector.broadcast %15 : vector<32x1xf32> to vector<32x900xf32>
    %18 = vector.broadcast %16 : vector<1x900xf32> to vector<32x900xf32>
    %19 = arith.mulf %17, %18 : vector<32x900xf32>
    %20 = arith.addf %14, %19 : vector<32x900xf32>
    %c0_6 = arith.constant 0 : index
    %c3 = arith.constant 3 : index
    %21 = vector.load %arg2[%c0_6, %c3] : memref<32x9xf32, #tpu.memory_space<vmem>>, vector<32x1xf32>
    %22 = vector.extract_strided_slice %1 {offsets = [0, 30], sizes = [1, 900], strides = [1, 1]} : vector<1x962xf32> to vector<1x900xf32>
    %23 = vector.broadcast %21 : vector<32x1xf32> to vector<32x900xf32>
    %24 = vector.broadcast %22 : vector<1x900xf32> to vector<32x900xf32>
    %25 = arith.mulf %23, %24 : vector<32x900xf32>
    %26 = arith.addf %20, %25 : vector<32x900xf32>
    %c0_7 = arith.constant 0 : index
    %c4 = arith.constant 4 : index
    %27 = vector.load %arg2[%c0_7, %c4] : memref<32x9xf32, #tpu.memory_space<vmem>>, vector<32x1xf32>
    %28 = vector.extract_strided_slice %1 {offsets = [0, 31], sizes = [1, 900], strides = [1, 1]} : vector<1x962xf32> to vector<1x900xf32>
    %29 = vector.broadcast %27 : vector<32x1xf32> to vector<32x900xf32>
    %30 = vector.broadcast %28 : vector<1x900xf32> to vector<32x900xf32>
    %31 = arith.mulf %29, %30 : vector<32x900xf32>
    %32 = arith.addf %26, %31 : vector<32x900xf32>
    %c0_8 = arith.constant 0 : index
    %c5 = arith.constant 5 : index
    %33 = vector.load %arg2[%c0_8, %c5] : memref<32x9xf32, #tpu.memory_space<vmem>>, vector<32x1xf32>
    %34 = vector.extract_strided_slice %1 {offsets = [0, 32], sizes = [1, 900], strides = [1, 1]} : vector<1x962xf32> to vector<1x900xf32>
    %35 = vector.broadcast %33 : vector<32x1xf32> to vector<32x900xf32>
    %36 = vector.broadcast %34 : vector<1x900xf32> to vector<32x900xf32>
    %37 = arith.mulf %35, %36 : vector<32x900xf32>
    %38 = arith.addf %32, %37 : vector<32x900xf32>
    %c0_9 = arith.constant 0 : index
    %c6 = arith.constant 6 : index
    %39 = vector.load %arg2[%c0_9, %c6] : memref<32x9xf32, #tpu.memory_space<vmem>>, vector<32x1xf32>
    %40 = vector.extract_strided_slice %1 {offsets = [0, 60], sizes = [1, 900], strides = [1, 1]} : vector<1x962xf32> to vector<1x900xf32>
    %41 = vector.broadcast %39 : vector<32x1xf32> to vector<32x900xf32>
    %42 = vector.broadcast %40 : vector<1x900xf32> to vector<32x900xf32>
    %43 = arith.mulf %41, %42 : vector<32x900xf32>
    %44 = arith.addf %38, %43 : vector<32x900xf32>
    %c0_10 = arith.constant 0 : index
    %c7 = arith.constant 7 : index
    %45 = vector.load %arg2[%c0_10, %c7] : memref<32x9xf32, #tpu.memory_space<vmem>>, vector<32x1xf32>
    %46 = vector.extract_strided_slice %1 {offsets = [0, 61], sizes = [1, 900], strides = [1, 1]} : vector<1x962xf32> to vector<1x900xf32>
    %47 = vector.broadcast %45 : vector<32x1xf32> to vector<32x900xf32>
    %48 = vector.broadcast %46 : vector<1x900xf32> to vector<32x900xf32>
    %49 = arith.mulf %47, %48 : vector<32x900xf32>
    %50 = arith.addf %44, %49 : vector<32x900xf32>
    %c0_11 = arith.constant 0 : index
    %c8 = arith.constant 8 : index
    %51 = vector.load %arg2[%c0_11, %c8] : memref<32x9xf32, #tpu.memory_space<vmem>>, vector<32x1xf32>
    %52 = vector.extract_strided_slice %1 {offsets = [0, 62], sizes = [1, 900], strides = [1, 1]} : vector<1x962xf32> to vector<1x900xf32>
    %53 = vector.broadcast %51 : vector<32x1xf32> to vector<32x900xf32>
    %54 = vector.broadcast %52 : vector<1x900xf32> to vector<32x900xf32>
    %55 = arith.mulf %53, %54 : vector<32x900xf32>
    %56 = arith.addf %50, %55 : vector<32x900xf32>
    %c0_12 = arith.constant 0 : index
    %c0_13 = arith.constant 0 : index
    %57 = vector.load %arg3[%c0_12, %c0_13] : memref<32x1xf32, #tpu.memory_space<vmem>>, vector<32x1xf32>
    %58 = vector.broadcast %57 : vector<32x1xf32> to vector<32x900xf32>
    %59 = arith.addf %56, %58 : vector<32x900xf32>
    %cst_14 = arith.constant 0.000000e+00 : f32
    %60 = vector.broadcast %cst_14 : f32 to vector<32x900xf32>
    %61 = arith.maximumf %59, %60 : vector<32x900xf32>
    %62 = vector.extract_strided_slice %61 {offsets = [0, 0], sizes = [32, 899], strides = [1, 1]} : vector<32x900xf32> to vector<32x899xf32>
    %63 = vector.extract_strided_slice %61 {offsets = [0, 1], sizes = [32, 899], strides = [1, 1]} : vector<32x900xf32> to vector<32x899xf32>
    %64 = arith.addf %62, %63 : vector<32x899xf32>
    %65 = vector.extract_strided_slice %64 {offsets = [0, 0], sizes = [32, 869], strides = [1, 1]} : vector<32x899xf32> to vector<32x869xf32>
    %66 = vector.extract_strided_slice %64 {offsets = [0, 30], sizes = [32, 869], strides = [1, 1]} : vector<32x899xf32> to vector<32x869xf32>
    %67 = arith.addf %65, %66 : vector<32x869xf32>
    %cst_15 = arith.constant 2.500000e-01 : f32
    %68 = vector.broadcast %cst_15 : f32 to vector<32x869xf32>
    %69 = arith.mulf %67, %68 : vector<32x869xf32>
    %c0_16 = arith.constant 0 : index
    %c0_17 = arith.constant 0 : index
    %70 = vector.load %arg8[%c0_16, %c0_17] : memref<869x290xf32, #tpu.memory_space<vmem>>, vector<869x290xf32>
    %cst_18 = arith.constant dense<0.000000e+00> : vector<32x290xf32>
    %71 = tpu.matmul %69, %70, %cst_18 {dimension_numbers = #tpu.dot_dimension_numbers<[1], [0], [0], [1], [0, 0, 1, 1], [], []>} : vector<32x869xf32>, vector<869x290xf32>, vector<32x290xf32> -> vector<32x290xf32>
    %cst_19 = arith.constant 0.000000e+00 : f32
    %72 = vector.broadcast %cst_19 : f32 to vector<64x256xf32>
    %c0_20 = arith.constant 0 : index
    %c0_21 = arith.constant 0 : index
    %c0_22 = arith.constant 0 : index
    %73 = vector.load %arg4[%c0_20, %c0_21, %c0_22] : memref<9x64x32xf32, #tpu.memory_space<vmem>>, vector<1x64x32xf32>
    %74 = vector.shape_cast %73 : vector<1x64x32xf32> to vector<64x32xf32>
    %75 = vector.extract_strided_slice %71 {offsets = [0, 0], sizes = [32, 256], strides = [1, 1]} : vector<32x290xf32> to vector<32x256xf32>
    %cst_23 = arith.constant dense<0.000000e+00> : vector<64x256xf32>
    %76 = tpu.matmul %74, %75, %cst_23 {dimension_numbers = #tpu.dot_dimension_numbers<[1], [0], [0], [1], [0, 0, 1, 1], [], []>} : vector<64x32xf32>, vector<32x256xf32>, vector<64x256xf32> -> vector<64x256xf32>
    %77 = arith.addf %72, %76 : vector<64x256xf32>
    %c1_24 = arith.constant 1 : index
    %c0_25 = arith.constant 0 : index
    %c0_26 = arith.constant 0 : index
    %78 = vector.load %arg4[%c1_24, %c0_25, %c0_26] : memref<9x64x32xf32, #tpu.memory_space<vmem>>, vector<1x64x32xf32>
    %79 = vector.shape_cast %78 : vector<1x64x32xf32> to vector<64x32xf32>
    %80 = vector.extract_strided_slice %71 {offsets = [0, 1], sizes = [32, 256], strides = [1, 1]} : vector<32x290xf32> to vector<32x256xf32>
    %cst_27 = arith.constant dense<0.000000e+00> : vector<64x256xf32>
    %81 = tpu.matmul %79, %80, %cst_27 {dimension_numbers = #tpu.dot_dimension_numbers<[1], [0], [0], [1], [0, 0, 1, 1], [], []>} : vector<64x32xf32>, vector<32x256xf32>, vector<64x256xf32> -> vector<64x256xf32>
    %82 = arith.addf %77, %81 : vector<64x256xf32>
    %c2_28 = arith.constant 2 : index
    %c0_29 = arith.constant 0 : index
    %c0_30 = arith.constant 0 : index
    %83 = vector.load %arg4[%c2_28, %c0_29, %c0_30] : memref<9x64x32xf32, #tpu.memory_space<vmem>>, vector<1x64x32xf32>
    %84 = vector.shape_cast %83 : vector<1x64x32xf32> to vector<64x32xf32>
    %85 = vector.extract_strided_slice %71 {offsets = [0, 2], sizes = [32, 256], strides = [1, 1]} : vector<32x290xf32> to vector<32x256xf32>
    %cst_31 = arith.constant dense<0.000000e+00> : vector<64x256xf32>
    %86 = tpu.matmul %84, %85, %cst_31 {dimension_numbers = #tpu.dot_dimension_numbers<[1], [0], [0], [1], [0, 0, 1, 1], [], []>} : vector<64x32xf32>, vector<32x256xf32>, vector<64x256xf32> -> vector<64x256xf32>
    %87 = arith.addf %82, %86 : vector<64x256xf32>
    %c3_32 = arith.constant 3 : index
    %c0_33 = arith.constant 0 : index
    %c0_34 = arith.constant 0 : index
    %88 = vector.load %arg4[%c3_32, %c0_33, %c0_34] : memref<9x64x32xf32, #tpu.memory_space<vmem>>, vector<1x64x32xf32>
    %89 = vector.shape_cast %88 : vector<1x64x32xf32> to vector<64x32xf32>
    %90 = vector.extract_strided_slice %71 {offsets = [0, 16], sizes = [32, 256], strides = [1, 1]} : vector<32x290xf32> to vector<32x256xf32>
    %cst_35 = arith.constant dense<0.000000e+00> : vector<64x256xf32>
    %91 = tpu.matmul %89, %90, %cst_35 {dimension_numbers = #tpu.dot_dimension_numbers<[1], [0], [0], [1], [0, 0, 1, 1], [], []>} : vector<64x32xf32>, vector<32x256xf32>, vector<64x256xf32> -> vector<64x256xf32>
    %92 = arith.addf %87, %91 : vector<64x256xf32>
    %c4_36 = arith.constant 4 : index
    %c0_37 = arith.constant 0 : index
    %c0_38 = arith.constant 0 : index
    %93 = vector.load %arg4[%c4_36, %c0_37, %c0_38] : memref<9x64x32xf32, #tpu.memory_space<vmem>>, vector<1x64x32xf32>
    %94 = vector.shape_cast %93 : vector<1x64x32xf32> to vector<64x32xf32>
    %95 = vector.extract_strided_slice %71 {offsets = [0, 17], sizes = [32, 256], strides = [1, 1]} : vector<32x290xf32> to vector<32x256xf32>
    %cst_39 = arith.constant dense<0.000000e+00> : vector<64x256xf32>
    %96 = tpu.matmul %94, %95, %cst_39 {dimension_numbers = #tpu.dot_dimension_numbers<[1], [0], [0], [1], [0, 0, 1, 1], [], []>} : vector<64x32xf32>, vector<32x256xf32>, vector<64x256xf32> -> vector<64x256xf32>
    %97 = arith.addf %92, %96 : vector<64x256xf32>
    %c5_40 = arith.constant 5 : index
    %c0_41 = arith.constant 0 : index
    %c0_42 = arith.constant 0 : index
    %98 = vector.load %arg4[%c5_40, %c0_41, %c0_42] : memref<9x64x32xf32, #tpu.memory_space<vmem>>, vector<1x64x32xf32>
    %99 = vector.shape_cast %98 : vector<1x64x32xf32> to vector<64x32xf32>
    %100 = vector.extract_strided_slice %71 {offsets = [0, 18], sizes = [32, 256], strides = [1, 1]} : vector<32x290xf32> to vector<32x256xf32>
    %cst_43 = arith.constant dense<0.000000e+00> : vector<64x256xf32>
    %101 = tpu.matmul %99, %100, %cst_43 {dimension_numbers = #tpu.dot_dimension_numbers<[1], [0], [0], [1], [0, 0, 1, 1], [], []>} : vector<64x32xf32>, vector<32x256xf32>, vector<64x256xf32> -> vector<64x256xf32>
    %102 = arith.addf %97, %101 : vector<64x256xf32>
    %c6_44 = arith.constant 6 : index
    %c0_45 = arith.constant 0 : index
    %c0_46 = arith.constant 0 : index
    %103 = vector.load %arg4[%c6_44, %c0_45, %c0_46] : memref<9x64x32xf32, #tpu.memory_space<vmem>>, vector<1x64x32xf32>
    %104 = vector.shape_cast %103 : vector<1x64x32xf32> to vector<64x32xf32>
    %105 = vector.extract_strided_slice %71 {offsets = [0, 32], sizes = [32, 256], strides = [1, 1]} : vector<32x290xf32> to vector<32x256xf32>
    %cst_47 = arith.constant dense<0.000000e+00> : vector<64x256xf32>
    %106 = tpu.matmul %104, %105, %cst_47 {dimension_numbers = #tpu.dot_dimension_numbers<[1], [0], [0], [1], [0, 0, 1, 1], [], []>} : vector<64x32xf32>, vector<32x256xf32>, vector<64x256xf32> -> vector<64x256xf32>
    %107 = arith.addf %102, %106 : vector<64x256xf32>
    %c7_48 = arith.constant 7 : index
    %c0_49 = arith.constant 0 : index
    %c0_50 = arith.constant 0 : index
    %108 = vector.load %arg4[%c7_48, %c0_49, %c0_50] : memref<9x64x32xf32, #tpu.memory_space<vmem>>, vector<1x64x32xf32>
    %109 = vector.shape_cast %108 : vector<1x64x32xf32> to vector<64x32xf32>
    %110 = vector.extract_strided_slice %71 {offsets = [0, 33], sizes = [32, 256], strides = [1, 1]} : vector<32x290xf32> to vector<32x256xf32>
    %cst_51 = arith.constant dense<0.000000e+00> : vector<64x256xf32>
    %111 = tpu.matmul %109, %110, %cst_51 {dimension_numbers = #tpu.dot_dimension_numbers<[1], [0], [0], [1], [0, 0, 1, 1], [], []>} : vector<64x32xf32>, vector<32x256xf32>, vector<64x256xf32> -> vector<64x256xf32>
    %112 = arith.addf %107, %111 : vector<64x256xf32>
    %c8_52 = arith.constant 8 : index
    %c0_53 = arith.constant 0 : index
    %c0_54 = arith.constant 0 : index
    %113 = vector.load %arg4[%c8_52, %c0_53, %c0_54] : memref<9x64x32xf32, #tpu.memory_space<vmem>>, vector<1x64x32xf32>
    %114 = vector.shape_cast %113 : vector<1x64x32xf32> to vector<64x32xf32>
    %115 = vector.extract_strided_slice %71 {offsets = [0, 34], sizes = [32, 256], strides = [1, 1]} : vector<32x290xf32> to vector<32x256xf32>
    %cst_55 = arith.constant dense<0.000000e+00> : vector<64x256xf32>
    %116 = tpu.matmul %114, %115, %cst_55 {dimension_numbers = #tpu.dot_dimension_numbers<[1], [0], [0], [1], [0, 0, 1, 1], [], []>} : vector<64x32xf32>, vector<32x256xf32>, vector<64x256xf32> -> vector<64x256xf32>
    %117 = arith.addf %112, %116 : vector<64x256xf32>
    %c0_56 = arith.constant 0 : index
    %c0_57 = arith.constant 0 : index
    %118 = vector.load %arg5[%c0_56, %c0_57] : memref<64x1xf32, #tpu.memory_space<vmem>>, vector<64x1xf32>
    %119 = vector.broadcast %118 : vector<64x1xf32> to vector<64x256xf32>
    %120 = arith.addf %117, %119 : vector<64x256xf32>
    %cst_58 = arith.constant 0.000000e+00 : f32
    %121 = vector.broadcast %cst_58 : f32 to vector<64x256xf32>
    %122 = arith.maximumf %120, %121 : vector<64x256xf32>
    %123 = vector.extract_strided_slice %122 {offsets = [0, 0], sizes = [64, 255], strides = [1, 1]} : vector<64x256xf32> to vector<64x255xf32>
    %124 = vector.extract_strided_slice %122 {offsets = [0, 1], sizes = [64, 255], strides = [1, 1]} : vector<64x256xf32> to vector<64x255xf32>
    %125 = arith.maximumf %123, %124 : vector<64x255xf32>
    %126 = vector.extract_strided_slice %125 {offsets = [0, 0], sizes = [64, 239], strides = [1, 1]} : vector<64x255xf32> to vector<64x239xf32>
    %127 = vector.extract_strided_slice %125 {offsets = [0, 16], sizes = [64, 239], strides = [1, 1]} : vector<64x255xf32> to vector<64x239xf32>
    %128 = arith.maximumf %126, %127 : vector<64x239xf32>
    %c0_59 = arith.constant 0 : index
    %c0_60 = arith.constant 0 : index
    %129 = vector.load %arg9[%c0_59, %c0_60] : memref<239x101xf32, #tpu.memory_space<vmem>>, vector<239x101xf32>
    %cst_61 = arith.constant dense<0.000000e+00> : vector<64x101xf32>
    %130 = tpu.matmul %128, %129, %cst_61 {dimension_numbers = #tpu.dot_dimension_numbers<[1], [0], [0], [1], [0, 0, 1, 1], [], []>} : vector<64x239xf32>, vector<239x101xf32>, vector<64x101xf32> -> vector<64x101xf32>
    %cst_62 = arith.constant 0.000000e+00 : f32
    %131 = vector.broadcast %cst_62 : f32 to vector<64x81xf32>
    %c0_63 = arith.constant 0 : index
    %c0_64 = arith.constant 0 : index
    %c0_65 = arith.constant 0 : index
    %132 = vector.load %arg6[%c0_63, %c0_64, %c0_65] : memref<9x64x64xf32, #tpu.memory_space<vmem>>, vector<1x64x64xf32>
    %133 = vector.shape_cast %132 : vector<1x64x64xf32> to vector<64x64xf32>
    %134 = vector.extract_strided_slice %130 {offsets = [0, 0], sizes = [64, 81], strides = [1, 1]} : vector<64x101xf32> to vector<64x81xf32>
    %cst_66 = arith.constant dense<0.000000e+00> : vector<64x81xf32>
    %135 = tpu.matmul %133, %134, %cst_66 {dimension_numbers = #tpu.dot_dimension_numbers<[1], [0], [0], [1], [0, 0, 1, 1], [], []>} : vector<64x64xf32>, vector<64x81xf32>, vector<64x81xf32> -> vector<64x81xf32>
    %136 = arith.addf %131, %135 : vector<64x81xf32>
    %c1_67 = arith.constant 1 : index
    %c0_68 = arith.constant 0 : index
    %c0_69 = arith.constant 0 : index
    %137 = vector.load %arg6[%c1_67, %c0_68, %c0_69] : memref<9x64x64xf32, #tpu.memory_space<vmem>>, vector<1x64x64xf32>
    %138 = vector.shape_cast %137 : vector<1x64x64xf32> to vector<64x64xf32>
    %139 = vector.extract_strided_slice %130 {offsets = [0, 1], sizes = [64, 81], strides = [1, 1]} : vector<64x101xf32> to vector<64x81xf32>
    %cst_70 = arith.constant dense<0.000000e+00> : vector<64x81xf32>
    %140 = tpu.matmul %138, %139, %cst_70 {dimension_numbers = #tpu.dot_dimension_numbers<[1], [0], [0], [1], [0, 0, 1, 1], [], []>} : vector<64x64xf32>, vector<64x81xf32>, vector<64x81xf32> -> vector<64x81xf32>
    %141 = arith.addf %136, %140 : vector<64x81xf32>
    %c2_71 = arith.constant 2 : index
    %c0_72 = arith.constant 0 : index
    %c0_73 = arith.constant 0 : index
    %142 = vector.load %arg6[%c2_71, %c0_72, %c0_73] : memref<9x64x64xf32, #tpu.memory_space<vmem>>, vector<1x64x64xf32>
    %143 = vector.shape_cast %142 : vector<1x64x64xf32> to vector<64x64xf32>
    %144 = vector.extract_strided_slice %130 {offsets = [0, 2], sizes = [64, 81], strides = [1, 1]} : vector<64x101xf32> to vector<64x81xf32>
    %cst_74 = arith.constant dense<0.000000e+00> : vector<64x81xf32>
    %145 = tpu.matmul %143, %144, %cst_74 {dimension_numbers = #tpu.dot_dimension_numbers<[1], [0], [0], [1], [0, 0, 1, 1], [], []>} : vector<64x64xf32>, vector<64x81xf32>, vector<64x81xf32> -> vector<64x81xf32>
    %146 = arith.addf %141, %145 : vector<64x81xf32>
    %c3_75 = arith.constant 3 : index
    %c0_76 = arith.constant 0 : index
    %c0_77 = arith.constant 0 : index
    %147 = vector.load %arg6[%c3_75, %c0_76, %c0_77] : memref<9x64x64xf32, #tpu.memory_space<vmem>>, vector<1x64x64xf32>
    %148 = vector.shape_cast %147 : vector<1x64x64xf32> to vector<64x64xf32>
    %149 = vector.extract_strided_slice %130 {offsets = [0, 9], sizes = [64, 81], strides = [1, 1]} : vector<64x101xf32> to vector<64x81xf32>
    %cst_78 = arith.constant dense<0.000000e+00> : vector<64x81xf32>
    %150 = tpu.matmul %148, %149, %cst_78 {dimension_numbers = #tpu.dot_dimension_numbers<[1], [0], [0], [1], [0, 0, 1, 1], [], []>} : vector<64x64xf32>, vector<64x81xf32>, vector<64x81xf32> -> vector<64x81xf32>
    %151 = arith.addf %146, %150 : vector<64x81xf32>
    %c4_79 = arith.constant 4 : index
    %c0_80 = arith.constant 0 : index
    %c0_81 = arith.constant 0 : index
    %152 = vector.load %arg6[%c4_79, %c0_80, %c0_81] : memref<9x64x64xf32, #tpu.memory_space<vmem>>, vector<1x64x64xf32>
    %153 = vector.shape_cast %152 : vector<1x64x64xf32> to vector<64x64xf32>
    %154 = vector.extract_strided_slice %130 {offsets = [0, 10], sizes = [64, 81], strides = [1, 1]} : vector<64x101xf32> to vector<64x81xf32>
    %cst_82 = arith.constant dense<0.000000e+00> : vector<64x81xf32>
    %155 = tpu.matmul %153, %154, %cst_82 {dimension_numbers = #tpu.dot_dimension_numbers<[1], [0], [0], [1], [0, 0, 1, 1], [], []>} : vector<64x64xf32>, vector<64x81xf32>, vector<64x81xf32> -> vector<64x81xf32>
    %156 = arith.addf %151, %155 : vector<64x81xf32>
    %c5_83 = arith.constant 5 : index
    %c0_84 = arith.constant 0 : index
    %c0_85 = arith.constant 0 : index
    %157 = vector.load %arg6[%c5_83, %c0_84, %c0_85] : memref<9x64x64xf32, #tpu.memory_space<vmem>>, vector<1x64x64xf32>
    %158 = vector.shape_cast %157 : vector<1x64x64xf32> to vector<64x64xf32>
    %159 = vector.extract_strided_slice %130 {offsets = [0, 11], sizes = [64, 81], strides = [1, 1]} : vector<64x101xf32> to vector<64x81xf32>
    %cst_86 = arith.constant dense<0.000000e+00> : vector<64x81xf32>
    %160 = tpu.matmul %158, %159, %cst_86 {dimension_numbers = #tpu.dot_dimension_numbers<[1], [0], [0], [1], [0, 0, 1, 1], [], []>} : vector<64x64xf32>, vector<64x81xf32>, vector<64x81xf32> -> vector<64x81xf32>
    %161 = arith.addf %156, %160 : vector<64x81xf32>
    %c6_87 = arith.constant 6 : index
    %c0_88 = arith.constant 0 : index
    %c0_89 = arith.constant 0 : index
    %162 = vector.load %arg6[%c6_87, %c0_88, %c0_89] : memref<9x64x64xf32, #tpu.memory_space<vmem>>, vector<1x64x64xf32>
    %163 = vector.shape_cast %162 : vector<1x64x64xf32> to vector<64x64xf32>
    %164 = vector.extract_strided_slice %130 {offsets = [0, 18], sizes = [64, 81], strides = [1, 1]} : vector<64x101xf32> to vector<64x81xf32>
    %cst_90 = arith.constant dense<0.000000e+00> : vector<64x81xf32>
    %165 = tpu.matmul %163, %164, %cst_90 {dimension_numbers = #tpu.dot_dimension_numbers<[1], [0], [0], [1], [0, 0, 1, 1], [], []>} : vector<64x64xf32>, vector<64x81xf32>, vector<64x81xf32> -> vector<64x81xf32>
    %166 = arith.addf %161, %165 : vector<64x81xf32>
    %c7_91 = arith.constant 7 : index
    %c0_92 = arith.constant 0 : index
    %c0_93 = arith.constant 0 : index
    %167 = vector.load %arg6[%c7_91, %c0_92, %c0_93] : memref<9x64x64xf32, #tpu.memory_space<vmem>>, vector<1x64x64xf32>
    %168 = vector.shape_cast %167 : vector<1x64x64xf32> to vector<64x64xf32>
    %169 = vector.extract_strided_slice %130 {offsets = [0, 19], sizes = [64, 81], strides = [1, 1]} : vector<64x101xf32> to vector<64x81xf32>
    %cst_94 = arith.constant dense<0.000000e+00> : vector<64x81xf32>
    %170 = tpu.matmul %168, %169, %cst_94 {dimension_numbers = #tpu.dot_dimension_numbers<[1], [0], [0], [1], [0, 0, 1, 1], [], []>} : vector<64x64xf32>, vector<64x81xf32>, vector<64x81xf32> -> vector<64x81xf32>
    %171 = arith.addf %166, %170 : vector<64x81xf32>
    %c8_95 = arith.constant 8 : index
    %c0_96 = arith.constant 0 : index
    %c0_97 = arith.constant 0 : index
    %172 = vector.load %arg6[%c8_95, %c0_96, %c0_97] : memref<9x64x64xf32, #tpu.memory_space<vmem>>, vector<1x64x64xf32>
    %173 = vector.shape_cast %172 : vector<1x64x64xf32> to vector<64x64xf32>
    %174 = vector.extract_strided_slice %130 {offsets = [0, 20], sizes = [64, 81], strides = [1, 1]} : vector<64x101xf32> to vector<64x81xf32>
    %cst_98 = arith.constant dense<0.000000e+00> : vector<64x81xf32>
    %175 = tpu.matmul %173, %174, %cst_98 {dimension_numbers = #tpu.dot_dimension_numbers<[1], [0], [0], [1], [0, 0, 1, 1], [], []>} : vector<64x64xf32>, vector<64x81xf32>, vector<64x81xf32> -> vector<64x81xf32>
    %176 = arith.addf %171, %175 : vector<64x81xf32>
    %c0_99 = arith.constant 0 : index
    %c0_100 = arith.constant 0 : index
    %177 = vector.load %arg7[%c0_99, %c0_100] : memref<64x1xf32, #tpu.memory_space<vmem>>, vector<64x1xf32>
    %178 = vector.broadcast %177 : vector<64x1xf32> to vector<64x81xf32>
    %179 = arith.addf %176, %178 : vector<64x81xf32>
    %cst_101 = arith.constant 0.000000e+00 : f32
    %180 = vector.broadcast %cst_101 : f32 to vector<64x81xf32>
    %181 = arith.maximumf %179, %180 : vector<64x81xf32>
    %182 = vector.extract_strided_slice %181 {offsets = [0, 0], sizes = [64, 80], strides = [1, 1]} : vector<64x81xf32> to vector<64x80xf32>
    %183 = vector.extract_strided_slice %181 {offsets = [0, 1], sizes = [64, 80], strides = [1, 1]} : vector<64x81xf32> to vector<64x80xf32>
    %184 = arith.maximumf %182, %183 : vector<64x80xf32>
    %185 = vector.extract_strided_slice %184 {offsets = [0, 0], sizes = [64, 71], strides = [1, 1]} : vector<64x80xf32> to vector<64x71xf32>
    %186 = vector.extract_strided_slice %184 {offsets = [0, 9], sizes = [64, 71], strides = [1, 1]} : vector<64x80xf32> to vector<64x71xf32>
    %187 = arith.maximumf %185, %186 : vector<64x71xf32>
    %c0_102 = arith.constant 0 : index
    %c0_103 = arith.constant 0 : index
    %188 = vector.load %arg10[%c0_102, %c0_103] : memref<71x9xf32, #tpu.memory_space<vmem>>, vector<71x9xf32>
    %cst_104 = arith.constant dense<0.000000e+00> : vector<64x9xf32>
    %189 = tpu.matmul %187, %188, %cst_104 {dimension_numbers = #tpu.dot_dimension_numbers<[1], [0], [0], [1], [0, 0, 1, 1], [], []>} : vector<64x71xf32>, vector<71x9xf32>, vector<64x9xf32> -> vector<64x9xf32>
    %c0_105 = arith.constant 0 : index
    %c0_106 = arith.constant 0 : index
    %190 = vector.load %arg12[%c0_105, %c0_106] : memref<128x1xf32, #tpu.memory_space<vmem>>, vector<128x1xf32>
    %c0_107 = arith.constant 0 : index
    %c0_108 = arith.constant 0 : index
    %c0_109 = arith.constant 0 : index
    %191 = vector.load %arg11[%c0_107, %c0_108, %c0_109] : memref<9x128x64xf32, #tpu.memory_space<vmem>>, vector<1x128x64xf32>
    %192 = vector.shape_cast %191 : vector<1x128x64xf32> to vector<128x64xf32>
    %193 = vector.extract_strided_slice %189 {offsets = [0, 0], sizes = [64, 1], strides = [1, 1]} : vector<64x9xf32> to vector<64x1xf32>
    %cst_110 = arith.constant dense<0.000000e+00> : vector<128x1xf32>
    %194 = tpu.matmul %192, %193, %cst_110 {dimension_numbers = #tpu.dot_dimension_numbers<[1], [0], [0], [1], [0, 0, 1, 1], [], []>} : vector<128x64xf32>, vector<64x1xf32>, vector<128x1xf32> -> vector<128x1xf32>
    %195 = arith.addf %190, %194 : vector<128x1xf32>
    %c1_111 = arith.constant 1 : index
    %c0_112 = arith.constant 0 : index
    %c0_113 = arith.constant 0 : index
    %196 = vector.load %arg11[%c1_111, %c0_112, %c0_113] : memref<9x128x64xf32, #tpu.memory_space<vmem>>, vector<1x128x64xf32>
    %197 = vector.shape_cast %196 : vector<1x128x64xf32> to vector<128x64xf32>
    %198 = vector.extract_strided_slice %189 {offsets = [0, 1], sizes = [64, 1], strides = [1, 1]} : vector<64x9xf32> to vector<64x1xf32>
    %cst_114 = arith.constant dense<0.000000e+00> : vector<128x1xf32>
    %199 = tpu.matmul %197, %198, %cst_114 {dimension_numbers = #tpu.dot_dimension_numbers<[1], [0], [0], [1], [0, 0, 1, 1], [], []>} : vector<128x64xf32>, vector<64x1xf32>, vector<128x1xf32> -> vector<128x1xf32>
    %200 = arith.addf %195, %199 : vector<128x1xf32>
    %c2_115 = arith.constant 2 : index
    %c0_116 = arith.constant 0 : index
    %c0_117 = arith.constant 0 : index
    %201 = vector.load %arg11[%c2_115, %c0_116, %c0_117] : memref<9x128x64xf32, #tpu.memory_space<vmem>>, vector<1x128x64xf32>
    %202 = vector.shape_cast %201 : vector<1x128x64xf32> to vector<128x64xf32>
    %203 = vector.extract_strided_slice %189 {offsets = [0, 2], sizes = [64, 1], strides = [1, 1]} : vector<64x9xf32> to vector<64x1xf32>
    %cst_118 = arith.constant dense<0.000000e+00> : vector<128x1xf32>
    %204 = tpu.matmul %202, %203, %cst_118 {dimension_numbers = #tpu.dot_dimension_numbers<[1], [0], [0], [1], [0, 0, 1, 1], [], []>} : vector<128x64xf32>, vector<64x1xf32>, vector<128x1xf32> -> vector<128x1xf32>
    %205 = arith.addf %200, %204 : vector<128x1xf32>
    %c3_119 = arith.constant 3 : index
    %c0_120 = arith.constant 0 : index
    %c0_121 = arith.constant 0 : index
    %206 = vector.load %arg11[%c3_119, %c0_120, %c0_121] : memref<9x128x64xf32, #tpu.memory_space<vmem>>, vector<1x128x64xf32>
    %207 = vector.shape_cast %206 : vector<1x128x64xf32> to vector<128x64xf32>
    %208 = vector.extract_strided_slice %189 {offsets = [0, 3], sizes = [64, 1], strides = [1, 1]} : vector<64x9xf32> to vector<64x1xf32>
    %cst_122 = arith.constant dense<0.000000e+00> : vector<128x1xf32>
    %209 = tpu.matmul %207, %208, %cst_122 {dimension_numbers = #tpu.dot_dimension_numbers<[1], [0], [0], [1], [0, 0, 1, 1], [], []>} : vector<128x64xf32>, vector<64x1xf32>, vector<128x1xf32> -> vector<128x1xf32>
    %210 = arith.addf %205, %209 : vector<128x1xf32>
    %c4_123 = arith.constant 4 : index
    %c0_124 = arith.constant 0 : index
    %c0_125 = arith.constant 0 : index
    %211 = vector.load %arg11[%c4_123, %c0_124, %c0_125] : memref<9x128x64xf32, #tpu.memory_space<vmem>>, vector<1x128x64xf32>
    %212 = vector.shape_cast %211 : vector<1x128x64xf32> to vector<128x64xf32>
    %213 = vector.extract_strided_slice %189 {offsets = [0, 4], sizes = [64, 1], strides = [1, 1]} : vector<64x9xf32> to vector<64x1xf32>
    %cst_126 = arith.constant dense<0.000000e+00> : vector<128x1xf32>
    %214 = tpu.matmul %212, %213, %cst_126 {dimension_numbers = #tpu.dot_dimension_numbers<[1], [0], [0], [1], [0, 0, 1, 1], [], []>} : vector<128x64xf32>, vector<64x1xf32>, vector<128x1xf32> -> vector<128x1xf32>
    %215 = arith.addf %210, %214 : vector<128x1xf32>
    %c5_127 = arith.constant 5 : index
    %c0_128 = arith.constant 0 : index
    %c0_129 = arith.constant 0 : index
    %216 = vector.load %arg11[%c5_127, %c0_128, %c0_129] : memref<9x128x64xf32, #tpu.memory_space<vmem>>, vector<1x128x64xf32>
    %217 = vector.shape_cast %216 : vector<1x128x64xf32> to vector<128x64xf32>
    %218 = vector.extract_strided_slice %189 {offsets = [0, 5], sizes = [64, 1], strides = [1, 1]} : vector<64x9xf32> to vector<64x1xf32>
    %cst_130 = arith.constant dense<0.000000e+00> : vector<128x1xf32>
    %219 = tpu.matmul %217, %218, %cst_130 {dimension_numbers = #tpu.dot_dimension_numbers<[1], [0], [0], [1], [0, 0, 1, 1], [], []>} : vector<128x64xf32>, vector<64x1xf32>, vector<128x1xf32> -> vector<128x1xf32>
    %220 = arith.addf %215, %219 : vector<128x1xf32>
    %c6_131 = arith.constant 6 : index
    %c0_132 = arith.constant 0 : index
    %c0_133 = arith.constant 0 : index
    %221 = vector.load %arg11[%c6_131, %c0_132, %c0_133] : memref<9x128x64xf32, #tpu.memory_space<vmem>>, vector<1x128x64xf32>
    %222 = vector.shape_cast %221 : vector<1x128x64xf32> to vector<128x64xf32>
    %223 = vector.extract_strided_slice %189 {offsets = [0, 6], sizes = [64, 1], strides = [1, 1]} : vector<64x9xf32> to vector<64x1xf32>
    %cst_134 = arith.constant dense<0.000000e+00> : vector<128x1xf32>
    %224 = tpu.matmul %222, %223, %cst_134 {dimension_numbers = #tpu.dot_dimension_numbers<[1], [0], [0], [1], [0, 0, 1, 1], [], []>} : vector<128x64xf32>, vector<64x1xf32>, vector<128x1xf32> -> vector<128x1xf32>
    %225 = arith.addf %220, %224 : vector<128x1xf32>
    %c7_135 = arith.constant 7 : index
    %c0_136 = arith.constant 0 : index
    %c0_137 = arith.constant 0 : index
    %226 = vector.load %arg11[%c7_135, %c0_136, %c0_137] : memref<9x128x64xf32, #tpu.memory_space<vmem>>, vector<1x128x64xf32>
    %227 = vector.shape_cast %226 : vector<1x128x64xf32> to vector<128x64xf32>
    %228 = vector.extract_strided_slice %189 {offsets = [0, 7], sizes = [64, 1], strides = [1, 1]} : vector<64x9xf32> to vector<64x1xf32>
    %cst_138 = arith.constant dense<0.000000e+00> : vector<128x1xf32>
    %229 = tpu.matmul %227, %228, %cst_138 {dimension_numbers = #tpu.dot_dimension_numbers<[1], [0], [0], [1], [0, 0, 1, 1], [], []>} : vector<128x64xf32>, vector<64x1xf32>, vector<128x1xf32> -> vector<128x1xf32>
    %230 = arith.addf %225, %229 : vector<128x1xf32>
    %c8_139 = arith.constant 8 : index
    %c0_140 = arith.constant 0 : index
    %c0_141 = arith.constant 0 : index
    %231 = vector.load %arg11[%c8_139, %c0_140, %c0_141] : memref<9x128x64xf32, #tpu.memory_space<vmem>>, vector<1x128x64xf32>
    %232 = vector.shape_cast %231 : vector<1x128x64xf32> to vector<128x64xf32>
    %233 = vector.extract_strided_slice %189 {offsets = [0, 8], sizes = [64, 1], strides = [1, 1]} : vector<64x9xf32> to vector<64x1xf32>
    %cst_142 = arith.constant dense<0.000000e+00> : vector<128x1xf32>
    %234 = tpu.matmul %232, %233, %cst_142 {dimension_numbers = #tpu.dot_dimension_numbers<[1], [0], [0], [1], [0, 0, 1, 1], [], []>} : vector<128x64xf32>, vector<64x1xf32>, vector<128x1xf32> -> vector<128x1xf32>
    %235 = arith.addf %230, %234 : vector<128x1xf32>
    %cst_143 = arith.constant 0.000000e+00 : f32
    %236 = vector.broadcast %cst_143 : f32 to vector<128x1xf32>
    %237 = arith.maximumf %235, %236 : vector<128x1xf32>
    %c0_144 = arith.constant 0 : index
    %c0_145 = arith.constant 0 : index
    %238 = vector.load %arg13[%c0_144, %c0_145] : memref<64x128xf32, #tpu.memory_space<vmem>>, vector<64x128xf32>
    %cst_146 = arith.constant dense<0.000000e+00> : vector<64x1xf32>
    %239 = tpu.matmul %238, %237, %cst_146 {dimension_numbers = #tpu.dot_dimension_numbers<[1], [0], [0], [1], [0, 0, 1, 1], [], []>} : vector<64x128xf32>, vector<128x1xf32>, vector<64x1xf32> -> vector<64x1xf32>
    %c0_147 = arith.constant 0 : index
    %c0_148 = arith.constant 0 : index
    %240 = vector.load %arg14[%c0_147, %c0_148] : memref<64x1xf32, #tpu.memory_space<vmem>>, vector<64x1xf32>
    %241 = arith.addf %239, %240 : vector<64x1xf32>
    %cst_149 = arith.constant 0.000000e+00 : f32
    %242 = vector.broadcast %cst_149 : f32 to vector<64x1xf32>
    %243 = arith.maximumf %241, %242 : vector<64x1xf32>
    %c0_150 = arith.constant 0 : index
    %c0_151 = arith.constant 0 : index
    %244 = vector.load %arg15[%c0_150, %c0_151] : memref<10x64xf32, #tpu.memory_space<vmem>>, vector<10x64xf32>
    %cst_152 = arith.constant dense<0.000000e+00> : vector<10x1xf32>
    %245 = tpu.matmul %244, %243, %cst_152 {dimension_numbers = #tpu.dot_dimension_numbers<[1], [0], [0], [1], [0, 0, 1, 1], [], []>} : vector<10x64xf32>, vector<64x1xf32>, vector<10x1xf32> -> vector<10x1xf32>
    %c0_153 = arith.constant 0 : index
    %c0_154 = arith.constant 0 : index
    %246 = vector.load %arg16[%c0_153, %c0_154] : memref<10x1xf32, #tpu.memory_space<vmem>>, vector<10x1xf32>
    %247 = arith.addf %245, %246 : vector<10x1xf32>
    %c0_155 = arith.constant 0 : index
    %c0_156 = arith.constant 0 : index
    %c0_157 = arith.constant 0 : index
    %248 = vector.load %arg17[%c0_155, %c0_156, %c0_157] : memref<1x10x1xf32, #tpu.memory_space<vmem>>, vector<1x10x1xf32>
    %249 = vector.shape_cast %248 : vector<1x10x1xf32> to vector<10x1xf32>
    %250 = vector.shape_cast %247 : vector<10x1xf32> to vector<1x10x1xf32>
    tpu.vector_store %arg17[%c0_155, %c0_156, %c0_157], %250 {strides = array<i32>} : memref<1x10x1xf32, #tpu.memory_space<vmem>>, vector<1x10x1xf32>,
    return
  }
  func.func @transform_0(%arg0: i32) -> (i32, i32, i32) {
    %c0_i32 = arith.constant 0 : i32
    %c0_i32_0 = arith.constant 0 : i32
    %c0_i32_1 = arith.constant 0 : i32
    return %arg0, %c0_i32, %c0_i32_0 : i32, i32, i32
  }
  func.func @transform_1(%arg0: i32) -> (i32, i32) {
    %c0_i32 = arith.constant 0 : i32
    %c0_i32_0 = arith.constant 0 : i32
    %c0_i32_1 = arith.constant 0 : i32
    return %c0_i32, %c0_i32_0 : i32, i32
  }
  func.func @transform_2(%arg0: i32) -> (i32, i32) {
    %c0_i32 = arith.constant 0 : i32
    %c0_i32_0 = arith.constant 0 : i32
    %c0_i32_1 = arith.constant 0 : i32
    return %c0_i32, %c0_i32_0 : i32, i32
  }
  func.func @transform_3(%arg0: i32) -> (i32, i32, i32) {
    %c0_i32 = arith.constant 0 : i32
    %c0_i32_0 = arith.constant 0 : i32
    %c0_i32_1 = arith.constant 0 : i32
    %c0_i32_2 = arith.constant 0 : i32
    return %c0_i32, %c0_i32_0, %c0_i32_1 : i32, i32, i32
  }
  func.func @transform_4(%arg0: i32) -> (i32, i32) {
    %c0_i32 = arith.constant 0 : i32
    %c0_i32_0 = arith.constant 0 : i32
    %c0_i32_1 = arith.constant 0 : i32
    return %c0_i32, %c0_i32_0 : i32, i32
  }
  func.func @transform_5(%arg0: i32) -> (i32, i32, i32) {
    %c0_i32 = arith.constant 0 : i32
    %c0_i32_0 = arith.constant 0 : i32
    %c0_i32_1 = arith.constant 0 : i32
    %c0_i32_2 = arith.constant 0 : i32
    return %c0_i32, %c0_i32_0, %c0_i32_1 : i32, i32, i32
  }
  func.func @transform_6(%arg0: i32) -> (i32, i32) {
    %c0_i32 = arith.constant 0 : i32
    %c0_i32_0 = arith.constant 0 : i32
    %c0_i32_1 = arith.constant 0 : i32
    return %c0_i32, %c0_i32_0 : i32, i32
  }
  func.func @transform_7(%arg0: i32) -> (i32, i32) {
    %c0_i32 = arith.constant 0 : i32
    %c0_i32_0 = arith.constant 0 : i32
    %c0_i32_1 = arith.constant 0 : i32
    return %c0_i32, %c0_i32_0 : i32, i32
  }
  func.func @transform_8(%arg0: i32) -> (i32, i32) {
    %c0_i32 = arith.constant 0 : i32
    %c0_i32_0 = arith.constant 0 : i32
    %c0_i32_1 = arith.constant 0 : i32
    return %c0_i32, %c0_i32_0 : i32, i32
  }
  func.func @transform_9(%arg0: i32) -> (i32, i32) {
    %c0_i32 = arith.constant 0 : i32
    %c0_i32_0 = arith.constant 0 : i32
    %c0_i32_1 = arith.constant 0 : i32
    return %c0_i32, %c0_i32_0 : i32, i32
  }
  func.func @transform_10(%arg0: i32) -> (i32, i32, i32) {
    %c0_i32 = arith.constant 0 : i32
    %c0_i32_0 = arith.constant 0 : i32
    %c0_i32_1 = arith.constant 0 : i32
    %c0_i32_2 = arith.constant 0 : i32
    return %c0_i32, %c0_i32_0, %c0_i32_1 : i32, i32, i32
  }
  func.func @transform_11(%arg0: i32) -> (i32, i32) {
    %c0_i32 = arith.constant 0 : i32
    %c0_i32_0 = arith.constant 0 : i32
    %c0_i32_1 = arith.constant 0 : i32
    return %c0_i32, %c0_i32_0 : i32, i32
  }
  func.func @transform_12(%arg0: i32) -> (i32, i32) {
    %c0_i32 = arith.constant 0 : i32
    %c0_i32_0 = arith.constant 0 : i32
    %c0_i32_1 = arith.constant 0 : i32
    return %c0_i32, %c0_i32_0 : i32, i32
  }
  func.func @transform_13(%arg0: i32) -> (i32, i32) {
    %c0_i32 = arith.constant 0 : i32
    %c0_i32_0 = arith.constant 0 : i32
    %c0_i32_1 = arith.constant 0 : i32
    return %c0_i32, %c0_i32_0 : i32, i32
  }
  func.func @transform_14(%arg0: i32) -> (i32, i32) {
    %c0_i32 = arith.constant 0 : i32
    %c0_i32_0 = arith.constant 0 : i32
    %c0_i32_1 = arith.constant 0 : i32
    return %c0_i32, %c0_i32_0 : i32, i32
  }
  func.func @transform_15(%arg0: i32) -> (i32, i32) {
    %c0_i32 = arith.constant 0 : i32
    %c0_i32_0 = arith.constant 0 : i32
    %c0_i32_1 = arith.constant 0 : i32
    return %c0_i32, %c0_i32_0 : i32, i32
  }
  func.func @transform_16(%arg0: i32) -> (i32, i32, i32) {
    %c0_i32 = arith.constant 0 : i32
    %c0_i32_0 = arith.constant 0 : i32
    %c0_i32_1 = arith.constant 0 : i32
    return %arg0, %c0_i32, %c0_i32_0 : i32, i32, i32
  }
}

</mosaic_0001>

<llo_original>
// kernel: conv_net_forward.1
$region0: #{conv_net_forward.1}
  #allocation0 [shape = 'u32[]', space=smem, size = 0x4, offset = 0x4, fixed_abs, tag = 'smem constant byte address 0x4 - core index']
  #allocation1 [shape = 'u32[144,128]{1,0:T(1,128)}', space=vmem, size = 0x12000, scoped, tag = 'internal scratch']
  %s0 = inlined_call_operand.vmem [shape: f32[2,1,962], index: 0, kind: input, shape index: {}]
  %s1 = inlined_call_operand.vmem [shape: f32[32,9], index: 1, kind: input, shape index: {}]
  %s2 = inlined_call_operand.vmem [shape: f32[32,1], index: 2, kind: input, shape index: {}]
  %s3 = inlined_call_operand.vmem [shape: f32[9,64,32], index: 3, kind: input, shape index: {}]
  %s4 = inlined_call_operand.vmem [shape: f32[64,1], index: 4, kind: input, shape index: {}]
  %s5 = inlined_call_operand.vmem [shape: f32[9,64,64], index: 5, kind: input, shape index: {}]
  %s6 = inlined_call_operand.vmem [shape: f32[64,1], index: 6, kind: input, shape index: {}]
  %s7 = inlined_call_operand.vmem [shape: f32[869,290], index: 7, kind: input, shape index: {}]
  %s8 = inlined_call_operand.vmem [shape: f32[239,101], index: 8, kind: input, shape index: {}]
  %s9 = inlined_call_operand.vmem [shape: f32[71,9], index: 9, kind: input, shape index: {}]
  %s10 = inlined_call_operand.vmem [shape: f32[9,128,64], index: 10, kind: input, shape index: {}]
  %s11 = inlined_call_operand.vmem [shape: f32[128,1], index: 11, kind: input, shape index: {}]
  %s12 = inlined_call_operand.vmem [shape: f32[64,128], index: 12, kind: input, shape index: {}]
  %s13 = inlined_call_operand.vmem [shape: f32[64,1], index: 13, kind: input, shape index: {}]
  %s14 = inlined_call_operand.vmem [shape: f32[10,64], index: 14, kind: input, shape index: {}]
  %s15 = inlined_call_operand.vmem [shape: f32[10,1], index: 15, kind: input, shape index: {}]
  %s16 = inlined_call_operand.vmem [shape: f32[2,10,1], index: 16, kind: output, shape index: {}]
  %s17 = sld [smem:[#allocation0]]
  $region97: #{conv_net_forward.1} parent=0
    _
  %s19 = ssub.s32 1, %s17
  %s20 = scalar_select 0, %s19, %s17
  loop: start=0, step=1, limit=4
  $region2: #{conv_net_forward.1} parent=0 // loop_pre_header
    _
  $region3: #{conv_net_forward.1} parent=0 // loop_header
    %s22 = sphi 0, %s26
    %p23 = scmp.ge.s32.totalorder %s22, 4
    %s32 = sphi 0, %s34
    %s35 = sphi 0, %s32
    %s36 = sphi 0, %s35
    %s52 = sphi 0, %s36
    %s56 = sphi 0, %s56
    %s58 = sphi 0, %s56
    %s59 = sphi 0, %s58
    %s73 = sphi 0, %s59
    %s77 = sphi 0, %s77
    %s79 = sphi 0, %s77
    %s80 = sphi 0, %s79
    %s94 = sphi 0, %s80
    %s98 = sphi 0, %s98
    %s100 = sphi 0, %s98
    %s101 = sphi 0, %s100
    %s115 = sphi 0, %s101
    %s119 = sphi 0, %s119
    %s121 = sphi 0, %s119
    %s122 = sphi 0, %s121
    %s136 = sphi 0, %s122
    %s140 = sphi 0, %s140
    %s142 = sphi 0, %s140
    %s143 = sphi 0, %s142
    %s157 = sphi 0, %s143
    %s161 = sphi 0, %s161
    %s163 = sphi 0, %s161
    %s164 = sphi 0, %s163
    %s178 = sphi 0, %s164
    %s182 = sphi 0, %s182
    %s184 = sphi 0, %s182
    %s185 = sphi 0, %s184
    %s199 = sphi 0, %s185
    %s203 = sphi 0, %s203
    %s205 = sphi 0, %s203
    %s206 = sphi 0, %s205
    %s220 = sphi 0, %s206
    %s224 = sphi 0, %s224
    %s226 = sphi 0, %s224
    %s227 = sphi 0, %s226
    %s241 = sphi 0, %s227
    %s245 = sphi 0, %s245
    %s247 = sphi 0, %s245
    %s248 = sphi 0, %s247
    %s262 = sphi 0, %s248
    %s266 = sphi 0, %s266
    %s268 = sphi 0, %s266
    %s269 = sphi 0, %s268
    %s283 = sphi 0, %s269
    %s287 = sphi 0, %s287
    %s289 = sphi 0, %s287
    %s290 = sphi 0, %s289
    %s304 = sphi 0, %s290
    %s308 = sphi 0, %s308
    %s310 = sphi 0, %s308
    %s311 = sphi 0, %s310
    %s325 = sphi 0, %s311
    %s329 = sphi 0, %s329
    %s331 = sphi 0, %s329
    %s332 = sphi 0, %s331
    %s346 = sphi 0, %s332
    %s350 = sphi 0, %s350
    %s352 = sphi 0, %s350
    %s353 = sphi 0, %s352
    %s367 = sphi 0, %s353
    %s373 = sphi 0, %s375
    %s376 = sphi 0, %s373
    %s377 = sphi 0, %s376
    %s393 = sphi 0, %s377
  $region4: #{conv_net_forward.1} parent=0 // loop_header_branch
    %25 = sbr.rel (%p23) target = $region8
  $region5: #{conv_net_forward.1} parent=0 // loop_body
    %s27 = ssub.s32 %s22, 1
    %s28 = ssub.s32 %s22, 2
    %s29 = sadd.s32 %s22, 1
    %s30 = ssub.s32 %s22, %s29
    %p31 = scmp.eq.s32.totalorder %s30, 0
    %s33 = sadd.s32 %s32, 1
    %s34 = scalar_select %p31, %s32, %s33
    %p37 = pneg %p31
    %p38 = scmp.eq.s32.totalorder %s22, 1
    %p39 = por %p37, %p38
    %p40 = scmp.ne.s32.totalorder %s32, %s35
    %p41 = scmp.eq.s32.totalorder %s22, 0
    %p42 = por %p40, %p41
    %p43 = scmp.ne.s32.totalorder %s32, %s35
    %p44 = scmp.eq.s32.totalorder %s27, 1
    %p45 = por %p43, %p44
    %p46 = scmp.ne.s32.totalorder %s35, %s36
    %p47 = scmp.eq.s32.totalorder %s27, 0
    %p48 = por %p46, %p47
    %p49 = scmp.ne.s32.totalorder %s35, %s36
    %p50 = scmp.eq.s32.totalorder %s28, 1
    %p51 = por %p49, %p50
    %p53 = scmp.ne.s32.totalorder %s36, %s52
    %p54 = scmp.eq.s32.totalorder %s28, 0
    %p55 = por %p53, %p54
    %s57 = sadd.s32 %s56, 1
    %p60 = scmp.eq.s32.totalorder %s22, 1
    %p61 = scmp.ne.s32.totalorder %s56, %s58
    %p62 = scmp.eq.s32.totalorder %s22, 0
    %p63 = por %p61, %p62
    %p64 = scmp.ne.s32.totalorder %s56, %s58
    %p65 = scmp.eq.s32.totalorder %s27, 1
    %p66 = por %p64, %p65
    %p67 = scmp.ne.s32.totalorder %s58, %s59
    %p68 = scmp.eq.s32.totalorder %s27, 0
    %p69 = por %p67, %p68
    %p70 = scmp.ne.s32.totalorder %s58, %s59
    %p71 = scmp.eq.s32.totalorder %s28, 1
    %p72 = por %p70, %p71
    %p74 = scmp.ne.s32.totalorder %s59, %s73
    %p75 = scmp.eq.s32.totalorder %s28, 0
    %p76 = por %p74, %p75
    %s78 = sadd.s32 %s77, 1
    %p81 = scmp.eq.s32.totalorder %s22, 1
    %p82 = scmp.ne.s32.totalorder %s77, %s79
    %p83 = scmp.eq.s32.totalorder %s22, 0
    %p84 = por %p82, %p83
    %p85 = scmp.ne.s32.totalorder %s77, %s79
    %p86 = scmp.eq.s32.totalorder %s27, 1
    %p87 = por %p85, %p86
    %p88 = scmp.ne.s32.totalorder %s79, %s80
    %p89 = scmp.eq.s32.totalorder %s27, 0
    %p90 = por %p88, %p89
    %p91 = scmp.ne.s32.totalorder %s79, %s80
    %p92 = scmp.eq.s32.totalorder %s28, 1
    %p93 = por %p91, %p92
    %p95 = scmp.ne.s32.totalorder %s80, %s94
    %p96 = scmp.eq.s32.totalorder %s28, 0
    %p97 = por %p95, %p96
    %s99 = sadd.s32 %s98, 1
    %p102 = scmp.eq.s32.totalorder %s22, 1
    %p103 = scmp.ne.s32.totalorder %s98, %s100
    %p104 = scmp.eq.s32.totalorder %s22, 0
    %p105 = por %p103, %p104
    %p106 = scmp.ne.s32.totalorder %s98, %s100
    %p107 = scmp.eq.s32.totalorder %s27, 1
    %p108 = por %p106, %p107
    %p109 = scmp.ne.s32.totalorder %s100, %s101
    %p110 = scmp.eq.s32.totalorder %s27, 0
    %p111 = por %p109, %p110
    %p112 = scmp.ne.s32.totalorder %s100, %s101
    %p113 = scmp.eq.s32.totalorder %s28, 1
    %p114 = por %p112, %p113
    %p116 = scmp.ne.s32.totalorder %s101, %s115
    %p117 = scmp.eq.s32.totalorder %s28, 0
    %p118 = por %p116, %p117
    %s120 = sadd.s32 %s119, 1
    %p123 = scmp.eq.s32.totalorder %s22, 1
    %p124 = scmp.ne.s32.totalorder %s119, %s121
    %p125 = scmp.eq.s32.totalorder %s22, 0
    %p126 = por %p124, %p125
    %p127 = scmp.ne.s32.totalorder %s119, %s121
    %p128 = scmp.eq.s32.totalorder %s27, 1
    %p129 = por %p127, %p128
    %p130 = scmp.ne.s32.totalorder %s121, %s122
    %p131 = scmp.eq.s32.totalorder %s27, 0
    %p132 = por %p130, %p131
    %p133 = scmp.ne.s32.totalorder %s121, %s122
    %p134 = scmp.eq.s32.totalorder %s28, 1
    %p135 = por %p133, %p134
    %p137 = scmp.ne.s32.totalorder %s122, %s136
    %p138 = scmp.eq.s32.totalorder %s28, 0
    %p139 = por %p137, %p138
    %s141 = sadd.s32 %s140, 1
    %p144 = scmp.eq.s32.totalorder %s22, 1
    %p145 = scmp.ne.s32.totalorder %s140, %s142
    %p146 = scmp.eq.s32.totalorder %s22, 0
    %p147 = por %p145, %p146
    %p148 = scmp.ne.s32.totalorder %s140, %s142
    %p149 = scmp.eq.s32.totalorder %s27, 1
    %p150 = por %p148, %p149
    %p151 = scmp.ne.s32.totalorder %s142, %s143
    %p152 = scmp.eq.s32.totalorder %s27, 0
    %p153 = por %p151, %p152
    %p154 = scmp.ne.s32.totalorder %s142, %s143
    %p155 = scmp.eq.s32.totalorder %s28, 1
    %p156 = por %p154, %p155
    %p158 = scmp.ne.s32.totalorder %s143, %s157
    %p159 = scmp.eq.s32.totalorder %s28, 0
    %p160 = por %p158, %p159
    %s162 = sadd.s32 %s161, 1
    %p165 = scmp.eq.s32.totalorder %s22, 1
    %p166 = scmp.ne.s32.totalorder %s161, %s163
    %p167 = scmp.eq.s32.totalorder %s22, 0
    %p168 = por %p166, %p167
    %p169 = scmp.ne.s32.totalorder %s161, %s163
    %p170 = scmp.eq.s32.totalorder %s27, 1
    %p171 = por %p169, %p170
    %p172 = scmp.ne.s32.totalorder %s163, %s164
    %p173 = scmp.eq.s32.totalorder %s27, 0
    %p174 = por %p172, %p173
    %p175 = scmp.ne.s32.totalorder %s163, %s164
    %p176 = scmp.eq.s32.totalorder %s28, 1
    %p177 = por %p175, %p176
    %p179 = scmp.ne.s32.totalorder %s164, %s178
    %p180 = scmp.eq.s32.totalorder %s28, 0
    %p181 = por %p179, %p180
    %s183 = sadd.s32 %s182, 1
    %p186 = scmp.eq.s32.totalorder %s22, 1
    %p187 = scmp.ne.s32.totalorder %s182, %s184
    %p188 = scmp.eq.s32.totalorder %s22, 0
    %p189 = por %p187, %p188
    %p190 = scmp.ne.s32.totalorder %s182, %s184
    %p191 = scmp.eq.s32.totalorder %s27, 1
    %p192 = por %p190, %p191
    %p193 = scmp.ne.s32.totalorder %s184, %s185
    %p194 = scmp.eq.s32.totalorder %s27, 0
    %p195 = por %p193, %p194
    %p196 = scmp.ne.s32.totalorder %s184, %s185
    %p197 = scmp.eq.s32.totalorder %s28, 1
    %p198 = por %p196, %p197
    %p200 = scmp.ne.s32.totalorder %s185, %s199
    %p201 = scmp.eq.s32.totalorder %s28, 0
    %p202 = por %p200, %p201
    %s204 = sadd.s32 %s203, 1
    %p207 = scmp.eq.s32.totalorder %s22, 1
    %p208 = scmp.ne.s32.totalorder %s203, %s205
    %p209 = scmp.eq.s32.totalorder %s22, 0
    %p210 = por %p208, %p209
    %p211 = scmp.ne.s32.totalorder %s203, %s205
    %p212 = scmp.eq.s32.totalorder %s27, 1
    %p213 = por %p211, %p212
    %p214 = scmp.ne.s32.totalorder %s205, %s206
    %p215 = scmp.eq.s32.totalorder %s27, 0
    %p216 = por %p214, %p215
    %p217 = scmp.ne.s32.totalorder %s205, %s206
    %p218 = scmp.eq.s32.totalorder %s28, 1
    %p219 = por %p217, %p218
    %p221 = scmp.ne.s32.totalorder %s206, %s220
    %p222 = scmp.eq.s32.totalorder %s28, 0
    %p223 = por %p221, %p222
    %s225 = sadd.s32 %s224, 1
    %p228 = scmp.eq.s32.totalorder %s22, 1
    %p229 = scmp.ne.s32.totalorder %s224, %s226
    %p230 = scmp.eq.s32.totalorder %s22, 0
    %p231 = por %p229, %p230
    %p232 = scmp.ne.s32.totalorder %s224, %s226
    %p233 = scmp.eq.s32.totalorder %s27, 1
    %p234 = por %p232, %p233
    %p235 = scmp.ne.s32.totalorder %s226, %s227
    %p236 = scmp.eq.s32.totalorder %s27, 0
    %p237 = por %p235, %p236
    %p238 = scmp.ne.s32.totalorder %s226, %s227
    %p239 = scmp.eq.s32.totalorder %s28, 1
    %p240 = por %p238, %p239
    %p242 = scmp.ne.s32.totalorder %s227, %s241
    %p243 = scmp.eq.s32.totalorder %s28, 0
    %p244 = por %p242, %p243
    %s246 = sadd.s32 %s245, 1
    %p249 = scmp.eq.s32.totalorder %s22, 1
    %p250 = scmp.ne.s32.totalorder %s245, %s247
    %p251 = scmp.eq.s32.totalorder %s22, 0
    %p252 = por %p250, %p251
    %p253 = scmp.ne.s32.totalorder %s245, %s247
    %p254 = scmp.eq.s32.totalorder %s27, 1
    %p255 = por %p253, %p254
    %p256 = scmp.ne.s32.totalorder %s247, %s248
    %p257 = scmp.eq.s32.totalorder %s27, 0
    %p258 = por %p256, %p257
    %p259 = scmp.ne.s32.totalorder %s247, %s248
    %p260 = scmp.eq.s32.totalorder %s28, 1
    %p261 = por %p259, %p260
    %p263 = scmp.ne.s32.totalorder %s248, %s262
    %p264 = scmp.eq.s32.totalorder %s28, 0
    %p265 = por %p263, %p264
    %s267 = sadd.s32 %s266, 1
    %p270 = scmp.eq.s32.totalorder %s22, 1
    %p271 = scmp.ne.s32.totalorder %s266, %s268
    %p272 = scmp.eq.s32.totalorder %s22, 0
    %p273 = por %p271, %p272
    %p274 = scmp.ne.s32.totalorder %s266, %s268
    %p275 = scmp.eq.s32.totalorder %s27, 1
    %p276 = por %p274, %p275
    %p277 = scmp.ne.s32.totalorder %s268, %s269
    %p278 = scmp.eq.s32.totalorder %s27, 0
    %p279 = por %p277, %p278
    %p280 = scmp.ne.s32.totalorder %s268, %s269
    %p281 = scmp.eq.s32.totalorder %s28, 1
    %p282 = por %p280, %p281
    %p284 = scmp.ne.s32.totalorder %s269, %s283
    %p285 = scmp.eq.s32.totalorder %s28, 0
    %p286 = por %p284, %p285
    %s288 = sadd.s32 %s287, 1
    %p291 = scmp.eq.s32.totalorder %s22, 1
    %p292 = scmp.ne.s32.totalorder %s287, %s289
    %p293 = scmp.eq.s32.totalorder %s22, 0
    %p294 = por %p292, %p293
    %p295 = scmp.ne.s32.totalorder %s287, %s289
    %p296 = scmp.eq.s32.totalorder %s27, 1
    %p297 = por %p295, %p296
    %p298 = scmp.ne.s32.totalorder %s289, %s290
    %p299 = scmp.eq.s32.totalorder %s27, 0
    %p300 = por %p298, %p299
    %p301 = scmp.ne.s32.totalorder %s289, %s290
    %p302 = scmp.eq.s32.totalorder %s28, 1
    %p303 = por %p301, %p302
    %p305 = scmp.ne.s32.totalorder %s290, %s304
    %p306 = scmp.eq.s32.totalorder %s28, 0
    %p307 = por %p305, %p306
    %s309 = sadd.s32 %s308, 1
    %p312 = scmp.eq.s32.totalorder %s22, 1
    %p313 = scmp.ne.s32.totalorder %s308, %s310
    %p314 = scmp.eq.s32.totalorder %s22, 0
    %p315 = por %p313, %p314
    %p316 = scmp.ne.s32.totalorder %s308, %s310
    %p317 = scmp.eq.s32.totalorder %s27, 1
    %p318 = por %p316, %p317
    %p319 = scmp.ne.s32.totalorder %s310, %s311
    %p320 = scmp.eq.s32.totalorder %s27, 0
    %p321 = por %p319, %p320
    %p322 = scmp.ne.s32.totalorder %s310, %s311
    %p323 = scmp.eq.s32.totalorder %s28, 1
    %p324 = por %p322, %p323
    %p326 = scmp.ne.s32.totalorder %s311, %s325
    %p327 = scmp.eq.s32.totalorder %s28, 0
    %p328 = por %p326, %p327
    %s330 = sadd.s32 %s329, 1
    %p333 = scmp.eq.s32.totalorder %s22, 1
    %p334 = scmp.ne.s32.totalorder %s329, %s331
    %p335 = scmp.eq.s32.totalorder %s22, 0
    %p336 = por %p334, %p335
    %p337 = scmp.ne.s32.totalorder %s329, %s331
    %p338 = scmp.eq.s32.totalorder %s27, 1
    %p339 = por %p337, %p338
    %p340 = scmp.ne.s32.totalorder %s331, %s332
    %p341 = scmp.eq.s32.totalorder %s27, 0
    %p342 = por %p340, %p341
    %p343 = scmp.ne.s32.totalorder %s331, %s332
    %p344 = scmp.eq.s32.totalorder %s28, 1
    %p345 = por %p343, %p344
    %p347 = scmp.ne.s32.totalorder %s332, %s346
    %p348 = scmp.eq.s32.totalorder %s28, 0
    %p349 = por %p347, %p348
    %s351 = sadd.s32 %s350, 1
    %p354 = scmp.eq.s32.totalorder %s22, 1
    %p355 = scmp.ne.s32.totalorder %s350, %s352
    %p356 = scmp.eq.s32.totalorder %s22, 0
    %p357 = por %p355, %p356
    %p358 = scmp.ne.s32.totalorder %s350, %s352
    %p359 = scmp.eq.s32.totalorder %s27, 1
    %p360 = por %p358, %p359
    %p361 = scmp.ne.s32.totalorder %s352, %s353
    %p362 = scmp.eq.s32.totalorder %s27, 0
    %p363 = por %p361, %p362
    %p364 = scmp.ne.s32.totalorder %s352, %s353
    %p365 = scmp.eq.s32.totalorder %s28, 1
    %p366 = por %p364, %p365
    %p368 = scmp.ne.s32.totalorder %s353, %s367
    %p369 = scmp.eq.s32.totalorder %s28, 0
    %p370 = por %p368, %p369
    %s371 = ssub.s32 %s22, %s29
    %p372 = scmp.eq.s32.totalorder %s371, 0
    %s374 = sadd.s32 %s373, 1
    %s375 = scalar_select %p372, %s373, %s374
    %p378 = pneg %p372
    %p379 = scmp.eq.s32.totalorder %s22, 1
    %p380 = por %p378, %p379
    %p381 = scmp.ne.s32.totalorder %s373, %s376
    %p382 = scmp.eq.s32.totalorder %s22, 0
    %p383 = por %p381, %p382
    %p384 = scmp.ne.s32.totalorder %s373, %s376
    %p385 = scmp.eq.s32.totalorder %s27, 1
    %p386 = por %p384, %p385
    %p387 = scmp.ne.s32.totalorder %s376, %s377
    %p388 = scmp.eq.s32.totalorder %s27, 0
    %p389 = por %p387, %p388
    %p390 = scmp.ne.s32.totalorder %s376, %s377
    %p391 = scmp.eq.s32.totalorder %s28, 1
    %p392 = por %p390, %p391
    %p394 = scmp.ne.s32.totalorder %s377, %s393
    %p395 = scmp.eq.s32.totalorder %s28, 0
    %p396 = por %p394, %p395
    %p397 = scmp.le.s32.totalorder 1, %s22
    %p398 = scmp.lt.s32.totalorder %s22, 3
    %p399 = pnand %p397, %p398
    %p400 = pneg %p399
    // Predicated region
    $region9: #{conv_net_forward.1} parent=5 // pred_check
      _
    $region10: #{conv_net_forward.1} parent=5 // pred_check_branch
      %402 = sbr.rel (%p399) target = $region12
    $region11: #{conv_net_forward.1} parent=5 // pred_region
      %s403 = ssub.s32 %s22, 1
      // Predicated region
      $region13: #{conv_net_forward.1} parent=11 // pred_check
        %p404 = pneg %p69
      $region14: #{conv_net_forward.1} parent=11 // pred_check_branch
        %406 = sbr.rel (%p404) target = $region16
      $region15: #{conv_net_forward.1} parent=11 // pred_region
        _
      $region16: #{conv_net_forward.1} parent=11 // pred_fallthru
        _
      // Predicated region
      $region17: #{conv_net_forward.1} parent=11 // pred_check
        %p407 = pneg %p90
      $region18: #{conv_net_forward.1} parent=11 // pred_check_branch
        %409 = sbr.rel (%p407) target = $region20
      $region19: #{conv_net_forward.1} parent=11 // pred_region
        _
      $region20: #{conv_net_forward.1} parent=11 // pred_fallthru
        _
      // Predicated region
      $region21: #{conv_net_forward.1} parent=11 // pred_check
        %p410 = pneg %p111
      $region22: #{conv_net_forward.1} parent=11 // pred_check_branch
        %412 = sbr.rel (%p410) target = $region24
      $region23: #{conv_net_forward.1} parent=11 // pred_region
        _
      $region24: #{conv_net_forward.1} parent=11 // pred_fallthru
        _
      // Predicated region
      $region25: #{conv_net_forward.1} parent=11 // pred_check
        %p413 = pneg %p132
      $region26: #{conv_net_forward.1} parent=11 // pred_check_branch
        %415 = sbr.rel (%p413) target = $region28
      $region27: #{conv_net_forward.1} parent=11 // pred_region
        _
      $region28: #{conv_net_forward.1} parent=11 // pred_fallthru
        _
      // Predicated region
      $region29: #{conv_net_forward.1} parent=11 // pred_check
        %p416 = pneg %p153
      $region30: #{conv_net_forward.1} parent=11 // pred_check_branch
        %418 = sbr.rel (%p416) target = $region32
      $region31: #{conv_net_forward.1} parent=11 // pred_region
        _
      $region32: #{conv_net_forward.1} parent=11 // pred_fallthru
        _
      // Predicated region
      $region33: #{conv_net_forward.1} parent=11 // pred_check
        %p419 = pneg %p174
      $region34: #{conv_net_forward.1} parent=11 // pred_check_branch
        %421 = sbr.rel (%p419) target = $region36
      $region35: #{conv_net_forward.1} parent=11 // pred_region
        _
      $region36: #{conv_net_forward.1} parent=11 // pred_fallthru
        _
      // Predicated region
      $region37: #{conv_net_forward.1} parent=11 // pred_check
        %p422 = pneg %p195
      $region38: #{conv_net_forward.1} parent=11 // pred_check_branch
        %424 = sbr.rel (%p422) target = $region40
      $region39: #{conv_net_forward.1} parent=11 // pred_region
        _
      $region40: #{conv_net_forward.1} parent=11 // pred_fallthru
        _
      // Predicated region
      $region41: #{conv_net_forward.1} parent=11 // pred_check
        %p425 = pneg %p216
      $region42: #{conv_net_forward.1} parent=11 // pred_check_branch
        %427 = sbr.rel (%p425) target = $region44
      $region43: #{conv_net_forward.1} parent=11 // pred_region
        _
      $region44: #{conv_net_forward.1} parent=11 // pred_fallthru
        _
      // Predicated region
      $region45: #{conv_net_forward.1} parent=11 // pred_check
        %p428 = pneg %p237
      $region46: #{conv_net_forward.1} parent=11 // pred_check_branch
        %430 = sbr.rel (%p428) target = $region48
      $region47: #{conv_net_forward.1} parent=11 // pred_region
        _
      $region48: #{conv_net_forward.1} parent=11 // pred_fallthru
        _
      // Predicated region
      $region49: #{conv_net_forward.1} parent=11 // pred_check
        %p431 = pneg %p258
      $region50: #{conv_net_forward.1} parent=11 // pred_check_branch
        %433 = sbr.rel (%p431) target = $region52
      $region51: #{conv_net_forward.1} parent=11 // pred_region
        _
      $region52: #{conv_net_forward.1} parent=11 // pred_fallthru
        _
      // Predicated region
      $region53: #{conv_net_forward.1} parent=11 // pred_check
        %p434 = pneg %p279
      $region54: #{conv_net_forward.1} parent=11 // pred_check_branch
        %436 = sbr.rel (%p434) target = $region56
      $region55: #{conv_net_forward.1} parent=11 // pred_region
        _
      $region56: #{conv_net_forward.1} parent=11 // pred_fallthru
        _
      // Predicated region
      $region57: #{conv_net_forward.1} parent=11 // pred_check
        %p437 = pneg %p300
      $region58: #{conv_net_forward.1} parent=11 // pred_check_branch
        %439 = sbr.rel (%p437) target = $region60
      $region59: #{conv_net_forward.1} parent=11 // pred_region
        _
      $region60: #{conv_net_forward.1} parent=11 // pred_fallthru
        _
      // Predicated region
      $region61: #{conv_net_forward.1} parent=11 // pred_check
        %p440 = pneg %p321
      $region62: #{conv_net_forward.1} parent=11 // pred_check_branch
        %442 = sbr.rel (%p440) target = $region64
      $region63: #{conv_net_forward.1} parent=11 // pred_region
        _
      $region64: #{conv_net_forward.1} parent=11 // pred_fallthru
        _
      // Predicated region
      $region65: #{conv_net_forward.1} parent=11 // pred_check
        %p443 = pneg %p342
      $region66: #{conv_net_forward.1} parent=11 // pred_check_branch
        %445 = sbr.rel (%p443) target = $region68
      $region67: #{conv_net_forward.1} parent=11 // pred_region
        _
      $region68: #{conv_net_forward.1} parent=11 // pred_fallthru
        _
      // Predicated region
      $region69: #{conv_net_forward.1} parent=11 // pred_check
        %p446 = pneg %p363
      $region70: #{conv_net_forward.1} parent=11 // pred_check_branch
        %448 = sbr.rel (%p446) target = $region72
      $region71: #{conv_net_forward.1} parent=11 // pred_region
        _
      $region72: #{conv_net_forward.1} parent=11 // pred_fallthru
        _
    $region12: #{conv_net_forward.1} parent=5 // pred_fallthru
      _
    %p449 = scmp.lt.s32.totalorder %s22, 2
    // Predicated region
    $region73: #{conv_net_forward.1} parent=5 // pred_check
      %p450 = pneg %p449
    $region74: #{conv_net_forward.1} parent=5 // pred_check_branch
      %452 = sbr.rel (%p450) target = $region76
    $region75: #{conv_net_forward.1} parent=5 // pred_region
      // Predicated region
      $region77: #{conv_net_forward.1} parent=75 // pred_check
        %p453 = pneg %p42
      $region78: #{conv_net_forward.1} parent=75 // pred_check_branch
        %455 = sbr.rel (%p453) target = $region80
      $region79: #{conv_net_forward.1} parent=75 // pred_region
        %p456 = scmp.lt.s32.totalorder %s22, 1
        %s457 = scalar_select %p456, %s22, 1
        %s458 = smul.addr %s457, 8
        %s459 = scalar_lea.vmem %s0, %s458
      $region80: #{conv_net_forward.1} parent=75 // pred_fallthru
        _
    $region76: #{conv_net_forward.1} parent=5 // pred_fallthru
      _
    %p460 = scmp.le.s32.totalorder 1, %s22
    %p461 = scmp.lt.s32.totalorder %s22, 3
    %p462 = pnand %p460, %p461
    %p463 = pneg %p462
    // Predicated region
    $region81: #{conv_net_forward.1} parent=5 // pred_check
      _
    $region82: #{conv_net_forward.1} parent=5 // pred_check_branch
      %465 = sbr.rel (%p462) target = $region84
    $region83: #{conv_net_forward.1} parent=5 // pred_region
      %s466 = ssub.s32 %s22, 1
      %p467 = scmp.lt.s32.totalorder %s27, 1
      %s468 = scalar_select %p467, %s27, 1
      %s469 = smul.addr %s468, 8
      %s470 = scalar_lea.vmem %s0, %s469
      %p471 = pneg %p48
      %p472 = pneg %p45
      %p473 = pneg %p69
      %p474 = pneg %p66
      %p475 = pneg %p90
      %p476 = pneg %p87
      %p477 = pneg %p111
      %p478 = pneg %p108
      %p479 = pneg %p132
      %p480 = pneg %p129
      %p481 = pneg %p153
      %p482 = pneg %p150
      %p483 = pneg %p174
      %p484 = pneg %p171
      %p485 = pneg %p195
      %p486 = pneg %p192
      %p487 = pneg %p216
      %p488 = pneg %p213
      %p489 = pneg %p237
      %p490 = pneg %p234
      %p491 = pneg %p258
      %p492 = pneg %p255
      %p493 = pneg %p279
      %p494 = pneg %p276
      %p495 = pneg %p300
      %p496 = pneg %p297
      %p497 = pneg %p321
      %p498 = pneg %p318
      %p499 = pneg %p342
      %p500 = pneg %p339
      %p501 = pneg %p363
      %p502 = pneg %p360
      %p503 = pneg %p389
      %p504 = pneg %p386
      %p505 = scmp.lt.s32.totalorder %s27, 1
      %s506 = scalar_select %p505, %s27, 1
      %s507 = smul.addr %s506, 2
      %s508 = smul.addr %s507, 8
      %s509 = scalar_lea.vmem %s16, %s508
      %p510 = scmp.lt.s32.totalorder %s27, 1
      %s511 = scalar_select %p510, %s27, 1
      %s512 = smul.addr %s511, 8
      %s513 = scalar_lea.vmem %s0, %s512
      %p514 = scmp.lt.s32.totalorder %s27, 1
      %s515 = scalar_select %p514, %s27, 1
      %s516 = smul.addr %s515, 2
      %s517 = smul.addr %s516, 8
      %s518 = scalar_lea.vmem %s16, %s517
      %v519 = vld [vmem:[%s513] sm:$0xff]
      %v520 = vld [vmem:[%s1] sm:$0xff]
      %v521 = vld [vmem:[%s1 + $0x8] sm:$0xff]
      %v522 = vld [vmem:[%s1 + $0x10] sm:$0xff]
      %v523 = vld [vmem:[%s1 + $0x18] sm:$0xff]
      %525 = vset.pattern.permute.xlu0 0
      %526 = vperm.xlu0 %525, %v520
      %v527 = vpop.permute.xlu0 %526
      %530 = vset.pattern.permute.xlu0 0
      %531 = vperm.xlu0 %530, %v521
      %v532 = vpop.permute.xlu0 %531
      %535 = vset.pattern.permute.xlu0 0
      %536 = vperm.xlu0 %535, %v522
      %v537 = vpop.permute.xlu0 %536
      %540 = vset.pattern.permute.xlu0 0
      %541 = vperm.xlu0 %540, %v523
      %v542 = vpop.permute.xlu0 %541
      %v545 = vlaneseq
      %v546 = vshrl.u32 %v545, 7
      %v547 = vsub.s32 0, %v546
      %v548 = vrot.slane %v519, %v547
      %v549 = vlaneseq
      %v550 = vshrl.u32 %v549, 7
      %v551 = vsub.s32 1, %v550
      %v552 = vrot.slane %v519, %v551
      %v553 = vlaneseq
      %v554 = vshrl.u32 %v553, 7
      %v555 = vsub.s32 2, %v554
      %v556 = vrot.slane %v519, %v555
      %v557 = vlaneseq
      %v558 = vshrl.u32 %v557, 7
      %v559 = vsub.s32 3, %v558
      %v560 = vrot.slane %v519, %v559
      %v561 = vlaneseq
      %v562 = vshrl.u32 %v561, 7
      %v563 = vsub.s32 4, %v562
      %v564 = vrot.slane %v519, %v563
      %v565 = vlaneseq
      %v566 = vshrl.u32 %v565, 7
      %v567 = vsub.s32 5, %v566
      %v568 = vrot.slane %v519, %v567
      %v569 = vlaneseq
      %v570 = vshrl.u32 %v569, 7
      %v571 = vsub.s32 6, %v570
      %v572 = vrot.slane %v519, %v571
      %v573 = vlaneseq
      %v574 = vshrl.u32 %v573, 7
      %v575 = vsub.s32 7, %v574
      %v576 = vrot.slane %v519, %v575
      %v585 = vmul.f32 %v527, %v548
      %v586 = vmul.f32 %v527, %v552
      %v587 = vmul.f32 %v527, %v556
      %v588 = vmul.f32 %v527, %v560
      %v589 = vmul.f32 %v527, %v564
      %v590 = vmul.f32 %v527, %v568
      %v591 = vmul.f32 %v527, %v572
      %v592 = vmul.f32 %v527, %v576
      %v593 = vmul.f32 %v532, %v548
      %v594 = vmul.f32 %v532, %v552
      %v595 = vmul.f32 %v532, %v556
      %v596 = vmul.f32 %v532, %v560
      %v597 = vmul.f32 %v532, %v564
      %v598 = vmul.f32 %v532, %v568
      %v599 = vmul.f32 %v532, %v572
      %v600 = vmul.f32 %v532, %v576
      %v601 = vmul.f32 %v537, %v548
      %v602 = vmul.f32 %v537, %v552
      %v603 = vmul.f32 %v537, %v556
      %v604 = vmul.f32 %v537, %v560
      %v605 = vmul.f32 %v537, %v564
      %v606 = vmul.f32 %v537, %v568
      %v607 = vmul.f32 %v537, %v572
      %v608 = vmul.f32 %v537, %v576
      %v609 = vmul.f32 %v542, %v548
      %v610 = vmul.f32 %v542, %v552
      %v611 = vmul.f32 %v542, %v556
      %v612 = vmul.f32 %v542, %v560
      %v613 = vmul.f32 %v542, %v564
      %v614 = vmul.f32 %v542, %v568
      %v615 = vmul.f32 %v542, %v572
      %v616 = vmul.f32 %v542, %v576
      %v617 = vadd.f32 %v585, 0.0
      %v618 = vadd.f32 %v586, 0.0
      %v619 = vadd.f32 %v587, 0.0
      %v620 = vadd.f32 %v588, 0.0
      %v621 = vadd.f32 %v589, 0.0
      %v622 = vadd.f32 %v590, 0.0
      %v623 = vadd.f32 %v591, 0.0
      %v624 = vadd.f32 %v592, 0.0
      %v625 = vadd.f32 %v593, 0.0
      %v626 = vadd.f32 %v594, 0.0
      %v627 = vadd.f32 %v595, 0.0
      %v628 = vadd.f32 %v596, 0.0
      %v629 = vadd.f32 %v597, 0.0
      %v630 = vadd.f32 %v598, 0.0
      %v631 = vadd.f32 %v599, 0.0
      %v632 = vadd.f32 %v600, 0.0
      %v633 = vadd.f32 %v601, 0.0
      %v634 = vadd.f32 %v602, 0.0
      %v635 = vadd.f32 %v603, 0.0
      %v636 = vadd.f32 %v604, 0.0
      %v637 = vadd.f32 %v605, 0.0
      %v638 = vadd.f32 %v606, 0.0
      %v639 = vadd.f32 %v607, 0.0
      %v640 = vadd.f32 %v608, 0.0
      %v641 = vadd.f32 %v609, 0.0
      %v642 = vadd.f32 %v610, 0.0
      %v643 = vadd.f32 %v611, 0.0
      %v644 = vadd.f32 %v612, 0.0
      %v645 = vadd.f32 %v613, 0.0
      %v646 = vadd.f32 %v614, 0.0
      %v647 = vadd.f32 %v615, 0.0
      %v648 = vadd.f32 %v616, 0.0
      %649 = vset.pattern.permute.xlu0 1
      %650 = vperm.xlu0 %649, %v520
      %v651 = vpop.permute.xlu0 %650
      %653 = vset.pattern.permute.xlu0 1
      %654 = vperm.xlu0 %653, %v521
      %v655 = vpop.permute.xlu0 %654
      %657 = vset.pattern.permute.xlu0 1
      %658 = vperm.xlu0 %657, %v522
      %v659 = vpop.permute.xlu0 %658
      %661 = vset.pattern.permute.xlu0 1
      %662 = vperm.xlu0 %661, %v523
      %v663 = vpop.permute.xlu0 %662
      %v665 = vmul.f32 %v651, %v548
      %v666 = vmul.f32 %v651, %v552
      %v667 = vmul.f32 %v651, %v556
      %v668 = vmul.f32 %v651, %v560
      %v669 = vmul.f32 %v651, %v564
      %v670 = vmul.f32 %v651, %v568
      %v671 = vmul.f32 %v651, %v572
      %v672 = vmul.f32 %v651, %v576
      %v673 = vmul.f32 %v655, %v548
      %v674 = vmul.f32 %v655, %v552
      %v675 = vmul.f32 %v655, %v556
      %v676 = vmul.f32 %v655, %v560
      %v677 = vmul.f32 %v655, %v564
      %v678 = vmul.f32 %v655, %v568
      %v679 = vmul.f32 %v655, %v572
      %v680 = vmul.f32 %v655, %v576
      %v681 = vmul.f32 %v659, %v548
      %v682 = vmul.f32 %v659, %v552
      %v683 = vmul.f32 %v659, %v556
      %v684 = vmul.f32 %v659, %v560
      %v685 = vmul.f32 %v659, %v564
      %v686 = vmul.f32 %v659, %v568
      %v687 = vmul.f32 %v659, %v572
      %v688 = vmul.f32 %v659, %v576
      %v689 = vmul.f32 %v663, %v548
      %v690 = vmul.f32 %v663, %v552
      %v691 = vmul.f32 %v663, %v556
      %v692 = vmul.f32 %v663, %v560
      %v693 = vmul.f32 %v663, %v564
      %v694 = vmul.f32 %v663, %v568
      %v695 = vmul.f32 %v663, %v572
      %v696 = vmul.f32 %v663, %v576
      %729 = vrot.lane.b32.xlu0 %v665, 127
      %v730 = vpop.permute.xlu0 %729
      %731 = vrot.lane.b32.xlu0 %v666, 127
      %v732 = vpop.permute.xlu0 %731
      %733 = vrot.lane.b32.xlu0 %v667, 127
      %v734 = vpop.permute.xlu0 %733
      %735 = vrot.lane.b32.xlu0 %v668, 127
      %v736 = vpop.permute.xlu0 %735
      %737 = vrot.lane.b32.xlu0 %v669, 127
      %v738 = vpop.permute.xlu0 %737
      %739 = vrot.lane.b32.xlu0 %v670, 127
      %v740 = vpop.permute.xlu0 %739
      %741 = vrot.lane.b32.xlu0 %v671, 127
      %v742 = vpop.permute.xlu0 %741
      %743 = vrot.lane.b32.xlu0 %v672, 127
      %v744 = vpop.permute.xlu0 %743
      %745 = vrot.lane.b32.xlu0 %v673, 127
      %v746 = vpop.permute.xlu0 %745
      %747 = vrot.lane.b32.xlu0 %v674, 127
      %v748 = vpop.permute.xlu0 %747
      %749 = vrot.lane.b32.xlu0 %v675, 127
      %v750 = vpop.permute.xlu0 %749
      %751 = vrot.lane.b32.xlu0 %v676, 127
      %v752 = vpop.permute.xlu0 %751
      %753 = vrot.lane.b32.xlu0 %v677, 127
      %v754 = vpop.permute.xlu0 %753
      %755 = vrot.lane.b32.xlu0 %v678, 127
      %v756 = vpop.permute.xlu0 %755
      %757 = vrot.lane.b32.xlu0 %v679, 127
      %v758 = vpop.permute.xlu0 %757
      %759 = vrot.lane.b32.xlu0 %v680, 127
      %v760 = vpop.permute.xlu0 %759
      %761 = vrot.lane.b32.xlu0 %v681, 127
      %v762 = vpop.permute.xlu0 %761
      %763 = vrot.lane.b32.xlu0 %v682, 127
      %v764 = vpop.permute.xlu0 %763
      %765 = vrot.lane.b32.xlu0 %v683, 127
      %v766 = vpop.permute.xlu0 %765
      %767 = vrot.lane.b32.xlu0 %v684, 127
      %v768 = vpop.permute.xlu0 %767
      %769 = vrot.lane.b32.xlu0 %v685, 127
      %v770 = vpop.permute.xlu0 %769
      %771 = vrot.lane.b32.xlu0 %v686, 127
      %v772 = vpop.permute.xlu0 %771
      %773 = vrot.lane.b32.xlu0 %v687, 127
      %v774 = vpop.permute.xlu0 %773
      %775 = vrot.lane.b32.xlu0 %v688, 127
      %v776 = vpop.permute.xlu0 %775
      %777 = vrot.lane.b32.xlu0 %v689, 127
      %v778 = vpop.permute.xlu0 %777
      %779 = vrot.lane.b32.xlu0 %v690, 127
      %v780 = vpop.permute.xlu0 %779
      %781 = vrot.lane.b32.xlu0 %v691, 127
      %v782 = vpop.permute.xlu0 %781
      %783 = vrot.lane.b32.xlu0 %v692, 127
      %v784 = vpop.permute.xlu0 %783
      %785 = vrot.lane.b32.xlu0 %v693, 127
      %v786 = vpop.permute.xlu0 %785
      %787 = vrot.lane.b32.xlu0 %v694, 127
      %v788 = vpop.permute.xlu0 %787
      %789 = vrot.lane.b32.xlu0 %v695, 127
      %v790 = vpop.permute.xlu0 %789
      %791 = vrot.lane.b32.xlu0 %v696, 127
      %v792 = vpop.permute.xlu0 %791
      %vm793 = vcmask 1039360
      %v794 = vsel %vm793, %v730, %v732
      %v795 = vsel %vm793, %v732, %v734
      %v796 = vsel %vm793, %v734, %v736
      %v797 = vsel %vm793, %v736, %v738
      %v798 = vsel %vm793, %v738, %v740
      %v799 = vsel %vm793, %v740, %v742
      %v800 = vsel %vm793, %v742, %v744
      %v801 = vsel %vm793, %v746, %v748
      %v802 = vsel %vm793, %v748, %v750
      %v803 = vsel %vm793, %v750, %v752
      %v804 = vsel %vm793, %v752, %v754
      %v805 = vsel %vm793, %v754, %v756
      %v806 = vsel %vm793, %v756, %v758
      %v807 = vsel %vm793, %v758, %v760
      %v808 = vsel %vm793, %v762, %v764
      %v809 = vsel %vm793, %v764, %v766
      %v810 = vsel %vm793, %v766, %v768
      %v811 = vsel %vm793, %v768, %v770
      %v812 = vsel %vm793, %v770, %v772
      %v813 = vsel %vm793, %v772, %v774
      %v814 = vsel %vm793, %v774, %v776
      %v815 = vsel %vm793, %v778, %v780
      %v816 = vsel %vm793, %v780, %v782
      %v817 = vsel %vm793, %v782, %v784
      %v818 = vsel %vm793, %v784, %v786
      %v819 = vsel %vm793, %v786, %v788
      %v820 = vsel %vm793, %v788, %v790
      %v821 = vsel %vm793, %v790, %v792
      %v854 = vadd.f32 %v617, %v794
      %v855 = vadd.f32 %v618, %v795
      %v856 = vadd.f32 %v619, %v796
      %v857 = vadd.f32 %v620, %v797
      %v858 = vadd.f32 %v621, %v798
      %v859 = vadd.f32 %v622, %v799
      %v860 = vadd.f32 %v623, %v800
      %v861 = vadd.f32 %v624, %v744
      %v862 = vadd.f32 %v625, %v801
      %v863 = vadd.f32 %v626, %v802
      %v864 = vadd.f32 %v627, %v803
      %v865 = vadd.f32 %v628, %v804
      %v866 = vadd.f32 %v629, %v805
      %v867 = vadd.f32 %v630, %v806
      %v868 = vadd.f32 %v631, %v807
      %v869 = vadd.f32 %v632, %v760
      %v870 = vadd.f32 %v633, %v808
      %v871 = vadd.f32 %v634, %v809
      %v872 = vadd.f32 %v635, %v810
      %v873 = vadd.f32 %v636, %v811
      %v874 = vadd.f32 %v637, %v812
      %v875 = vadd.f32 %v638, %v813
      %v876 = vadd.f32 %v639, %v814
      %v877 = vadd.f32 %v640, %v776
      %v878 = vadd.f32 %v641, %v815
      %v879 = vadd.f32 %v642, %v816
      %v880 = vadd.f32 %v643, %v817
      %v881 = vadd.f32 %v644, %v818
      %v882 = vadd.f32 %v645, %v819
      %v883 = vadd.f32 %v646, %v820
      %v884 = vadd.f32 %v647, %v821
      %v885 = vadd.f32 %v648, %v792
      %886 = vset.pattern.permute.xlu0 2
      %887 = vperm.xlu0 %886, %v520
      %v888 = vpop.permute.xlu0 %887
      %890 = vset.pattern.permute.xlu0 2
      %891 = vperm.xlu0 %890, %v521
      %v892 = vpop.permute.xlu0 %891
      %894 = vset.pattern.permute.xlu0 2
      %895 = vperm.xlu0 %894, %v522
      %v896 = vpop.permute.xlu0 %895
      %898 = vset.pattern.permute.xlu0 2
      %899 = vperm.xlu0 %898, %v523
      %v900 = vpop.permute.xlu0 %899
      %v902 = vmul.f32 %v888, %v548
      %v903 = vmul.f32 %v888, %v552
      %v904 = vmul.f32 %v888, %v556
      %v905 = vmul.f32 %v888, %v560
      %v906 = vmul.f32 %v888, %v564
      %v907 = vmul.f32 %v888, %v568
      %v908 = vmul.f32 %v888, %v572
      %v909 = vmul.f32 %v888, %v576
      %v910 = vmul.f32 %v892, %v548
      %v911 = vmul.f32 %v892, %v552
      %v912 = vmul.f32 %v892, %v556
      %v913 = vmul.f32 %v892, %v560
      %v914 = vmul.f32 %v892, %v564
      %v915 = vmul.f32 %v892, %v568
      %v916 = vmul.f32 %v892, %v572
      %v917 = vmul.f32 %v892, %v576
      %v918 = vmul.f32 %v896, %v548
      %v919 = vmul.f32 %v896, %v552
      %v920 = vmul.f32 %v896, %v556
      %v921 = vmul.f32 %v896, %v560
      %v922 = vmul.f32 %v896, %v564
      %v923 = vmul.f32 %v896, %v568
      %v924 = vmul.f32 %v896, %v572
      %v925 = vmul.f32 %v896, %v576
      %v926 = vmul.f32 %v900, %v548
      %v927 = vmul.f32 %v900, %v552
      %v928 = vmul.f32 %v900, %v556
      %v929 = vmul.f32 %v900, %v560
      %v930 = vmul.f32 %v900, %v564
      %v931 = vmul.f32 %v900, %v568
      %v932 = vmul.f32 %v900, %v572
      %v933 = vmul.f32 %v900, %v576
      %966 = vrot.lane.b32.xlu0 %v902, 126
      %v967 = vpop.permute.xlu0 %966
      %968 = vrot.lane.b32.xlu0 %v903, 126
      %v969 = vpop.permute.xlu0 %968
      %970 = vrot.lane.b32.xlu0 %v904, 126
      %v971 = vpop.permute.xlu0 %970
      %972 = vrot.lane.b32.xlu0 %v905, 126
      %v973 = vpop.permute.xlu0 %972
      %974 = vrot.lane.b32.xlu0 %v906, 126
      %v975 = vpop.permute.xlu0 %974
      %976 = vrot.lane.b32.xlu0 %v907, 126
      %v977 = vpop.permute.xlu0 %976
      %978 = vrot.lane.b32.xlu0 %v908, 126
      %v979 = vpop.permute.xlu0 %978
      %980 = vrot.lane.b32.xlu0 %v909, 126
      %v981 = vpop.permute.xlu0 %980
      %982 = vrot.lane.b32.xlu0 %v910, 126
      %v983 = vpop.permute.xlu0 %982
      %984 = vrot.lane.b32.xlu0 %v911, 126
      %v985 = vpop.permute.xlu0 %984
      %986 = vrot.lane.b32.xlu0 %v912, 126
      %v987 = vpop.permute.xlu0 %986
      %988 = vrot.lane.b32.xlu0 %v913, 126
      %v989 = vpop.permute.xlu0 %988
      %990 = vrot.lane.b32.xlu0 %v914, 126
      %v991 = vpop.permute.xlu0 %990
      %992 = vrot.lane.b32.xlu0 %v915, 126
      %v993 = vpop.permute.xlu0 %992
      %994 = vrot.lane.b32.xlu0 %v916, 126
      %v995 = vpop.permute.xlu0 %994
      %996 = vrot.lane.b32.xlu0 %v917, 126
      %v997 = vpop.permute.xlu0 %996
      %998 = vrot.lane.b32.xlu0 %v918, 126
      %v999 = vpop.permute.xlu0 %998
      %1000 = vrot.lane.b32.xlu0 %v919, 126
      %v1001 = vpop.permute.xlu0 %1000
      %1002 = vrot.lane.b32.xlu0 %v920, 126
      %v1003 = vpop.permute.xlu0 %1002
      %1004 = vrot.lane.b32.xlu0 %v921, 126
      %v1005 = vpop.permute.xlu0 %1004
      %1006 = vrot.lane.b32.xlu0 %v922, 126
      %v1007 = vpop.permute.xlu0 %1006
      %1008 = vrot.lane.b32.xlu0 %v923, 126
      %v1009 = vpop.permute.xlu0 %1008
      %1010 = vrot.lane.b32.xlu0 %v924, 126
      %v1011 = vpop.permute.xlu0 %1010
      %1012 = vrot.lane.b32.xlu0 %v925, 126
      %v1013 = vpop.permute.xlu0 %1012
      %1014 = vrot.lane.b32.xlu0 %v926, 126
      %v1015 = vpop.permute.xlu0 %1014
      %1016 = vrot.lane.b32.xlu0 %v927, 126
      %v1017 = vpop.permute.xlu0 %1016
      %1018 = vrot.lane.b32.xlu0 %v928, 126
      %v1019 = vpop.permute.xlu0 %1018
      %1020 = vrot.lane.b32.xlu0 %v929, 126
      %v1021 = vpop.permute.xlu0 %1020
      %1022 = vrot.lane.b32.xlu0 %v930, 126
      %v1023 = vpop.permute.xlu0 %1022
      %1024 = vrot.lane.b32.xlu0 %v931, 126
      %v1025 = vpop.permute.xlu0 %1024
      %1026 = vrot.lane.b32.xlu0 %v932, 126
      %v1027 = vpop.permute.xlu0 %1026
      %1028 = vrot.lane.b32.xlu0 %v933, 126
      %v1029 = vpop.permute.xlu0 %1028
      %vm1030 = vcmask 1031168
      %v1031 = vsel %vm1030, %v967, %v969
      %v1032 = vsel %vm1030, %v969, %v971
      %v1033 = vsel %vm1030, %v971, %v973
      %v1034 = vsel %vm1030, %v973, %v975
      %v1035 = vsel %vm1030, %v975, %v977
      %v1036 = vsel %vm1030, %v977, %v979
      %v1037 = vsel %vm1030, %v979, %v981
      %v1038 = vsel %vm1030, %v983, %v985
      %v1039 = vsel %vm1030, %v985, %v987
      %v1040 = vsel %vm1030, %v987, %v989
      %v1041 = vsel %vm1030, %v989, %v991
      %v1042 = vsel %vm1030, %v991, %v993
      %v1043 = vsel %vm1030, %v993, %v995
      %v1044 = vsel %vm1030, %v995, %v997
      %v1045 = vsel %vm1030, %v999, %v1001
      %v1046 = vsel %vm1030, %v1001, %v1003
      %v1047 = vsel %vm1030, %v1003, %v1005
      %v1048 = vsel %vm1030, %v1005, %v1007
      %v1049 = vsel %vm1030, %v1007, %v1009
      %v1050 = vsel %vm1030, %v1009, %v1011
      %v1051 = vsel %vm1030, %v1011, %v1013
      %v1052 = vsel %vm1030, %v1015, %v1017
      %v1053 = vsel %vm1030, %v1017, %v1019
      %v1054 = vsel %vm1030, %v1019, %v1021
      %v1055 = vsel %vm1030, %v1021, %v1023
      %v1056 = vsel %vm1030, %v1023, %v1025
      %v1057 = vsel %vm1030, %v1025, %v1027
      %v1058 = vsel %vm1030, %v1027, %v1029
      %v1091 = vadd.f32 %v854, %v1031
      %v1092 = vadd.f32 %v855, %v1032
      %v1093 = vadd.f32 %v856, %v1033
      %v1094 = vadd.f32 %v857, %v1034
      %v1095 = vadd.f32 %v858, %v1035
      %v1096 = vadd.f32 %v859, %v1036
      %v1097 = vadd.f32 %v860, %v1037
      %v1098 = vadd.f32 %v861, %v981
      %v1099 = vadd.f32 %v862, %v1038
      %v1100 = vadd.f32 %v863, %v1039
      %v1101 = vadd.f32 %v864, %v1040
      %v1102 = vadd.f32 %v865, %v1041
      %v1103 = vadd.f32 %v866, %v1042
      %v1104 = vadd.f32 %v867, %v1043
      %v1105 = vadd.f32 %v868, %v1044
      %v1106 = vadd.f32 %v869, %v997
      %v1107 = vadd.f32 %v870, %v1045
      %v1108 = vadd.f32 %v871, %v1046
      %v1109 = vadd.f32 %v872, %v1047
      %v1110 = vadd.f32 %v873, %v1048
      %v1111 = vadd.f32 %v874, %v1049
      %v1112 = vadd.f32 %v875, %v1050
      %v1113 = vadd.f32 %v876, %v1051
      %v1114 = vadd.f32 %v877, %v1013
      %v1115 = vadd.f32 %v878, %v1052
      %v1116 = vadd.f32 %v879, %v1053
      %v1117 = vadd.f32 %v880, %v1054
      %v1118 = vadd.f32 %v881, %v1055
      %v1119 = vadd.f32 %v882, %v1056
      %v1120 = vadd.f32 %v883, %v1057
      %v1121 = vadd.f32 %v884, %v1058
      %v1122 = vadd.f32 %v885, %v1029
      %1123 = vset.pattern.permute.xlu0 3
      %1124 = vperm.xlu0 %1123, %v520
      %v1125 = vpop.permute.xlu0 %1124
      %1127 = vset.pattern.permute.xlu0 3
      %1128 = vperm.xlu0 %1127, %v521
      %v1129 = vpop.permute.xlu0 %1128
      %1131 = vset.pattern.permute.xlu0 3
      %1132 = vperm.xlu0 %1131, %v522
      %v1133 = vpop.permute.xlu0 %1132
      %1135 = vset.pattern.permute.xlu0 3
      %1136 = vperm.xlu0 %1135, %v523
      %v1137 = vpop.permute.xlu0 %1136
      %v1139 = vmul.f32 %v1125, %v548
      %v1140 = vmul.f32 %v1125, %v552
      %v1141 = vmul.f32 %v1125, %v556
      %v1142 = vmul.f32 %v1125, %v560
      %v1143 = vmul.f32 %v1125, %v564
      %v1144 = vmul.f32 %v1125, %v568
      %v1145 = vmul.f32 %v1125, %v572
      %v1146 = vmul.f32 %v1125, %v576
      %v1147 = vmul.f32 %v1129, %v548
      %v1148 = vmul.f32 %v1129, %v552
      %v1149 = vmul.f32 %v1129, %v556
      %v1150 = vmul.f32 %v1129, %v560
      %v1151 = vmul.f32 %v1129, %v564
      %v1152 = vmul.f32 %v1129, %v568
      %v1153 = vmul.f32 %v1129, %v572
      %v1154 = vmul.f32 %v1129, %v576
      %v1155 = vmul.f32 %v1133, %v548
      %v1156 = vmul.f32 %v1133, %v552
      %v1157 = vmul.f32 %v1133, %v556
      %v1158 = vmul.f32 %v1133, %v560
      %v1159 = vmul.f32 %v1133, %v564
      %v1160 = vmul.f32 %v1133, %v568
      %v1161 = vmul.f32 %v1133, %v572
      %v1162 = vmul.f32 %v1133, %v576
      %v1163 = vmul.f32 %v1137, %v548
      %v1164 = vmul.f32 %v1137, %v552
      %v1165 = vmul.f32 %v1137, %v556
      %v1166 = vmul.f32 %v1137, %v560
      %v1167 = vmul.f32 %v1137, %v564
      %v1168 = vmul.f32 %v1137, %v568
      %v1169 = vmul.f32 %v1137, %v572
      %v1170 = vmul.f32 %v1137, %v576
      %1203 = vrot.lane.b32.xlu0 %v1139, 98
      %v1204 = vpop.permute.xlu0 %1203
      %1205 = vrot.lane.b32.xlu0 %v1140, 98
      %v1206 = vpop.permute.xlu0 %1205
      %1207 = vrot.lane.b32.xlu0 %v1141, 98
      %v1208 = vpop.permute.xlu0 %1207
      %1209 = vrot.lane.b32.xlu0 %v1142, 98
      %v1210 = vpop.permute.xlu0 %1209
      %1211 = vrot.lane.b32.xlu0 %v1143, 98
      %v1212 = vpop.permute.xlu0 %1211
      %1213 = vrot.lane.b32.xlu0 %v1144, 98
      %v1214 = vpop.permute.xlu0 %1213
      %1215 = vrot.lane.b32.xlu0 %v1145, 98
      %v1216 = vpop.permute.xlu0 %1215
      %1217 = vrot.lane.b32.xlu0 %v1146, 98
      %v1218 = vpop.permute.xlu0 %1217
      %1219 = vrot.lane.b32.xlu0 %v1147, 98
      %v1220 = vpop.permute.xlu0 %1219
      %1221 = vrot.lane.b32.xlu0 %v1148, 98
      %v1222 = vpop.permute.xlu0 %1221
      %1223 = vrot.lane.b32.xlu0 %v1149, 98
      %v1224 = vpop.permute.xlu0 %1223
      %1225 = vrot.lane.b32.xlu0 %v1150, 98
      %v1226 = vpop.permute.xlu0 %1225
      %1227 = vrot.lane.b32.xlu0 %v1151, 98
      %v1228 = vpop.permute.xlu0 %1227
      %1229 = vrot.lane.b32.xlu0 %v1152, 98
      %v1230 = vpop.permute.xlu0 %1229
      %1231 = vrot.lane.b32.xlu0 %v1153, 98
      %v1232 = vpop.permute.xlu0 %1231
      %1233 = vrot.lane.b32.xlu0 %v1154, 98
      %v1234 = vpop.permute.xlu0 %1233
      %1235 = vrot.lane.b32.xlu0 %v1155, 98
      %v1236 = vpop.permute.xlu0 %1235
      %1237 = vrot.lane.b32.xlu0 %v1156, 98
      %v1238 = vpop.permute.xlu0 %1237
      %1239 = vrot.lane.b32.xlu0 %v1157, 98
      %v1240 = vpop.permute.xlu0 %1239
      %1241 = vrot.lane.b32.xlu0 %v1158, 98
      %v1242 = vpop.permute.xlu0 %1241
      %1243 = vrot.lane.b32.xlu0 %v1159, 98
      %v1244 = vpop.permute.xlu0 %1243
      %1245 = vrot.lane.b32.xlu0 %v1160, 98
      %v1246 = vpop.permute.xlu0 %1245
      %1247 = vrot.lane.b32.xlu0 %v1161, 98
      %v1248 = vpop.permute.xlu0 %1247
      %1249 = vrot.lane.b32.xlu0 %v1162, 98
      %v1250 = vpop.permute.xlu0 %1249
      %1251 = vrot.lane.b32.xlu0 %v1163, 98
      %v1252 = vpop.permute.xlu0 %1251
      %1253 = vrot.lane.b32.xlu0 %v1164, 98
      %v1254 = vpop.permute.xlu0 %1253
      %1255 = vrot.lane.b32.xlu0 %v1165, 98
      %v1256 = vpop.permute.xlu0 %1255
      %1257 = vrot.lane.b32.xlu0 %v1166, 98
      %v1258 = vpop.permute.xlu0 %1257
      %1259 = vrot.lane.b32.xlu0 %v1167, 98
      %v1260 = vpop.permute.xlu0 %1259
      %1261 = vrot.lane.b32.xlu0 %v1168, 98
      %v1262 = vpop.permute.xlu0 %1261
      %1263 = vrot.lane.b32.xlu0 %v1169, 98
      %v1264 = vpop.permute.xlu0 %1263
      %1265 = vrot.lane.b32.xlu0 %v1170, 98
      %v1266 = vpop.permute.xlu0 %1265
      %vm1267 = vcmask 801792
      %v1268 = vsel %vm1267, %v1204, %v1206
      %v1269 = vsel %vm1267, %v1206, %v1208
      %v1270 = vsel %vm1267, %v1208, %v1210
      %v1271 = vsel %vm1267, %v1210, %v1212
      %v1272 = vsel %vm1267, %v1212, %v1214
      %v1273 = vsel %vm1267, %v1214, %v1216
      %v1274 = vsel %vm1267, %v1216, %v1218
      %v1275 = vsel %vm1267, %v1220, %v1222
      %v1276 = vsel %vm1267, %v1222, %v1224
      %v1277 = vsel %vm1267, %v1224, %v1226
      %v1278 = vsel %vm1267, %v1226, %v1228
      %v1279 = vsel %vm1267, %v1228, %v1230
      %v1280 = vsel %vm1267, %v1230, %v1232
      %v1281 = vsel %vm1267, %v1232, %v1234
      %v1282 = vsel %vm1267, %v1236, %v1238
      %v1283 = vsel %vm1267, %v1238, %v1240
      %v1284 = vsel %vm1267, %v1240, %v1242
      %v1285 = vsel %vm1267, %v1242, %v1244
      %v1286 = vsel %vm1267, %v1244, %v1246
      %v1287 = vsel %vm1267, %v1246, %v1248
      %v1288 = vsel %vm1267, %v1248, %v1250
      %v1289 = vsel %vm1267, %v1252, %v1254
      %v1290 = vsel %vm1267, %v1254, %v1256
      %v1291 = vsel %vm1267, %v1256, %v1258
      %v1292 = vsel %vm1267, %v1258, %v1260
      %v1293 = vsel %vm1267, %v1260, %v1262
      %v1294 = vsel %vm1267, %v1262, %v1264
      %v1295 = vsel %vm1267, %v1264, %v1266
      %v1328 = vadd.f32 %v1091, %v1268
      %v1329 = vadd.f32 %v1092, %v1269
      %v1330 = vadd.f32 %v1093, %v1270
      %v1331 = vadd.f32 %v1094, %v1271
      %v1332 = vadd.f32 %v1095, %v1272
      %v1333 = vadd.f32 %v1096, %v1273
      %v1334 = vadd.f32 %v1097, %v1274
      %v1335 = vadd.f32 %v1098, %v1218
      %v1336 = vadd.f32 %v1099, %v1275
      %v1337 = vadd.f32 %v1100, %v1276
      %v1338 = vadd.f32 %v1101, %v1277
      %v1339 = vadd.f32 %v1102, %v1278
      %v1340 = vadd.f32 %v1103, %v1279
      %v1341 = vadd.f32 %v1104, %v1280
      %v1342 = vadd.f32 %v1105, %v1281
      %v1343 = vadd.f32 %v1106, %v1234
      %v1344 = vadd.f32 %v1107, %v1282
      %v1345 = vadd.f32 %v1108, %v1283
      %v1346 = vadd.f32 %v1109, %v1284
      %v1347 = vadd.f32 %v1110, %v1285
      %v1348 = vadd.f32 %v1111, %v1286
      %v1349 = vadd.f32 %v1112, %v1287
      %v1350 = vadd.f32 %v1113, %v1288
      %v1351 = vadd.f32 %v1114, %v1250
      %v1352 = vadd.f32 %v1115, %v1289
      %v1353 = vadd.f32 %v1116, %v1290
      %v1354 = vadd.f32 %v1117, %v1291
      %v1355 = vadd.f32 %v1118, %v1292
      %v1356 = vadd.f32 %v1119, %v1293
      %v1357 = vadd.f32 %v1120, %v1294
      %v1358 = vadd.f32 %v1121, %v1295
      %v1359 = vadd.f32 %v1122, %v1266
      %1360 = vset.pattern.permute.xlu0 4
      %1361 = vperm.xlu0 %1360, %v520
      %v1362 = vpop.permute.xlu0 %1361
      %1364 = vset.pattern.permute.xlu0 4
      %1365 = vperm.xlu0 %1364, %v521
      %v1366 = vpop.permute.xlu0 %1365
      %1368 = vset.pattern.permute.xlu0 4
      %1369 = vperm.xlu0 %1368, %v522
      %v1370 = vpop.permute.xlu0 %1369
      %1372 = vset.pattern.permute.xlu0 4
      %1373 = vperm.xlu0 %1372, %v523
      %v1374 = vpop.permute.xlu0 %1373
      %v1376 = vmul.f32 %v1362, %v548
      %v1377 = vmul.f32 %v1362, %v552
      %v1378 = vmul.f32 %v1362, %v556
      %v1379 = vmul.f32 %v1362, %v560
      %v1380 = vmul.f32 %v1362, %v564
      %v1381 = vmul.f32 %v1362, %v568
      %v1382 = vmul.f32 %v1362, %v572
      %v1383 = vmul.f32 %v1362, %v576
      %v1384 = vmul.f32 %v1366, %v548
      %v1385 = vmul.f32 %v1366, %v552
      %v1386 = vmul.f32 %v1366, %v556
      %v1387 = vmul.f32 %v1366, %v560
      %v1388 = vmul.f32 %v1366, %v564
      %v1389 = vmul.f32 %v1366, %v568
      %v1390 = vmul.f32 %v1366, %v572
      %v1391 = vmul.f32 %v1366, %v576
      %v1392 = vmul.f32 %v1370, %v548
      %v1393 = vmul.f32 %v1370, %v552
      %v1394 = vmul.f32 %v1370, %v556
      %v1395 = vmul.f32 %v1370, %v560
      %v1396 = vmul.f32 %v1370, %v564
      %v1397 = vmul.f32 %v1370, %v568
      %v1398 = vmul.f32 %v1370, %v572
      %v1399 = vmul.f32 %v1370, %v576
      %v1400 = vmul.f32 %v1374, %v548
      %v1401 = vmul.f32 %v1374, %v552
      %v1402 = vmul.f32 %v1374, %v556
      %v1403 = vmul.f32 %v1374, %v560
      %v1404 = vmul.f32 %v1374, %v564
      %v1405 = vmul.f32 %v1374, %v568
      %v1406 = vmul.f32 %v1374, %v572
      %v1407 = vmul.f32 %v1374, %v576
      %1440 = vrot.lane.b32.xlu0 %v1376, 97
      %v1441 = vpop.permute.xlu0 %1440
      %1442 = vrot.lane.b32.xlu0 %v1377, 97
      %v1443 = vpop.permute.xlu0 %1442
      %1444 = vrot.lane.b32.xlu0 %v1378, 97
      %v1445 = vpop.permute.xlu0 %1444
      %1446 = vrot.lane.b32.xlu0 %v1379, 97
      %v1447 = vpop.permute.xlu0 %1446
      %1448 = vrot.lane.b32.xlu0 %v1380, 97
      %v1449 = vpop.permute.xlu0 %1448
      %1450 = vrot.lane.b32.xlu0 %v1381, 97
      %v1451 = vpop.permute.xlu0 %1450
      %1452 = vrot.lane.b32.xlu0 %v1382, 97
      %v1453 = vpop.permute.xlu0 %1452
      %1454 = vrot.lane.b32.xlu0 %v1383, 97
      %v1455 = vpop.permute.xlu0 %1454
      %1456 = vrot.lane.b32.xlu0 %v1384, 97
      %v1457 = vpop.permute.xlu0 %1456
      %1458 = vrot.lane.b32.xlu0 %v1385, 97
      %v1459 = vpop.permute.xlu0 %1458
      %1460 = vrot.lane.b32.xlu0 %v1386, 97
      %v1461 = vpop.permute.xlu0 %1460
      %1462 = vrot.lane.b32.xlu0 %v1387, 97
      %v1463 = vpop.permute.xlu0 %1462
      %1464 = vrot.lane.b32.xlu0 %v1388, 97
      %v1465 = vpop.permute.xlu0 %1464
      %1466 = vrot.lane.b32.xlu0 %v1389, 97
      %v1467 = vpop.permute.xlu0 %1466
      %1468 = vrot.lane.b32.xlu0 %v1390, 97
      %v1469 = vpop.permute.xlu0 %1468
      %1470 = vrot.lane.b32.xlu0 %v1391, 97
      %v1471 = vpop.permute.xlu0 %1470
      %1472 = vrot.lane.b32.xlu0 %v1392, 97
      %v1473 = vpop.permute.xlu0 %1472
      %1474 = vrot.lane.b32.xlu0 %v1393, 97
      %v1475 = vpop.permute.xlu0 %1474
      %1476 = vrot.lane.b32.xlu0 %v1394, 97
      %v1477 = vpop.permute.xlu0 %1476
      %1478 = vrot.lane.b32.xlu0 %v1395, 97
      %v1479 = vpop.permute.xlu0 %1478
      %1480 = vrot.lane.b32.xlu0 %v1396, 97
      %v1481 = vpop.permute.xlu0 %1480
      %1482 = vrot.lane.b32.xlu0 %v1397, 97
      %v1483 = vpop.permute.xlu0 %1482
      %1484 = vrot.lane.b32.xlu0 %v1398, 97
      %v1485 = vpop.permute.xlu0 %1484
      %1486 = vrot.lane.b32.xlu0 %v1399, 97
      %v1487 = vpop.permute.xlu0 %1486
      %1488 = vrot.lane.b32.xlu0 %v1400, 97
      %v1489 = vpop.permute.xlu0 %1488
      %1490 = vrot.lane.b32.xlu0 %v1401, 97
      %v1491 = vpop.permute.xlu0 %1490
      %1492 = vrot.lane.b32.xlu0 %v1402, 97
      %v1493 = vpop.permute.xlu0 %1492
      %1494 = vrot.lane.b32.xlu0 %v1403, 97
      %v1495 = vpop.permute.xlu0 %1494
      %1496 = vrot.lane.b32.xlu0 %v1404, 97
      %v1497 = vpop.permute.xlu0 %1496
      %1498 = vrot.lane.b32.xlu0 %v1405, 97
      %v1499 = vpop.permute.xlu0 %1498
      %1500 = vrot.lane.b32.xlu0 %v1406, 97
      %v1501 = vpop.permute.xlu0 %1500
      %1502 = vrot.lane.b32.xlu0 %v1407, 97
      %v1503 = vpop.permute.xlu0 %1502
      %vm1504 = vcmask 793600
      %v1505 = vsel %vm1504, %v1441, %v1443
      %v1506 = vsel %vm1504, %v1443, %v1445
      %v1507 = vsel %vm1504, %v1445, %v1447
      %v1508 = vsel %vm1504, %v1447, %v1449
      %v1509 = vsel %vm1504, %v1449, %v1451
      %v1510 = vsel %vm1504, %v1451, %v1453
      %v1511 = vsel %vm1504, %v1453, %v1455
      %v1512 = vsel %vm1504, %v1457, %v1459
      %v1513 = vsel %vm1504, %v1459, %v1461
      %v1514 = vsel %vm1504, %v1461, %v1463
      %v1515 = vsel %vm1504, %v1463, %v1465
      %v1516 = vsel %vm1504, %v1465, %v1467
      %v1517 = vsel %vm1504, %v1467, %v1469
      %v1518 = vsel %vm1504, %v1469, %v1471
      %v1519 = vsel %vm1504, %v1473, %v1475
      %v1520 = vsel %vm1504, %v1475, %v1477
      %v1521 = vsel %vm1504, %v1477, %v1479
      %v1522 = vsel %vm1504, %v1479, %v1481
      %v1523 = vsel %vm1504, %v1481, %v1483
      %v1524 = vsel %vm1504, %v1483, %v1485
      %v1525 = vsel %vm1504, %v1485, %v1487
      %v1526 = vsel %vm1504, %v1489, %v1491
      %v1527 = vsel %vm1504, %v1491, %v1493
      %v1528 = vsel %vm1504, %v1493, %v1495
      %v1529 = vsel %vm1504, %v1495, %v1497
      %v1530 = vsel %vm1504, %v1497, %v1499
      %v1531 = vsel %vm1504, %v1499, %v1501
      %v1532 = vsel %vm1504, %v1501, %v1503
      %v1565 = vadd.f32 %v1328, %v1505
      %v1566 = vadd.f32 %v1329, %v1506
      %v1567 = vadd.f32 %v1330, %v1507
      %v1568 = vadd.f32 %v1331, %v1508
      %v1569 = vadd.f32 %v1332, %v1509
      %v1570 = vadd.f32 %v1333, %v1510
      %v1571 = vadd.f32 %v1334, %v1511
      %v1572 = vadd.f32 %v1335, %v1455
      %v1573 = vadd.f32 %v1336, %v1512
      %v1574 = vadd.f32 %v1337, %v1513
      %v1575 = vadd.f32 %v1338, %v1514
      %v1576 = vadd.f32 %v1339, %v1515
      %v1577 = vadd.f32 %v1340, %v1516
      %v1578 = vadd.f32 %v1341, %v1517
      %v1579 = vadd.f32 %v1342, %v1518
      %v1580 = vadd.f32 %v1343, %v1471
      %v1581 = vadd.f32 %v1344, %v1519
      %v1582 = vadd.f32 %v1345, %v1520
      %v1583 = vadd.f32 %v1346, %v1521
      %v1584 = vadd.f32 %v1347, %v1522
      %v1585 = vadd.f32 %v1348, %v1523
      %v1586 = vadd.f32 %v1349, %v1524
      %v1587 = vadd.f32 %v1350, %v1525
      %v1588 = vadd.f32 %v1351, %v1487
      %v1589 = vadd.f32 %v1352, %v1526
      %v1590 = vadd.f32 %v1353, %v1527
      %v1591 = vadd.f32 %v1354, %v1528
      %v1592 = vadd.f32 %v1355, %v1529
      %v1593 = vadd.f32 %v1356, %v1530
      %v1594 = vadd.f32 %v1357, %v1531
      %v1595 = vadd.f32 %v1358, %v1532
      %v1596 = vadd.f32 %v1359, %v1503
      %1597 = vset.pattern.permute.xlu0 5
      %1598 = vperm.xlu0 %1597, %v520
      %v1599 = vpop.permute.xlu0 %1598
      %1601 = vset.pattern.permute.xlu0 5
      %1602 = vperm.xlu0 %1601, %v521
      %v1603 = vpop.permute.xlu0 %1602
      %1605 = vset.pattern.permute.xlu0 5
      %1606 = vperm.xlu0 %1605, %v522
      %v1607 = vpop.permute.xlu0 %1606
      %1609 = vset.pattern.permute.xlu0 5
      %1610 = vperm.xlu0 %1609, %v523
      %v1611 = vpop.permute.xlu0 %1610
      %v1613 = vmul.f32 %v1599, %v548
      %v1614 = vmul.f32 %v1599, %v552
      %v1615 = vmul.f32 %v1599, %v556
      %v1616 = vmul.f32 %v1599, %v560
      %v1617 = vmul.f32 %v1599, %v564
      %v1618 = vmul.f32 %v1599, %v568
      %v1619 = vmul.f32 %v1599, %v572
      %v1620 = vmul.f32 %v1599, %v576
      %v1621 = vmul.f32 %v1603, %v548
      %v1622 = vmul.f32 %v1603, %v552
      %v1623 = vmul.f32 %v1603, %v556
      %v1624 = vmul.f32 %v1603, %v560
      %v1625 = vmul.f32 %v1603, %v564
      %v1626 = vmul.f32 %v1603, %v568
      %v1627 = vmul.f32 %v1603, %v572
      %v1628 = vmul.f32 %v1603, %v576
      %v1629 = vmul.f32 %v1607, %v548
      %v1630 = vmul.f32 %v1607, %v552
      %v1631 = vmul.f32 %v1607, %v556
      %v1632 = vmul.f32 %v1607, %v560
      %v1633 = vmul.f32 %v1607, %v564
      %v1634 = vmul.f32 %v1607, %v568
      %v1635 = vmul.f32 %v1607, %v572
      %v1636 = vmul.f32 %v1607, %v576
      %v1637 = vmul.f32 %v1611, %v548
      %v1638 = vmul.f32 %v1611, %v552
      %v1639 = vmul.f32 %v1611, %v556
      %v1640 = vmul.f32 %v1611, %v560
      %v1641 = vmul.f32 %v1611, %v564
      %v1642 = vmul.f32 %v1611, %v568
      %v1643 = vmul.f32 %v1611, %v572
      %v1644 = vmul.f32 %v1611, %v576
      %1677 = vrot.lane.b32.xlu0 %v1613, 96
      %v1678 = vpop.permute.xlu0 %1677
      %1679 = vrot.lane.b32.xlu0 %v1614, 96
      %v1680 = vpop.permute.xlu0 %1679
      %1681 = vrot.lane.b32.xlu0 %v1615, 96
      %v1682 = vpop.permute.xlu0 %1681
      %1683 = vrot.lane.b32.xlu0 %v1616, 96
      %v1684 = vpop.permute.xlu0 %1683
      %1685 = vrot.lane.b32.xlu0 %v1617, 96
      %v1686 = vpop.permute.xlu0 %1685
      %1687 = vrot.lane.b32.xlu0 %v1618, 96
      %v1688 = vpop.permute.xlu0 %1687
      %1689 = vrot.lane.b32.xlu0 %v1619, 96
      %v1690 = vpop.permute.xlu0 %1689
      %1691 = vrot.lane.b32.xlu0 %v1620, 96
      %v1692 = vpop.permute.xlu0 %1691
      %1693 = vrot.lane.b32.xlu0 %v1621, 96
      %v1694 = vpop.permute.xlu0 %1693
      %1695 = vrot.lane.b32.xlu0 %v1622, 96
      %v1696 = vpop.permute.xlu0 %1695
      %1697 = vrot.lane.b32.xlu0 %v1623, 96
      %v1698 = vpop.permute.xlu0 %1697
      %1699 = vrot.lane.b32.xlu0 %v1624, 96
      %v1700 = vpop.permute.xlu0 %1699
      %1701 = vrot.lane.b32.xlu0 %v1625, 96
      %v1702 = vpop.permute.xlu0 %1701
      %1703 = vrot.lane.b32.xlu0 %v1626, 96
      %v1704 = vpop.permute.xlu0 %1703
      %1705 = vrot.lane.b32.xlu0 %v1627, 96
      %v1706 = vpop.permute.xlu0 %1705
      %1707 = vrot.lane.b32.xlu0 %v1628, 96
      %v1708 = vpop.permute.xlu0 %1707
      %1709 = vrot.lane.b32.xlu0 %v1629, 96
      %v1710 = vpop.permute.xlu0 %1709
      %1711 = vrot.lane.b32.xlu0 %v1630, 96
      %v1712 = vpop.permute.xlu0 %1711
      %1713 = vrot.lane.b32.xlu0 %v1631, 96
      %v1714 = vpop.permute.xlu0 %1713
      %1715 = vrot.lane.b32.xlu0 %v1632, 96
      %v1716 = vpop.permute.xlu0 %1715
      %1717 = vrot.lane.b32.xlu0 %v1633, 96
      %v1718 = vpop.permute.xlu0 %1717
      %1719 = vrot.lane.b32.xlu0 %v1634, 96
      %v1720 = vpop.permute.xlu0 %1719
      %1721 = vrot.lane.b32.xlu0 %v1635, 96
      %v1722 = vpop.permute.xlu0 %1721
      %1723 = vrot.lane.b32.xlu0 %v1636, 96
      %v1724 = vpop.permute.xlu0 %1723
      %1725 = vrot.lane.b32.xlu0 %v1637, 96
      %v1726 = vpop.permute.xlu0 %1725
      %1727 = vrot.lane.b32.xlu0 %v1638, 96
      %v1728 = vpop.permute.xlu0 %1727
      %1729 = vrot.lane.b32.xlu0 %v1639, 96
      %v1730 = vpop.permute.xlu0 %1729
      %1731 = vrot.lane.b32.xlu0 %v1640, 96
      %v1732 = vpop.permute.xlu0 %1731
      %1733 = vrot.lane.b32.xlu0 %v1641, 96
      %v1734 = vpop.permute.xlu0 %1733
      %1735 = vrot.lane.b32.xlu0 %v1642, 96
      %v1736 = vpop.permute.xlu0 %1735
      %1737 = vrot.lane.b32.xlu0 %v1643, 96
      %v1738 = vpop.permute.xlu0 %1737
      %1739 = vrot.lane.b32.xlu0 %v1644, 96
      %v1740 = vpop.permute.xlu0 %1739
      %vm1741 = vcmask 785408
      %v1742 = vsel %vm1741, %v1678, %v1680
      %v1743 = vsel %vm1741, %v1680, %v1682
      %v1744 = vsel %vm1741, %v1682, %v1684
      %v1745 = vsel %vm1741, %v1684, %v1686
      %v1746 = vsel %vm1741, %v1686, %v1688
      %v1747 = vsel %vm1741, %v1688, %v1690
      %v1748 = vsel %vm1741, %v1690, %v1692
      %v1749 = vsel %vm1741, %v1694, %v1696
      %v1750 = vsel %vm1741, %v1696, %v1698
      %v1751 = vsel %vm1741, %v1698, %v1700
      %v1752 = vsel %vm1741, %v1700, %v1702
      %v1753 = vsel %vm1741, %v1702, %v1704
      %v1754 = vsel %vm1741, %v1704, %v1706
      %v1755 = vsel %vm1741, %v1706, %v1708
      %v1756 = vsel %vm1741, %v1710, %v1712
      %v1757 = vsel %vm1741, %v1712, %v1714
      %v1758 = vsel %vm1741, %v1714, %v1716
      %v1759 = vsel %vm1741, %v1716, %v1718
      %v1760 = vsel %vm1741, %v1718, %v1720
      %v1761 = vsel %vm1741, %v1720, %v1722
      %v1762 = vsel %vm1741, %v1722, %v1724
      %v1763 = vsel %vm1741, %v1726, %v1728
      %v1764 = vsel %vm1741, %v1728, %v1730
      %v1765 = vsel %vm1741, %v1730, %v1732
      %v1766 = vsel %vm1741, %v1732, %v1734
      %v1767 = vsel %vm1741, %v1734, %v1736
      %v1768 = vsel %vm1741, %v1736, %v1738
      %v1769 = vsel %vm1741, %v1738, %v1740
      %v1802 = vadd.f32 %v1565, %v1742
      %v1803 = vadd.f32 %v1566, %v1743
      %v1804 = vadd.f32 %v1567, %v1744
      %v1805 = vadd.f32 %v1568, %v1745
      %v1806 = vadd.f32 %v1569, %v1746
      %v1807 = vadd.f32 %v1570, %v1747
      %v1808 = vadd.f32 %v1571, %v1748
      %v1809 = vadd.f32 %v1572, %v1692
      %v1810 = vadd.f32 %v1573, %v1749
      %v1811 = vadd.f32 %v1574, %v1750
      %v1812 = vadd.f32 %v1575, %v1751
      %v1813 = vadd.f32 %v1576, %v1752
      %v1814 = vadd.f32 %v1577, %v1753
      %v1815 = vadd.f32 %v1578, %v1754
      %v1816 = vadd.f32 %v1579, %v1755
      %v1817 = vadd.f32 %v1580, %v1708
      %v1818 = vadd.f32 %v1581, %v1756
      %v1819 = vadd.f32 %v1582, %v1757
      %v1820 = vadd.f32 %v1583, %v1758
      %v1821 = vadd.f32 %v1584, %v1759
      %v1822 = vadd.f32 %v1585, %v1760
      %v1823 = vadd.f32 %v1586, %v1761
      %v1824 = vadd.f32 %v1587, %v1762
      %v1825 = vadd.f32 %v1588, %v1724
      %v1826 = vadd.f32 %v1589, %v1763
      %v1827 = vadd.f32 %v1590, %v1764
      %v1828 = vadd.f32 %v1591, %v1765
      %v1829 = vadd.f32 %v1592, %v1766
      %v1830 = vadd.f32 %v1593, %v1767
      %v1831 = vadd.f32 %v1594, %v1768
      %v1832 = vadd.f32 %v1595, %v1769
      %v1833 = vadd.f32 %v1596, %v1740
      %1834 = vset.pattern.permute.xlu0 6
      %1835 = vperm.xlu0 %1834, %v520
      %v1836 = vpop.permute.xlu0 %1835
      %1838 = vset.pattern.permute.xlu0 6
      %1839 = vperm.xlu0 %1838, %v521
      %v1840 = vpop.permute.xlu0 %1839
      %1842 = vset.pattern.permute.xlu0 6
      %1843 = vperm.xlu0 %1842, %v522
      %v1844 = vpop.permute.xlu0 %1843
      %1846 = vset.pattern.permute.xlu0 6
      %1847 = vperm.xlu0 %1846, %v523
      %v1848 = vpop.permute.xlu0 %1847
      %v1850 = vmul.f32 %v1836, %v548
      %v1851 = vmul.f32 %v1836, %v552
      %v1852 = vmul.f32 %v1836, %v556
      %v1853 = vmul.f32 %v1836, %v560
      %v1854 = vmul.f32 %v1836, %v564
      %v1855 = vmul.f32 %v1836, %v568
      %v1856 = vmul.f32 %v1836, %v572
      %v1857 = vmul.f32 %v1836, %v576
      %v1858 = vmul.f32 %v1840, %v548
      %v1859 = vmul.f32 %v1840, %v552
      %v1860 = vmul.f32 %v1840, %v556
      %v1861 = vmul.f32 %v1840, %v560
      %v1862 = vmul.f32 %v1840, %v564
      %v1863 = vmul.f32 %v1840, %v568
      %v1864 = vmul.f32 %v1840, %v572
      %v1865 = vmul.f32 %v1840, %v576
      %v1866 = vmul.f32 %v1844, %v548
      %v1867 = vmul.f32 %v1844, %v552
      %v1868 = vmul.f32 %v1844, %v556
      %v1869 = vmul.f32 %v1844, %v560
      %v1870 = vmul.f32 %v1844, %v564
      %v1871 = vmul.f32 %v1844, %v568
      %v1872 = vmul.f32 %v1844, %v572
      %v1873 = vmul.f32 %v1844, %v576
      %v1874 = vmul.f32 %v1848, %v548
      %v1875 = vmul.f32 %v1848, %v552
      %v1876 = vmul.f32 %v1848, %v556
      %v1877 = vmul.f32 %v1848, %v560
      %v1878 = vmul.f32 %v1848, %v564
      %v1879 = vmul.f32 %v1848, %v568
      %v1880 = vmul.f32 %v1848, %v572
      %v1881 = vmul.f32 %v1848, %v576
      %1914 = vrot.lane.b32.xlu0 %v1850, 68
      %v1915 = vpop.permute.xlu0 %1914
      %1916 = vrot.lane.b32.xlu0 %v1851, 68
      %v1917 = vpop.permute.xlu0 %1916
      %1918 = vrot.lane.b32.xlu0 %v1852, 68
      %v1919 = vpop.permute.xlu0 %1918
      %1920 = vrot.lane.b32.xlu0 %v1853, 68
      %v1921 = vpop.permute.xlu0 %1920
      %1922 = vrot.lane.b32.xlu0 %v1854, 68
      %v1923 = vpop.permute.xlu0 %1922
      %1924 = vrot.lane.b32.xlu0 %v1855, 68
      %v1925 = vpop.permute.xlu0 %1924
      %1926 = vrot.lane.b32.xlu0 %v1856, 68
      %v1927 = vpop.permute.xlu0 %1926
      %1928 = vrot.lane.b32.xlu0 %v1857, 68
      %v1929 = vpop.permute.xlu0 %1928
      %1930 = vrot.lane.b32.xlu0 %v1858, 68
      %v1931 = vpop.permute.xlu0 %1930
      %1932 = vrot.lane.b32.xlu0 %v1859, 68
      %v1933 = vpop.permute.xlu0 %1932
      %1934 = vrot.lane.b32.xlu0 %v1860, 68
      %v1935 = vpop.permute.xlu0 %1934
      %1936 = vrot.lane.b32.xlu0 %v1861, 68
      %v1937 = vpop.permute.xlu0 %1936
      %1938 = vrot.lane.b32.xlu0 %v1862, 68
      %v1939 = vpop.permute.xlu0 %1938
      %1940 = vrot.lane.b32.xlu0 %v1863, 68
      %v1941 = vpop.permute.xlu0 %1940
      %1942 = vrot.lane.b32.xlu0 %v1864, 68
      %v1943 = vpop.permute.xlu0 %1942
      %1944 = vrot.lane.b32.xlu0 %v1865, 68
      %v1945 = vpop.permute.xlu0 %1944
      %1946 = vrot.lane.b32.xlu0 %v1866, 68
      %v1947 = vpop.permute.xlu0 %1946
      %1948 = vrot.lane.b32.xlu0 %v1867, 68
      %v1949 = vpop.permute.xlu0 %1948
      %1950 = vrot.lane.b32.xlu0 %v1868, 68
      %v1951 = vpop.permute.xlu0 %1950
      %1952 = vrot.lane.b32.xlu0 %v1869, 68
      %v1953 = vpop.permute.xlu0 %1952
      %1954 = vrot.lane.b32.xlu0 %v1870, 68
      %v1955 = vpop.permute.xlu0 %1954
      %1956 = vrot.lane.b32.xlu0 %v1871, 68
      %v1957 = vpop.permute.xlu0 %1956
      %1958 = vrot.lane.b32.xlu0 %v1872, 68
      %v1959 = vpop.permute.xlu0 %1958
      %1960 = vrot.lane.b32.xlu0 %v1873, 68
      %v1961 = vpop.permute.xlu0 %1960
      %1962 = vrot.lane.b32.xlu0 %v1874, 68
      %v1963 = vpop.permute.xlu0 %1962
      %1964 = vrot.lane.b32.xlu0 %v1875, 68
      %v1965 = vpop.permute.xlu0 %1964
      %1966 = vrot.lane.b32.xlu0 %v1876, 68
      %v1967 = vpop.permute.xlu0 %1966
      %1968 = vrot.lane.b32.xlu0 %v1877, 68
      %v1969 = vpop.permute.xlu0 %1968
      %1970 = vrot.lane.b32.xlu0 %v1878, 68
      %v1971 = vpop.permute.xlu0 %1970
      %1972 = vrot.lane.b32.xlu0 %v1879, 68
      %v1973 = vpop.permute.xlu0 %1972
      %1974 = vrot.lane.b32.xlu0 %v1880, 68
      %v1975 = vpop.permute.xlu0 %1974
      %1976 = vrot.lane.b32.xlu0 %v1881, 68
      %v1977 = vpop.permute.xlu0 %1976
      %vm1978 = vcmask 556032
      %v1979 = vsel %vm1978, %v1915, %v1917
      %v1980 = vsel %vm1978, %v1917, %v1919
      %v1981 = vsel %vm1978, %v1919, %v1921
      %v1982 = vsel %vm1978, %v1921, %v1923
      %v1983 = vsel %vm1978, %v1923, %v1925
      %v1984 = vsel %vm1978, %v1925, %v1927
      %v1985 = vsel %vm1978, %v1927, %v1929
      %v1986 = vsel %vm1978, %v1931, %v1933
      %v1987 = vsel %vm1978, %v1933, %v1935
      %v1988 = vsel %vm1978, %v1935, %v1937
      %v1989 = vsel %vm1978, %v1937, %v1939
      %v1990 = vsel %vm1978, %v1939, %v1941
      %v1991 = vsel %vm1978, %v1941, %v1943
      %v1992 = vsel %vm1978, %v1943, %v1945
      %v1993 = vsel %vm1978, %v1947, %v1949
      %v1994 = vsel %vm1978, %v1949, %v1951
      %v1995 = vsel %vm1978, %v1951, %v1953
      %v1996 = vsel %vm1978, %v1953, %v1955
      %v1997 = vsel %vm1978, %v1955, %v1957
      %v1998 = vsel %vm1978, %v1957, %v1959
      %v1999 = vsel %vm1978, %v1959, %v1961
      %v2000 = vsel %vm1978, %v1963, %v1965
      %v2001 = vsel %vm1978, %v1965, %v1967
      %v2002 = vsel %vm1978, %v1967, %v1969
      %v2003 = vsel %vm1978, %v1969, %v1971
      %v2004 = vsel %vm1978, %v1971, %v1973
      %v2005 = vsel %vm1978, %v1973, %v1975
      %v2006 = vsel %vm1978, %v1975, %v1977
      %v2039 = vadd.f32 %v1802, %v1979
      %v2040 = vadd.f32 %v1803, %v1980
      %v2041 = vadd.f32 %v1804, %v1981
      %v2042 = vadd.f32 %v1805, %v1982
      %v2043 = vadd.f32 %v1806, %v1983
      %v2044 = vadd.f32 %v1807, %v1984
      %v2045 = vadd.f32 %v1808, %v1985
      %v2046 = vadd.f32 %v1809, %v1929
      %v2047 = vadd.f32 %v1810, %v1986
      %v2048 = vadd.f32 %v1811, %v1987
      %v2049 = vadd.f32 %v1812, %v1988
      %v2050 = vadd.f32 %v1813, %v1989
      %v2051 = vadd.f32 %v1814, %v1990
      %v2052 = vadd.f32 %v1815, %v1991
      %v2053 = vadd.f32 %v1816, %v1992
      %v2054 = vadd.f32 %v1817, %v1945
      %v2055 = vadd.f32 %v1818, %v1993
      %v2056 = vadd.f32 %v1819, %v1994
      %v2057 = vadd.f32 %v1820, %v1995
      %v2058 = vadd.f32 %v1821, %v1996
      %v2059 = vadd.f32 %v1822, %v1997
      %v2060 = vadd.f32 %v1823, %v1998
      %v2061 = vadd.f32 %v1824, %v1999
      %v2062 = vadd.f32 %v1825, %v1961
      %v2063 = vadd.f32 %v1826, %v2000
      %v2064 = vadd.f32 %v1827, %v2001
      %v2065 = vadd.f32 %v1828, %v2002
      %v2066 = vadd.f32 %v1829, %v2003
      %v2067 = vadd.f32 %v1830, %v2004
      %v2068 = vadd.f32 %v1831, %v2005
      %v2069 = vadd.f32 %v1832, %v2006
      %v2070 = vadd.f32 %v1833, %v1977
      %2071 = vset.pattern.permute.xlu0 7
      %2072 = vperm.xlu0 %2071, %v520
      %v2073 = vpop.permute.xlu0 %2072
      %2075 = vset.pattern.permute.xlu0 7
      %2076 = vperm.xlu0 %2075, %v521
      %v2077 = vpop.permute.xlu0 %2076
      %2079 = vset.pattern.permute.xlu0 7
      %2080 = vperm.xlu0 %2079, %v522
      %v2081 = vpop.permute.xlu0 %2080
      %2083 = vset.pattern.permute.xlu0 7
      %2084 = vperm.xlu0 %2083, %v523
      %v2085 = vpop.permute.xlu0 %2084
      %v2087 = vmul.f32 %v2073, %v548
      %v2088 = vmul.f32 %v2073, %v552
      %v2089 = vmul.f32 %v2073, %v556
      %v2090 = vmul.f32 %v2073, %v560
      %v2091 = vmul.f32 %v2073, %v564
      %v2092 = vmul.f32 %v2073, %v568
      %v2093 = vmul.f32 %v2073, %v572
      %v2094 = vmul.f32 %v2073, %v576
      %v2095 = vmul.f32 %v2077, %v548
      %v2096 = vmul.f32 %v2077, %v552
      %v2097 = vmul.f32 %v2077, %v556
      %v2098 = vmul.f32 %v2077, %v560
      %v2099 = vmul.f32 %v2077, %v564
      %v2100 = vmul.f32 %v2077, %v568
      %v2101 = vmul.f32 %v2077, %v572
      %v2102 = vmul.f32 %v2077, %v576
      %v2103 = vmul.f32 %v2081, %v548
      %v2104 = vmul.f32 %v2081, %v552
      %v2105 = vmul.f32 %v2081, %v556
      %v2106 = vmul.f32 %v2081, %v560
      %v2107 = vmul.f32 %v2081, %v564
      %v2108 = vmul.f32 %v2081, %v568
      %v2109 = vmul.f32 %v2081, %v572
      %v2110 = vmul.f32 %v2081, %v576
      %v2111 = vmul.f32 %v2085, %v548
      %v2112 = vmul.f32 %v2085, %v552
      %v2113 = vmul.f32 %v2085, %v556
      %v2114 = vmul.f32 %v2085, %v560
      %v2115 = vmul.f32 %v2085, %v564
      %v2116 = vmul.f32 %v2085, %v568
      %v2117 = vmul.f32 %v2085, %v572
      %v2118 = vmul.f32 %v2085, %v576
      %2151 = vrot.lane.b32.xlu0 %v2087, 67
      %v2152 = vpop.permute.xlu0 %2151
      %2153 = vrot.lane.b32.xlu0 %v2088, 67
      %v2154 = vpop.permute.xlu0 %2153
      %2155 = vrot.lane.b32.xlu0 %v2089, 67
      %v2156 = vpop.permute.xlu0 %2155
      %2157 = vrot.lane.b32.xlu0 %v2090, 67
      %v2158 = vpop.permute.xlu0 %2157
      %2159 = vrot.lane.b32.xlu0 %v2091, 67
      %v2160 = vpop.permute.xlu0 %2159
      %2161 = vrot.lane.b32.xlu0 %v2092, 67
      %v2162 = vpop.permute.xlu0 %2161
      %2163 = vrot.lane.b32.xlu0 %v2093, 67
      %v2164 = vpop.permute.xlu0 %2163
      %2165 = vrot.lane.b32.xlu0 %v2094, 67
      %v2166 = vpop.permute.xlu0 %2165
      %2167 = vrot.lane.b32.xlu0 %v2095, 67
      %v2168 = vpop.permute.xlu0 %2167
      %2169 = vrot.lane.b32.xlu0 %v2096, 67
      %v2170 = vpop.permute.xlu0 %2169
      %2171 = vrot.lane.b32.xlu0 %v2097, 67
      %v2172 = vpop.permute.xlu0 %2171
      %2173 = vrot.lane.b32.xlu0 %v2098, 67
      %v2174 = vpop.permute.xlu0 %2173
      %2175 = vrot.lane.b32.xlu0 %v2099, 67
      %v2176 = vpop.permute.xlu0 %2175
      %2177 = vrot.lane.b32.xlu0 %v2100, 67
      %v2178 = vpop.permute.xlu0 %2177
      %2179 = vrot.lane.b32.xlu0 %v2101, 67
      %v2180 = vpop.permute.xlu0 %2179
      %2181 = vrot.lane.b32.xlu0 %v2102, 67
      %v2182 = vpop.permute.xlu0 %2181
      %2183 = vrot.lane.b32.xlu0 %v2103, 67
      %v2184 = vpop.permute.xlu0 %2183
      %2185 = vrot.lane.b32.xlu0 %v2104, 67
      %v2186 = vpop.permute.xlu0 %2185
      %2187 = vrot.lane.b32.xlu0 %v2105, 67
      %v2188 = vpop.permute.xlu0 %2187
      %2189 = vrot.lane.b32.xlu0 %v2106, 67
      %v2190 = vpop.permute.xlu0 %2189
      %2191 = vrot.lane.b32.xlu0 %v2107, 67
      %v2192 = vpop.permute.xlu0 %2191
      %2193 = vrot.lane.b32.xlu0 %v2108, 67
      %v2194 = vpop.permute.xlu0 %2193
      %2195 = vrot.lane.b32.xlu0 %v2109, 67
      %v2196 = vpop.permute.xlu0 %2195
      %2197 = vrot.lane.b32.xlu0 %v2110, 67
      %v2198 = vpop.permute.xlu0 %2197
      %2199 = vrot.lane.b32.xlu0 %v2111, 67
      %v2200 = vpop.permute.xlu0 %2199
      %2201 = vrot.lane.b32.xlu0 %v2112, 67
      %v2202 = vpop.permute.xlu0 %2201
      %2203 = vrot.lane.b32.xlu0 %v2113, 67
      %v2204 = vpop.permute.xlu0 %2203
      %2205 = vrot.lane.b32.xlu0 %v2114, 67
      %v2206 = vpop.permute.xlu0 %2205
      %2207 = vrot.lane.b32.xlu0 %v2115, 67
      %v2208 = vpop.permute.xlu0 %2207
      %2209 = vrot.lane.b32.xlu0 %v2116, 67
      %v2210 = vpop.permute.xlu0 %2209
      %2211 = vrot.lane.b32.xlu0 %v2117, 67
      %v2212 = vpop.permute.xlu0 %2211
      %2213 = vrot.lane.b32.xlu0 %v2118, 67
      %v2214 = vpop.permute.xlu0 %2213
      %vm2215 = vcmask 547840
      %v2216 = vsel %vm2215, %v2152, %v2154
      %v2217 = vsel %vm2215, %v2154, %v2156
      %v2218 = vsel %vm2215, %v2156, %v2158
      %v2219 = vsel %vm2215, %v2158, %v2160
      %v2220 = vsel %vm2215, %v2160, %v2162
      %v2221 = vsel %vm2215, %v2162, %v2164
      %v2222 = vsel %vm2215, %v2164, %v2166
      %v2223 = vsel %vm2215, %v2168, %v2170
      %v2224 = vsel %vm2215, %v2170, %v2172
      %v2225 = vsel %vm2215, %v2172, %v2174
      %v2226 = vsel %vm2215, %v2174, %v2176
      %v2227 = vsel %vm2215, %v2176, %v2178
      %v2228 = vsel %vm2215, %v2178, %v2180
      %v2229 = vsel %vm2215, %v2180, %v2182
      %v2230 = vsel %vm2215, %v2184, %v2186
      %v2231 = vsel %vm2215, %v2186, %v2188
      %v2232 = vsel %vm2215, %v2188, %v2190
      %v2233 = vsel %vm2215, %v2190, %v2192
      %v2234 = vsel %vm2215, %v2192, %v2194
      %v2235 = vsel %vm2215, %v2194, %v2196
      %v2236 = vsel %vm2215, %v2196, %v2198
      %v2237 = vsel %vm2215, %v2200, %v2202
      %v2238 = vsel %vm2215, %v2202, %v2204
      %v2239 = vsel %vm2215, %v2204, %v2206
      %v2240 = vsel %vm2215, %v2206, %v2208
      %v2241 = vsel %vm2215, %v2208, %v2210
      %v2242 = vsel %vm2215, %v2210, %v2212
      %v2243 = vsel %vm2215, %v2212, %v2214
      %v2276 = vadd.f32 %v2039, %v2216
      %v2277 = vadd.f32 %v2040, %v2217
      %v2278 = vadd.f32 %v2041, %v2218
      %v2279 = vadd.f32 %v2042, %v2219
      %v2280 = vadd.f32 %v2043, %v2220
      %v2281 = vadd.f32 %v2044, %v2221
      %v2282 = vadd.f32 %v2045, %v2222
      %v2283 = vadd.f32 %v2046, %v2166
      %v2284 = vadd.f32 %v2047, %v2223
      %v2285 = vadd.f32 %v2048, %v2224
      %v2286 = vadd.f32 %v2049, %v2225
      %v2287 = vadd.f32 %v2050, %v2226
      %v2288 = vadd.f32 %v2051, %v2227
      %v2289 = vadd.f32 %v2052, %v2228
      %v2290 = vadd.f32 %v2053, %v2229
      %v2291 = vadd.f32 %v2054, %v2182
      %v2292 = vadd.f32 %v2055, %v2230
      %v2293 = vadd.f32 %v2056, %v2231
      %v2294 = vadd.f32 %v2057, %v2232
      %v2295 = vadd.f32 %v2058, %v2233
      %v2296 = vadd.f32 %v2059, %v2234
      %v2297 = vadd.f32 %v2060, %v2235
      %v2298 = vadd.f32 %v2061, %v2236
      %v2299 = vadd.f32 %v2062, %v2198
      %v2300 = vadd.f32 %v2063, %v2237
      %v2301 = vadd.f32 %v2064, %v2238
      %v2302 = vadd.f32 %v2065, %v2239
      %v2303 = vadd.f32 %v2066, %v2240
      %v2304 = vadd.f32 %v2067, %v2241
      %v2305 = vadd.f32 %v2068, %v2242
      %v2306 = vadd.f32 %v2069, %v2243
      %v2307 = vadd.f32 %v2070, %v2214
      %2308 = vset.pattern.permute.xlu0 8
      %2309 = vperm.xlu0 %2308, %v520
      %v2310 = vpop.permute.xlu0 %2309
      %2312 = vset.pattern.permute.xlu0 8
      %2313 = vperm.xlu0 %2312, %v521
      %v2314 = vpop.permute.xlu0 %2313
      %2316 = vset.pattern.permute.xlu0 8
      %2317 = vperm.xlu0 %2316, %v522
      %v2318 = vpop.permute.xlu0 %2317
      %2320 = vset.pattern.permute.xlu0 8
      %2321 = vperm.xlu0 %2320, %v523
      %v2322 = vpop.permute.xlu0 %2321
      %v2324 = vmul.f32 %v2310, %v548
      %v2325 = vmul.f32 %v2310, %v552
      %v2326 = vmul.f32 %v2310, %v556
      %v2327 = vmul.f32 %v2310, %v560
      %v2328 = vmul.f32 %v2310, %v564
      %v2329 = vmul.f32 %v2310, %v568
      %v2330 = vmul.f32 %v2310, %v572
      %v2331 = vmul.f32 %v2310, %v576
      %v2332 = vmul.f32 %v2314, %v548
      %v2333 = vmul.f32 %v2314, %v552
      %v2334 = vmul.f32 %v2314, %v556
      %v2335 = vmul.f32 %v2314, %v560
      %v2336 = vmul.f32 %v2314, %v564
      %v2337 = vmul.f32 %v2314, %v568
      %v2338 = vmul.f32 %v2314, %v572
      %v2339 = vmul.f32 %v2314, %v576
      %v2340 = vmul.f32 %v2318, %v548
      %v2341 = vmul.f32 %v2318, %v552
      %v2342 = vmul.f32 %v2318, %v556
      %v2343 = vmul.f32 %v2318, %v560
      %v2344 = vmul.f32 %v2318, %v564
      %v2345 = vmul.f32 %v2318, %v568
      %v2346 = vmul.f32 %v2318, %v572
      %v2347 = vmul.f32 %v2318, %v576
      %v2348 = vmul.f32 %v2322, %v548
      %v2349 = vmul.f32 %v2322, %v552
      %v2350 = vmul.f32 %v2322, %v556
      %v2351 = vmul.f32 %v2322, %v560
      %v2352 = vmul.f32 %v2322, %v564
      %v2353 = vmul.f32 %v2322, %v568
      %v2354 = vmul.f32 %v2322, %v572
      %v2355 = vmul.f32 %v2322, %v576
      %2388 = vrot.lane.b32.xlu0 %v2324, 66
      %v2389 = vpop.permute.xlu0 %2388
      %2390 = vrot.lane.b32.xlu0 %v2325, 66
      %v2391 = vpop.permute.xlu0 %2390
      %2392 = vrot.lane.b32.xlu0 %v2326, 66
      %v2393 = vpop.permute.xlu0 %2392
      %2394 = vrot.lane.b32.xlu0 %v2327, 66
      %v2395 = vpop.permute.xlu0 %2394
      %2396 = vrot.lane.b32.xlu0 %v2328, 66
      %v2397 = vpop.permute.xlu0 %2396
      %2398 = vrot.lane.b32.xlu0 %v2329, 66
      %v2399 = vpop.permute.xlu0 %2398
      %2400 = vrot.lane.b32.xlu0 %v2330, 66
      %v2401 = vpop.permute.xlu0 %2400
      %2402 = vrot.lane.b32.xlu0 %v2331, 66
      %v2403 = vpop.permute.xlu0 %2402
      %2404 = vrot.lane.b32.xlu0 %v2332, 66
      %v2405 = vpop.permute.xlu0 %2404
      %2406 = vrot.lane.b32.xlu0 %v2333, 66
      %v2407 = vpop.permute.xlu0 %2406
      %2408 = vrot.lane.b32.xlu0 %v2334, 66
      %v2409 = vpop.permute.xlu0 %2408
      %2410 = vrot.lane.b32.xlu0 %v2335, 66
      %v2411 = vpop.permute.xlu0 %2410
      %2412 = vrot.lane.b32.xlu0 %v2336, 66
      %v2413 = vpop.permute.xlu0 %2412
      %2414 = vrot.lane.b32.xlu0 %v2337, 66
      %v2415 = vpop.permute.xlu0 %2414
      %2416 = vrot.lane.b32.xlu0 %v2338, 66
      %v2417 = vpop.permute.xlu0 %2416
      %2418 = vrot.lane.b32.xlu0 %v2339, 66
      %v2419 = vpop.permute.xlu0 %2418
      %2420 = vrot.lane.b32.xlu0 %v2340, 66
      %v2421 = vpop.permute.xlu0 %2420
      %2422 = vrot.lane.b32.xlu0 %v2341, 66
      %v2423 = vpop.permute.xlu0 %2422
      %2424 = vrot.lane.b32.xlu0 %v2342, 66
      %v2425 = vpop.permute.xlu0 %2424
      %2426 = vrot.lane.b32.xlu0 %v2343, 66
      %v2427 = vpop.permute.xlu0 %2426
      %2428 = vrot.lane.b32.xlu0 %v2344, 66
      %v2429 = vpop.permute.xlu0 %2428
      %2430 = vrot.lane.b32.xlu0 %v2345, 66
      %v2431 = vpop.permute.xlu0 %2430
      %2432 = vrot.lane.b32.xlu0 %v2346, 66
      %v2433 = vpop.permute.xlu0 %2432
      %2434 = vrot.lane.b32.xlu0 %v2347, 66
      %v2435 = vpop.permute.xlu0 %2434
      %2436 = vrot.lane.b32.xlu0 %v2348, 66
      %v2437 = vpop.permute.xlu0 %2436
      %2438 = vrot.lane.b32.xlu0 %v2349, 66
      %v2439 = vpop.permute.xlu0 %2438
      %2440 = vrot.lane.b32.xlu0 %v2350, 66
      %v2441 = vpop.permute.xlu0 %2440
      %2442 = vrot.lane.b32.xlu0 %v2351, 66
      %v2443 = vpop.permute.xlu0 %2442
      %2444 = vrot.lane.b32.xlu0 %v2352, 66
      %v2445 = vpop.permute.xlu0 %2444
      %2446 = vrot.lane.b32.xlu0 %v2353, 66
      %v2447 = vpop.permute.xlu0 %2446
      %2448 = vrot.lane.b32.xlu0 %v2354, 66
      %v2449 = vpop.permute.xlu0 %2448
      %2450 = vrot.lane.b32.xlu0 %v2355, 66
      %v2451 = vpop.permute.xlu0 %2450
      %vm2452 = vcmask 539648
      %v2453 = vsel %vm2452, %v2389, %v2391
      %v2454 = vsel %vm2452, %v2391, %v2393
      %v2455 = vsel %vm2452, %v2393, %v2395
      %v2456 = vsel %vm2452, %v2395, %v2397
      %v2457 = vsel %vm2452, %v2397, %v2399
      %v2458 = vsel %vm2452, %v2399, %v2401
      %v2459 = vsel %vm2452, %v2401, %v2403
      %v2460 = vsel %vm2452, %v2405, %v2407
      %v2461 = vsel %vm2452, %v2407, %v2409
      %v2462 = vsel %vm2452, %v2409, %v2411
      %v2463 = vsel %vm2452, %v2411, %v2413
      %v2464 = vsel %vm2452, %v2413, %v2415
      %v2465 = vsel %vm2452, %v2415, %v2417
      %v2466 = vsel %vm2452, %v2417, %v2419
      %v2467 = vsel %vm2452, %v2421, %v2423
      %v2468 = vsel %vm2452, %v2423, %v2425
      %v2469 = vsel %vm2452, %v2425, %v2427
      %v2470 = vsel %vm2452, %v2427, %v2429
      %v2471 = vsel %vm2452, %v2429, %v2431
      %v2472 = vsel %vm2452, %v2431, %v2433
      %v2473 = vsel %vm2452, %v2433, %v2435
      %v2474 = vsel %vm2452, %v2437, %v2439
      %v2475 = vsel %vm2452, %v2439, %v2441
      %v2476 = vsel %vm2452, %v2441, %v2443
      %v2477 = vsel %vm2452, %v2443, %v2445
      %v2478 = vsel %vm2452, %v2445, %v2447
      %v2479 = vsel %vm2452, %v2447, %v2449
      %v2480 = vsel %vm2452, %v2449, %v2451
      %v2513 = vadd.f32 %v2276, %v2453
      %v2514 = vadd.f32 %v2277, %v2454
      %v2515 = vadd.f32 %v2278, %v2455
      %v2516 = vadd.f32 %v2279, %v2456
      %v2517 = vadd.f32 %v2280, %v2457
      %v2518 = vadd.f32 %v2281, %v2458
      %v2519 = vadd.f32 %v2282, %v2459
      %v2520 = vadd.f32 %v2283, %v2403
      %v2521 = vadd.f32 %v2284, %v2460
      %v2522 = vadd.f32 %v2285, %v2461
      %v2523 = vadd.f32 %v2286, %v2462
      %v2524 = vadd.f32 %v2287, %v2463
      %v2525 = vadd.f32 %v2288, %v2464
      %v2526 = vadd.f32 %v2289, %v2465
      %v2527 = vadd.f32 %v2290, %v2466
      %v2528 = vadd.f32 %v2291, %v2419
      %v2529 = vadd.f32 %v2292, %v2467
      %v2530 = vadd.f32 %v2293, %v2468
      %v2531 = vadd.f32 %v2294, %v2469
      %v2532 = vadd.f32 %v2295, %v2470
      %v2533 = vadd.f32 %v2296, %v2471
      %v2534 = vadd.f32 %v2297, %v2472
      %v2535 = vadd.f32 %v2298, %v2473
      %v2536 = vadd.f32 %v2299, %v2435
      %v2537 = vadd.f32 %v2300, %v2474
      %v2538 = vadd.f32 %v2301, %v2475
      %v2539 = vadd.f32 %v2302, %v2476
      %v2540 = vadd.f32 %v2303, %v2477
      %v2541 = vadd.f32 %v2304, %v2478
      %v2542 = vadd.f32 %v2305, %v2479
      %v2543 = vadd.f32 %v2306, %v2480
      %v2544 = vadd.f32 %v2307, %v2451
      %v2545 = vld [vmem:[%s2] sm:$0xff]
      %v2546 = vld [vmem:[%s2 + $0x8] sm:$0xff]
      %v2547 = vld [vmem:[%s2 + $0x10] sm:$0xff]
      %v2548 = vld [vmem:[%s2 + $0x18] sm:$0xff]
      %2550 = vset.pattern.permute.xlu0 0
      %2551 = vperm.xlu0 %2550, %v2545
      %v2552 = vpop.permute.xlu0 %2551
      %2555 = vset.pattern.permute.xlu0 0
      %2556 = vperm.xlu0 %2555, %v2546
      %v2557 = vpop.permute.xlu0 %2556
      %2560 = vset.pattern.permute.xlu0 0
      %2561 = vperm.xlu0 %2560, %v2547
      %v2562 = vpop.permute.xlu0 %2561
      %2565 = vset.pattern.permute.xlu0 0
      %2566 = vperm.xlu0 %2565, %v2548
      %v2567 = vpop.permute.xlu0 %2566
      %v2569 = vadd.f32 %v2513, %v2552
      %v2570 = vadd.f32 %v2514, %v2552
      %v2571 = vadd.f32 %v2515, %v2552
      %v2572 = vadd.f32 %v2516, %v2552
      %v2573 = vadd.f32 %v2517, %v2552
      %v2574 = vadd.f32 %v2518, %v2552
      %v2575 = vadd.f32 %v2519, %v2552
      %v2576 = vadd.f32 %v2520, %v2552
      %v2577 = vadd.f32 %v2521, %v2557
      %v2578 = vadd.f32 %v2522, %v2557
      %v2579 = vadd.f32 %v2523, %v2557
      %v2580 = vadd.f32 %v2524, %v2557
      %v2581 = vadd.f32 %v2525, %v2557
      %v2582 = vadd.f32 %v2526, %v2557
      %v2583 = vadd.f32 %v2527, %v2557
      %v2584 = vadd.f32 %v2528, %v2557
      %v2585 = vadd.f32 %v2529, %v2562
      %v2586 = vadd.f32 %v2530, %v2562
      %v2587 = vadd.f32 %v2531, %v2562
      %v2588 = vadd.f32 %v2532, %v2562
      %v2589 = vadd.f32 %v2533, %v2562
      %v2590 = vadd.f32 %v2534, %v2562
      %v2591 = vadd.f32 %v2535, %v2562
      %v2592 = vadd.f32 %v2536, %v2562
      %v2593 = vadd.f32 %v2537, %v2567
      %v2594 = vadd.f32 %v2538, %v2567
      %v2595 = vadd.f32 %v2539, %v2567
      %v2596 = vadd.f32 %v2540, %v2567
      %v2597 = vadd.f32 %v2541, %v2567
      %v2598 = vadd.f32 %v2542, %v2567
      %v2599 = vadd.f32 %v2543, %v2567
      %v2600 = vadd.f32 %v2544, %v2567
      %v2601 = vmax.f32 %v2569, 0.0
      %v2602 = vmax.f32 %v2570, 0.0
      %v2603 = vmax.f32 %v2571, 0.0
      %v2604 = vmax.f32 %v2572, 0.0
      %v2605 = vmax.f32 %v2573, 0.0
      %v2606 = vmax.f32 %v2574, 0.0
      %v2607 = vmax.f32 %v2575, 0.0
      %v2608 = vmax.f32 %v2576, 0.0
      %v2609 = vmax.f32 %v2577, 0.0
      %v2610 = vmax.f32 %v2578, 0.0
      %v2611 = vmax.f32 %v2579, 0.0
      %v2612 = vmax.f32 %v2580, 0.0
      %v2613 = vmax.f32 %v2581, 0.0
      %v2614 = vmax.f32 %v2582, 0.0
      %v2615 = vmax.f32 %v2583, 0.0
      %v2616 = vmax.f32 %v2584, 0.0
      %v2617 = vmax.f32 %v2585, 0.0
      %v2618 = vmax.f32 %v2586, 0.0
      %v2619 = vmax.f32 %v2587, 0.0
      %v2620 = vmax.f32 %v2588, 0.0
      %v2621 = vmax.f32 %v2589, 0.0
      %v2622 = vmax.f32 %v2590, 0.0
      %v2623 = vmax.f32 %v2591, 0.0
      %v2624 = vmax.f32 %v2592, 0.0
      %v2625 = vmax.f32 %v2593, 0.0
      %v2626 = vmax.f32 %v2594, 0.0
      %v2627 = vmax.f32 %v2595, 0.0
      %v2628 = vmax.f32 %v2596, 0.0
      %v2629 = vmax.f32 %v2597, 0.0
      %v2630 = vmax.f32 %v2598, 0.0
      %v2631 = vmax.f32 %v2599, 0.0
      %v2632 = vmax.f32 %v2600, 0.0
      %2665 = vrot.lane.b32.xlu0 %v2601, 127
      %v2666 = vpop.permute.xlu0 %2665
      %2667 = vrot.lane.b32.xlu0 %v2602, 127
      %v2668 = vpop.permute.xlu0 %2667
      %2669 = vrot.lane.b32.xlu0 %v2603, 127
      %v2670 = vpop.permute.xlu0 %2669
      %2671 = vrot.lane.b32.xlu0 %v2604, 127
      %v2672 = vpop.permute.xlu0 %2671
      %2673 = vrot.lane.b32.xlu0 %v2605, 127
      %v2674 = vpop.permute.xlu0 %2673
      %2675 = vrot.lane.b32.xlu0 %v2606, 127
      %v2676 = vpop.permute.xlu0 %2675
      %2677 = vrot.lane.b32.xlu0 %v2607, 127
      %v2678 = vpop.permute.xlu0 %2677
      %2679 = vrot.lane.b32.xlu0 %v2608, 127
      %v2680 = vpop.permute.xlu0 %2679
      %2681 = vrot.lane.b32.xlu0 %v2609, 127
      %v2682 = vpop.permute.xlu0 %2681
      %2683 = vrot.lane.b32.xlu0 %v2610, 127
      %v2684 = vpop.permute.xlu0 %2683
      %2685 = vrot.lane.b32.xlu0 %v2611, 127
      %v2686 = vpop.permute.xlu0 %2685
      %2687 = vrot.lane.b32.xlu0 %v2612, 127
      %v2688 = vpop.permute.xlu0 %2687
      %2689 = vrot.lane.b32.xlu0 %v2613, 127
      %v2690 = vpop.permute.xlu0 %2689
      %2691 = vrot.lane.b32.xlu0 %v2614, 127
      %v2692 = vpop.permute.xlu0 %2691
      %2693 = vrot.lane.b32.xlu0 %v2615, 127
      %v2694 = vpop.permute.xlu0 %2693
      %2695 = vrot.lane.b32.xlu0 %v2616, 127
      %v2696 = vpop.permute.xlu0 %2695
      %2697 = vrot.lane.b32.xlu0 %v2617, 127
      %v2698 = vpop.permute.xlu0 %2697
      %2699 = vrot.lane.b32.xlu0 %v2618, 127
      %v2700 = vpop.permute.xlu0 %2699
      %2701 = vrot.lane.b32.xlu0 %v2619, 127
      %v2702 = vpop.permute.xlu0 %2701
      %2703 = vrot.lane.b32.xlu0 %v2620, 127
      %v2704 = vpop.permute.xlu0 %2703
      %2705 = vrot.lane.b32.xlu0 %v2621, 127
      %v2706 = vpop.permute.xlu0 %2705
      %2707 = vrot.lane.b32.xlu0 %v2622, 127
      %v2708 = vpop.permute.xlu0 %2707
      %2709 = vrot.lane.b32.xlu0 %v2623, 127
      %v2710 = vpop.permute.xlu0 %2709
      %2711 = vrot.lane.b32.xlu0 %v2624, 127
      %v2712 = vpop.permute.xlu0 %2711
      %2713 = vrot.lane.b32.xlu0 %v2625, 127
      %v2714 = vpop.permute.xlu0 %2713
      %2715 = vrot.lane.b32.xlu0 %v2626, 127
      %v2716 = vpop.permute.xlu0 %2715
      %2717 = vrot.lane.b32.xlu0 %v2627, 127
      %v2718 = vpop.permute.xlu0 %2717
      %2719 = vrot.lane.b32.xlu0 %v2628, 127
      %v2720 = vpop.permute.xlu0 %2719
      %2721 = vrot.lane.b32.xlu0 %v2629, 127
      %v2722 = vpop.permute.xlu0 %2721
      %2723 = vrot.lane.b32.xlu0 %v2630, 127
      %v2724 = vpop.permute.xlu0 %2723
      %2725 = vrot.lane.b32.xlu0 %v2631, 127
      %v2726 = vpop.permute.xlu0 %2725
      %2727 = vrot.lane.b32.xlu0 %v2632, 127
      %v2728 = vpop.permute.xlu0 %2727
      %v2729 = vsel %vm793, %v2666, %v2668
      %v2730 = vsel %vm793, %v2668, %v2670
      %v2731 = vsel %vm793, %v2670, %v2672
      %v2732 = vsel %vm793, %v2672, %v2674
      %v2733 = vsel %vm793, %v2674, %v2676
      %v2734 = vsel %vm793, %v2676, %v2678
      %v2735 = vsel %vm793, %v2678, %v2680
      %v2736 = vsel %vm793, %v2682, %v2684
      %v2737 = vsel %vm793, %v2684, %v2686
      %v2738 = vsel %vm793, %v2686, %v2688
      %v2739 = vsel %vm793, %v2688, %v2690
      %v2740 = vsel %vm793, %v2690, %v2692
      %v2741 = vsel %vm793, %v2692, %v2694
      %v2742 = vsel %vm793, %v2694, %v2696
      %v2743 = vsel %vm793, %v2698, %v2700
      %v2744 = vsel %vm793, %v2700, %v2702
      %v2745 = vsel %vm793, %v2702, %v2704
      %v2746 = vsel %vm793, %v2704, %v2706
      %v2747 = vsel %vm793, %v2706, %v2708
      %v2748 = vsel %vm793, %v2708, %v2710
      %v2749 = vsel %vm793, %v2710, %v2712
      %v2750 = vsel %vm793, %v2714, %v2716
      %v2751 = vsel %vm793, %v2716, %v2718
      %v2752 = vsel %vm793, %v2718, %v2720
      %v2753 = vsel %vm793, %v2720, %v2722
      %v2754 = vsel %vm793, %v2722, %v2724
      %v2755 = vsel %vm793, %v2724, %v2726
      %v2756 = vsel %vm793, %v2726, %v2728
      %v2789 = vadd.f32 %v2601, %v2729
      %v2790 = vadd.f32 %v2602, %v2730
      %v2791 = vadd.f32 %v2603, %v2731
      %v2792 = vadd.f32 %v2604, %v2732
      %v2793 = vadd.f32 %v2605, %v2733
      %v2794 = vadd.f32 %v2606, %v2734
      %v2795 = vadd.f32 %v2607, %v2735
      %v2796 = vadd.f32 %v2608, %v2680
      %v2797 = vadd.f32 %v2609, %v2736
      %v2798 = vadd.f32 %v2610, %v2737
      %v2799 = vadd.f32 %v2611, %v2738
      %v2800 = vadd.f32 %v2612, %v2739
      %v2801 = vadd.f32 %v2613, %v2740
      %v2802 = vadd.f32 %v2614, %v2741
      %v2803 = vadd.f32 %v2615, %v2742
      %v2804 = vadd.f32 %v2616, %v2696
      %v2805 = vadd.f32 %v2617, %v2743
      %v2806 = vadd.f32 %v2618, %v2744
      %v2807 = vadd.f32 %v2619, %v2745
      %v2808 = vadd.f32 %v2620, %v2746
      %v2809 = vadd.f32 %v2621, %v2747
      %v2810 = vadd.f32 %v2622, %v2748
      %v2811 = vadd.f32 %v2623, %v2749
      %v2812 = vadd.f32 %v2624, %v2712
      %v2813 = vadd.f32 %v2625, %v2750
      %v2814 = vadd.f32 %v2626, %v2751
      %v2815 = vadd.f32 %v2627, %v2752
      %v2816 = vadd.f32 %v2628, %v2753
      %v2817 = vadd.f32 %v2629, %v2754
      %v2818 = vadd.f32 %v2630, %v2755
      %v2819 = vadd.f32 %v2631, %v2756
      %v2820 = vadd.f32 %v2632, %v2728
      %2853 = vrot.lane.b32.xlu0 %v2789, 98
      %v2854 = vpop.permute.xlu0 %2853
      %2855 = vrot.lane.b32.xlu0 %v2790, 98
      %v2856 = vpop.permute.xlu0 %2855
      %2857 = vrot.lane.b32.xlu0 %v2791, 98
      %v2858 = vpop.permute.xlu0 %2857
      %2859 = vrot.lane.b32.xlu0 %v2792, 98
      %v2860 = vpop.permute.xlu0 %2859
      %2861 = vrot.lane.b32.xlu0 %v2793, 98
      %v2862 = vpop.permute.xlu0 %2861
      %2863 = vrot.lane.b32.xlu0 %v2794, 98
      %v2864 = vpop.permute.xlu0 %2863
      %2865 = vrot.lane.b32.xlu0 %v2795, 98
      %v2866 = vpop.permute.xlu0 %2865
      %2867 = vrot.lane.b32.xlu0 %v2796, 98
      %v2868 = vpop.permute.xlu0 %2867
      %2869 = vrot.lane.b32.xlu0 %v2797, 98
      %v2870 = vpop.permute.xlu0 %2869
      %2871 = vrot.lane.b32.xlu0 %v2798, 98
      %v2872 = vpop.permute.xlu0 %2871
      %2873 = vrot.lane.b32.xlu0 %v2799, 98
      %v2874 = vpop.permute.xlu0 %2873
      %2875 = vrot.lane.b32.xlu0 %v2800, 98
      %v2876 = vpop.permute.xlu0 %2875
      %2877 = vrot.lane.b32.xlu0 %v2801, 98
      %v2878 = vpop.permute.xlu0 %2877
      %2879 = vrot.lane.b32.xlu0 %v2802, 98
      %v2880 = vpop.permute.xlu0 %2879
      %2881 = vrot.lane.b32.xlu0 %v2803, 98
      %v2882 = vpop.permute.xlu0 %2881
      %2883 = vrot.lane.b32.xlu0 %v2804, 98
      %v2884 = vpop.permute.xlu0 %2883
      %2885 = vrot.lane.b32.xlu0 %v2805, 98
      %v2886 = vpop.permute.xlu0 %2885
      %2887 = vrot.lane.b32.xlu0 %v2806, 98
      %v2888 = vpop.permute.xlu0 %2887
      %2889 = vrot.lane.b32.xlu0 %v2807, 98
      %v2890 = vpop.permute.xlu0 %2889
      %2891 = vrot.lane.b32.xlu0 %v2808, 98
      %v2892 = vpop.permute.xlu0 %2891
      %2893 = vrot.lane.b32.xlu0 %v2809, 98
      %v2894 = vpop.permute.xlu0 %2893
      %2895 = vrot.lane.b32.xlu0 %v2810, 98
      %v2896 = vpop.permute.xlu0 %2895
      %2897 = vrot.lane.b32.xlu0 %v2811, 98
      %v2898 = vpop.permute.xlu0 %2897
      %2899 = vrot.lane.b32.xlu0 %v2812, 98
      %v2900 = vpop.permute.xlu0 %2899
      %2901 = vrot.lane.b32.xlu0 %v2813, 98
      %v2902 = vpop.permute.xlu0 %2901
      %2903 = vrot.lane.b32.xlu0 %v2814, 98
      %v2904 = vpop.permute.xlu0 %2903
      %2905 = vrot.lane.b32.xlu0 %v2815, 98
      %v2906 = vpop.permute.xlu0 %2905
      %2907 = vrot.lane.b32.xlu0 %v2816, 98
      %v2908 = vpop.permute.xlu0 %2907
      %2909 = vrot.lane.b32.xlu0 %v2817, 98
      %v2910 = vpop.permute.xlu0 %2909
      %2911 = vrot.lane.b32.xlu0 %v2818, 98
      %v2912 = vpop.permute.xlu0 %2911
      %2913 = vrot.lane.b32.xlu0 %v2819, 98
      %v2914 = vpop.permute.xlu0 %2913
      %2915 = vrot.lane.b32.xlu0 %v2820, 98
      %v2916 = vpop.permute.xlu0 %2915
      %v2917 = vsel %vm1267, %v2854, %v2856
      %v2918 = vsel %vm1267, %v2856, %v2858
      %v2919 = vsel %vm1267, %v2858, %v2860
      %v2920 = vsel %vm1267, %v2860, %v2862
      %v2921 = vsel %vm1267, %v2862, %v2864
      %v2922 = vsel %vm1267, %v2864, %v2866
      %v2923 = vsel %vm1267, %v2866, %v2868
      %v2924 = vsel %vm1267, %v2870, %v2872
      %v2925 = vsel %vm1267, %v2872, %v2874
      %v2926 = vsel %vm1267, %v2874, %v2876
      %v2927 = vsel %vm1267, %v2876, %v2878
      %v2928 = vsel %vm1267, %v2878, %v2880
      %v2929 = vsel %vm1267, %v2880, %v2882
      %v2930 = vsel %vm1267, %v2882, %v2884
      %v2931 = vsel %vm1267, %v2886, %v2888
      %v2932 = vsel %vm1267, %v2888, %v2890
      %v2933 = vsel %vm1267, %v2890, %v2892
      %v2934 = vsel %vm1267, %v2892, %v2894
      %v2935 = vsel %vm1267, %v2894, %v2896
      %v2936 = vsel %vm1267, %v2896, %v2898
      %v2937 = vsel %vm1267, %v2898, %v2900
      %v2938 = vsel %vm1267, %v2902, %v2904
      %v2939 = vsel %vm1267, %v2904, %v2906
      %v2940 = vsel %vm1267, %v2906, %v2908
      %v2941 = vsel %vm1267, %v2908, %v2910
      %v2942 = vsel %vm1267, %v2910, %v2912
      %v2943 = vsel %vm1267, %v2912, %v2914
      %v2944 = vsel %vm1267, %v2914, %v2916
      %v2973 = vadd.f32 %v2789, %v2917
      %v2974 = vadd.f32 %v2790, %v2918
      %v2975 = vadd.f32 %v2791, %v2919
      %v2976 = vadd.f32 %v2792, %v2920
      %v2977 = vadd.f32 %v2793, %v2921
      %v2978 = vadd.f32 %v2794, %v2922
      %v2979 = vadd.f32 %v2795, %v2923
      %v2980 = vadd.f32 %v2797, %v2924
      %v2981 = vadd.f32 %v2798, %v2925
      %v2982 = vadd.f32 %v2799, %v2926
      %v2983 = vadd.f32 %v2800, %v2927
      %v2984 = vadd.f32 %v2801, %v2928
      %v2985 = vadd.f32 %v2802, %v2929
      %v2986 = vadd.f32 %v2803, %v2930
      %v2987 = vadd.f32 %v2805, %v2931
      %v2988 = vadd.f32 %v2806, %v2932
      %v2989 = vadd.f32 %v2807, %v2933
      %v2990 = vadd.f32 %v2808, %v2934
      %v2991 = vadd.f32 %v2809, %v2935
      %v2992 = vadd.f32 %v2810, %v2936
      %v2993 = vadd.f32 %v2811, %v2937
      %v2994 = vadd.f32 %v2813, %v2938
      %v2995 = vadd.f32 %v2814, %v2939
      %v2996 = vadd.f32 %v2815, %v2940
      %v2997 = vadd.f32 %v2816, %v2941
      %v2998 = vadd.f32 %v2817, %v2942
      %v2999 = vadd.f32 %v2818, %v2943
      %v3000 = vadd.f32 %v2819, %v2944
      %v3001 = vmul.f32 %v2973, 0.25
      %v3002 = vmul.f32 %v2974, 0.25
      %v3003 = vmul.f32 %v2975, 0.25
      %v3004 = vmul.f32 %v2976, 0.25
      %v3005 = vmul.f32 %v2977, 0.25
      %v3006 = vmul.f32 %v2978, 0.25
      %v3007 = vmul.f32 %v2979, 0.25
      %v3008 = vmul.f32 %v2980, 0.25
      %v3009 = vmul.f32 %v2981, 0.25
      %v3010 = vmul.f32 %v2982, 0.25
      %v3011 = vmul.f32 %v2983, 0.25
      %v3012 = vmul.f32 %v2984, 0.25
      %v3013 = vmul.f32 %v2985, 0.25
      %v3014 = vmul.f32 %v2986, 0.25
      %v3015 = vmul.f32 %v2987, 0.25
      %v3016 = vmul.f32 %v2988, 0.25
      %v3017 = vmul.f32 %v2989, 0.25
      %v3018 = vmul.f32 %v2990, 0.25
      %v3019 = vmul.f32 %v2991, 0.25
      %v3020 = vmul.f32 %v2992, 0.25
      %v3021 = vmul.f32 %v2993, 0.25
      %v3022 = vmul.f32 %v2994, 0.25
      %v3023 = vmul.f32 %v2995, 0.25
      %v3024 = vmul.f32 %v2996, 0.25
      %v3025 = vmul.f32 %v2997, 0.25
      %v3026 = vmul.f32 %v2998, 0.25
      %v3027 = vmul.f32 %v2999, 0.25
      %v3028 = vmul.f32 %v3000, 0.25
      %v3029 = vld [vmem:[%s7] sm:$0xff]
      %v3030 = vld [vmem:[%s7 + $0x8] sm:$0xff]
      %v3031 = vld [vmem:[%s7 + $0x10] sm:$0xff]
      %v3032 = vld [vmem:[%s7 + $0x18] sm:$0xff]
      %v3033 = vld [vmem:[%s7 + $0x20] sm:$0xff]
      %v3034 = vld [vmem:[%s7 + $0x28] sm:$0xff]
      %v3035 = vld [vmem:[%s7 + $0x30] sm:$0xff]
      %v3036 = vld [vmem:[%s7 + $0x38] sm:$0xff]
      %v3037 = vld [vmem:[%s7 + $0x40] sm:$0xff]
      %v3038 = vld [vmem:[%s7 + $0x48] sm:$0xff]
      %v3039 = vld [vmem:[%s7 + $0x50] sm:$0xff]
      %v3040 = vld [vmem:[%s7 + $0x58] sm:$0xff]
      %v3041 = vld [vmem:[%s7 + $0x60] sm:$0xff]
      %v3042 = vld [vmem:[%s7 + $0x68] sm:$0xff]
      %v3043 = vld [vmem:[%s7 + $0x70] sm:$0xff]
      %v3044 = vld [vmem:[%s7 + $0x78] sm:$0xff]
      %v3045 = vld [vmem:[%s7 + $0x80] sm:$0xff]
      %v3046 = vld [vmem:[%s7 + $0x88] sm:$0xff]
      %v3047 = vld [vmem:[%s7 + $0x90] sm:$0xff]
      %v3048 = vld [vmem:[%s7 + $0x98] sm:$0xff]
      %v3049 = vld [vmem:[%s7 + $0xa0] sm:$0xff]
      %v3050 = vld [vmem:[%s7 + $0xa8] sm:$0xff]
      %v3051 = vld [vmem:[%s7 + $0xb0] sm:$0xff]
      %v3052 = vld [vmem:[%s7 + $0xb8] sm:$0xff]
      %v3053 = vld [vmem:[%s7 + $0xc0] sm:$0xff]
      %v3054 = vld [vmem:[%s7 + $0xc8] sm:$0xff]
      %v3055 = vld [vmem:[%s7 + $0xd0] sm:$0xff]
      %v3056 = vld [vmem:[%s7 + $0xd8] sm:$0xff]
      %v3057 = vld [vmem:[%s7 + $0xe0] sm:$0xff]
      %v3058 = vld [vmem:[%s7 + $0xe8] sm:$0xff]
      %v3059 = vld [vmem:[%s7 + $0xf0] sm:$0xff]
      %v3060 = vld [vmem:[%s7 + $0xf8] sm:$0xff]
      %v3061 = vld [vmem:[%s7 + $0x100] sm:$0xff]
      %v3062 = vld [vmem:[%s7 + $0x108] sm:$0xff]
      %v3063 = vld [vmem:[%s7 + $0x110] sm:$0xff]
      %v3064 = vld [vmem:[%s7 + $0x118] sm:$0xff]
      %v3065 = vld [vmem:[%s7 + $0x120] sm:$0xff]
      %v3066 = vld [vmem:[%s7 + $0x128] sm:$0xff]
      %v3067 = vld [vmem:[%s7 + $0x130] sm:$0xff]
      %v3068 = vld [vmem:[%s7 + $0x138] sm:$0xff]
      %v3069 = vld [vmem:[%s7 + $0x140] sm:$0xff]
      %v3070 = vld [vmem:[%s7 + $0x148] sm:$0xff]
      %v3071 = vld [vmem:[%s7 + $0x150] sm:$0xff]
      %v3072 = vld [vmem:[%s7 + $0x158] sm:$0xff]
      %v3073 = vld [vmem:[%s7 + $0x160] sm:$0xff]
      %v3074 = vld [vmem:[%s7 + $0x168] sm:$0xff]
      %v3075 = vld [vmem:[%s7 + $0x170] sm:$0xff]
      %v3076 = vld [vmem:[%s7 + $0x178] sm:$0xff]
      %v3077 = vld [vmem:[%s7 + $0x180] sm:$0xff]
      %v3078 = vld [vmem:[%s7 + $0x188] sm:$0xff]
      %v3079 = vld [vmem:[%s7 + $0x190] sm:$0xff]
      %v3080 = vld [vmem:[%s7 + $0x198] sm:$0xff]
      %v3081 = vld [vmem:[%s7 + $0x1a0] sm:$0xff]
      %v3082 = vld [vmem:[%s7 + $0x1a8] sm:$0xff]
      %v3083 = vld [vmem:[%s7 + $0x1b0] sm:$0xff]
      %v3084 = vld [vmem:[%s7 + $0x1b8] sm:$0xff]
      %v3085 = vld [vmem:[%s7 + $0x1c0] sm:$0xff]
      %v3086 = vld [vmem:[%s7 + $0x1c8] sm:$0xff]
      %v3087 = vld [vmem:[%s7 + $0x1d0] sm:$0xff]
      %v3088 = vld [vmem:[%s7 + $0x1d8] sm:$0xff]
      %v3089 = vld [vmem:[%s7 + $0x1e0] sm:$0xff]
      %v3090 = vld [vmem:[%s7 + $0x1e8] sm:$0xff]
      %v3091 = vld [vmem:[%s7 + $0x1f0] sm:$0xff]
      %v3092 = vld [vmem:[%s7 + $0x1f8] sm:$0xff]
      %v3093 = vld [vmem:[%s7 + $0x200] sm:$0xff]
      %v3094 = vld [vmem:[%s7 + $0x208] sm:$0xff]
      %v3095 = vld [vmem:[%s7 + $0x210] sm:$0xff]
      %v3096 = vld [vmem:[%s7 + $0x218] sm:$0xff]
      %v3097 = vld [vmem:[%s7 + $0x220] sm:$0xff]
      %v3098 = vld [vmem:[%s7 + $0x228] sm:$0xff]
      %v3099 = vld [vmem:[%s7 + $0x230] sm:$0xff]
      %v3100 = vld [vmem:[%s7 + $0x238] sm:$0xff]
      %v3101 = vld [vmem:[%s7 + $0x240] sm:$0xff]
      %v3102 = vld [vmem:[%s7 + $0x248] sm:$0xff]
      %v3103 = vld [vmem:[%s7 + $0x250] sm:$0xff]
      %v3104 = vld [vmem:[%s7 + $0x258] sm:$0xff]
      %v3105 = vld [vmem:[%s7 + $0x260] sm:$0xff]
      %v3106 = vld [vmem:[%s7 + $0x268] sm:$0xff]
      %v3107 = vld [vmem:[%s7 + $0x270] sm:$0xff]
      %v3108 = vld [vmem:[%s7 + $0x278] sm:$0xff]
      %v3109 = vld [vmem:[%s7 + $0x280] sm:$0xff]
      %v3110 = vld [vmem:[%s7 + $0x288] sm:$0xff]
      %v3111 = vld [vmem:[%s7 + $0x290] sm:$0xff]
      %v3112 = vld [vmem:[%s7 + $0x298] sm:$0xff]
      %v3113 = vld [vmem:[%s7 + $0x2a0] sm:$0xff]
      %v3114 = vld [vmem:[%s7 + $0x2a8] sm:$0xff]
      %v3115 = vld [vmem:[%s7 + $0x2b0] sm:$0xff]
      %v3116 = vld [vmem:[%s7 + $0x2b8] sm:$0xff]
      %v3117 = vld [vmem:[%s7 + $0x2c0] sm:$0xff]
      %v3118 = vld [vmem:[%s7 + $0x2c8] sm:$0xff]
      %v3119 = vld [vmem:[%s7 + $0x2d0] sm:$0xff]
      %v3120 = vld [vmem:[%s7 + $0x2d8] sm:$0xff]
      %v3121 = vld [vmem:[%s7 + $0x2e0] sm:$0xff]
      %v3122 = vld [vmem:[%s7 + $0x2e8] sm:$0xff]
      %v3123 = vld [vmem:[%s7 + $0x2f0] sm:$0xff]
      %v3124 = vld [vmem:[%s7 + $0x2f8] sm:$0xff]
      %v3125 = vld [vmem:[%s7 + $0x300] sm:$0xff]
      %v3126 = vld [vmem:[%s7 + $0x308] sm:$0xff]
      %v3127 = vld [vmem:[%s7 + $0x310] sm:$0xff]
      %v3128 = vld [vmem:[%s7 + $0x318] sm:$0xff]
      %v3129 = vld [vmem:[%s7 + $0x320] sm:$0xff]
      %v3130 = vld [vmem:[%s7 + $0x328] sm:$0xff]
      %v3131 = vld [vmem:[%s7 + $0x330] sm:$0xff]
      %v3132 = vld [vmem:[%s7 + $0x338] sm:$0xff]
      %v3133 = vld [vmem:[%s7 + $0x340] sm:$0xff]
      %v3134 = vld [vmem:[%s7 + $0x348] sm:$0xff]
      %v3135 = vld [vmem:[%s7 + $0x350] sm:$0xff]
      %v3136 = vld [vmem:[%s7 + $0x358] sm:$0xff]
      %v3137 = vld [vmem:[%s7 + $0x360] sm:$0xff]
      %v3138 = vld [vmem:[%s7 + $0x368] sm:$0xff]
      %v3139 = vld [vmem:[%s7 + $0x370] sm:$0xff]
      %v3140 = vld [vmem:[%s7 + $0x378] sm:$0xff]
      %v3141 = vld [vmem:[%s7 + $0x380] sm:$0xff]
      %v3142 = vld [vmem:[%s7 + $0x388] sm:$0xff]
      %v3143 = vld [vmem:[%s7 + $0x390] sm:$0xff]
      %v3144 = vld [vmem:[%s7 + $0x398] sm:$0xff]
      %v3145 = vld [vmem:[%s7 + $0x3a0] sm:$0xff]
      %v3146 = vld [vmem:[%s7 + $0x3a8] sm:$0xff]
      %v3147 = vld [vmem:[%s7 + $0x3b0] sm:$0xff]
      %v3148 = vld [vmem:[%s7 + $0x3b8] sm:$0xff]
      %v3149 = vld [vmem:[%s7 + $0x3c0] sm:$0xff]
      %v3150 = vld [vmem:[%s7 + $0x3c8] sm:$0xff]
      %v3151 = vld [vmem:[%s7 + $0x3d0] sm:$0xff]
      %v3152 = vld [vmem:[%s7 + $0x3d8] sm:$0xff]
      %v3153 = vld [vmem:[%s7 + $0x3e0] sm:$0xff]
      %v3154 = vld [vmem:[%s7 + $0x3e8] sm:$0xff]
      %v3155 = vld [vmem:[%s7 + $0x3f0] sm:$0xff]
      %v3156 = vld [vmem:[%s7 + $0x3f8] sm:$0xff]
      %v3157 = vld [vmem:[%s7 + $0x400] sm:$0xff]
      %v3158 = vld [vmem:[%s7 + $0x408] sm:$0xff]
      %v3159 = vld [vmem:[%s7 + $0x410] sm:$0xff]
      %v3160 = vld [vmem:[%s7 + $0x418] sm:$0xff]
      %v3161 = vld [vmem:[%s7 + $0x420] sm:$0xff]
      %v3162 = vld [vmem:[%s7 + $0x428] sm:$0xff]
      %v3163 = vld [vmem:[%s7 + $0x430] sm:$0xff]
      %v3164 = vld [vmem:[%s7 + $0x438] sm:$0xff]
      %v3165 = vld [vmem:[%s7 + $0x440] sm:$0xff]
      %v3166 = vld [vmem:[%s7 + $0x448] sm:$0xff]
      %v3167 = vld [vmem:[%s7 + $0x450] sm:$0xff]
      %v3168 = vld [vmem:[%s7 + $0x458] sm:$0xff]
      %v3169 = vld [vmem:[%s7 + $0x460] sm:$0xff]
      %v3170 = vld [vmem:[%s7 + $0x468] sm:$0xff]
      %v3171 = vld [vmem:[%s7 + $0x470] sm:$0xff]
      %v3172 = vld [vmem:[%s7 + $0x478] sm:$0xff]
      %v3173 = vld [vmem:[%s7 + $0x480] sm:$0xff]
      %v3174 = vld [vmem:[%s7 + $0x488] sm:$0xff]
      %v3175 = vld [vmem:[%s7 + $0x490] sm:$0xff]
      %v3176 = vld [vmem:[%s7 + $0x498] sm:$0xff]
      %v3177 = vld [vmem:[%s7 + $0x4a0] sm:$0xff]
      %v3178 = vld [vmem:[%s7 + $0x4a8] sm:$0xff]
      %v3179 = vld [vmem:[%s7 + $0x4b0] sm:$0xff]
      %v3180 = vld [vmem:[%s7 + $0x4b8] sm:$0xff]
      %v3181 = vld [vmem:[%s7 + $0x4c0] sm:$0xff]
      %v3182 = vld [vmem:[%s7 + $0x4c8] sm:$0xff]
      %v3183 = vld [vmem:[%s7 + $0x4d0] sm:$0xff]
      %v3184 = vld [vmem:[%s7 + $0x4d8] sm:$0xff]
      %v3185 = vld [vmem:[%s7 + $0x4e0] sm:$0xff]
      %v3186 = vld [vmem:[%s7 + $0x4e8] sm:$0xff]
      %v3187 = vld [vmem:[%s7 + $0x4f0] sm:$0xff]
      %v3188 = vld [vmem:[%s7 + $0x4f8] sm:$0xff]
      %v3189 = vld [vmem:[%s7 + $0x500] sm:$0xff]
      %v3190 = vld [vmem:[%s7 + $0x508] sm:$0xff]
      %v3191 = vld [vmem:[%s7 + $0x510] sm:$0xff]
      %v3192 = vld [vmem:[%s7 + $0x518] sm:$0xff]
      %v3193 = vld [vmem:[%s7 + $0x520] sm:$0xff]
      %v3194 = vld [vmem:[%s7 + $0x528] sm:$0xff]
      %v3195 = vld [vmem:[%s7 + $0x530] sm:$0xff]
      %v3196 = vld [vmem:[%s7 + $0x538] sm:$0xff]
      %v3197 = vld [vmem:[%s7 + $0x540] sm:$0xff]
      %v3198 = vld [vmem:[%s7 + $0x548] sm:$0xff]
      %v3199 = vld [vmem:[%s7 + $0x550] sm:$0xff]
      %v3200 = vld [vmem:[%s7 + $0x558] sm:$0xff]
      %v3201 = vld [vmem:[%s7 + $0x560] sm:$0xff]
      %v3202 = vld [vmem:[%s7 + $0x568] sm:$0xff]
      %v3203 = vld [vmem:[%s7 + $0x570] sm:$0xff]
      %v3204 = vld [vmem:[%s7 + $0x578] sm:$0xff]
      %v3205 = vld [vmem:[%s7 + $0x580] sm:$0xff]
      %v3206 = vld [vmem:[%s7 + $0x588] sm:$0xff]
      %v3207 = vld [vmem:[%s7 + $0x590] sm:$0xff]
      %v3208 = vld [vmem:[%s7 + $0x598] sm:$0xff]
      %v3209 = vld [vmem:[%s7 + $0x5a0] sm:$0xff]
      %v3210 = vld [vmem:[%s7 + $0x5a8] sm:$0xff]
      %v3211 = vld [vmem:[%s7 + $0x5b0] sm:$0xff]
      %v3212 = vld [vmem:[%s7 + $0x5b8] sm:$0xff]
      %v3213 = vld [vmem:[%s7 + $0x5c0] sm:$0xff]
      %v3214 = vld [vmem:[%s7 + $0x5c8] sm:$0xff]
      %v3215 = vld [vmem:[%s7 + $0x5d0] sm:$0xff]
      %v3216 = vld [vmem:[%s7 + $0x5d8] sm:$0xff]
      %v3217 = vld [vmem:[%s7 + $0x5e0] sm:$0xff]
      %v3218 = vld [vmem:[%s7 + $0x5e8] sm:$0xff]
      %v3219 = vld [vmem:[%s7 + $0x5f0] sm:$0xff]
      %v3220 = vld [vmem:[%s7 + $0x5f8] sm:$0xff]
      %v3221 = vld [vmem:[%s7 + $0x600] sm:$0xff]
      %v3222 = vld [vmem:[%s7 + $0x608] sm:$0xff]
      %v3223 = vld [vmem:[%s7 + $0x610] sm:$0xff]
      %v3224 = vld [vmem:[%s7 + $0x618] sm:$0xff]
      %v3225 = vld [vmem:[%s7 + $0x620] sm:$0xff]
      %v3226 = vld [vmem:[%s7 + $0x628] sm:$0xff]
      %v3227 = vld [vmem:[%s7 + $0x630] sm:$0xff]
      %v3228 = vld [vmem:[%s7 + $0x638] sm:$0xff]
      %v3229 = vld [vmem:[%s7 + $0x640] sm:$0xff]
      %v3230 = vld [vmem:[%s7 + $0x648] sm:$0xff]
      %v3231 = vld [vmem:[%s7 + $0x650] sm:$0xff]
      %v3232 = vld [vmem:[%s7 + $0x658] sm:$0xff]
      %v3233 = vld [vmem:[%s7 + $0x660] sm:$0xff]
      %v3234 = vld [vmem:[%s7 + $0x668] sm:$0xff]
      %v3235 = vld [vmem:[%s7 + $0x670] sm:$0xff]
      %v3236 = vld [vmem:[%s7 + $0x678] sm:$0xff]
      %v3237 = vld [vmem:[%s7 + $0x680] sm:$0xff]
      %v3238 = vld [vmem:[%s7 + $0x688] sm:$0xff]
      %v3239 = vld [vmem:[%s7 + $0x690] sm:$0xff]
      %v3240 = vld [vmem:[%s7 + $0x698] sm:$0xff]
      %v3241 = vld [vmem:[%s7 + $0x6a0] sm:$0xff]
      %v3242 = vld [vmem:[%s7 + $0x6a8] sm:$0xff]
      %v3243 = vld [vmem:[%s7 + $0x6b0] sm:$0xff]
      %v3244 = vld [vmem:[%s7 + $0x6b8] sm:$0xff]
      %v3245 = vld [vmem:[%s7 + $0x6c0] sm:$0xff]
      %v3246 = vld [vmem:[%s7 + $0x6c8] sm:$0xff]
      %v3247 = vld [vmem:[%s7 + $0x6d0] sm:$0xff]
      %v3248 = vld [vmem:[%s7 + $0x6d8] sm:$0xff]
      %v3249 = vld [vmem:[%s7 + $0x6e0] sm:$0xff]
      %v3250 = vld [vmem:[%s7 + $0x6e8] sm:$0xff]
      %v3251 = vld [vmem:[%s7 + $0x6f0] sm:$0xff]
      %v3252 = vld [vmem:[%s7 + $0x6f8] sm:$0xff]
      %v3253 = vld [vmem:[%s7 + $0x700] sm:$0xff]
      %v3254 = vld [vmem:[%s7 + $0x708] sm:$0xff]
      %v3255 = vld [vmem:[%s7 + $0x710] sm:$0xff]
      %v3256 = vld [vmem:[%s7 + $0x718] sm:$0xff]
      %v3257 = vld [vmem:[%s7 + $0x720] sm:$0xff]
      %v3258 = vld [vmem:[%s7 + $0x728] sm:$0xff]
      %v3259 = vld [vmem:[%s7 + $0x730] sm:$0xff]
      %v3260 = vld [vmem:[%s7 + $0x738] sm:$0xff]
      %v3261 = vld [vmem:[%s7 + $0x740] sm:$0xff]
      %v3262 = vld [vmem:[%s7 + $0x748] sm:$0xff]
      %v3263 = vld [vmem:[%s7 + $0x750] sm:$0xff]
      %v3264 = vld [vmem:[%s7 + $0x758] sm:$0xff]
      %v3265 = vld [vmem:[%s7 + $0x760] sm:$0xff]
      %v3266 = vld [vmem:[%s7 + $0x768] sm:$0xff]
      %v3267 = vld [vmem:[%s7 + $0x770] sm:$0xff]
      %v3268 = vld [vmem:[%s7 + $0x778] sm:$0xff]
      %v3269 = vld [vmem:[%s7 + $0x780] sm:$0xff]
      %v3270 = vld [vmem:[%s7 + $0x788] sm:$0xff]
      %v3271 = vld [vmem:[%s7 + $0x790] sm:$0xff]
      %v3272 = vld [vmem:[%s7 + $0x798] sm:$0xff]
      %v3273 = vld [vmem:[%s7 + $0x7a0] sm:$0xff]
      %v3274 = vld [vmem:[%s7 + $0x7a8] sm:$0xff]
      %v3275 = vld [vmem:[%s7 + $0x7b0] sm:$0xff]
      %v3276 = vld [vmem:[%s7 + $0x7b8] sm:$0xff]
      %v3277 = vld [vmem:[%s7 + $0x7c0] sm:$0xff]
      %v3278 = vld [vmem:[%s7 + $0x7c8] sm:$0xff]
      %v3279 = vld [vmem:[%s7 + $0x7d0] sm:$0xff]
      %v3280 = vld [vmem:[%s7 + $0x7d8] sm:$0xff]
      %v3281 = vld [vmem:[%s7 + $0x7e0] sm:$0xff]
      %v3282 = vld [vmem:[%s7 + $0x7e8] sm:$0xff]
      %v3283 = vld [vmem:[%s7 + $0x7f0] sm:$0xff]
      %v3284 = vld [vmem:[%s7 + $0x7f8] sm:$0xff]
      %v3285 = vld [vmem:[%s7 + $0x800] sm:$0xff]
      %v3286 = vld [vmem:[%s7 + $0x808] sm:$0xff]
      %v3287 = vld [vmem:[%s7 + $0x810] sm:$0xff]
      %v3288 = vld [vmem:[%s7 + $0x818] sm:$0xff]
      %v3289 = vld [vmem:[%s7 + $0x820] sm:$0xff]
      %v3290 = vld [vmem:[%s7 + $0x828] sm:$0xff]
      %v3291 = vld [vmem:[%s7 + $0x830] sm:$0xff]
      %v3292 = vld [vmem:[%s7 + $0x838] sm:$0xff]
      %v3293 = vld [vmem:[%s7 + $0x840] sm:$0xff]
      %v3294 = vld [vmem:[%s7 + $0x848] sm:$0xff]
      %v3295 = vld [vmem:[%s7 + $0x850] sm:$0xff]
      %v3296 = vld [vmem:[%s7 + $0x858] sm:$0xff]
      %v3297 = vld [vmem:[%s7 + $0x860] sm:$0xff]
      %v3298 = vld [vmem:[%s7 + $0x868] sm:$0xff]
      %v3299 = vld [vmem:[%s7 + $0x870] sm:$0xff]
      %v3300 = vld [vmem:[%s7 + $0x878] sm:$0xff]
      %v3301 = vld [vmem:[%s7 + $0x880] sm:$0xff]
      %v3302 = vld [vmem:[%s7 + $0x888] sm:$0xff]
      %v3303 = vld [vmem:[%s7 + $0x890] sm:$0xff]
      %v3304 = vld [vmem:[%s7 + $0x898] sm:$0xff]
      %v3305 = vld [vmem:[%s7 + $0x8a0] sm:$0xff]
      %v3306 = vld [vmem:[%s7 + $0x8a8] sm:$0xff]
      %v3307 = vld [vmem:[%s7 + $0x8b0] sm:$0xff]
      %v3308 = vld [vmem:[%s7 + $0x8b8] sm:$0xff]
      %v3309 = vld [vmem:[%s7 + $0x8c0] sm:$0xff]
      %v3310 = vld [vmem:[%s7 + $0x8c8] sm:$0xff]
      %v3311 = vld [vmem:[%s7 + $0x8d0] sm:$0xff]
      %v3312 = vld [vmem:[%s7 + $0x8d8] sm:$0xff]
      %v3313 = vld [vmem:[%s7 + $0x8e0] sm:$0xff]
      %v3314 = vld [vmem:[%s7 + $0x8e8] sm:$0xff]
      %v3315 = vld [vmem:[%s7 + $0x8f0] sm:$0xff]
      %v3316 = vld [vmem:[%s7 + $0x8f8] sm:$0xff]
      %v3317 = vld [vmem:[%s7 + $0x900] sm:$0xff]
      %v3318 = vld [vmem:[%s7 + $0x908] sm:$0xff]
      %v3319 = vld [vmem:[%s7 + $0x910] sm:$0xff]
      %v3320 = vld [vmem:[%s7 + $0x918] sm:$0xff]
      %v3321 = vld [vmem:[%s7 + $0x920] sm:$0xff]
      %v3322 = vld [vmem:[%s7 + $0x928] sm:$0xff]
      %v3323 = vld [vmem:[%s7 + $0x930] sm:$0xff]
      %v3324 = vld [vmem:[%s7 + $0x938] sm:$0xff]
      %v3325 = vld [vmem:[%s7 + $0x940] sm:$0xff]
      %v3326 = vld [vmem:[%s7 + $0x948] sm:$0xff]
      %v3327 = vld [vmem:[%s7 + $0x950] sm:$0xff]
      %v3328 = vld [vmem:[%s7 + $0x958] sm:$0xff]
      %v3329 = vld [vmem:[%s7 + $0x960] sm:$0xff]
      %v3330 = vld [vmem:[%s7 + $0x968] sm:$0xff]
      %v3331 = vld [vmem:[%s7 + $0x970] sm:$0xff]
      %v3332 = vld [vmem:[%s7 + $0x978] sm:$0xff]
      %v3333 = vld [vmem:[%s7 + $0x980] sm:$0xff]
      %v3334 = vld [vmem:[%s7 + $0x988] sm:$0xff]
      %v3335 = vld [vmem:[%s7 + $0x990] sm:$0xff]
      %v3336 = vld [vmem:[%s7 + $0x998] sm:$0xff]
      %v3337 = vld [vmem:[%s7 + $0x9a0] sm:$0xff]
      %v3338 = vld [vmem:[%s7 + $0x9a8] sm:$0xff]
      %v3339 = vld [vmem:[%s7 + $0x9b0] sm:$0xff]
      %v3340 = vld [vmem:[%s7 + $0x9b8] sm:$0xff]
      %v3341 = vld [vmem:[%s7 + $0x9c0] sm:$0xff]
      %v3342 = vld [vmem:[%s7 + $0x9c8] sm:$0xff]
      %v3343 = vld [vmem:[%s7 + $0x9d0] sm:$0xff]
      %v3344 = vld [vmem:[%s7 + $0x9d8] sm:$0xff]
      %v3345 = vld [vmem:[%s7 + $0x9e0] sm:$0xff]
      %v3346 = vld [vmem:[%s7 + $0x9e8] sm:$0xff]
      %v3347 = vld [vmem:[%s7 + $0x9f0] sm:$0xff]
      %v3348 = vld [vmem:[%s7 + $0x9f8] sm:$0xff]
      %v3349 = vld [vmem:[%s7 + $0xa00] sm:$0xff]
      %v3350 = vld [vmem:[%s7 + $0xa08] sm:$0xff]
      %v3351 = vld [vmem:[%s7 + $0xa10] sm:$0xff]
      %v3352 = vld [vmem:[%s7 + $0xa18] sm:$0xff]
      %v3353 = vld [vmem:[%s7 + $0xa20] sm:$0x1f]
      %v3354 = vld [vmem:[%s7 + $0xa28] sm:$0x1f]
      %v3355 = vld [vmem:[%s7 + $0xa30] sm:$0x1f]
      %vm3356 = vcmask 826368
      %v3358 = vsel %vm3356, %v3007, 0
      %v3361 = vsel %vm3356, %v3014, 0
      %v3364 = vsel %vm3356, %v3021, 0
      %v3367 = vsel %vm3356, %v3028, 0
      %vm3369 = vcmask 1044480
      %v3371 = vsel %vm3369, %v3353, 0
      %v3374 = vsel %vm3369, %v3354, 0
      %v3377 = vsel %vm3369, %v3355, 0
      %3379 = vmatprep.subr.mxu0 %v3030
      %3380 = vmatpush1.msra.mxu0 %v3029
      %3381 = vmatprep.subr.mxu0 %v3033
      %3382 = vmatpush1.msra.mxu0 %v3032
      %3383 = vmatprep.subr.mxu0 %v3036
      %3384 = vmatpush1.msra.mxu0 %v3035
      %3385 = vmatprep.subr.mxu0 %v3039
      %3386 = vmatpush1.msra.mxu0 %v3038
      %3387 = vmatprep.subr.mxu0 %v3042
      %3388 = vmatpush1.msra.mxu0 %v3041
      %3389 = vmatprep.subr.mxu0 %v3045
      %3390 = vmatpush1.msra.mxu0 %v3044
      %3391 = vmatprep.subr.mxu0 %v3048
      %3392 = vmatpush1.msra.mxu0 %v3047
      %3393 = vmatprep.subr.mxu0 %v3051
      %3394 = vmatpush1.msra.mxu0 %v3050
      %3395 = vmatprep.subr.mxu0 %v3054
      %3396 = vmatpush1.msra.mxu0 %v3053
      %3397 = vmatprep.subr.mxu0 %v3057
      %3398 = vmatpush1.msra.mxu0 %v3056
      %3399 = vmatprep.subr.mxu0 %v3060
      %3400 = vmatpush1.msra.mxu0 %v3059
      %3401 = vmatprep.subr.mxu0 %v3063
      %3402 = vmatpush1.msra.mxu0 %v3062
      %3403 = vmatprep.subr.mxu0 %v3066
      %3404 = vmatpush1.msra.mxu0 %v3065
      %3405 = vmatprep.subr.mxu0 %v3069
      %3406 = vmatpush1.msra.mxu0 %v3068
      %3407 = vmatprep.subr.mxu0 %v3072
      %3408 = vmatpush1.msra.mxu0 %v3071
      %3409 = vmatprep.subr.mxu0 %v3075
      %3410 = vmatpush1.msra.mxu0 %v3074
      %3411 = vmatprep.subr.mxu0 %v3078
      %3412 = vmatpush1.msra.mxu0 %v3077
      %3413 = vmatprep.subr.mxu0 %v3081
      %3414 = vmatpush1.msra.mxu0 %v3080
      %3415 = vmatprep.subr.mxu0 %v3084
      %3416 = vmatpush1.msra.mxu0 %v3083
      %3417 = vmatprep.subr.mxu0 %v3087
      %3418 = vmatpush1.msra.mxu0 %v3086
      %3419 = vmatprep.subr.mxu0 %v3090
      %3420 = vmatpush1.msra.mxu0 %v3089
      %3421 = vmatprep.subr.mxu0 %v3093
      %3422 = vmatpush1.msra.mxu0 %v3092
      %3423 = vmatprep.subr.mxu0 %v3096
      %3424 = vmatpush1.msra.mxu0 %v3095
      %3425 = vmatprep.subr.mxu0 %v3099
      %3426 = vmatpush1.msra.mxu0 %v3098
      %3427 = vmatprep.subr.mxu0 %v3102
      %3428 = vmatpush1.msra.mxu0 %v3101
      %3429 = vmatprep.subr.mxu0 %v3105
      %3430 = vmatpush1.msra.mxu0 %v3104
      %3431 = vmatprep.subr.mxu0 %v3108
      %3432 = vmatpush1.msra.mxu0 %v3107
      %3433 = vmatprep.subr.mxu0 %v3111
      %3434 = vmatpush1.msra.mxu0 %v3110
      %3435 = vmatprep.subr.mxu0 %v3114
      %3436 = vmatpush1.msra.mxu0 %v3113
      %3437 = vmatprep.subr.mxu0 %v3117
      %3438 = vmatpush1.msra.mxu0 %v3116
      %3439 = vmatprep.subr.mxu0 %v3120
      %3440 = vmatpush1.msra.mxu0 %v3119
      %3441 = vmatprep.subr.mxu0 %v3123
      %3442 = vmatpush1.msra.mxu0 %v3122
      %3443 = vmatprep.mubr.f32.mxu0 %v3002
      %3444 = vmatmul.mubr.f32.gmra.mrb[0].mxu0 %v3001
      %v3445 = vpop.f32.mrb[0].mxu0
      %v3446 = vadd.f32 0.0, %v3445
      %v3447 = vpop.f32.mrb[0].mxu0
      %v3448 = vadd.f32 0.0, %v3447
      %3449 = vmatprep.mubr.f32.mxu0 %v3009
      %3450 = vmatmul.mubr.f32.gmra.mrb[0].mxu0 %v3008
      %v3451 = vpop.f32.mrb[0].mxu0
      %v3452 = vadd.f32 0.0, %v3451
      %v3453 = vpop.f32.mrb[0].mxu0
      %v3454 = vadd.f32 0.0, %v3453
      %3455 = vmatprep.mubr.f32.mxu0 %v3016
      %3456 = vmatmul.mubr.f32.gmra.mrb[0].mxu0 %v3015
      %v3457 = vpop.f32.mrb[0].mxu0
      %v3458 = vadd.f32 0.0, %v3457
      %v3459 = vpop.f32.mrb[0].mxu0
      %v3460 = vadd.f32 0.0, %v3459
      %3461 = vmatprep.mubr.f32.mxu0 %v3023
      %3462 = vmatmul.mubr.f32.gmra.mrb[0].mxu0 %v3022
      %v3463 = vpop.f32.mrb[0].mxu0
      %v3464 = vadd.f32 0.0, %v3463
      %v3465 = vpop.f32.mrb[0].mxu0
      %v3466 = vadd.f32 0.0, %v3465
      %3467 = vdwg.mxu0
      %3468 = vmatprep.subr.mxu0 %v3126
      %3469 = vmatpush1.msra.mxu0 %v3125
      %3470 = vmatprep.subr.mxu0 %v3129
      %3471 = vmatpush1.msra.mxu0 %v3128
      %3472 = vmatprep.subr.mxu0 %v3132
      %3473 = vmatpush1.msra.mxu0 %v3131
      %3474 = vmatprep.subr.mxu0 %v3135
      %3475 = vmatpush1.msra.mxu0 %v3134
      %3476 = vmatprep.subr.mxu0 %v3138
      %3477 = vmatpush1.msra.mxu0 %v3137
      %3478 = vmatprep.subr.mxu0 %v3141
      %3479 = vmatpush1.msra.mxu0 %v3140
      %3480 = vmatprep.subr.mxu0 %v3144
      %3481 = vmatpush1.msra.mxu0 %v3143
      %3482 = vmatprep.subr.mxu0 %v3147
      %3483 = vmatpush1.msra.mxu0 %v3146
      %3484 = vmatprep.subr.mxu0 %v3150
      %3485 = vmatpush1.msra.mxu0 %v3149
      %3486 = vmatprep.subr.mxu0 %v3153
      %3487 = vmatpush1.msra.mxu0 %v3152
      %3488 = vmatprep.subr.mxu0 %v3156
      %3489 = vmatpush1.msra.mxu0 %v3155
      %3490 = vmatprep.subr.mxu0 %v3159
      %3491 = vmatpush1.msra.mxu0 %v3158
      %3492 = vmatprep.subr.mxu0 %v3162
      %3493 = vmatpush1.msra.mxu0 %v3161
      %3494 = vmatprep.subr.mxu0 %v3165
      %3495 = vmatpush1.msra.mxu0 %v3164
      %3496 = vmatprep.subr.mxu0 %v3168
      %3497 = vmatpush1.msra.mxu0 %v3167
      %3498 = vmatprep.subr.mxu0 %v3171
      %3499 = vmatpush1.msra.mxu0 %v3170
      %3500 = vmatprep.subr.mxu0 %v3174
      %3501 = vmatpush1.msra.mxu0 %v3173
      %3502 = vmatprep.subr.mxu0 %v3177
      %3503 = vmatpush1.msra.mxu0 %v3176
      %3504 = vmatprep.subr.mxu0 %v3180
      %3505 = vmatpush1.msra.mxu0 %v3179
      %3506 = vmatprep.subr.mxu0 %v3183
      %3507 = vmatpush1.msra.mxu0 %v3182
      %3508 = vmatprep.subr.mxu0 %v3186
      %3509 = vmatpush1.msra.mxu0 %v3185
      %3510 = vmatprep.subr.mxu0 %v3189
      %3511 = vmatpush1.msra.mxu0 %v3188
      %3512 = vmatprep.subr.mxu0 %v3192
      %3513 = vmatpush1.msra.mxu0 %v3191
      %3514 = vmatprep.subr.mxu0 %v3195
      %3515 = vmatpush1.msra.mxu0 %v3194
      %3516 = vmatprep.subr.mxu0 %v3198
      %3517 = vmatpush1.msra.mxu0 %v3197
      %3518 = vmatprep.subr.mxu0 %v3201
      %3519 = vmatpush1.msra.mxu0 %v3200
      %3520 = vmatprep.subr.mxu0 %v3204
      %3521 = vmatpush1.msra.mxu0 %v3203
      %3522 = vmatprep.subr.mxu0 %v3207
      %3523 = vmatpush1.msra.mxu0 %v3206
      %3524 = vmatprep.subr.mxu0 %v3210
      %3525 = vmatpush1.msra.mxu0 %v3209
      %3526 = vmatprep.subr.mxu0 %v3213
      %3527 = vmatpush1.msra.mxu0 %v3212
      %3528 = vmatprep.subr.mxu0 %v3216
      %3529 = vmatpush1.msra.mxu0 %v3215
      %3530 = vmatprep.subr.mxu0 %v3219
      %3531 = vmatpush1.msra.mxu0 %v3218
      %3532 = vmatprep.mubr.f32.mxu0 %v3004
      %3533 = vmatmul.mubr.f32.gmra.mrb[0].mxu0 %v3003
      %v3534 = vpop.f32.mrb[0].mxu0
      %v3535 = vadd.f32 %v3446, %v3534
      %v3536 = vpop.f32.mrb[0].mxu0
      %v3537 = vadd.f32 %v3448, %v3536
      %3538 = vmatprep.mubr.f32.mxu0 %v3011
      %3539 = vmatmul.mubr.f32.gmra.mrb[0].mxu0 %v3010
      %v3540 = vpop.f32.mrb[0].mxu0
      %v3541 = vadd.f32 %v3452, %v3540
      %v3542 = vpop.f32.mrb[0].mxu0
      %v3543 = vadd.f32 %v3454, %v3542
      %3544 = vmatprep.mubr.f32.mxu0 %v3018
      %3545 = vmatmul.mubr.f32.gmra.mrb[0].mxu0 %v3017
      %v3546 = vpop.f32.mrb[0].mxu0
      %v3547 = vadd.f32 %v3458, %v3546
      %v3548 = vpop.f32.mrb[0].mxu0
      %v3549 = vadd.f32 %v3460, %v3548
      %3550 = vmatprep.mubr.f32.mxu0 %v3025
      %3551 = vmatmul.mubr.f32.gmra.mrb[0].mxu0 %v3024
      %v3552 = vpop.f32.mrb[0].mxu0
      %v3553 = vadd.f32 %v3464, %v3552
      %v3554 = vpop.f32.mrb[0].mxu0
      %v3555 = vadd.f32 %v3466, %v3554
      %3556 = vdwg.mxu0
      %3557 = vmatprep.subr.mxu0 %v3222
      %3558 = vmatpush1.msra.mxu0 %v3221
      %3559 = vmatprep.subr.mxu0 %v3225
      %3560 = vmatpush1.msra.mxu0 %v3224
      %3561 = vmatprep.subr.mxu0 %v3228
      %3562 = vmatpush1.msra.mxu0 %v3227
      %3563 = vmatprep.subr.mxu0 %v3231
      %3564 = vmatpush1.msra.mxu0 %v3230
      %3565 = vmatprep.subr.mxu0 %v3234
      %3566 = vmatpush1.msra.mxu0 %v3233
      %3567 = vmatprep.subr.mxu0 %v3237
      %3568 = vmatpush1.msra.mxu0 %v3236
      %3569 = vmatprep.subr.mxu0 %v3240
      %3570 = vmatpush1.msra.mxu0 %v3239
      %3571 = vmatprep.subr.mxu0 %v3243
      %3572 = vmatpush1.msra.mxu0 %v3242
      %3573 = vmatprep.subr.mxu0 %v3246
      %3574 = vmatpush1.msra.mxu0 %v3245
      %3575 = vmatprep.subr.mxu0 %v3249
      %3576 = vmatpush1.msra.mxu0 %v3248
      %3577 = vmatprep.subr.mxu0 %v3252
      %3578 = vmatpush1.msra.mxu0 %v3251
      %3579 = vmatprep.subr.mxu0 %v3255
      %3580 = vmatpush1.msra.mxu0 %v3254
      %3581 = vmatprep.subr.mxu0 %v3258
      %3582 = vmatpush1.msra.mxu0 %v3257
      %3583 = vmatprep.subr.mxu0 %v3261
      %3584 = vmatpush1.msra.mxu0 %v3260
      %3585 = vmatprep.subr.mxu0 %v3264
      %3586 = vmatpush1.msra.mxu0 %v3263
      %3587 = vmatprep.subr.mxu0 %v3267
      %3588 = vmatpush1.msra.mxu0 %v3266
      %3589 = vmatprep.subr.mxu0 %v3270
      %3590 = vmatpush1.msra.mxu0 %v3269
      %3591 = vmatprep.subr.mxu0 %v3273
      %3592 = vmatpush1.msra.mxu0 %v3272
      %3593 = vmatprep.subr.mxu0 %v3276
      %3594 = vmatpush1.msra.mxu0 %v3275
      %3595 = vmatprep.subr.mxu0 %v3279
      %3596 = vmatpush1.msra.mxu0 %v3278
      %3597 = vmatprep.subr.mxu0 %v3282
      %3598 = vmatpush1.msra.mxu0 %v3281
      %3599 = vmatprep.subr.mxu0 %v3285
      %3600 = vmatpush1.msra.mxu0 %v3284
      %3601 = vmatprep.subr.mxu0 %v3288
      %3602 = vmatpush1.msra.mxu0 %v3287
      %3603 = vmatprep.subr.mxu0 %v3291
      %3604 = vmatpush1.msra.mxu0 %v3290
      %3605 = vmatprep.subr.mxu0 %v3294
      %3606 = vmatpush1.msra.mxu0 %v3293
      %3607 = vmatprep.subr.mxu0 %v3297
      %3608 = vmatpush1.msra.mxu0 %v3296
      %3609 = vmatprep.subr.mxu0 %v3300
      %3610 = vmatpush1.msra.mxu0 %v3299
      %3611 = vmatprep.subr.mxu0 %v3303
      %3612 = vmatpush1.msra.mxu0 %v3302
      %3613 = vmatprep.subr.mxu0 %v3306
      %3614 = vmatpush1.msra.mxu0 %v3305
      %3615 = vmatprep.subr.mxu0 %v3309
      %3616 = vmatpush1.msra.mxu0 %v3308
      %3617 = vmatprep.subr.mxu0 %v3312
      %3618 = vmatpush1.msra.mxu0 %v3311
      %3619 = vmatprep.subr.mxu0 %v3315
      %3620 = vmatpush1.msra.mxu0 %v3314
      %3621 = vmatprep.mubr.f32.mxu0 %v3006
      %3622 = vmatmul.mubr.f32.gmra.mrb[0].mxu0 %v3005
      %v3623 = vpop.f32.mrb[0].mxu0
      %v3624 = vadd.f32 %v3535, %v3623
      %v3625 = vpop.f32.mrb[0].mxu0
      %v3626 = vadd.f32 %v3537, %v3625
      %3627 = vmatprep.mubr.f32.mxu0 %v3013
      %3628 = vmatmul.mubr.f32.gmra.mrb[0].mxu0 %v3012
      %v3629 = vpop.f32.mrb[0].mxu0
      %v3630 = vadd.f32 %v3541, %v3629
      %v3631 = vpop.f32.mrb[0].mxu0
      %v3632 = vadd.f32 %v3543, %v3631
      %3633 = vmatprep.mubr.f32.mxu0 %v3020
      %3634 = vmatmul.mubr.f32.gmra.mrb[0].mxu0 %v3019
      %v3635 = vpop.f32.mrb[0].mxu0
      %v3636 = vadd.f32 %v3547, %v3635
      %v3637 = vpop.f32.mrb[0].mxu0
      %v3638 = vadd.f32 %v3549, %v3637
      %3639 = vmatprep.mubr.f32.mxu0 %v3027
      %3640 = vmatmul.mubr.f32.gmra.mrb[0].mxu0 %v3026
      %v3641 = vpop.f32.mrb[0].mxu0
      %v3642 = vadd.f32 %v3553, %v3641
      %v3643 = vpop.f32.mrb[0].mxu0
      %v3644 = vadd.f32 %v3555, %v3643
      %3645 = vdwg.mxu0
      %3646 = vmatprep.subr.mxu0 %v3318
      %3647 = vmatpush1.msra.mxu0 %v3317
      %3648 = vmatprep.subr.mxu0 %v3321
      %3649 = vmatpush1.msra.mxu0 %v3320
      %3650 = vmatprep.subr.mxu0 %v3324
      %3651 = vmatpush1.msra.mxu0 %v3323
      %3652 = vmatprep.subr.mxu0 %v3327
      %3653 = vmatpush1.msra.mxu0 %v3326
      %3654 = vmatprep.subr.mxu0 %v3330
      %3655 = vmatpush1.msra.mxu0 %v3329
      %3656 = vmatprep.subr.mxu0 %v3333
      %3657 = vmatpush1.msra.mxu0 %v3332
      %3658 = vmatprep.subr.mxu0 %v3336
      %3659 = vmatpush1.msra.mxu0 %v3335
      %3660 = vmatprep.subr.mxu0 %v3339
      %3661 = vmatpush1.msra.mxu0 %v3338
      %3662 = vmatprep.subr.mxu0 %v3342
      %3663 = vmatpush1.msra.mxu0 %v3341
      %3664 = vmatprep.subr.mxu0 %v3345
      %3665 = vmatpush1.msra.mxu0 %v3344
      %3666 = vmatprep.subr.mxu0 %v3348
      %3667 = vmatpush1.msra.mxu0 %v3347
      %3668 = vmatprep.subr.mxu0 %v3351
      %3669 = vmatpush1.msra.mxu0 %v3350
      %3670 = vmatprep.subr.mxu0 %v3374
      %3671 = vmatpush1.msra.mxu0 %v3371
      %3672 = vmatprep.subr.mxu0 0.0
      %3673 = vmatpush1.msra.mxu0 0.0
      %3674 = vmatprep.subr.mxu0 0.0
      %3675 = vmatpush1.msra.mxu0 0.0
      %3676 = vmatprep.subr.mxu0 0.0
      %3677 = vmatpush1.msra.mxu0 0.0
      %3678 = vmatprep.subr.mxu0 0.0
      %3679 = vmatpush1.msra.mxu0 0.0
      %3680 = vmatprep.subr.mxu0 0.0
      %3681 = vmatpush1.msra.mxu0 0.0
      %3682 = vmatprep.subr.mxu0 0.0
      %3683 = vmatpush1.msra.mxu0 0.0
      %3684 = vmatprep.subr.mxu0 0.0
      %3685 = vmatpush1.msra.mxu0 0.0
      %3686 = vmatprep.subr.mxu0 0.0
      %3687 = vmatpush1.msra.mxu0 0.0
      %3688 = vmatprep.subr.mxu0 0.0
      %3689 = vmatpush1.msra.mxu0 0.0
      %3690 = vmatprep.subr.mxu0 0.0
      %3691 = vmatpush1.msra.mxu0 0.0
      %3692 = vmatprep.subr.mxu0 0.0
      %3693 = vmatpush1.msra.mxu0 0.0
      %3694 = vmatprep.subr.mxu0 0.0
      %3695 = vmatpush1.msra.mxu0 0.0
      %3696 = vmatprep.subr.mxu0 0.0
      %3697 = vmatpush1.msra.mxu0 0.0
      %3698 = vmatprep.subr.mxu0 0.0
      %3699 = vmatpush1.msra.mxu0 0.0
      %3700 = vmatprep.subr.mxu0 0.0
      %3701 = vmatpush1.msra.mxu0 0.0
      %3702 = vmatprep.subr.mxu0 0.0
      %3703 = vmatpush1.msra.mxu0 0.0
      %3704 = vmatprep.subr.mxu0 0.0
      %3705 = vmatpush1.msra.mxu0 0.0
      %3706 = vmatprep.subr.mxu0 0.0
      %3707 = vmatpush1.msra.mxu0 0.0
      %3708 = vmatprep.subr.mxu0 0.0
      %3709 = vmatpush1.msra.mxu0 0.0
      %3710 = vmatprep.mubr.f32.mxu0 0.0
      %3711 = vmatmul.mubr.f32.gmra.mrb[0].mxu0 %v3358
      %v3712 = vpop.f32.mrb[0].mxu0
      %v3713 = vadd.f32 %v3624, %v3712
      %v3714 = vpop.f32.mrb[0].mxu0
      %v3715 = vadd.f32 %v3626, %v3714
      %3716 = vmatprep.mubr.f32.mxu0 0.0
      %3717 = vmatmul.mubr.f32.gmra.mrb[0].mxu0 %v3361
      %v3718 = vpop.f32.mrb[0].mxu0
      %v3719 = vadd.f32 %v3630, %v3718
      %v3720 = vpop.f32.mrb[0].mxu0
      %v3721 = vadd.f32 %v3632, %v3720
      %3722 = vmatprep.mubr.f32.mxu0 0.0
      %3723 = vmatmul.mubr.f32.gmra.mrb[0].mxu0 %v3364
      %v3724 = vpop.f32.mrb[0].mxu0
      %v3725 = vadd.f32 %v3636, %v3724
      %v3726 = vpop.f32.mrb[0].mxu0
      %v3727 = vadd.f32 %v3638, %v3726
      %3728 = vmatprep.mubr.f32.mxu0 0.0
      %3729 = vmatmul.mubr.f32.gmra.mrb[0].mxu0 %v3367
      %v3730 = vpop.f32.mrb[0].mxu0
      %v3731 = vadd.f32 %v3642, %v3730
      %v3732 = vpop.f32.mrb[0].mxu0
      %v3733 = vadd.f32 %v3644, %v3732
      %3734 = vdwg.mxu0
      %3735 = vmatprep.subr.mxu0 0.0
      %3736 = vmatpush1.msra.mxu0 %v3031
      %3737 = vmatprep.subr.mxu0 0.0
      %3738 = vmatpush1.msra.mxu0 %v3034
      %3739 = vmatprep.subr.mxu0 0.0
      %3740 = vmatpush1.msra.mxu0 %v3037
      %3741 = vmatprep.subr.mxu0 0.0
      %3742 = vmatpush1.msra.mxu0 %v3040
      %3743 = vmatprep.subr.mxu0 0.0
      %3744 = vmatpush1.msra.mxu0 %v3043
      %3745 = vmatprep.subr.mxu0 0.0
      %3746 = vmatpush1.msra.mxu0 %v3046
      %3747 = vmatprep.subr.mxu0 0.0
      %3748 = vmatpush1.msra.mxu0 %v3049
      %3749 = vmatprep.subr.mxu0 0.0
      %3750 = vmatpush1.msra.mxu0 %v3052
      %3751 = vmatprep.subr.mxu0 0.0
      %3752 = vmatpush1.msra.mxu0 %v3055
      %3753 = vmatprep.subr.mxu0 0.0
      %3754 = vmatpush1.msra.mxu0 %v3058
      %3755 = vmatprep.subr.mxu0 0.0
      %3756 = vmatpush1.msra.mxu0 %v3061
      %3757 = vmatprep.subr.mxu0 0.0
      %3758 = vmatpush1.msra.mxu0 %v3064
      %3759 = vmatprep.subr.mxu0 0.0
      %3760 = vmatpush1.msra.mxu0 %v3067
      %3761 = vmatprep.subr.mxu0 0.0
      %3762 = vmatpush1.msra.mxu0 %v3070
      %3763 = vmatprep.subr.mxu0 0.0
      %3764 = vmatpush1.msra.mxu0 %v3073
      %3765 = vmatprep.subr.mxu0 0.0
      %3766 = vmatpush1.msra.mxu0 %v3076
      %3767 = vmatprep.subr.mxu0 0.0
      %3768 = vmatpush1.msra.mxu0 %v3079
      %3769 = vmatprep.subr.mxu0 0.0
      %3770 = vmatpush1.msra.mxu0 %v3082
      %3771 = vmatprep.subr.mxu0 0.0
      %3772 = vmatpush1.msra.mxu0 %v3085
      %3773 = vmatprep.subr.mxu0 0.0
      %3774 = vmatpush1.msra.mxu0 %v3088
      %3775 = vmatprep.subr.mxu0 0.0
      %3776 = vmatpush1.msra.mxu0 %v3091
      %3777 = vmatprep.subr.mxu0 0.0
      %3778 = vmatpush1.msra.mxu0 %v3094
      %3779 = vmatprep.subr.mxu0 0.0
      %3780 = vmatpush1.msra.mxu0 %v3097
      %3781 = vmatprep.subr.mxu0 0.0
      %3782 = vmatpush1.msra.mxu0 %v3100
      %3783 = vmatprep.subr.mxu0 0.0
      %3784 = vmatpush1.msra.mxu0 %v3103
      %3785 = vmatprep.subr.mxu0 0.0
      %3786 = vmatpush1.msra.mxu0 %v3106
      %3787 = vmatprep.subr.mxu0 0.0
      %3788 = vmatpush1.msra.mxu0 %v3109
      %3789 = vmatprep.subr.mxu0 0.0
      %3790 = vmatpush1.msra.mxu0 %v3112
      %3791 = vmatprep.subr.mxu0 0.0
      %3792 = vmatpush1.msra.mxu0 %v3115
      %3793 = vmatprep.subr.mxu0 0.0
      %3794 = vmatpush1.msra.mxu0 %v3118
      %3795 = vmatprep.subr.mxu0 0.0
      %3796 = vmatpush1.msra.mxu0 %v3121
      %3797 = vmatprep.subr.mxu0 0.0
      %3798 = vmatpush1.msra.mxu0 %v3124
      %3799 = vmatprep.mubr.f32.mxu0 %v3002
      %3800 = vmatmul.mubr.f32.gmra.mrb[0].mxu0 %v3001
      %v3801 = vpop.f32.mrb[0].mxu0
      %v3802 = vadd.f32 0.0, %v3801
      %v3803 = vpop.f32.mrb[0].mxu0
      %3804 = vmatprep.mubr.f32.mxu0 %v3009
      %3805 = vmatmul.mubr.f32.gmra.mrb[0].mxu0 %v3008
      %v3806 = vpop.f32.mrb[0].mxu0
      %v3807 = vadd.f32 0.0, %v3806
      %v3808 = vpop.f32.mrb[0].mxu0
      %3809 = vmatprep.mubr.f32.mxu0 %v3016
      %3810 = vmatmul.mubr.f32.gmra.mrb[0].mxu0 %v3015
      %v3811 = vpop.f32.mrb[0].mxu0
      %v3812 = vadd.f32 0.0, %v3811
      %v3813 = vpop.f32.mrb[0].mxu0
      %3814 = vmatprep.mubr.f32.mxu0 %v3023
      %3815 = vmatmul.mubr.f32.gmra.mrb[0].mxu0 %v3022
      %v3816 = vpop.f32.mrb[0].mxu0
      %v3817 = vadd.f32 0.0, %v3816
      %v3818 = vpop.f32.mrb[0].mxu0
      %3819 = vdwg.mxu0
      %3820 = vmatprep.subr.mxu0 0.0
      %3821 = vmatpush1.msra.mxu0 %v3127
      %3822 = vmatprep.subr.mxu0 0.0
      %3823 = vmatpush1.msra.mxu0 %v3130
      %3824 = vmatprep.subr.mxu0 0.0
      %3825 = vmatpush1.msra.mxu0 %v3133
      %3826 = vmatprep.subr.mxu0 0.0
      %3827 = vmatpush1.msra.mxu0 %v3136
      %3828 = vmatprep.subr.mxu0 0.0
      %3829 = vmatpush1.msra.mxu0 %v3139
      %3830 = vmatprep.subr.mxu0 0.0
      %3831 = vmatpush1.msra.mxu0 %v3142
      %3832 = vmatprep.subr.mxu0 0.0
      %3833 = vmatpush1.msra.mxu0 %v3145
      %3834 = vmatprep.subr.mxu0 0.0
      %3835 = vmatpush1.msra.mxu0 %v3148
      %3836 = vmatprep.subr.mxu0 0.0
      %3837 = vmatpush1.msra.mxu0 %v3151
      %3838 = vmatprep.subr.mxu0 0.0
      %3839 = vmatpush1.msra.mxu0 %v3154
      %3840 = vmatprep.subr.mxu0 0.0
      %3841 = vmatpush1.msra.mxu0 %v3157
      %3842 = vmatprep.subr.mxu0 0.0
      %3843 = vmatpush1.msra.mxu0 %v3160
      %3844 = vmatprep.subr.mxu0 0.0
      %3845 = vmatpush1.msra.mxu0 %v3163
      %3846 = vmatprep.subr.mxu0 0.0
      %3847 = vmatpush1.msra.mxu0 %v3166
      %3848 = vmatprep.subr.mxu0 0.0
      %3849 = vmatpush1.msra.mxu0 %v3169
      %3850 = vmatprep.subr.mxu0 0.0
      %3851 = vmatpush1.msra.mxu0 %v3172
      %3852 = vmatprep.subr.mxu0 0.0
      %3853 = vmatpush1.msra.mxu0 %v3175
      %3854 = vmatprep.subr.mxu0 0.0
      %3855 = vmatpush1.msra.mxu0 %v3178
      %3856 = vmatprep.subr.mxu0 0.0
      %3857 = vmatpush1.msra.mxu0 %v3181
      %3858 = vmatprep.subr.mxu0 0.0
      %3859 = vmatpush1.msra.mxu0 %v3184
      %3860 = vmatprep.subr.mxu0 0.0
      %3861 = vmatpush1.msra.mxu0 %v3187
      %3862 = vmatprep.subr.mxu0 0.0
      %3863 = vmatpush1.msra.mxu0 %v3190
      %3864 = vmatprep.subr.mxu0 0.0
      %3865 = vmatpush1.msra.mxu0 %v3193
      %3866 = vmatprep.subr.mxu0 0.0
      %3867 = vmatpush1.msra.mxu0 %v3196
      %3868 = vmatprep.subr.mxu0 0.0
      %3869 = vmatpush1.msra.mxu0 %v3199
      %3870 = vmatprep.subr.mxu0 0.0
      %3871 = vmatpush1.msra.mxu0 %v3202
      %3872 = vmatprep.subr.mxu0 0.0
      %3873 = vmatpush1.msra.mxu0 %v3205
      %3874 = vmatprep.subr.mxu0 0.0
      %3875 = vmatpush1.msra.mxu0 %v3208
      %3876 = vmatprep.subr.mxu0 0.0
      %3877 = vmatpush1.msra.mxu0 %v3211
      %3878 = vmatprep.subr.mxu0 0.0
      %3879 = vmatpush1.msra.mxu0 %v3214
      %3880 = vmatprep.subr.mxu0 0.0
      %3881 = vmatpush1.msra.mxu0 %v3217
      %3882 = vmatprep.subr.mxu0 0.0
      %3883 = vmatpush1.msra.mxu0 %v3220
      %3884 = vmatprep.mubr.f32.mxu0 %v3004
      %3885 = vmatmul.mubr.f32.gmra.mrb[0].mxu0 %v3003
      %v3886 = vpop.f32.mrb[0].mxu0
      %v3887 = vadd.f32 %v3802, %v3886
      %v3888 = vpop.f32.mrb[0].mxu0
      %3889 = vmatprep.mubr.f32.mxu0 %v3011
      %3890 = vmatmul.mubr.f32.gmra.mrb[0].mxu0 %v3010
      %v3891 = vpop.f32.mrb[0].mxu0
      %v3892 = vadd.f32 %v3807, %v3891
      %v3893 = vpop.f32.mrb[0].mxu0
      %3894 = vmatprep.mubr.f32.mxu0 %v3018
      %3895 = vmatmul.mubr.f32.gmra.mrb[0].mxu0 %v3017
      %v3896 = vpop.f32.mrb[0].mxu0
      %v3897 = vadd.f32 %v3812, %v3896
      %v3898 = vpop.f32.mrb[0].mxu0
      %3899 = vmatprep.mubr.f32.mxu0 %v3025
      %3900 = vmatmul.mubr.f32.gmra.mrb[0].mxu0 %v3024
      %v3901 = vpop.f32.mrb[0].mxu0
      %v3902 = vadd.f32 %v3817, %v3901
      %v3903 = vpop.f32.mrb[0].mxu0
      %3904 = vdwg.mxu0
      %3905 = vmatprep.subr.mxu0 0.0
      %3906 = vmatpush1.msra.mxu0 %v3223
      %3907 = vmatprep.subr.mxu0 0.0
      %3908 = vmatpush1.msra.mxu0 %v3226
      %3909 = vmatprep.subr.mxu0 0.0
      %3910 = vmatpush1.msra.mxu0 %v3229
      %3911 = vmatprep.subr.mxu0 0.0
      %3912 = vmatpush1.msra.mxu0 %v3232
      %3913 = vmatprep.subr.mxu0 0.0
      %3914 = vmatpush1.msra.mxu0 %v3235
      %3915 = vmatprep.subr.mxu0 0.0
      %3916 = vmatpush1.msra.mxu0 %v3238
      %3917 = vmatprep.subr.mxu0 0.0
      %3918 = vmatpush1.msra.mxu0 %v3241
      %3919 = vmatprep.subr.mxu0 0.0
      %3920 = vmatpush1.msra.mxu0 %v3244
      %3921 = vmatprep.subr.mxu0 0.0
      %3922 = vmatpush1.msra.mxu0 %v3247
      %3923 = vmatprep.subr.mxu0 0.0
      %3924 = vmatpush1.msra.mxu0 %v3250
      %3925 = vmatprep.subr.mxu0 0.0
      %3926 = vmatpush1.msra.mxu0 %v3253
      %3927 = vmatprep.subr.mxu0 0.0
      %3928 = vmatpush1.msra.mxu0 %v3256
      %3929 = vmatprep.subr.mxu0 0.0
      %3930 = vmatpush1.msra.mxu0 %v3259
      %3931 = vmatprep.subr.mxu0 0.0
      %3932 = vmatpush1.msra.mxu0 %v3262
      %3933 = vmatprep.subr.mxu0 0.0
      %3934 = vmatpush1.msra.mxu0 %v3265
      %3935 = vmatprep.subr.mxu0 0.0
      %3936 = vmatpush1.msra.mxu0 %v3268
      %3937 = vmatprep.subr.mxu0 0.0
      %3938 = vmatpush1.msra.mxu0 %v3271
      %3939 = vmatprep.subr.mxu0 0.0
      %3940 = vmatpush1.msra.mxu0 %v3274
      %3941 = vmatprep.subr.mxu0 0.0
      %3942 = vmatpush1.msra.mxu0 %v3277
      %3943 = vmatprep.subr.mxu0 0.0
      %3944 = vmatpush1.msra.mxu0 %v3280
      %3945 = vmatprep.subr.mxu0 0.0
      %3946 = vmatpush1.msra.mxu0 %v3283
      %3947 = vmatprep.subr.mxu0 0.0
      %3948 = vmatpush1.msra.mxu0 %v3286
      %3949 = vmatprep.subr.mxu0 0.0
      %3950 = vmatpush1.msra.mxu0 %v3289
      %3951 = vmatprep.subr.mxu0 0.0
      %3952 = vmatpush1.msra.mxu0 %v3292
      %3953 = vmatprep.subr.mxu0 0.0
      %3954 = vmatpush1.msra.mxu0 %v3295
      %3955 = vmatprep.subr.mxu0 0.0
      %3956 = vmatpush1.msra.mxu0 %v3298
      %3957 = vmatprep.subr.mxu0 0.0
      %3958 = vmatpush1.msra.mxu0 %v3301
      %3959 = vmatprep.subr.mxu0 0.0
      %3960 = vmatpush1.msra.mxu0 %v3304
      %3961 = vmatprep.subr.mxu0 0.0
      %3962 = vmatpush1.msra.mxu0 %v3307
      %3963 = vmatprep.subr.mxu0 0.0
      %3964 = vmatpush1.msra.mxu0 %v3310
      %3965 = vmatprep.subr.mxu0 0.0
      %3966 = vmatpush1.msra.mxu0 %v3313
      %3967 = vmatprep.subr.mxu0 0.0
      %3968 = vmatpush1.msra.mxu0 %v3316
      %3969 = vmatprep.mubr.f32.mxu0 %v3006
      %3970 = vmatmul.mubr.f32.gmra.mrb[0].mxu0 %v3005
      %v3971 = vpop.f32.mrb[0].mxu0
      %v3972 = vadd.f32 %v3887, %v3971
      %v3973 = vpop.f32.mrb[0].mxu0
      %3974 = vmatprep.mubr.f32.mxu0 %v3013
      %3975 = vmatmul.mubr.f32.gmra.mrb[0].mxu0 %v3012
      %v3976 = vpop.f32.mrb[0].mxu0
      %v3977 = vadd.f32 %v3892, %v3976
      %v3978 = vpop.f32.mrb[0].mxu0
      %3979 = vmatprep.mubr.f32.mxu0 %v3020
      %3980 = vmatmul.mubr.f32.gmra.mrb[0].mxu0 %v3019
      %v3981 = vpop.f32.mrb[0].mxu0
      %v3982 = vadd.f32 %v3897, %v3981
      %v3983 = vpop.f32.mrb[0].mxu0
      %3984 = vmatprep.mubr.f32.mxu0 %v3027
      %3985 = vmatmul.mubr.f32.gmra.mrb[0].mxu0 %v3026
      %v3986 = vpop.f32.mrb[0].mxu0
      %v3987 = vadd.f32 %v3902, %v3986
      %v3988 = vpop.f32.mrb[0].mxu0
      %3989 = vdwg.mxu0
      %3990 = vmatprep.subr.mxu0 0.0
      %3991 = vmatpush1.msra.mxu0 %v3319
      %3992 = vmatprep.subr.mxu0 0.0
      %3993 = vmatpush1.msra.mxu0 %v3322
      %3994 = vmatprep.subr.mxu0 0.0
      %3995 = vmatpush1.msra.mxu0 %v3325
      %3996 = vmatprep.subr.mxu0 0.0
      %3997 = vmatpush1.msra.mxu0 %v3328
      %3998 = vmatprep.subr.mxu0 0.0
      %3999 = vmatpush1.msra.mxu0 %v3331
      %4000 = vmatprep.subr.mxu0 0.0
      %4001 = vmatpush1.msra.mxu0 %v3334
      %4002 = vmatprep.subr.mxu0 0.0
      %4003 = vmatpush1.msra.mxu0 %v3337
      %4004 = vmatprep.subr.mxu0 0.0
      %4005 = vmatpush1.msra.mxu0 %v3340
      %4006 = vmatprep.subr.mxu0 0.0
      %4007 = vmatpush1.msra.mxu0 %v3343
      %4008 = vmatprep.subr.mxu0 0.0
      %4009 = vmatpush1.msra.mxu0 %v3346
      %4010 = vmatprep.subr.mxu0 0.0
      %4011 = vmatpush1.msra.mxu0 %v3349
      %4012 = vmatprep.subr.mxu0 0.0
      %4013 = vmatpush1.msra.mxu0 %v3352
      %4014 = vmatprep.subr.mxu0 0.0
      %4015 = vmatpush1.msra.mxu0 %v3377
      %4016 = vmatprep.subr.mxu0 0.0
      %4017 = vmatpush1.msra.mxu0 0.0
      %4018 = vmatprep.subr.mxu0 0.0
      %4019 = vmatpush1.msra.mxu0 0.0
      %4020 = vmatprep.subr.mxu0 0.0
      %4021 = vmatpush1.msra.mxu0 0.0
      %4022 = vmatprep.subr.mxu0 0.0
      %4023 = vmatpush1.msra.mxu0 0.0
      %4024 = vmatprep.subr.mxu0 0.0
      %4025 = vmatpush1.msra.mxu0 0.0
      %4026 = vmatprep.subr.mxu0 0.0
      %4027 = vmatpush1.msra.mxu0 0.0
      %4028 = vmatprep.subr.mxu0 0.0
      %4029 = vmatpush1.msra.mxu0 0.0
      %4030 = vmatprep.subr.mxu0 0.0
      %4031 = vmatpush1.msra.mxu0 0.0
      %4032 = vmatprep.subr.mxu0 0.0
      %4033 = vmatpush1.msra.mxu0 0.0
      %4034 = vmatprep.subr.mxu0 0.0
      %4035 = vmatpush1.msra.mxu0 0.0
      %4036 = vmatprep.subr.mxu0 0.0
      %4037 = vmatpush1.msra.mxu0 0.0
      %4038 = vmatprep.subr.mxu0 0.0
      %4039 = vmatpush1.msra.mxu0 0.0
      %4040 = vmatprep.subr.mxu0 0.0
      %4041 = vmatpush1.msra.mxu0 0.0
      %4042 = vmatprep.subr.mxu0 0.0
      %4043 = vmatpush1.msra.mxu0 0.0
      %4044 = vmatprep.subr.mxu0 0.0
      %4045 = vmatpush1.msra.mxu0 0.0
      %4046 = vmatprep.subr.mxu0 0.0
      %4047 = vmatpush1.msra.mxu0 0.0
      %4048 = vmatprep.subr.mxu0 0.0
      %4049 = vmatpush1.msra.mxu0 0.0
      %4050 = vmatprep.subr.mxu0 0.0
      %4051 = vmatpush1.msra.mxu0 0.0
      %4052 = vmatprep.subr.mxu0 0.0
      %4053 = vmatpush1.msra.mxu0 0.0
      %4054 = vmatprep.mubr.f32.mxu0 0.0
      %4055 = vmatmul.mubr.f32.gmra.mrb[0].mxu0 %v3358
      %v4056 = vpop.f32.mrb[0].mxu0
      %v4057 = vadd.f32 %v3972, %v4056
      %v4058 = vpop.f32.mrb[0].mxu0
      %4059 = vmatprep.mubr.f32.mxu0 0.0
      %4060 = vmatmul.mubr.f32.gmra.mrb[0].mxu0 %v3361
      %v4061 = vpop.f32.mrb[0].mxu0
      %v4062 = vadd.f32 %v3977, %v4061
      %v4063 = vpop.f32.mrb[0].mxu0
      %4064 = vmatprep.mubr.f32.mxu0 0.0
      %4065 = vmatmul.mubr.f32.gmra.mrb[0].mxu0 %v3364
      %v4066 = vpop.f32.mrb[0].mxu0
      %v4067 = vadd.f32 %v3982, %v4066
      %v4068 = vpop.f32.mrb[0].mxu0
      %4069 = vmatprep.mubr.f32.mxu0 0.0
      %4070 = vmatmul.mubr.f32.gmra.mrb[0].mxu0 %v3367
      %v4071 = vpop.f32.mrb[0].mxu0
      %v4072 = vadd.f32 %v3987, %v4071
      %v4073 = vpop.f32.mrb[0].mxu0
      %4074 = vdwg.mxu0
      %v4075 = vld [vmem:[%s3] sm:$0xff]
      %v4076 = vld [vmem:[%s3 + $0x8] sm:$0xff]
      %v4077 = vld [vmem:[%s3 + $0x10] sm:$0xff]
      %v4078 = vld [vmem:[%s3 + $0x18] sm:$0xff]
      %v4079 = vld [vmem:[%s3 + $0x20] sm:$0xff]
      %v4080 = vld [vmem:[%s3 + $0x28] sm:$0xff]
      %v4081 = vld [vmem:[%s3 + $0x30] sm:$0xff]
      %v4082 = vld [vmem:[%s3 + $0x38] sm:$0xff]
      %s4083 = scalar_lea.vmem %s3, 64
      %v4084 = vld [vmem:[%s4083] sm:$0xff]
      %v4085 = vld [vmem:[%s4083 + $0x8] sm:$0xff]
      %v4086 = vld [vmem:[%s4083 + $0x10] sm:$0xff]
      %v4087 = vld [vmem:[%s4083 + $0x18] sm:$0xff]
      %v4088 = vld [vmem:[%s4083 + $0x20] sm:$0xff]
      %v4089 = vld [vmem:[%s4083 + $0x28] sm:$0xff]
      %v4090 = vld [vmem:[%s4083 + $0x30] sm:$0xff]
      %v4091 = vld [vmem:[%s4083 + $0x38] sm:$0xff]
      %4104 = vrot.lane.b32.xlu0 %v3713, 127
      %v4105 = vpop.permute.xlu0 %4104
      %4106 = vrot.lane.b32.xlu0 %v3715, 127
      %v4107 = vpop.permute.xlu0 %4106
      %4108 = vrot.lane.b32.xlu0 %v4057, 127
      %v4109 = vpop.permute.xlu0 %4108
      %4110 = vrot.lane.b32.xlu0 %v3719, 127
      %v4111 = vpop.permute.xlu0 %4110
      %4112 = vrot.lane.b32.xlu0 %v3721, 127
      %v4113 = vpop.permute.xlu0 %4112
      %4114 = vrot.lane.b32.xlu0 %v4062, 127
      %v4115 = vpop.permute.xlu0 %4114
      %4116 = vrot.lane.b32.xlu0 %v3725, 127
      %v4117 = vpop.permute.xlu0 %4116
      %4118 = vrot.lane.b32.xlu0 %v3727, 127
      %v4119 = vpop.permute.xlu0 %4118
      %4120 = vrot.lane.b32.xlu0 %v4067, 127
      %v4121 = vpop.permute.xlu0 %4120
      %4122 = vrot.lane.b32.xlu0 %v3731, 127
      %v4123 = vpop.permute.xlu0 %4122
      %4124 = vrot.lane.b32.xlu0 %v3733, 127
      %v4125 = vpop.permute.xlu0 %4124
      %4126 = vrot.lane.b32.xlu0 %v4072, 127
      %v4127 = vpop.permute.xlu0 %4126
      %v4128 = vsel %vm793, %v4105, %v4107
      %v4129 = vsel %vm793, %v4107, %v4109
      %v4130 = vsel %vm793, %v4111, %v4113
      %v4131 = vsel %vm793, %v4113, %v4115
      %v4132 = vsel %vm793, %v4117, %v4119
      %v4133 = vsel %vm793, %v4119, %v4121
      %v4134 = vsel %vm793, %v4123, %v4125
      %v4135 = vsel %vm793, %v4125, %v4127
      %vm4144 = vcmask 261120
      %v4146 = vsel %vm4144, %v4084, 0
      %v4149 = vsel %vm4144, %v4085, 0
      %v4152 = vsel %vm4144, %v4086, 0
      %v4155 = vsel %vm4144, %v4087, 0
      %v4158 = vsel %vm4144, %v4088, 0
      %v4161 = vsel %vm4144, %v4089, 0
      %v4164 = vsel %vm4144, %v4090, 0
      %v4167 = vsel %vm4144, %v4091, 0
      %4169 = vmatprep.subr.mxu0 %v4129
      %4170 = vmatpush1.msra.mxu0 %v4128
      %4171 = vmatprep.subr.mxu0 %v4131
      %4172 = vmatpush1.msra.mxu0 %v4130
      %4173 = vmatprep.subr.mxu0 %v4133
      %4174 = vmatpush1.msra.mxu0 %v4132
      %4175 = vmatprep.subr.mxu0 %v4135
      %4176 = vmatpush1.msra.mxu0 %v4134
      %4177 = vmatprep.subr.mxu0 0.0
      %4178 = vmatpush1.msra.mxu0 0.0
      %4179 = vmatprep.subr.mxu0 0.0
      %4180 = vmatpush1.msra.mxu0 0.0
      %4181 = vmatprep.subr.mxu0 0.0
      %4182 = vmatpush1.msra.mxu0 0.0
      %4183 = vmatprep.subr.mxu0 0.0
      %4184 = vmatpush1.msra.mxu0 0.0
      %4185 = vmatprep.subr.mxu0 0.0
      %4186 = vmatpush1.msra.mxu0 0.0
      %4187 = vmatprep.subr.mxu0 0.0
      %4188 = vmatpush1.msra.mxu0 0.0
      %4189 = vmatprep.subr.mxu0 0.0
      %4190 = vmatpush1.msra.mxu0 0.0
      %4191 = vmatprep.subr.mxu0 0.0
      %4192 = vmatpush1.msra.mxu0 0.0
      %4193 = vmatprep.subr.mxu0 0.0
      %4194 = vmatpush1.msra.mxu0 0.0
      %4195 = vmatprep.subr.mxu0 0.0
      %4196 = vmatpush1.msra.mxu0 0.0
      %4197 = vmatprep.subr.mxu0 0.0
      %4198 = vmatpush1.msra.mxu0 0.0
      %4199 = vmatprep.subr.mxu0 0.0
      %4200 = vmatpush1.msra.mxu0 0.0
      %4201 = vmatprep.subr.mxu0 0.0
      %4202 = vmatpush1.msra.mxu0 0.0
      %4203 = vmatprep.subr.mxu0 0.0
      %4204 = vmatpush1.msra.mxu0 0.0
      %4205 = vmatprep.subr.mxu0 0.0
      %4206 = vmatpush1.msra.mxu0 0.0
      %4207 = vmatprep.subr.mxu0 0.0
      %4208 = vmatpush1.msra.mxu0 0.0
      %4209 = vmatprep.subr.mxu0 0.0
      %4210 = vmatpush1.msra.mxu0 0.0
      %4211 = vmatprep.subr.mxu0 0.0
      %4212 = vmatpush1.msra.mxu0 0.0
      %4213 = vmatprep.subr.mxu0 0.0
      %4214 = vmatpush1.msra.mxu0 0.0
      %4215 = vmatprep.subr.mxu0 0.0
      %4216 = vmatpush1.msra.mxu0 0.0
      %4217 = vmatprep.subr.mxu0 0.0
      %4218 = vmatpush1.msra.mxu0 0.0
      %4219 = vmatprep.subr.mxu0 0.0
      %4220 = vmatpush1.msra.mxu0 0.0
      %4221 = vmatprep.subr.mxu0 0.0
      %4222 = vmatpush1.msra.mxu0 0.0
      %4223 = vmatprep.subr.mxu0 0.0
      %4224 = vmatpush1.msra.mxu0 0.0
      %4225 = vmatprep.subr.mxu0 0.0
      %4226 = vmatpush1.msra.mxu0 0.0
      %4227 = vmatprep.subr.mxu0 0.0
      %4228 = vmatpush1.msra.mxu0 0.0
      %4229 = vmatprep.subr.mxu0 0.0
      %4230 = vmatpush1.msra.mxu0 0.0
      %4231 = vmatprep.subr.mxu0 0.0
      %4232 = vmatpush1.msra.mxu0 0.0
      %4233 = vmatprep.mubr.f32.mxu0 0.0
      %4234 = vmatmul.mubr.f32.gmra.mrb[0].mxu0 %v4146
      %v4235 = vpop.f32.mrb[0].mxu0
      %v4236 = vadd.f32 0.0, %v4235
      %v4237 = vpop.f32.mrb[0].mxu0
      %v4238 = vadd.f32 0.0, %v4237
      %4239 = vmatprep.mubr.f32.mxu0 0.0
      %4240 = vmatmul.mubr.f32.gmra.mrb[0].mxu0 %v4149
      %v4241 = vpop.f32.mrb[0].mxu0
      %v4242 = vadd.f32 0.0, %v4241
      %v4243 = vpop.f32.mrb[0].mxu0
      %v4244 = vadd.f32 0.0, %v4243
      %4245 = vmatprep.mubr.f32.mxu0 0.0
      %4246 = vmatmul.mubr.f32.gmra.mrb[0].mxu0 %v4152
      %v4247 = vpop.f32.mrb[0].mxu0
      %v4248 = vadd.f32 0.0, %v4247
      %v4249 = vpop.f32.mrb[0].mxu0
      %v4250 = vadd.f32 0.0, %v4249
      %4251 = vmatprep.mubr.f32.mxu0 0.0
      %4252 = vmatmul.mubr.f32.gmra.mrb[0].mxu0 %v4155
      %v4253 = vpop.f32.mrb[0].mxu0
      %v4254 = vadd.f32 0.0, %v4253
      %v4255 = vpop.f32.mrb[0].mxu0
      %v4256 = vadd.f32 0.0, %v4255
      %4257 = vmatprep.mubr.f32.mxu0 0.0
      %4258 = vmatmul.mubr.f32.gmra.mrb[0].mxu0 %v4158
      %v4259 = vpop.f32.mrb[0].mxu0
      %v4260 = vadd.f32 0.0, %v4259
      %v4261 = vpop.f32.mrb[0].mxu0
      %v4262 = vadd.f32 0.0, %v4261
      %4263 = vmatprep.mubr.f32.mxu0 0.0
      %4264 = vmatmul.mubr.f32.gmra.mrb[0].mxu0 %v4161
      %v4265 = vpop.f32.mrb[0].mxu0
      %v4266 = vadd.f32 0.0, %v4265
      %v4267 = vpop.f32.mrb[0].mxu0
      %v4268 = vadd.f32 0.0, %v4267
      %4269 = vmatprep.mubr.f32.mxu0 0.0
      %4270 = vmatmul.mubr.f32.gmra.mrb[0].mxu0 %v4164
      %v4271 = vpop.f32.mrb[0].mxu0
      %v4272 = vadd.f32 0.0, %v4271
      %v4273 = vpop.f32.mrb[0].mxu0
      %v4274 = vadd.f32 0.0, %v4273
      %4275 = vmatprep.mubr.f32.mxu0 0.0
      %4276 = vmatmul.mubr.f32.gmra.mrb[0].mxu0 %v4167
      %v4277 = vpop.f32.mrb[0].mxu0
      %v4278 = vadd.f32 0.0, %v4277
      %v4279 = vpop.f32.mrb[0].mxu0
      %v4280 = vadd.f32 0.0, %v4279
      %4281 = vdwg.mxu0
      %v4283 = vsel %vm4144, %v4075, 0
      %v4286 = vsel %vm4144, %v4076, 0
      %v4289 = vsel %vm4144, %v4077, 0
      %v4292 = vsel %vm4144, %v4078, 0
      %v4295 = vsel %vm4144, %v4079, 0
      %v4298 = vsel %vm4144, %v4080, 0
      %v4301 = vsel %vm4144, %v4081, 0
      %v4304 = vsel %vm4144, %v4082, 0
      %4306 = vmatprep.subr.mxu0 %v3715
      %4307 = vmatpush1.msra.mxu0 %v3713
      %4308 = vmatprep.subr.mxu0 %v3721
      %4309 = vmatpush1.msra.mxu0 %v3719
      %4310 = vmatprep.subr.mxu0 %v3727
      %4311 = vmatpush1.msra.mxu0 %v3725
      %4312 = vmatprep.subr.mxu0 %v3733
      %4313 = vmatpush1.msra.mxu0 %v3731
      %4314 = vmatprep.subr.mxu0 0.0
      %4315 = vmatpush1.msra.mxu0 0.0
      %4316 = vmatprep.subr.mxu0 0.0
      %4317 = vmatpush1.msra.mxu0 0.0
      %4318 = vmatprep.subr.mxu0 0.0
      %4319 = vmatpush1.msra.mxu0 0.0
      %4320 = vmatprep.subr.mxu0 0.0
      %4321 = vmatpush1.msra.mxu0 0.0
      %4322 = vmatprep.subr.mxu0 0.0
      %4323 = vmatpush1.msra.mxu0 0.0
      %4324 = vmatprep.subr.mxu0 0.0
      %4325 = vmatpush1.msra.mxu0 0.0
      %4326 = vmatprep.subr.mxu0 0.0
      %4327 = vmatpush1.msra.mxu0 0.0
      %4328 = vmatprep.subr.mxu0 0.0
      %4329 = vmatpush1.msra.mxu0 0.0
      %4330 = vmatprep.subr.mxu0 0.0
      %4331 = vmatpush1.msra.mxu0 0.0
      %4332 = vmatprep.subr.mxu0 0.0
      %4333 = vmatpush1.msra.mxu0 0.0
      %4334 = vmatprep.subr.mxu0 0.0
      %4335 = vmatpush1.msra.mxu0 0.0
      %4336 = vmatprep.subr.mxu0 0.0
      %4337 = vmatpush1.msra.mxu0 0.0
      %4338 = vmatprep.subr.mxu0 0.0
      %4339 = vmatpush1.msra.mxu0 0.0
      %4340 = vmatprep.subr.mxu0 0.0
      %4341 = vmatpush1.msra.mxu0 0.0
      %4342 = vmatprep.subr.mxu0 0.0
      %4343 = vmatpush1.msra.mxu0 0.0
      %4344 = vmatprep.subr.mxu0 0.0
      %4345 = vmatpush1.msra.mxu0 0.0
      %4346 = vmatprep.subr.mxu0 0.0
      %4347 = vmatpush1.msra.mxu0 0.0
      %4348 = vmatprep.subr.mxu0 0.0
      %4349 = vmatpush1.msra.mxu0 0.0
      %4350 = vmatprep.subr.mxu0 0.0
      %4351 = vmatpush1.msra.mxu0 0.0
      %4352 = vmatprep.subr.mxu0 0.0
      %4353 = vmatpush1.msra.mxu0 0.0
      %4354 = vmatprep.subr.mxu0 0.0
      %4355 = vmatpush1.msra.mxu0 0.0
      %4356 = vmatprep.subr.mxu0 0.0
      %4357 = vmatpush1.msra.mxu0 0.0
      %4358 = vmatprep.subr.mxu0 0.0
      %4359 = vmatpush1.msra.mxu0 0.0
      %4360 = vmatprep.subr.mxu0 0.0
      %4361 = vmatpush1.msra.mxu0 0.0
      %4362 = vmatprep.subr.mxu0 0.0
      %4363 = vmatpush1.msra.mxu0 0.0
      %4364 = vmatprep.subr.mxu0 0.0
      %4365 = vmatpush1.msra.mxu0 0.0
      %4366 = vmatprep.subr.mxu0 0.0
      %4367 = vmatpush1.msra.mxu0 0.0
      %4368 = vmatprep.subr.mxu0 0.0
      %4369 = vmatpush1.msra.mxu0 0.0
      %4370 = vmatprep.mubr.f32.mxu0 0.0
      %4371 = vmatmul.mubr.f32.gmra.mrb[0].mxu0 %v4283
      %v4372 = vpop.f32.mrb[0].mxu0
      %v4373 = vadd.f32 %v4236, %v4372
      %v4374 = vpop.f32.mrb[0].mxu0
      %v4375 = vadd.f32 %v4238, %v4374
      %4376 = vmatprep.mubr.f32.mxu0 0.0
      %4377 = vmatmul.mubr.f32.gmra.mrb[0].mxu0 %v4286
      %v4378 = vpop.f32.mrb[0].mxu0
      %v4379 = vadd.f32 %v4242, %v4378
      %v4380 = vpop.f32.mrb[0].mxu0
      %v4381 = vadd.f32 %v4244, %v4380
      %4382 = vmatprep.mubr.f32.mxu0 0.0
      %4383 = vmatmul.mubr.f32.gmra.mrb[0].mxu0 %v4289
      %v4384 = vpop.f32.mrb[0].mxu0
      %v4385 = vadd.f32 %v4248, %v4384
      %v4386 = vpop.f32.mrb[0].mxu0
      %v4387 = vadd.f32 %v4250, %v4386
      %4388 = vmatprep.mubr.f32.mxu0 0.0
      %4389 = vmatmul.mubr.f32.gmra.mrb[0].mxu0 %v4292
      %v4390 = vpop.f32.mrb[0].mxu0
      %v4391 = vadd.f32 %v4254, %v4390
      %v4392 = vpop.f32.mrb[0].mxu0
      %v4393 = vadd.f32 %v4256, %v4392
      %4394 = vmatprep.mubr.f32.mxu0 0.0
      %4395 = vmatmul.mubr.f32.gmra.mrb[0].mxu0 %v4295
      %v4396 = vpop.f32.mrb[0].mxu0
      %v4397 = vadd.f32 %v4260, %v4396
      %v4398 = vpop.f32.mrb[0].mxu0
      %v4399 = vadd.f32 %v4262, %v4398
      %4400 = vmatprep.mubr.f32.mxu0 0.0
      %4401 = vmatmul.mubr.f32.gmra.mrb[0].mxu0 %v4298
      %v4402 = vpop.f32.mrb[0].mxu0
      %v4403 = vadd.f32 %v4266, %v4402
      %v4404 = vpop.f32.mrb[0].mxu0
      %v4405 = vadd.f32 %v4268, %v4404
      %4406 = vmatprep.mubr.f32.mxu0 0.0
      %4407 = vmatmul.mubr.f32.gmra.mrb[0].mxu0 %v4301
      %v4408 = vpop.f32.mrb[0].mxu0
      %v4409 = vadd.f32 %v4272, %v4408
      %v4410 = vpop.f32.mrb[0].mxu0
      %v4411 = vadd.f32 %v4274, %v4410
      %4412 = vmatprep.mubr.f32.mxu0 0.0
      %4413 = vmatmul.mubr.f32.gmra.mrb[0].mxu0 %v4304
      %v4414 = vpop.f32.mrb[0].mxu0
      %v4415 = vadd.f32 %v4278, %v4414
      %v4416 = vpop.f32.mrb[0].mxu0
      %v4417 = vadd.f32 %v4280, %v4416
      %4418 = vdwg.mxu0
      %s4419 = scalar_lea.vmem %s3, 128
      %v4420 = vld [vmem:[%s4419] sm:$0xff]
      %v4421 = vld [vmem:[%s4419 + $0x8] sm:$0xff]
      %v4422 = vld [vmem:[%s4419 + $0x10] sm:$0xff]
      %v4423 = vld [vmem:[%s4419 + $0x18] sm:$0xff]
      %v4424 = vld [vmem:[%s4419 + $0x20] sm:$0xff]
      %v4425 = vld [vmem:[%s4419 + $0x28] sm:$0xff]
      %v4426 = vld [vmem:[%s4419 + $0x30] sm:$0xff]
      %v4427 = vld [vmem:[%s4419 + $0x38] sm:$0xff]
      %4428 = vrot.lane.b32.xlu0 %v3713, 126
      %v4429 = vpop.permute.xlu0 %4428
      %4430 = vrot.lane.b32.xlu0 %v3715, 126
      %v4431 = vpop.permute.xlu0 %4430
      %4432 = vrot.lane.b32.xlu0 %v4057, 126
      %v4433 = vpop.permute.xlu0 %4432
      %4434 = vrot.lane.b32.xlu0 %v3719, 126
      %v4435 = vpop.permute.xlu0 %4434
      %4436 = vrot.lane.b32.xlu0 %v3721, 126
      %v4437 = vpop.permute.xlu0 %4436
      %4438 = vrot.lane.b32.xlu0 %v4062, 126
      %v4439 = vpop.permute.xlu0 %4438
      %4440 = vrot.lane.b32.xlu0 %v3725, 126
      %v4441 = vpop.permute.xlu0 %4440
      %4442 = vrot.lane.b32.xlu0 %v3727, 126
      %v4443 = vpop.permute.xlu0 %4442
      %4444 = vrot.lane.b32.xlu0 %v4067, 126
      %v4445 = vpop.permute.xlu0 %4444
      %4446 = vrot.lane.b32.xlu0 %v3731, 126
      %v4447 = vpop.permute.xlu0 %4446
      %4448 = vrot.lane.b32.xlu0 %v3733, 126
      %v4449 = vpop.permute.xlu0 %4448
      %4450 = vrot.lane.b32.xlu0 %v4072, 126
      %v4451 = vpop.permute.xlu0 %4450
      %v4452 = vsel %vm1030, %v4429, %v4431
      %v4453 = vsel %vm1030, %v4431, %v4433
      %v4454 = vsel %vm1030, %v4435, %v4437
      %v4455 = vsel %vm1030, %v4437, %v4439
      %v4456 = vsel %vm1030, %v4441, %v4443
      %v4457 = vsel %vm1030, %v4443, %v4445
      %v4458 = vsel %vm1030, %v4447, %v4449
      %v4459 = vsel %vm1030, %v4449, %v4451
      %v4469 = vsel %vm4144, %v4420, 0
      %v4472 = vsel %vm4144, %v4421, 0
      %v4475 = vsel %vm4144, %v4422, 0
      %v4478 = vsel %vm4144, %v4423, 0
      %v4481 = vsel %vm4144, %v4424, 0
      %v4484 = vsel %vm4144, %v4425, 0
      %v4487 = vsel %vm4144, %v4426, 0
      %v4490 = vsel %vm4144, %v4427, 0
      %4492 = vmatprep.subr.mxu0 %v4453
      %4493 = vmatpush1.msra.mxu0 %v4452
      %4494 = vmatprep.subr.mxu0 %v4455
      %4495 = vmatpush1.msra.mxu0 %v4454
      %4496 = vmatprep.subr.mxu0 %v4457
      %4497 = vmatpush1.msra.mxu0 %v4456
      %4498 = vmatprep.subr.mxu0 %v4459
      %4499 = vmatpush1.msra.mxu0 %v4458
      %4500 = vmatprep.subr.mxu0 0.0
      %4501 = vmatpush1.msra.mxu0 0.0
      %4502 = vmatprep.subr.mxu0 0.0
      %4503 = vmatpush1.msra.mxu0 0.0
      %4504 = vmatprep.subr.mxu0 0.0
      %4505 = vmatpush1.msra.mxu0 0.0
      %4506 = vmatprep.subr.mxu0 0.0
      %4507 = vmatpush1.msra.mxu0 0.0
      %4508 = vmatprep.subr.mxu0 0.0
      %4509 = vmatpush1.msra.mxu0 0.0
      %4510 = vmatprep.subr.mxu0 0.0
      %4511 = vmatpush1.msra.mxu0 0.0
      %4512 = vmatprep.subr.mxu0 0.0
      %4513 = vmatpush1.msra.mxu0 0.0
      %4514 = vmatprep.subr.mxu0 0.0
      %4515 = vmatpush1.msra.mxu0 0.0
      %4516 = vmatprep.subr.mxu0 0.0
      %4517 = vmatpush1.msra.mxu0 0.0
      %4518 = vmatprep.subr.mxu0 0.0
      %4519 = vmatpush1.msra.mxu0 0.0
      %4520 = vmatprep.subr.mxu0 0.0
      %4521 = vmatpush1.msra.mxu0 0.0
      %4522 = vmatprep.subr.mxu0 0.0
      %4523 = vmatpush1.msra.mxu0 0.0
      %4524 = vmatprep.subr.mxu0 0.0
      %4525 = vmatpush1.msra.mxu0 0.0
      %4526 = vmatprep.subr.mxu0 0.0
      %4527 = vmatpush1.msra.mxu0 0.0
      %4528 = vmatprep.subr.mxu0 0.0
      %4529 = vmatpush1.msra.mxu0 0.0
      %4530 = vmatprep.subr.mxu0 0.0
      %4531 = vmatpush1.msra.mxu0 0.0
      %4532 = vmatprep.subr.mxu0 0.0
      %4533 = vmatpush1.msra.mxu0 0.0
      %4534 = vmatprep.subr.mxu0 0.0
      %4535 = vmatpush1.msra.mxu0 0.0
      %4536 = vmatprep.subr.mxu0 0.0
      %4537 = vmatpush1.msra.mxu0 0.0
      %4538 = vmatprep.subr.mxu0 0.0
      %4539 = vmatpush1.msra.mxu0 0.0
      %4540 = vmatprep.subr.mxu0 0.0
      %4541 = vmatpush1.msra.mxu0 0.0
      %4542 = vmatprep.subr.mxu0 0.0
      %4543 = vmatpush1.msra.mxu0 0.0
      %4544 = vmatprep.subr.mxu0 0.0
      %4545 = vmatpush1.msra.mxu0 0.0
      %4546 = vmatprep.subr.mxu0 0.0
      %4547 = vmatpush1.msra.mxu0 0.0
      %4548 = vmatprep.subr.mxu0 0.0
      %4549 = vmatpush1.msra.mxu0 0.0
      %4550 = vmatprep.subr.mxu0 0.0
      %4551 = vmatpush1.msra.mxu0 0.0
      %4552 = vmatprep.subr.mxu0 0.0
      %4553 = vmatpush1.msra.mxu0 0.0
      %4554 = vmatprep.subr.mxu0 0.0
      %4555 = vmatpush1.msra.mxu0 0.0
      %4556 = vmatprep.mubr.f32.mxu0 0.0
      %4557 = vmatmul.mubr.f32.gmra.mrb[0].mxu0 %v4469
      %v4558 = vpop.f32.mrb[0].mxu0
      %v4559 = vadd.f32 0.0, %v4558
      %v4560 = vpop.f32.mrb[0].mxu0
      %v4561 = vadd.f32 0.0, %v4560
      %4562 = vmatprep.mubr.f32.mxu0 0.0
      %4563 = vmatmul.mubr.f32.gmra.mrb[0].mxu0 %v4472
      %v4564 = vpop.f32.mrb[0].mxu0
      %v4565 = vadd.f32 0.0, %v4564
      %v4566 = vpop.f32.mrb[0].mxu0
      %v4567 = vadd.f32 0.0, %v4566
      %4568 = vmatprep.mubr.f32.mxu0 0.0
      %4569 = vmatmul.mubr.f32.gmra.mrb[0].mxu0 %v4475
      %v4570 = vpop.f32.mrb[0].mxu0
      %v4571 = vadd.f32 0.0, %v4570
      %v4572 = vpop.f32.mrb[0].mxu0
      %v4573 = vadd.f32 0.0, %v4572
      %4574 = vmatprep.mubr.f32.mxu0 0.0
      %4575 = vmatmul.mubr.f32.gmra.mrb[0].mxu0 %v4478
      %v4576 = vpop.f32.mrb[0].mxu0
      %v4577 = vadd.f32 0.0, %v4576
      %v4578 = vpop.f32.mrb[0].mxu0
      %v4579 = vadd.f32 0.0, %v4578
      %4580 = vmatprep.mubr.f32.mxu0 0.0
      %4581 = vmatmul.mubr.f32.gmra.mrb[0].mxu0 %v4481
      %v4582 = vpop.f32.mrb[0].mxu0
      %v4583 = vadd.f32 0.0, %v4582
      %v4584 = vpop.f32.mrb[0].mxu0
      %v4585 = vadd.f32 0.0, %v4584
      %4586 = vmatprep.mubr.f32.mxu0 0.0
      %4587 = vmatmul.mubr.f32.gmra.mrb[0].mxu0 %v4484
      %v4588 = vpop.f32.mrb[0].mxu0
      %v4589 = vadd.f32 0.0, %v4588
      %v4590 = vpop.f32.mrb[0].mxu0
      %v4591 = vadd.f32 0.0, %v4590
      %4592 = vmatprep.mubr.f32.mxu0 0.0
      %4593 = vmatmul.mubr.f32.gmra.mrb[0].mxu0 %v4487
      %v4594 = vpop.f32.mrb[0].mxu0
      %v4595 = vadd.f32 0.0, %v4594
      %v4596 = vpop.f32.mrb[0].mxu0
      %v4597 = vadd.f32 0.0, %v4596
      %4598 = vmatprep.mubr.f32.mxu0 0.0
      %4599 = vmatmul.mubr.f32.gmra.mrb[0].mxu0 %v4490
      %v4600 = vpop.f32.mrb[0].mxu0
      %v4601 = vadd.f32 0.0, %v4600
      %v4602 = vpop.f32.mrb[0].mxu0
      %v4603 = vadd.f32 0.0, %v4602
      %4604 = vdwg.mxu0
      %v4605 = vadd.f32 %v4373, %v4559
      %v4606 = vadd.f32 %v4375, %v4561
      %v4607 = vadd.f32 %v4379, %v4565
      %v4608 = vadd.f32 %v4381, %v4567
      %v4609 = vadd.f32 %v4385, %v4571
      %v4610 = vadd.f32 %v4387, %v4573
      %v4611 = vadd.f32 %v4391, %v4577
      %v4612 = vadd.f32 %v4393, %v4579
      %v4613 = vadd.f32 %v4397, %v4583
      %v4614 = vadd.f32 %v4399, %v4585
      %v4615 = vadd.f32 %v4403, %v4589
      %v4616 = vadd.f32 %v4405, %v4591
      %v4617 = vadd.f32 %v4409, %v4595
      %v4618 = vadd.f32 %v4411, %v4597
      %v4619 = vadd.f32 %v4415, %v4601
      %v4620 = vadd.f32 %v4417, %v4603
      %s4621 = scalar_lea.vmem %s3, 192
      %v4622 = vld [vmem:[%s4621] sm:$0xff]
      %v4623 = vld [vmem:[%s4621 + $0x8] sm:$0xff]
      %v4624 = vld [vmem:[%s4621 + $0x10] sm:$0xff]
      %v4625 = vld [vmem:[%s4621 + $0x18] sm:$0xff]
      %v4626 = vld [vmem:[%s4621 + $0x20] sm:$0xff]
      %v4627 = vld [vmem:[%s4621 + $0x28] sm:$0xff]
      %v4628 = vld [vmem:[%s4621 + $0x30] sm:$0xff]
      %v4629 = vld [vmem:[%s4621 + $0x38] sm:$0xff]
      %4630 = vrot.lane.b32.xlu0 %v3713, 112
      %v4631 = vpop.permute.xlu0 %4630
      %4632 = vrot.lane.b32.xlu0 %v3715, 112
      %v4633 = vpop.permute.xlu0 %4632
      %4634 = vrot.lane.b32.xlu0 %v4057, 112
      %v4635 = vpop.permute.xlu0 %4634
      %4636 = vrot.lane.b32.xlu0 %v3719, 112
      %v4637 = vpop.permute.xlu0 %4636
      %4638 = vrot.lane.b32.xlu0 %v3721, 112
      %v4639 = vpop.permute.xlu0 %4638
      %4640 = vrot.lane.b32.xlu0 %v4062, 112
      %v4641 = vpop.permute.xlu0 %4640
      %4642 = vrot.lane.b32.xlu0 %v3725, 112
      %v4643 = vpop.permute.xlu0 %4642
      %4644 = vrot.lane.b32.xlu0 %v3727, 112
      %v4645 = vpop.permute.xlu0 %4644
      %4646 = vrot.lane.b32.xlu0 %v4067, 112
      %v4647 = vpop.permute.xlu0 %4646
      %4648 = vrot.lane.b32.xlu0 %v3731, 112
      %v4649 = vpop.permute.xlu0 %4648
      %4650 = vrot.lane.b32.xlu0 %v3733, 112
      %v4651 = vpop.permute.xlu0 %4650
      %4652 = vrot.lane.b32.xlu0 %v4072, 112
      %v4653 = vpop.permute.xlu0 %4652
      %vm4654 = vcmask 916480
      %v4655 = vsel %vm4654, %v4631, %v4633
      %v4656 = vsel %vm4654, %v4633, %v4635
      %v4657 = vsel %vm4654, %v4637, %v4639
      %v4658 = vsel %vm4654, %v4639, %v4641
      %v4659 = vsel %vm4654, %v4643, %v4645
      %v4660 = vsel %vm4654, %v4645, %v4647
      %v4661 = vsel %vm4654, %v4649, %v4651
      %v4662 = vsel %vm4654, %v4651, %v4653
      %v4672 = vsel %vm4144, %v4622, 0
      %v4675 = vsel %vm4144, %v4623, 0
      %v4678 = vsel %vm4144, %v4624, 0
      %v4681 = vsel %vm4144, %v4625, 0
      %v4684 = vsel %vm4144, %v4626, 0
      %v4687 = vsel %vm4144, %v4627, 0
      %v4690 = vsel %vm4144, %v4628, 0
      %v4693 = vsel %vm4144, %v4629, 0
      %4695 = vmatprep.subr.mxu0 %v4656
      %4696 = vmatpush1.msra.mxu0 %v4655
      %4697 = vmatprep.subr.mxu0 %v4658
      %4698 = vmatpush1.msra.mxu0 %v4657
      %4699 = vmatprep.subr.mxu0 %v4660
      %4700 = vmatpush1.msra.mxu0 %v4659
      %4701 = vmatprep.subr.mxu0 %v4662
      %4702 = vmatpush1.msra.mxu0 %v4661
      %4703 = vmatprep.subr.mxu0 0.0
      %4704 = vmatpush1.msra.mxu0 0.0
      %4705 = vmatprep.subr.mxu0 0.0
      %4706 = vmatpush1.msra.mxu0 0.0
      %4707 = vmatprep.subr.mxu0 0.0
      %4708 = vmatpush1.msra.mxu0 0.0
      %4709 = vmatprep.subr.mxu0 0.0
      %4710 = vmatpush1.msra.mxu0 0.0
      %4711 = vmatprep.subr.mxu0 0.0
      %4712 = vmatpush1.msra.mxu0 0.0
      %4713 = vmatprep.subr.mxu0 0.0
      %4714 = vmatpush1.msra.mxu0 0.0
      %4715 = vmatprep.subr.mxu0 0.0
      %4716 = vmatpush1.msra.mxu0 0.0
      %4717 = vmatprep.subr.mxu0 0.0
      %4718 = vmatpush1.msra.mxu0 0.0
      %4719 = vmatprep.subr.mxu0 0.0
      %4720 = vmatpush1.msra.mxu0 0.0
      %4721 = vmatprep.subr.mxu0 0.0
      %4722 = vmatpush1.msra.mxu0 0.0
      %4723 = vmatprep.subr.mxu0 0.0
      %4724 = vmatpush1.msra.mxu0 0.0
      %4725 = vmatprep.subr.mxu0 0.0
      %4726 = vmatpush1.msra.mxu0 0.0
      %4727 = vmatprep.subr.mxu0 0.0
      %4728 = vmatpush1.msra.mxu0 0.0
      %4729 = vmatprep.subr.mxu0 0.0
      %4730 = vmatpush1.msra.mxu0 0.0
      %4731 = vmatprep.subr.mxu0 0.0
      %4732 = vmatpush1.msra.mxu0 0.0
      %4733 = vmatprep.subr.mxu0 0.0
      %4734 = vmatpush1.msra.mxu0 0.0
      %4735 = vmatprep.subr.mxu0 0.0
      %4736 = vmatpush1.msra.mxu0 0.0
      %4737 = vmatprep.subr.mxu0 0.0
      %4738 = vmatpush1.msra.mxu0 0.0
      %4739 = vmatprep.subr.mxu0 0.0
      %4740 = vmatpush1.msra.mxu0 0.0
      %4741 = vmatprep.subr.mxu0 0.0
      %4742 = vmatpush1.msra.mxu0 0.0
      %4743 = vmatprep.subr.mxu0 0.0
      %4744 = vmatpush1.msra.mxu0 0.0
      %4745 = vmatprep.subr.mxu0 0.0
      %4746 = vmatpush1.msra.mxu0 0.0
      %4747 = vmatprep.subr.mxu0 0.0
      %4748 = vmatpush1.msra.mxu0 0.0
      %4749 = vmatprep.subr.mxu0 0.0
      %4750 = vmatpush1.msra.mxu0 0.0
      %4751 = vmatprep.subr.mxu0 0.0
      %4752 = vmatpush1.msra.mxu0 0.0
      %4753 = vmatprep.subr.mxu0 0.0
      %4754 = vmatpush1.msra.mxu0 0.0
      %4755 = vmatprep.subr.mxu0 0.0
      %4756 = vmatpush1.msra.mxu0 0.0
      %4757 = vmatprep.subr.mxu0 0.0
      %4758 = vmatpush1.msra.mxu0 0.0
      %4759 = vmatprep.mubr.f32.mxu0 0.0
      %4760 = vmatmul.mubr.f32.gmra.mrb[0].mxu0 %v4672
      %v4761 = vpop.f32.mrb[0].mxu0
      %v4762 = vadd.f32 0.0, %v4761
      %v4763 = vpop.f32.mrb[0].mxu0
      %v4764 = vadd.f32 0.0, %v4763
      %4765 = vmatprep.mubr.f32.mxu0 0.0
      %4766 = vmatmul.mubr.f32.gmra.mrb[0].mxu0 %v4675
      %v4767 = vpop.f32.mrb[0].mxu0
      %v4768 = vadd.f32 0.0, %v4767
      %v4769 = vpop.f32.mrb[0].mxu0
      %v4770 = vadd.f32 0.0, %v4769
      %4771 = vmatprep.mubr.f32.mxu0 0.0
      %4772 = vmatmul.mubr.f32.gmra.mrb[0].mxu0 %v4678
      %v4773 = vpop.f32.mrb[0].mxu0
      %v4774 = vadd.f32 0.0, %v4773
      %v4775 = vpop.f32.mrb[0].mxu0
      %v4776 = vadd.f32 0.0, %v4775
      %4777 = vmatprep.mubr.f32.mxu0 0.0
      %4778 = vmatmul.mubr.f32.gmra.mrb[0].mxu0 %v4681
      %v4779 = vpop.f32.mrb[0].mxu0
      %v4780 = vadd.f32 0.0, %v4779
      %v4781 = vpop.f32.mrb[0].mxu0
      %v4782 = vadd.f32 0.0, %v4781
      %4783 = vmatprep.mubr.f32.mxu0 0.0
      %4784 = vmatmul.mubr.f32.gmra.mrb[0].mxu0 %v4684
      %v4785 = vpop.f32.mrb[0].mxu0
      %v4786 = vadd.f32 0.0, %v4785
      %v4787 = vpop.f32.mrb[0].mxu0
      %v4788 = vadd.f32 0.0, %v4787
      %4789 = vmatprep.mubr.f32.mxu0 0.0
      %4790 = vmatmul.mubr.f32.gmra.mrb[0].mxu0 %v4687
      %v4791 = vpop.f32.mrb[0].mxu0
      %v4792 = vadd.f32 0.0, %v4791
      %v4793 = vpop.f32.mrb[0].mxu0
      %v4794 = vadd.f32 0.0, %v4793
      %4795 = vmatprep.mubr.f32.mxu0 0.0
      %4796 = vmatmul.mubr.f32.gmra.mrb[0].mxu0 %v4690
      %v4797 = vpop.f32.mrb[0].mxu0
      %v4798 = vadd.f32 0.0, %v4797
      %v4799 = vpop.f32.mrb[0].mxu0
      %v4800 = vadd.f32 0.0, %v4799
      %4801 = vmatprep.mubr.f32.mxu0 0.0
      %4802 = vmatmul.mubr.f32.gmra.mrb[0].mxu0 %v4693
      %v4803 = vpop.f32.mrb[0].mxu0
      %v4804 = vadd.f32 0.0, %v4803
      %v4805 = vpop.f32.mrb[0].mxu0
      %v4806 = vadd.f32 0.0, %v4805
      %4807 = vdwg.mxu0
      %v4808 = vadd.f32 %v4605, %v4762
      %v4809 = vadd.f32 %v4606, %v4764
      %v4810 = vadd.f32 %v4607, %v4768
      %v4811 = vadd.f32 %v4608, %v4770
      %v4812 = vadd.f32 %v4609, %v4774
      %v4813 = vadd.f32 %v4610, %v4776
      %v4814 = vadd.f32 %v4611, %v4780
      %v4815 = vadd.f32 %v4612, %v4782
      %v4816 = vadd.f32 %v4613, %v4786
      %v4817 = vadd.f32 %v4614, %v4788
      %v4818 = vadd.f32 %v4615, %v4792
      %v4819 = vadd.f32 %v4616, %v4794
      %v4820 = vadd.f32 %v4617, %v4798
      %v4821 = vadd.f32 %v4618, %v4800
      %v4822 = vadd.f32 %v4619, %v4804
      %v4823 = vadd.f32 %v4620, %v4806
      %s4824 = scalar_lea.vmem %s3, 256
      %v4825 = vld [vmem:[%s4824] sm:$0xff]
      %v4826 = vld [vmem:[%s4824 + $0x8] sm:$0xff]
      %v4827 = vld [vmem:[%s4824 + $0x10] sm:$0xff]
      %v4828 = vld [vmem:[%s4824 + $0x18] sm:$0xff]
      %v4829 = vld [vmem:[%s4824 + $0x20] sm:$0xff]
      %v4830 = vld [vmem:[%s4824 + $0x28] sm:$0xff]
      %v4831 = vld [vmem:[%s4824 + $0x30] sm:$0xff]
      %v4832 = vld [vmem:[%s4824 + $0x38] sm:$0xff]
      %4833 = vrot.lane.b32.xlu0 %v3713, 111
      %v4834 = vpop.permute.xlu0 %4833
      %4835 = vrot.lane.b32.xlu0 %v3715, 111
      %v4836 = vpop.permute.xlu0 %4835
      %4837 = vrot.lane.b32.xlu0 %v4057, 111
      %v4838 = vpop.permute.xlu0 %4837
      %4839 = vrot.lane.b32.xlu0 %v3719, 111
      %v4840 = vpop.permute.xlu0 %4839
      %4841 = vrot.lane.b32.xlu0 %v3721, 111
      %v4842 = vpop.permute.xlu0 %4841
      %4843 = vrot.lane.b32.xlu0 %v4062, 111
      %v4844 = vpop.permute.xlu0 %4843
      %4845 = vrot.lane.b32.xlu0 %v3725, 111
      %v4846 = vpop.permute.xlu0 %4845
      %4847 = vrot.lane.b32.xlu0 %v3727, 111
      %v4848 = vpop.permute.xlu0 %4847
      %4849 = vrot.lane.b32.xlu0 %v4067, 111
      %v4850 = vpop.permute.xlu0 %4849
      %4851 = vrot.lane.b32.xlu0 %v3731, 111
      %v4852 = vpop.permute.xlu0 %4851
      %4853 = vrot.lane.b32.xlu0 %v3733, 111
      %v4854 = vpop.permute.xlu0 %4853
      %4855 = vrot.lane.b32.xlu0 %v4072, 111
      %v4856 = vpop.permute.xlu0 %4855
      %vm4857 = vcmask 908288
      %v4858 = vsel %vm4857, %v4834, %v4836
      %v4859 = vsel %vm4857, %v4836, %v4838
      %v4860 = vsel %vm4857, %v4840, %v4842
      %v4861 = vsel %vm4857, %v4842, %v4844
      %v4862 = vsel %vm4857, %v4846, %v4848
      %v4863 = vsel %vm4857, %v4848, %v4850
      %v4864 = vsel %vm4857, %v4852, %v4854
      %v4865 = vsel %vm4857, %v4854, %v4856
      %v4875 = vsel %vm4144, %v4825, 0
      %v4878 = vsel %vm4144, %v4826, 0
      %v4881 = vsel %vm4144, %v4827, 0
      %v4884 = vsel %vm4144, %v4828, 0
      %v4887 = vsel %vm4144, %v4829, 0
      %v4890 = vsel %vm4144, %v4830, 0
      %v4893 = vsel %vm4144, %v4831, 0
      %v4896 = vsel %vm4144, %v4832, 0
      %4898 = vmatprep.subr.mxu0 %v4859
      %4899 = vmatpush1.msra.mxu0 %v4858
      %4900 = vmatprep.subr.mxu0 %v4861
      %4901 = vmatpush1.msra.mxu0 %v4860
      %4902 = vmatprep.subr.mxu0 %v4863
      %4903 = vmatpush1.msra.mxu0 %v4862
      %4904 = vmatprep.subr.mxu0 %v4865
      %4905 = vmatpush1.msra.mxu0 %v4864
      %4906 = vmatprep.subr.mxu0 0.0
      %4907 = vmatpush1.msra.mxu0 0.0
      %4908 = vmatprep.subr.mxu0 0.0
      %4909 = vmatpush1.msra.mxu0 0.0
      %4910 = vmatprep.subr.mxu0 0.0
      %4911 = vmatpush1.msra.mxu0 0.0
      %4912 = vmatprep.subr.mxu0 0.0
      %4913 = vmatpush1.msra.mxu0 0.0
      %4914 = vmatprep.subr.mxu0 0.0
      %4915 = vmatpush1.msra.mxu0 0.0
      %4916 = vmatprep.subr.mxu0 0.0
      %4917 = vmatpush1.msra.mxu0 0.0
      %4918 = vmatprep.subr.mxu0 0.0
      %4919 = vmatpush1.msra.mxu0 0.0
      %4920 = vmatprep.subr.mxu0 0.0
      %4921 = vmatpush1.msra.mxu0 0.0
      %4922 = vmatprep.subr.mxu0 0.0
      %4923 = vmatpush1.msra.mxu0 0.0
      %4924 = vmatprep.subr.mxu0 0.0
      %4925 = vmatpush1.msra.mxu0 0.0
      %4926 = vmatprep.subr.mxu0 0.0
      %4927 = vmatpush1.msra.mxu0 0.0
      %4928 = vmatprep.subr.mxu0 0.0
      %4929 = vmatpush1.msra.mxu0 0.0
      %4930 = vmatprep.subr.mxu0 0.0
      %4931 = vmatpush1.msra.mxu0 0.0
      %4932 = vmatprep.subr.mxu0 0.0
      %4933 = vmatpush1.msra.mxu0 0.0
      %4934 = vmatprep.subr.mxu0 0.0
      %4935 = vmatpush1.msra.mxu0 0.0
      %4936 = vmatprep.subr.mxu0 0.0
      %4937 = vmatpush1.msra.mxu0 0.0
      %4938 = vmatprep.subr.mxu0 0.0
      %4939 = vmatpush1.msra.mxu0 0.0
      %4940 = vmatprep.subr.mxu0 0.0
      %4941 = vmatpush1.msra.mxu0 0.0
      %4942 = vmatprep.subr.mxu0 0.0
      %4943 = vmatpush1.msra.mxu0 0.0
      %4944 = vmatprep.subr.mxu0 0.0
      %4945 = vmatpush1.msra.mxu0 0.0
      %4946 = vmatprep.subr.mxu0 0.0
      %4947 = vmatpush1.msra.mxu0 0.0
      %4948 = vmatprep.subr.mxu0 0.0
      %4949 = vmatpush1.msra.mxu0 0.0
      %4950 = vmatprep.subr.mxu0 0.0
      %4951 = vmatpush1.msra.mxu0 0.0
      %4952 = vmatprep.subr.mxu0 0.0
      %4953 = vmatpush1.msra.mxu0 0.0
      %4954 = vmatprep.subr.mxu0 0.0
      %4955 = vmatpush1.msra.mxu0 0.0
      %4956 = vmatprep.subr.mxu0 0.0
      %4957 = vmatpush1.msra.mxu0 0.0
      %4958 = vmatprep.subr.mxu0 0.0
      %4959 = vmatpush1.msra.mxu0 0.0
      %4960 = vmatprep.subr.mxu0 0.0
      %4961 = vmatpush1.msra.mxu0 0.0
      %4962 = vmatprep.mubr.f32.mxu0 0.0
      %4963 = vmatmul.mubr.f32.gmra.mrb[0].mxu0 %v4875
      %v4964 = vpop.f32.mrb[0].mxu0
      %v4965 = vadd.f32 0.0, %v4964
      %v4966 = vpop.f32.mrb[0].mxu0
      %v4967 = vadd.f32 0.0, %v4966
      %4968 = vmatprep.mubr.f32.mxu0 0.0
      %4969 = vmatmul.mubr.f32.gmra.mrb[0].mxu0 %v4878
      %v4970 = vpop.f32.mrb[0].mxu0
      %v4971 = vadd.f32 0.0, %v4970
      %v4972 = vpop.f32.mrb[0].mxu0
      %v4973 = vadd.f32 0.0, %v4972
      %4974 = vmatprep.mubr.f32.mxu0 0.0
      %4975 = vmatmul.mubr.f32.gmra.mrb[0].mxu0 %v4881
      %v4976 = vpop.f32.mrb[0].mxu0
      %v4977 = vadd.f32 0.0, %v4976
      %v4978 = vpop.f32.mrb[0].mxu0
      %v4979 = vadd.f32 0.0, %v4978
      %4980 = vmatprep.mubr.f32.mxu0 0.0
      %4981 = vmatmul.mubr.f32.gmra.mrb[0].mxu0 %v4884
      %v4982 = vpop.f32.mrb[0].mxu0
      %v4983 = vadd.f32 0.0, %v4982
      %v4984 = vpop.f32.mrb[0].mxu0
      %v4985 = vadd.f32 0.0, %v4984
      %4986 = vmatprep.mubr.f32.mxu0 0.0
      %4987 = vmatmul.mubr.f32.gmra.mrb[0].mxu0 %v4887
      %v4988 = vpop.f32.mrb[0].mxu0
      %v4989 = vadd.f32 0.0, %v4988
      %v4990 = vpop.f32.mrb[0].mxu0
      %v4991 = vadd.f32 0.0, %v4990
      %4992 = vmatprep.mubr.f32.mxu0 0.0
      %4993 = vmatmul.mubr.f32.gmra.mrb[0].mxu0 %v4890
      %v4994 = vpop.f32.mrb[0].mxu0
      %v4995 = vadd.f32 0.0, %v4994
      %v4996 = vpop.f32.mrb[0].mxu0
      %v4997 = vadd.f32 0.0, %v4996
      %4998 = vmatprep.mubr.f32.mxu0 0.0
      %4999 = vmatmul.mubr.f32.gmra.mrb[0].mxu0 %v4893
      %v5000 = vpop.f32.mrb[0].mxu0
      %v5001 = vadd.f32 0.0, %v5000
      %v5002 = vpop.f32.mrb[0].mxu0
      %v5003 = vadd.f32 0.0, %v5002
      %5004 = vmatprep.mubr.f32.mxu0 0.0
      %5005 = vmatmul.mubr.f32.gmra.mrb[0].mxu0 %v4896
      %v5006 = vpop.f32.mrb[0].mxu0
      %v5007 = vadd.f32 0.0, %v5006
      %v5008 = vpop.f32.mrb[0].mxu0
      %v5009 = vadd.f32 0.0, %v5008
      %5010 = vdwg.mxu0
      %v5011 = vadd.f32 %v4808, %v4965
      %v5012 = vadd.f32 %v4809, %v4967
      %v5013 = vadd.f32 %v4810, %v4971
      %v5014 = vadd.f32 %v4811, %v4973
      %v5015 = vadd.f32 %v4812, %v4977
      %v5016 = vadd.f32 %v4813, %v4979
      %v5017 = vadd.f32 %v4814, %v4983
      %v5018 = vadd.f32 %v4815, %v4985
      %v5019 = vadd.f32 %v4816, %v4989
      %v5020 = vadd.f32 %v4817, %v4991
      %v5021 = vadd.f32 %v4818, %v4995
      %v5022 = vadd.f32 %v4819, %v4997
      %v5023 = vadd.f32 %v4820, %v5001
      %v5024 = vadd.f32 %v4821, %v5003
      %v5025 = vadd.f32 %v4822, %v5007
      %v5026 = vadd.f32 %v4823, %v5009
      %s5027 = scalar_lea.vmem %s3, 320
      %v5028 = vld [vmem:[%s5027] sm:$0xff]
      %v5029 = vld [vmem:[%s5027 + $0x8] sm:$0xff]
      %v5030 = vld [vmem:[%s5027 + $0x10] sm:$0xff]
      %v5031 = vld [vmem:[%s5027 + $0x18] sm:$0xff]
      %v5032 = vld [vmem:[%s5027 + $0x20] sm:$0xff]
      %v5033 = vld [vmem:[%s5027 + $0x28] sm:$0xff]
      %v5034 = vld [vmem:[%s5027 + $0x30] sm:$0xff]
      %v5035 = vld [vmem:[%s5027 + $0x38] sm:$0xff]
      %5036 = vrot.lane.b32.xlu0 %v3713, 110
      %v5037 = vpop.permute.xlu0 %5036
      %5038 = vrot.lane.b32.xlu0 %v3715, 110
      %v5039 = vpop.permute.xlu0 %5038
      %5040 = vrot.lane.b32.xlu0 %v4057, 110
      %v5041 = vpop.permute.xlu0 %5040
      %5042 = vrot.lane.b32.xlu0 %v3719, 110
      %v5043 = vpop.permute.xlu0 %5042
      %5044 = vrot.lane.b32.xlu0 %v3721, 110
      %v5045 = vpop.permute.xlu0 %5044
      %5046 = vrot.lane.b32.xlu0 %v4062, 110
      %v5047 = vpop.permute.xlu0 %5046
      %5048 = vrot.lane.b32.xlu0 %v3725, 110
      %v5049 = vpop.permute.xlu0 %5048
      %5050 = vrot.lane.b32.xlu0 %v3727, 110
      %v5051 = vpop.permute.xlu0 %5050
      %5052 = vrot.lane.b32.xlu0 %v4067, 110
      %v5053 = vpop.permute.xlu0 %5052
      %5054 = vrot.lane.b32.xlu0 %v3731, 110
      %v5055 = vpop.permute.xlu0 %5054
      %5056 = vrot.lane.b32.xlu0 %v3733, 110
      %v5057 = vpop.permute.xlu0 %5056
      %5058 = vrot.lane.b32.xlu0 %v4072, 110
      %v5059 = vpop.permute.xlu0 %5058
      %vm5060 = vcmask 900096
      %v5061 = vsel %vm5060, %v5037, %v5039
      %v5062 = vsel %vm5060, %v5039, %v5041
      %v5063 = vsel %vm5060, %v5043, %v5045
      %v5064 = vsel %vm5060, %v5045, %v5047
      %v5065 = vsel %vm5060, %v5049, %v5051
      %v5066 = vsel %vm5060, %v5051, %v5053
      %v5067 = vsel %vm5060, %v5055, %v5057
      %v5068 = vsel %vm5060, %v5057, %v5059
      %v5078 = vsel %vm4144, %v5028, 0
      %v5081 = vsel %vm4144, %v5029, 0
      %v5084 = vsel %vm4144, %v5030, 0
      %v5087 = vsel %vm4144, %v5031, 0
      %v5090 = vsel %vm4144, %v5032, 0
      %v5093 = vsel %vm4144, %v5033, 0
      %v5096 = vsel %vm4144, %v5034, 0
      %v5099 = vsel %vm4144, %v5035, 0
      %5101 = vmatprep.subr.mxu0 %v5062
      %5102 = vmatpush1.msra.mxu0 %v5061
      %5103 = vmatprep.subr.mxu0 %v5064
      %5104 = vmatpush1.msra.mxu0 %v5063
      %5105 = vmatprep.subr.mxu0 %v5066
      %5106 = vmatpush1.msra.mxu0 %v5065
      %5107 = vmatprep.subr.mxu0 %v5068
      %5108 = vmatpush1.msra.mxu0 %v5067
      %5109 = vmatprep.subr.mxu0 0.0
      %5110 = vmatpush1.msra.mxu0 0.0
      %5111 = vmatprep.subr.mxu0 0.0
      %5112 = vmatpush1.msra.mxu0 0.0
      %5113 = vmatprep.subr.mxu0 0.0
      %5114 = vmatpush1.msra.mxu0 0.0
      %5115 = vmatprep.subr.mxu0 0.0
      %5116 = vmatpush1.msra.mxu0 0.0
      %5117 = vmatprep.subr.mxu0 0.0
      %5118 = vmatpush1.msra.mxu0 0.0
      %5119 = vmatprep.subr.mxu0 0.0
      %5120 = vmatpush1.msra.mxu0 0.0
      %5121 = vmatprep.subr.mxu0 0.0
      %5122 = vmatpush1.msra.mxu0 0.0
      %5123 = vmatprep.subr.mxu0 0.0
      %5124 = vmatpush1.msra.mxu0 0.0
      %5125 = vmatprep.subr.mxu0 0.0
      %5126 = vmatpush1.msra.mxu0 0.0
      %5127 = vmatprep.subr.mxu0 0.0
      %5128 = vmatpush1.msra.mxu0 0.0
      %5129 = vmatprep.subr.mxu0 0.0
      %5130 = vmatpush1.msra.mxu0 0.0
      %5131 = vmatprep.subr.mxu0 0.0
      %5132 = vmatpush1.msra.mxu0 0.0
      %5133 = vmatprep.subr.mxu0 0.0
      %5134 = vmatpush1.msra.mxu0 0.0
      %5135 = vmatprep.subr.mxu0 0.0
      %5136 = vmatpush1.msra.mxu0 0.0
      %5137 = vmatprep.subr.mxu0 0.0
      %5138 = vmatpush1.msra.mxu0 0.0
      %5139 = vmatprep.subr.mxu0 0.0
      %5140 = vmatpush1.msra.mxu0 0.0
      %5141 = vmatprep.subr.mxu0 0.0
      %5142 = vmatpush1.msra.mxu0 0.0
      %5143 = vmatprep.subr.mxu0 0.0
      %5144 = vmatpush1.msra.mxu0 0.0
      %5145 = vmatprep.subr.mxu0 0.0
      %5146 = vmatpush1.msra.mxu0 0.0
      %5147 = vmatprep.subr.mxu0 0.0
      %5148 = vmatpush1.msra.mxu0 0.0
      %5149 = vmatprep.subr.mxu0 0.0
      %5150 = vmatpush1.msra.mxu0 0.0
      %5151 = vmatprep.subr.mxu0 0.0
      %5152 = vmatpush1.msra.mxu0 0.0
      %5153 = vmatprep.subr.mxu0 0.0
      %5154 = vmatpush1.msra.mxu0 0.0
      %5155 = vmatprep.subr.mxu0 0.0
      %5156 = vmatpush1.msra.mxu0 0.0
      %5157 = vmatprep.subr.mxu0 0.0
      %5158 = vmatpush1.msra.mxu0 0.0
      %5159 = vmatprep.subr.mxu0 0.0
      %5160 = vmatpush1.msra.mxu0 0.0
      %5161 = vmatprep.subr.mxu0 0.0
      %5162 = vmatpush1.msra.mxu0 0.0
      %5163 = vmatprep.subr.mxu0 0.0
      %5164 = vmatpush1.msra.mxu0 0.0
      %5165 = vmatprep.mubr.f32.mxu0 0.0
      %5166 = vmatmul.mubr.f32.gmra.mrb[0].mxu0 %v5078
      %v5167 = vpop.f32.mrb[0].mxu0
      %v5168 = vadd.f32 0.0, %v5167
      %v5169 = vpop.f32.mrb[0].mxu0
      %v5170 = vadd.f32 0.0, %v5169
      %5171 = vmatprep.mubr.f32.mxu0 0.0
      %5172 = vmatmul.mubr.f32.gmra.mrb[0].mxu0 %v5081
      %v5173 = vpop.f32.mrb[0].mxu0
      %v5174 = vadd.f32 0.0, %v5173
      %v5175 = vpop.f32.mrb[0].mxu0
      %v5176 = vadd.f32 0.0, %v5175
      %5177 = vmatprep.mubr.f32.mxu0 0.0
      %5178 = vmatmul.mubr.f32.gmra.mrb[0].mxu0 %v5084
      %v5179 = vpop.f32.mrb[0].mxu0
      %v5180 = vadd.f32 0.0, %v5179
      %v5181 = vpop.f32.mrb[0].mxu0
      %v5182 = vadd.f32 0.0, %v5181
      %5183 = vmatprep.mubr.f32.mxu0 0.0
      %5184 = vmatmul.mubr.f32.gmra.mrb[0].mxu0 %v5087
      %v5185 = vpop.f32.mrb[0].mxu0
      %v5186 = vadd.f32 0.0, %v5185
      %v5187 = vpop.f32.mrb[0].mxu0
      %v5188 = vadd.f32 0.0, %v5187
      %5189 = vmatprep.mubr.f32.mxu0 0.0
      %5190 = vmatmul.mubr.f32.gmra.mrb[0].mxu0 %v5090
      %v5191 = vpop.f32.mrb[0].mxu0
      %v5192 = vadd.f32 0.0, %v5191
      %v5193 = vpop.f32.mrb[0].mxu0
      %v5194 = vadd.f32 0.0, %v5193
      %5195 = vmatprep.mubr.f32.mxu0 0.0
      %5196 = vmatmul.mubr.f32.gmra.mrb[0].mxu0 %v5093
      %v5197 = vpop.f32.mrb[0].mxu0
      %v5198 = vadd.f32 0.0, %v5197
      %v5199 = vpop.f32.mrb[0].mxu0
      %v5200 = vadd.f32 0.0, %v5199
      %5201 = vmatprep.mubr.f32.mxu0 0.0
      %5202 = vmatmul.mubr.f32.gmra.mrb[0].mxu0 %v5096
      %v5203 = vpop.f32.mrb[0].mxu0
      %v5204 = vadd.f32 0.0, %v5203
      %v5205 = vpop.f32.mrb[0].mxu0
      %v5206 = vadd.f32 0.0, %v5205
      %5207 = vmatprep.mubr.f32.mxu0 0.0
      %5208 = vmatmul.mubr.f32.gmra.mrb[0].mxu0 %v5099
      %v5209 = vpop.f32.mrb[0].mxu0
      %v5210 = vadd.f32 0.0, %v5209
      %v5211 = vpop.f32.mrb[0].mxu0
      %v5212 = vadd.f32 0.0, %v5211
      %5213 = vdwg.mxu0
      %v5214 = vadd.f32 %v5011, %v5168
      %v5215 = vadd.f32 %v5012, %v5170
      %v5216 = vadd.f32 %v5013, %v5174
      %v5217 = vadd.f32 %v5014, %v5176
      %v5218 = vadd.f32 %v5015, %v5180
      %v5219 = vadd.f32 %v5016, %v5182
      %v5220 = vadd.f32 %v5017, %v5186
      %v5221 = vadd.f32 %v5018, %v5188
      %v5222 = vadd.f32 %v5019, %v5192
      %v5223 = vadd.f32 %v5020, %v5194
      %v5224 = vadd.f32 %v5021, %v5198
      %v5225 = vadd.f32 %v5022, %v5200
      %v5226 = vadd.f32 %v5023, %v5204
      %v5227 = vadd.f32 %v5024, %v5206
      %v5228 = vadd.f32 %v5025, %v5210
      %v5229 = vadd.f32 %v5026, %v5212
      %s5230 = scalar_lea.vmem %s3, 384
      %v5231 = vld [vmem:[%s5230] sm:$0xff]
      %v5232 = vld [vmem:[%s5230 + $0x8] sm:$0xff]
      %v5233 = vld [vmem:[%s5230 + $0x10] sm:$0xff]
      %v5234 = vld [vmem:[%s5230 + $0x18] sm:$0xff]
      %v5235 = vld [vmem:[%s5230 + $0x20] sm:$0xff]
      %v5236 = vld [vmem:[%s5230 + $0x28] sm:$0xff]
      %v5237 = vld [vmem:[%s5230 + $0x30] sm:$0xff]
      %v5238 = vld [vmem:[%s5230 + $0x38] sm:$0xff]
      %5239 = vrot.lane.b32.xlu0 %v3713, 96
      %v5240 = vpop.permute.xlu0 %5239
      %5241 = vrot.lane.b32.xlu0 %v3715, 96
      %v5242 = vpop.permute.xlu0 %5241
      %5243 = vrot.lane.b32.xlu0 %v4057, 96
      %v5244 = vpop.permute.xlu0 %5243
      %5245 = vrot.lane.b32.xlu0 %v3719, 96
      %v5246 = vpop.permute.xlu0 %5245
      %5247 = vrot.lane.b32.xlu0 %v3721, 96
      %v5248 = vpop.permute.xlu0 %5247
      %5249 = vrot.lane.b32.xlu0 %v4062, 96
      %v5250 = vpop.permute.xlu0 %5249
      %5251 = vrot.lane.b32.xlu0 %v3725, 96
      %v5252 = vpop.permute.xlu0 %5251
      %5253 = vrot.lane.b32.xlu0 %v3727, 96
      %v5254 = vpop.permute.xlu0 %5253
      %5255 = vrot.lane.b32.xlu0 %v4067, 96
      %v5256 = vpop.permute.xlu0 %5255
      %5257 = vrot.lane.b32.xlu0 %v3731, 96
      %v5258 = vpop.permute.xlu0 %5257
      %5259 = vrot.lane.b32.xlu0 %v3733, 96
      %v5260 = vpop.permute.xlu0 %5259
      %5261 = vrot.lane.b32.xlu0 %v4072, 96
      %v5262 = vpop.permute.xlu0 %5261
      %v5263 = vsel %vm1741, %v5240, %v5242
      %v5264 = vsel %vm1741, %v5242, %v5244
      %v5265 = vsel %vm1741, %v5246, %v5248
      %v5266 = vsel %vm1741, %v5248, %v5250
      %v5267 = vsel %vm1741, %v5252, %v5254
      %v5268 = vsel %vm1741, %v5254, %v5256
      %v5269 = vsel %vm1741, %v5258, %v5260
      %v5270 = vsel %vm1741, %v5260, %v5262
      %v5280 = vsel %vm4144, %v5231, 0
      %v5283 = vsel %vm4144, %v5232, 0
      %v5286 = vsel %vm4144, %v5233, 0
      %v5289 = vsel %vm4144, %v5234, 0
      %v5292 = vsel %vm4144, %v5235, 0
      %v5295 = vsel %vm4144, %v5236, 0
      %v5298 = vsel %vm4144, %v5237, 0
      %v5301 = vsel %vm4144, %v5238, 0
      %5303 = vmatprep.subr.mxu0 %v5264
      %5304 = vmatpush1.msra.mxu0 %v5263
      %5305 = vmatprep.subr.mxu0 %v5266
      %5306 = vmatpush1.msra.mxu0 %v5265
      %5307 = vmatprep.subr.mxu0 %v5268
      %5308 = vmatpush1.msra.mxu0 %v5267
      %5309 = vmatprep.subr.mxu0 %v5270
      %5310 = vmatpush1.msra.mxu0 %v5269
      %5311 = vmatprep.subr.mxu0 0.0
      %5312 = vmatpush1.msra.mxu0 0.0
      %5313 = vmatprep.subr.mxu0 0.0
      %5314 = vmatpush1.msra.mxu0 0.0
      %5315 = vmatprep.subr.mxu0 0.0
      %5316 = vmatpush1.msra.mxu0 0.0
      %5317 = vmatprep.subr.mxu0 0.0
      %5318 = vmatpush1.msra.mxu0 0.0
      %5319 = vmatprep.subr.mxu0 0.0
      %5320 = vmatpush1.msra.mxu0 0.0
      %5321 = vmatprep.subr.mxu0 0.0
      %5322 = vmatpush1.msra.mxu0 0.0
      %5323 = vmatprep.subr.mxu0 0.0
      %5324 = vmatpush1.msra.mxu0 0.0
      %5325 = vmatprep.subr.mxu0 0.0
      %5326 = vmatpush1.msra.mxu0 0.0
      %5327 = vmatprep.subr.mxu0 0.0
      %5328 = vmatpush1.msra.mxu0 0.0
      %5329 = vmatprep.subr.mxu0 0.0
      %5330 = vmatpush1.msra.mxu0 0.0
      %5331 = vmatprep.subr.mxu0 0.0
      %5332 = vmatpush1.msra.mxu0 0.0
      %5333 = vmatprep.subr.mxu0 0.0
      %5334 = vmatpush1.msra.mxu0 0.0
      %5335 = vmatprep.subr.mxu0 0.0
      %5336 = vmatpush1.msra.mxu0 0.0
      %5337 = vmatprep.subr.mxu0 0.0
      %5338 = vmatpush1.msra.mxu0 0.0
      %5339 = vmatprep.subr.mxu0 0.0
      %5340 = vmatpush1.msra.mxu0 0.0
      %5341 = vmatprep.subr.mxu0 0.0
      %5342 = vmatpush1.msra.mxu0 0.0
      %5343 = vmatprep.subr.mxu0 0.0
      %5344 = vmatpush1.msra.mxu0 0.0
      %5345 = vmatprep.subr.mxu0 0.0
      %5346 = vmatpush1.msra.mxu0 0.0
      %5347 = vmatprep.subr.mxu0 0.0
      %5348 = vmatpush1.msra.mxu0 0.0
      %5349 = vmatprep.subr.mxu0 0.0
      %5350 = vmatpush1.msra.mxu0 0.0
      %5351 = vmatprep.subr.mxu0 0.0
      %5352 = vmatpush1.msra.mxu0 0.0
      %5353 = vmatprep.subr.mxu0 0.0
      %5354 = vmatpush1.msra.mxu0 0.0
      %5355 = vmatprep.subr.mxu0 0.0
      %5356 = vmatpush1.msra.mxu0 0.0
      %5357 = vmatprep.subr.mxu0 0.0
      %5358 = vmatpush1.msra.mxu0 0.0
      %5359 = vmatprep.subr.mxu0 0.0
      %5360 = vmatpush1.msra.mxu0 0.0
      %5361 = vmatprep.subr.mxu0 0.0
      %5362 = vmatpush1.msra.mxu0 0.0
      %5363 = vmatprep.subr.mxu0 0.0
      %5364 = vmatpush1.msra.mxu0 0.0
      %5365 = vmatprep.subr.mxu0 0.0
      %5366 = vmatpush1.msra.mxu0 0.0
      %5367 = vmatprep.mubr.f32.mxu0 0.0
      %5368 = vmatmul.mubr.f32.gmra.mrb[0].mxu0 %v5280
      %v5369 = vpop.f32.mrb[0].mxu0
      %v5370 = vadd.f32 0.0, %v5369
      %v5371 = vpop.f32.mrb[0].mxu0
      %v5372 = vadd.f32 0.0, %v5371
      %5373 = vmatprep.mubr.f32.mxu0 0.0
      %5374 = vmatmul.mubr.f32.gmra.mrb[0].mxu0 %v5283
      %v5375 = vpop.f32.mrb[0].mxu0
      %v5376 = vadd.f32 0.0, %v5375
      %v5377 = vpop.f32.mrb[0].mxu0
      %v5378 = vadd.f32 0.0, %v5377
      %5379 = vmatprep.mubr.f32.mxu0 0.0
      %5380 = vmatmul.mubr.f32.gmra.mrb[0].mxu0 %v5286
      %v5381 = vpop.f32.mrb[0].mxu0
      %v5382 = vadd.f32 0.0, %v5381
      %v5383 = vpop.f32.mrb[0].mxu0
      %v5384 = vadd.f32 0.0, %v5383
      %5385 = vmatprep.mubr.f32.mxu0 0.0
      %5386 = vmatmul.mubr.f32.gmra.mrb[0].mxu0 %v5289
      %v5387 = vpop.f32.mrb[0].mxu0
      %v5388 = vadd.f32 0.0, %v5387
      %v5389 = vpop.f32.mrb[0].mxu0
      %v5390 = vadd.f32 0.0, %v5389
      %5391 = vmatprep.mubr.f32.mxu0 0.0
      %5392 = vmatmul.mubr.f32.gmra.mrb[0].mxu0 %v5292
      %v5393 = vpop.f32.mrb[0].mxu0
      %v5394 = vadd.f32 0.0, %v5393
      %v5395 = vpop.f32.mrb[0].mxu0
      %v5396 = vadd.f32 0.0, %v5395
      %5397 = vmatprep.mubr.f32.mxu0 0.0
      %5398 = vmatmul.mubr.f32.gmra.mrb[0].mxu0 %v5295
      %v5399 = vpop.f32.mrb[0].mxu0
      %v5400 = vadd.f32 0.0, %v5399
      %v5401 = vpop.f32.mrb[0].mxu0
      %v5402 = vadd.f32 0.0, %v5401
      %5403 = vmatprep.mubr.f32.mxu0 0.0
      %5404 = vmatmul.mubr.f32.gmra.mrb[0].mxu0 %v5298
      %v5405 = vpop.f32.mrb[0].mxu0
      %v5406 = vadd.f32 0.0, %v5405
      %v5407 = vpop.f32.mrb[0].mxu0
      %v5408 = vadd.f32 0.0, %v5407
      %5409 = vmatprep.mubr.f32.mxu0 0.0
      %5410 = vmatmul.mubr.f32.gmra.mrb[0].mxu0 %v5301
      %v5411 = vpop.f32.mrb[0].mxu0
      %v5412 = vadd.f32 0.0, %v5411
      %v5413 = vpop.f32.mrb[0].mxu0
      %v5414 = vadd.f32 0.0, %v5413
      %5415 = vdwg.mxu0
      %v5416 = vadd.f32 %v5214, %v5370
      %v5417 = vadd.f32 %v5215, %v5372
      %v5418 = vadd.f32 %v5216, %v5376
      %v5419 = vadd.f32 %v5217, %v5378
      %v5420 = vadd.f32 %v5218, %v5382
      %v5421 = vadd.f32 %v5219, %v5384
      %v5422 = vadd.f32 %v5220, %v5388
      %v5423 = vadd.f32 %v5221, %v5390
      %v5424 = vadd.f32 %v5222, %v5394
      %v5425 = vadd.f32 %v5223, %v5396
      %v5426 = vadd.f32 %v5224, %v5400
      %v5427 = vadd.f32 %v5225, %v5402
      %v5428 = vadd.f32 %v5226, %v5406
      %v5429 = vadd.f32 %v5227, %v5408
      %v5430 = vadd.f32 %v5228, %v5412
      %v5431 = vadd.f32 %v5229, %v5414
      %s5432 = scalar_lea.vmem %s3, 448
      %v5433 = vld [vmem:[%s5432] sm:$0xff]
      %v5434 = vld [vmem:[%s5432 + $0x8] sm:$0xff]
      %v5435 = vld [vmem:[%s5432 + $0x10] sm:$0xff]
      %v5436 = vld [vmem:[%s5432 + $0x18] sm:$0xff]
      %v5437 = vld [vmem:[%s5432 + $0x20] sm:$0xff]
      %v5438 = vld [vmem:[%s5432 + $0x28] sm:$0xff]
      %v5439 = vld [vmem:[%s5432 + $0x30] sm:$0xff]
      %v5440 = vld [vmem:[%s5432 + $0x38] sm:$0xff]
      %5441 = vrot.lane.b32.xlu0 %v3713, 95
      %v5442 = vpop.permute.xlu0 %5441
      %5443 = vrot.lane.b32.xlu0 %v3715, 95
      %v5444 = vpop.permute.xlu0 %5443
      %5445 = vrot.lane.b32.xlu0 %v4057, 95
      %v5446 = vpop.permute.xlu0 %5445
      %5447 = vrot.lane.b32.xlu0 %v3719, 95
      %v5448 = vpop.permute.xlu0 %5447
      %5449 = vrot.lane.b32.xlu0 %v3721, 95
      %v5450 = vpop.permute.xlu0 %5449
      %5451 = vrot.lane.b32.xlu0 %v4062, 95
      %v5452 = vpop.permute.xlu0 %5451
      %5453 = vrot.lane.b32.xlu0 %v3725, 95
      %v5454 = vpop.permute.xlu0 %5453
      %5455 = vrot.lane.b32.xlu0 %v3727, 95
      %v5456 = vpop.permute.xlu0 %5455
      %5457 = vrot.lane.b32.xlu0 %v4067, 95
      %v5458 = vpop.permute.xlu0 %5457
      %5459 = vrot.lane.b32.xlu0 %v3731, 95
      %v5460 = vpop.permute.xlu0 %5459
      %5461 = vrot.lane.b32.xlu0 %v3733, 95
      %v5462 = vpop.permute.xlu0 %5461
      %5463 = vrot.lane.b32.xlu0 %v4072, 95
      %v5464 = vpop.permute.xlu0 %5463
      %vm5465 = vcmask 777216
      %v5466 = vsel %vm5465, %v5442, %v5444
      %v5467 = vsel %vm5465, %v5444, %v5446
      %v5468 = vsel %vm5465, %v5448, %v5450
      %v5469 = vsel %vm5465, %v5450, %v5452
      %v5470 = vsel %vm5465, %v5454, %v5456
      %v5471 = vsel %vm5465, %v5456, %v5458
      %v5472 = vsel %vm5465, %v5460, %v5462
      %v5473 = vsel %vm5465, %v5462, %v5464
      %v5483 = vsel %vm4144, %v5433, 0
      %v5486 = vsel %vm4144, %v5434, 0
      %v5489 = vsel %vm4144, %v5435, 0
      %v5492 = vsel %vm4144, %v5436, 0
      %v5495 = vsel %vm4144, %v5437, 0
      %v5498 = vsel %vm4144, %v5438, 0
      %v5501 = vsel %vm4144, %v5439, 0
      %v5504 = vsel %vm4144, %v5440, 0
      %5506 = vmatprep.subr.mxu0 %v5467
      %5507 = vmatpush1.msra.mxu0 %v5466
      %5508 = vmatprep.subr.mxu0 %v5469
      %5509 = vmatpush1.msra.mxu0 %v5468
      %5510 = vmatprep.subr.mxu0 %v5471
      %5511 = vmatpush1.msra.mxu0 %v5470
      %5512 = vmatprep.subr.mxu0 %v5473
      %5513 = vmatpush1.msra.mxu0 %v5472
      %5514 = vmatprep.subr.mxu0 0.0
      %5515 = vmatpush1.msra.mxu0 0.0
      %5516 = vmatprep.subr.mxu0 0.0
      %5517 = vmatpush1.msra.mxu0 0.0
      %5518 = vmatprep.subr.mxu0 0.0
      %5519 = vmatpush1.msra.mxu0 0.0
      %5520 = vmatprep.subr.mxu0 0.0
      %5521 = vmatpush1.msra.mxu0 0.0
      %5522 = vmatprep.subr.mxu0 0.0
      %5523 = vmatpush1.msra.mxu0 0.0
      %5524 = vmatprep.subr.mxu0 0.0
      %5525 = vmatpush1.msra.mxu0 0.0
      %5526 = vmatprep.subr.mxu0 0.0
      %5527 = vmatpush1.msra.mxu0 0.0
      %5528 = vmatprep.subr.mxu0 0.0
      %5529 = vmatpush1.msra.mxu0 0.0
      %5530 = vmatprep.subr.mxu0 0.0
      %5531 = vmatpush1.msra.mxu0 0.0
      %5532 = vmatprep.subr.mxu0 0.0
      %5533 = vmatpush1.msra.mxu0 0.0
      %5534 = vmatprep.subr.mxu0 0.0
      %5535 = vmatpush1.msra.mxu0 0.0
      %5536 = vmatprep.subr.mxu0 0.0
      %5537 = vmatpush1.msra.mxu0 0.0
      %5538 = vmatprep.subr.mxu0 0.0
      %5539 = vmatpush1.msra.mxu0 0.0
      %5540 = vmatprep.subr.mxu0 0.0
      %5541 = vmatpush1.msra.mxu0 0.0
      %5542 = vmatprep.subr.mxu0 0.0
      %5543 = vmatpush1.msra.mxu0 0.0
      %5544 = vmatprep.subr.mxu0 0.0
      %5545 = vmatpush1.msra.mxu0 0.0
      %5546 = vmatprep.subr.mxu0 0.0
      %5547 = vmatpush1.msra.mxu0 0.0
      %5548 = vmatprep.subr.mxu0 0.0
      %5549 = vmatpush1.msra.mxu0 0.0
      %5550 = vmatprep.subr.mxu0 0.0
      %5551 = vmatpush1.msra.mxu0 0.0
      %5552 = vmatprep.subr.mxu0 0.0
      %5553 = vmatpush1.msra.mxu0 0.0
      %5554 = vmatprep.subr.mxu0 0.0
      %5555 = vmatpush1.msra.mxu0 0.0
      %5556 = vmatprep.subr.mxu0 0.0
      %5557 = vmatpush1.msra.mxu0 0.0
      %5558 = vmatprep.subr.mxu0 0.0
      %5559 = vmatpush1.msra.mxu0 0.0
      %5560 = vmatprep.subr.mxu0 0.0
      %5561 = vmatpush1.msra.mxu0 0.0
      %5562 = vmatprep.subr.mxu0 0.0
      %5563 = vmatpush1.msra.mxu0 0.0
      %5564 = vmatprep.subr.mxu0 0.0
      %5565 = vmatpush1.msra.mxu0 0.0
      %5566 = vmatprep.subr.mxu0 0.0
      %5567 = vmatpush1.msra.mxu0 0.0
      %5568 = vmatprep.subr.mxu0 0.0
      %5569 = vmatpush1.msra.mxu0 0.0
      %5570 = vmatprep.mubr.f32.mxu0 0.0
      %5571 = vmatmul.mubr.f32.gmra.mrb[0].mxu0 %v5483
      %v5572 = vpop.f32.mrb[0].mxu0
      %v5573 = vadd.f32 0.0, %v5572
      %v5574 = vpop.f32.mrb[0].mxu0
      %v5575 = vadd.f32 0.0, %v5574
      %5576 = vmatprep.mubr.f32.mxu0 0.0
      %5577 = vmatmul.mubr.f32.gmra.mrb[0].mxu0 %v5486
      %v5578 = vpop.f32.mrb[0].mxu0
      %v5579 = vadd.f32 0.0, %v5578
      %v5580 = vpop.f32.mrb[0].mxu0
      %v5581 = vadd.f32 0.0, %v5580
      %5582 = vmatprep.mubr.f32.mxu0 0.0
      %5583 = vmatmul.mubr.f32.gmra.mrb[0].mxu0 %v5489
      %v5584 = vpop.f32.mrb[0].mxu0
      %v5585 = vadd.f32 0.0, %v5584
      %v5586 = vpop.f32.mrb[0].mxu0
      %v5587 = vadd.f32 0.0, %v5586
      %5588 = vmatprep.mubr.f32.mxu0 0.0
      %5589 = vmatmul.mubr.f32.gmra.mrb[0].mxu0 %v5492
      %v5590 = vpop.f32.mrb[0].mxu0
      %v5591 = vadd.f32 0.0, %v5590
      %v5592 = vpop.f32.mrb[0].mxu0
      %v5593 = vadd.f32 0.0, %v5592
      %5594 = vmatprep.mubr.f32.mxu0 0.0
      %5595 = vmatmul.mubr.f32.gmra.mrb[0].mxu0 %v5495
      %v5596 = vpop.f32.mrb[0].mxu0
      %v5597 = vadd.f32 0.0, %v5596
      %v5598 = vpop.f32.mrb[0].mxu0
      %v5599 = vadd.f32 0.0, %v5598
      %5600 = vmatprep.mubr.f32.mxu0 0.0
      %5601 = vmatmul.mubr.f32.gmra.mrb[0].mxu0 %v5498
      %v5602 = vpop.f32.mrb[0].mxu0
      %v5603 = vadd.f32 0.0, %v5602
      %v5604 = vpop.f32.mrb[0].mxu0
      %v5605 = vadd.f32 0.0, %v5604
      %5606 = vmatprep.mubr.f32.mxu0 0.0
      %5607 = vmatmul.mubr.f32.gmra.mrb[0].mxu0 %v5501
      %v5608 = vpop.f32.mrb[0].mxu0
      %v5609 = vadd.f32 0.0, %v5608
      %v5610 = vpop.f32.mrb[0].mxu0
      %v5611 = vadd.f32 0.0, %v5610
      %5612 = vmatprep.mubr.f32.mxu0 0.0
      %5613 = vmatmul.mubr.f32.gmra.mrb[0].mxu0 %v5504
      %v5614 = vpop.f32.mrb[0].mxu0
      %v5615 = vadd.f32 0.0, %v5614
      %v5616 = vpop.f32.mrb[0].mxu0
      %v5617 = vadd.f32 0.0, %v5616
      %5618 = vdwg.mxu0
      %v5619 = vadd.f32 %v5416, %v5573
      %v5620 = vadd.f32 %v5417, %v5575
      %v5621 = vadd.f32 %v5418, %v5579
      %v5622 = vadd.f32 %v5419, %v5581
      %v5623 = vadd.f32 %v5420, %v5585
      %v5624 = vadd.f32 %v5421, %v5587
      %v5625 = vadd.f32 %v5422, %v5591
      %v5626 = vadd.f32 %v5423, %v5593
      %v5627 = vadd.f32 %v5424, %v5597
      %v5628 = vadd.f32 %v5425, %v5599
      %v5629 = vadd.f32 %v5426, %v5603
      %v5630 = vadd.f32 %v5427, %v5605
      %v5631 = vadd.f32 %v5428, %v5609
      %v5632 = vadd.f32 %v5429, %v5611
      %v5633 = vadd.f32 %v5430, %v5615
      %v5634 = vadd.f32 %v5431, %v5617
      %s5635 = scalar_lea.vmem %s3, 512
      %v5636 = vld [vmem:[%s5635] sm:$0xff]
      %v5637 = vld [vmem:[%s5635 + $0x8] sm:$0xff]
      %v5638 = vld [vmem:[%s5635 + $0x10] sm:$0xff]
      %v5639 = vld [vmem:[%s5635 + $0x18] sm:$0xff]
      %v5640 = vld [vmem:[%s5635 + $0x20] sm:$0xff]
      %v5641 = vld [vmem:[%s5635 + $0x28] sm:$0xff]
      %v5642 = vld [vmem:[%s5635 + $0x30] sm:$0xff]
      %v5643 = vld [vmem:[%s5635 + $0x38] sm:$0xff]
      %5644 = vrot.lane.b32.xlu0 %v3713, 94
      %v5645 = vpop.permute.xlu0 %5644
      %5646 = vrot.lane.b32.xlu0 %v3715, 94
      %v5647 = vpop.permute.xlu0 %5646
      %5648 = vrot.lane.b32.xlu0 %v4057, 94
      %v5649 = vpop.permute.xlu0 %5648
      %5650 = vrot.lane.b32.xlu0 %v3719, 94
      %v5651 = vpop.permute.xlu0 %5650
      %5652 = vrot.lane.b32.xlu0 %v3721, 94
      %v5653 = vpop.permute.xlu0 %5652
      %5654 = vrot.lane.b32.xlu0 %v4062, 94
      %v5655 = vpop.permute.xlu0 %5654
      %5656 = vrot.lane.b32.xlu0 %v3725, 94
      %v5657 = vpop.permute.xlu0 %5656
      %5658 = vrot.lane.b32.xlu0 %v3727, 94
      %v5659 = vpop.permute.xlu0 %5658
      %5660 = vrot.lane.b32.xlu0 %v4067, 94
      %v5661 = vpop.permute.xlu0 %5660
      %5662 = vrot.lane.b32.xlu0 %v3731, 94
      %v5663 = vpop.permute.xlu0 %5662
      %5664 = vrot.lane.b32.xlu0 %v3733, 94
      %v5665 = vpop.permute.xlu0 %5664
      %5666 = vrot.lane.b32.xlu0 %v4072, 94
      %v5667 = vpop.permute.xlu0 %5666
      %vm5668 = vcmask 769024
      %v5669 = vsel %vm5668, %v5645, %v5647
      %v5670 = vsel %vm5668, %v5647, %v5649
      %v5671 = vsel %vm5668, %v5651, %v5653
      %v5672 = vsel %vm5668, %v5653, %v5655
      %v5673 = vsel %vm5668, %v5657, %v5659
      %v5674 = vsel %vm5668, %v5659, %v5661
      %v5675 = vsel %vm5668, %v5663, %v5665
      %v5676 = vsel %vm5668, %v5665, %v5667
      %v5686 = vsel %vm4144, %v5636, 0
      %v5689 = vsel %vm4144, %v5637, 0
      %v5692 = vsel %vm4144, %v5638, 0
      %v5695 = vsel %vm4144, %v5639, 0
      %v5698 = vsel %vm4144, %v5640, 0
      %v5701 = vsel %vm4144, %v5641, 0
      %v5704 = vsel %vm4144, %v5642, 0
      %v5707 = vsel %vm4144, %v5643, 0
      %5709 = vmatprep.subr.mxu0 %v5670
      %5710 = vmatpush1.msra.mxu0 %v5669
      %5711 = vmatprep.subr.mxu0 %v5672
      %5712 = vmatpush1.msra.mxu0 %v5671
      %5713 = vmatprep.subr.mxu0 %v5674
      %5714 = vmatpush1.msra.mxu0 %v5673
      %5715 = vmatprep.subr.mxu0 %v5676
      %5716 = vmatpush1.msra.mxu0 %v5675
      %5717 = vmatprep.subr.mxu0 0.0
      %5718 = vmatpush1.msra.mxu0 0.0
      %5719 = vmatprep.subr.mxu0 0.0
      %5720 = vmatpush1.msra.mxu0 0.0
      %5721 = vmatprep.subr.mxu0 0.0
      %5722 = vmatpush1.msra.mxu0 0.0
      %5723 = vmatprep.subr.mxu0 0.0
      %5724 = vmatpush1.msra.mxu0 0.0
      %5725 = vmatprep.subr.mxu0 0.0
      %5726 = vmatpush1.msra.mxu0 0.0
      %5727 = vmatprep.subr.mxu0 0.0
      %5728 = vmatpush1.msra.mxu0 0.0
      %5729 = vmatprep.subr.mxu0 0.0
      %5730 = vmatpush1.msra.mxu0 0.0
      %5731 = vmatprep.subr.mxu0 0.0
      %5732 = vmatpush1.msra.mxu0 0.0
      %5733 = vmatprep.subr.mxu0 0.0
      %5734 = vmatpush1.msra.mxu0 0.0
      %5735 = vmatprep.subr.mxu0 0.0
      %5736 = vmatpush1.msra.mxu0 0.0
      %5737 = vmatprep.subr.mxu0 0.0
      %5738 = vmatpush1.msra.mxu0 0.0
      %5739 = vmatprep.subr.mxu0 0.0
      %5740 = vmatpush1.msra.mxu0 0.0
      %5741 = vmatprep.subr.mxu0 0.0
      %5742 = vmatpush1.msra.mxu0 0.0
      %5743 = vmatprep.subr.mxu0 0.0
      %5744 = vmatpush1.msra.mxu0 0.0
      %5745 = vmatprep.subr.mxu0 0.0
      %5746 = vmatpush1.msra.mxu0 0.0
      %5747 = vmatprep.subr.mxu0 0.0
      %5748 = vmatpush1.msra.mxu0 0.0
      %5749 = vmatprep.subr.mxu0 0.0
      %5750 = vmatpush1.msra.mxu0 0.0
      %5751 = vmatprep.subr.mxu0 0.0
      %5752 = vmatpush1.msra.mxu0 0.0
      %5753 = vmatprep.subr.mxu0 0.0
      %5754 = vmatpush1.msra.mxu0 0.0
      %5755 = vmatprep.subr.mxu0 0.0
      %5756 = vmatpush1.msra.mxu0 0.0
      %5757 = vmatprep.subr.mxu0 0.0
      %5758 = vmatpush1.msra.mxu0 0.0
      %5759 = vmatprep.subr.mxu0 0.0
      %5760 = vmatpush1.msra.mxu0 0.0
      %5761 = vmatprep.subr.mxu0 0.0
      %5762 = vmatpush1.msra.mxu0 0.0
      %5763 = vmatprep.subr.mxu0 0.0
      %5764 = vmatpush1.msra.mxu0 0.0
      %5765 = vmatprep.subr.mxu0 0.0
      %5766 = vmatpush1.msra.mxu0 0.0
      %5767 = vmatprep.subr.mxu0 0.0
      %5768 = vmatpush1.msra.mxu0 0.0
      %5769 = vmatprep.subr.mxu0 0.0
      %5770 = vmatpush1.msra.mxu0 0.0
      %5771 = vmatprep.subr.mxu0 0.0
      %5772 = vmatpush1.msra.mxu0 0.0
      %5773 = vmatprep.mubr.f32.mxu0 0.0
      %5774 = vmatmul.mubr.f32.gmra.mrb[0].mxu0 %v5686
      %v5775 = vpop.f32.mrb[0].mxu0
      %v5776 = vadd.f32 0.0, %v5775
      %v5777 = vpop.f32.mrb[0].mxu0
      %v5778 = vadd.f32 0.0, %v5777
      %5779 = vmatprep.mubr.f32.mxu0 0.0
      %5780 = vmatmul.mubr.f32.gmra.mrb[0].mxu0 %v5689
      %v5781 = vpop.f32.mrb[0].mxu0
      %v5782 = vadd.f32 0.0, %v5781
      %v5783 = vpop.f32.mrb[0].mxu0
      %v5784 = vadd.f32 0.0, %v5783
      %5785 = vmatprep.mubr.f32.mxu0 0.0
      %5786 = vmatmul.mubr.f32.gmra.mrb[0].mxu0 %v5692
      %v5787 = vpop.f32.mrb[0].mxu0
      %v5788 = vadd.f32 0.0, %v5787
      %v5789 = vpop.f32.mrb[0].mxu0
      %v5790 = vadd.f32 0.0, %v5789
      %5791 = vmatprep.mubr.f32.mxu0 0.0
      %5792 = vmatmul.mubr.f32.gmra.mrb[0].mxu0 %v5695
      %v5793 = vpop.f32.mrb[0].mxu0
      %v5794 = vadd.f32 0.0, %v5793
      %v5795 = vpop.f32.mrb[0].mxu0
      %v5796 = vadd.f32 0.0, %v5795
      %5797 = vmatprep.mubr.f32.mxu0 0.0
      %5798 = vmatmul.mubr.f32.gmra.mrb[0].mxu0 %v5698
      %v5799 = vpop.f32.mrb[0].mxu0
      %v5800 = vadd.f32 0.0, %v5799
      %v5801 = vpop.f32.mrb[0].mxu0
      %v5802 = vadd.f32 0.0, %v5801
      %5803 = vmatprep.mubr.f32.mxu0 0.0
      %5804 = vmatmul.mubr.f32.gmra.mrb[0].mxu0 %v5701
      %v5805 = vpop.f32.mrb[0].mxu0
      %v5806 = vadd.f32 0.0, %v5805
      %v5807 = vpop.f32.mrb[0].mxu0
      %v5808 = vadd.f32 0.0, %v5807
      %5809 = vmatprep.mubr.f32.mxu0 0.0
      %5810 = vmatmul.mubr.f32.gmra.mrb[0].mxu0 %v5704
      %v5811 = vpop.f32.mrb[0].mxu0
      %v5812 = vadd.f32 0.0, %v5811
      %v5813 = vpop.f32.mrb[0].mxu0
      %v5814 = vadd.f32 0.0, %v5813
      %5815 = vmatprep.mubr.f32.mxu0 0.0
      %5816 = vmatmul.mubr.f32.gmra.mrb[0].mxu0 %v5707
      %v5817 = vpop.f32.mrb[0].mxu0
      %v5818 = vadd.f32 0.0, %v5817
      %v5819 = vpop.f32.mrb[0].mxu0
      %v5820 = vadd.f32 0.0, %v5819
      %5821 = vdwg.mxu0
      %v5822 = vadd.f32 %v5619, %v5776
      %v5823 = vadd.f32 %v5620, %v5778
      %v5824 = vadd.f32 %v5621, %v5782
      %v5825 = vadd.f32 %v5622, %v5784
      %v5826 = vadd.f32 %v5623, %v5788
      %v5827 = vadd.f32 %v5624, %v5790
      %v5828 = vadd.f32 %v5625, %v5794
      %v5829 = vadd.f32 %v5626, %v5796
      %v5830 = vadd.f32 %v5627, %v5800
      %v5831 = vadd.f32 %v5628, %v5802
      %v5832 = vadd.f32 %v5629, %v5806
      %v5833 = vadd.f32 %v5630, %v5808
      %v5834 = vadd.f32 %v5631, %v5812
      %v5835 = vadd.f32 %v5632, %v5814
      %v5836 = vadd.f32 %v5633, %v5818
      %v5837 = vadd.f32 %v5634, %v5820
      %v5838 = vld [vmem:[%s4] sm:$0xff]
      %v5839 = vld [vmem:[%s4 + $0x8] sm:$0xff]
      %v5840 = vld [vmem:[%s4 + $0x10] sm:$0xff]
      %v5841 = vld [vmem:[%s4 + $0x18] sm:$0xff]
      %v5842 = vld [vmem:[%s4 + $0x20] sm:$0xff]
      %v5843 = vld [vmem:[%s4 + $0x28] sm:$0xff]
      %v5844 = vld [vmem:[%s4 + $0x30] sm:$0xff]
      %v5845 = vld [vmem:[%s4 + $0x38] sm:$0xff]
      %5847 = vset.pattern.permute.xlu0 0
      %5848 = vperm.xlu0 %5847, %v5838
      %v5849 = vpop.permute.xlu0 %5848
      %5852 = vset.pattern.permute.xlu0 0
      %5853 = vperm.xlu0 %5852, %v5839
      %v5854 = vpop.permute.xlu0 %5853
      %5857 = vset.pattern.permute.xlu0 0
      %5858 = vperm.xlu0 %5857, %v5840
      %v5859 = vpop.permute.xlu0 %5858
      %5862 = vset.pattern.permute.xlu0 0
      %5863 = vperm.xlu0 %5862, %v5841
      %v5864 = vpop.permute.xlu0 %5863
      %5867 = vset.pattern.permute.xlu0 0
      %5868 = vperm.xlu0 %5867, %v5842
      %v5869 = vpop.permute.xlu0 %5868
      %5872 = vset.pattern.permute.xlu0 0
      %5873 = vperm.xlu0 %5872, %v5843
      %v5874 = vpop.permute.xlu0 %5873
      %5877 = vset.pattern.permute.xlu0 0
      %5878 = vperm.xlu0 %5877, %v5844
      %v5879 = vpop.permute.xlu0 %5878
      %5882 = vset.pattern.permute.xlu0 0
      %5883 = vperm.xlu0 %5882, %v5845
      %v5884 = vpop.permute.xlu0 %5883
      %v5886 = vadd.f32 %v5822, %v5849
      %v5887 = vadd.f32 %v5823, %v5849
      %v5888 = vadd.f32 %v5824, %v5854
      %v5889 = vadd.f32 %v5825, %v5854
      %v5890 = vadd.f32 %v5826, %v5859
      %v5891 = vadd.f32 %v5827, %v5859
      %v5892 = vadd.f32 %v5828, %v5864
      %v5893 = vadd.f32 %v5829, %v5864
      %v5894 = vadd.f32 %v5830, %v5869
      %v5895 = vadd.f32 %v5831, %v5869
      %v5896 = vadd.f32 %v5832, %v5874
      %v5897 = vadd.f32 %v5833, %v5874
      %v5898 = vadd.f32 %v5834, %v5879
      %v5899 = vadd.f32 %v5835, %v5879
      %v5900 = vadd.f32 %v5836, %v5884
      %v5901 = vadd.f32 %v5837, %v5884
      %v5902 = vmax.f32 %v5886, 0.0
      %v5903 = vmax.f32 %v5887, 0.0
      %v5904 = vmax.f32 %v5888, 0.0
      %v5905 = vmax.f32 %v5889, 0.0
      %v5906 = vmax.f32 %v5890, 0.0
      %v5907 = vmax.f32 %v5891, 0.0
      %v5908 = vmax.f32 %v5892, 0.0
      %v5909 = vmax.f32 %v5893, 0.0
      %v5910 = vmax.f32 %v5894, 0.0
      %v5911 = vmax.f32 %v5895, 0.0
      %v5912 = vmax.f32 %v5896, 0.0
      %v5913 = vmax.f32 %v5897, 0.0
      %v5914 = vmax.f32 %v5898, 0.0
      %v5915 = vmax.f32 %v5899, 0.0
      %v5916 = vmax.f32 %v5900, 0.0
      %v5917 = vmax.f32 %v5901, 0.0
      %5934 = vrot.lane.b32.xlu0 %v5902, 127
      %v5935 = vpop.permute.xlu0 %5934
      %5936 = vrot.lane.b32.xlu0 %v5903, 127
      %v5937 = vpop.permute.xlu0 %5936
      %5938 = vrot.lane.b32.xlu0 %v5904, 127
      %v5939 = vpop.permute.xlu0 %5938
      %5940 = vrot.lane.b32.xlu0 %v5905, 127
      %v5941 = vpop.permute.xlu0 %5940
      %5942 = vrot.lane.b32.xlu0 %v5906, 127
      %v5943 = vpop.permute.xlu0 %5942
      %5944 = vrot.lane.b32.xlu0 %v5907, 127
      %v5945 = vpop.permute.xlu0 %5944
      %5946 = vrot.lane.b32.xlu0 %v5908, 127
      %v5947 = vpop.permute.xlu0 %5946
      %5948 = vrot.lane.b32.xlu0 %v5909, 127
      %v5949 = vpop.permute.xlu0 %5948
      %5950 = vrot.lane.b32.xlu0 %v5910, 127
      %v5951 = vpop.permute.xlu0 %5950
      %5952 = vrot.lane.b32.xlu0 %v5911, 127
      %v5953 = vpop.permute.xlu0 %5952
      %5954 = vrot.lane.b32.xlu0 %v5912, 127
      %v5955 = vpop.permute.xlu0 %5954
      %5956 = vrot.lane.b32.xlu0 %v5913, 127
      %v5957 = vpop.permute.xlu0 %5956
      %5958 = vrot.lane.b32.xlu0 %v5914, 127
      %v5959 = vpop.permute.xlu0 %5958
      %5960 = vrot.lane.b32.xlu0 %v5915, 127
      %v5961 = vpop.permute.xlu0 %5960
      %5962 = vrot.lane.b32.xlu0 %v5916, 127
      %v5963 = vpop.permute.xlu0 %5962
      %5964 = vrot.lane.b32.xlu0 %v5917, 127
      %v5965 = vpop.permute.xlu0 %5964
      %v5966 = vsel %vm793, %v5935, %v5937
      %v5967 = vsel %vm793, %v5939, %v5941
      %v5968 = vsel %vm793, %v5943, %v5945
      %v5969 = vsel %vm793, %v5947, %v5949
      %v5970 = vsel %vm793, %v5951, %v5953
      %v5971 = vsel %vm793, %v5955, %v5957
      %v5972 = vsel %vm793, %v5959, %v5961
      %v5973 = vsel %vm793, %v5963, %v5965
      %v5990 = vmax.f32 %v5902, %v5966
      %v5991 = vmax.f32 %v5903, %v5937
      %v5992 = vmax.f32 %v5904, %v5967
      %v5993 = vmax.f32 %v5905, %v5941
      %v5994 = vmax.f32 %v5906, %v5968
      %v5995 = vmax.f32 %v5907, %v5945
      %v5996 = vmax.f32 %v5908, %v5969
      %v5997 = vmax.f32 %v5909, %v5949
      %v5998 = vmax.f32 %v5910, %v5970
      %v5999 = vmax.f32 %v5911, %v5953
      %v6000 = vmax.f32 %v5912, %v5971
      %v6001 = vmax.f32 %v5913, %v5957
      %v6002 = vmax.f32 %v5914, %v5972
      %v6003 = vmax.f32 %v5915, %v5961
      %v6004 = vmax.f32 %v5916, %v5973
      %v6005 = vmax.f32 %v5917, %v5965
      %6022 = vrot.lane.b32.xlu0 %v5990, 112
      %v6023 = vpop.permute.xlu0 %6022
      %6024 = vrot.lane.b32.xlu0 %v5991, 112
      %v6025 = vpop.permute.xlu0 %6024
      %6026 = vrot.lane.b32.xlu0 %v5992, 112
      %v6027 = vpop.permute.xlu0 %6026
      %6028 = vrot.lane.b32.xlu0 %v5993, 112
      %v6029 = vpop.permute.xlu0 %6028
      %6030 = vrot.lane.b32.xlu0 %v5994, 112
      %v6031 = vpop.permute.xlu0 %6030
      %6032 = vrot.lane.b32.xlu0 %v5995, 112
      %v6033 = vpop.permute.xlu0 %6032
      %6034 = vrot.lane.b32.xlu0 %v5996, 112
      %v6035 = vpop.permute.xlu0 %6034
      %6036 = vrot.lane.b32.xlu0 %v5997, 112
      %v6037 = vpop.permute.xlu0 %6036
      %6038 = vrot.lane.b32.xlu0 %v5998, 112
      %v6039 = vpop.permute.xlu0 %6038
      %6040 = vrot.lane.b32.xlu0 %v5999, 112
      %v6041 = vpop.permute.xlu0 %6040
      %6042 = vrot.lane.b32.xlu0 %v6000, 112
      %v6043 = vpop.permute.xlu0 %6042
      %6044 = vrot.lane.b32.xlu0 %v6001, 112
      %v6045 = vpop.permute.xlu0 %6044
      %6046 = vrot.lane.b32.xlu0 %v6002, 112
      %v6047 = vpop.permute.xlu0 %6046
      %6048 = vrot.lane.b32.xlu0 %v6003, 112
      %v6049 = vpop.permute.xlu0 %6048
      %6050 = vrot.lane.b32.xlu0 %v6004, 112
      %v6051 = vpop.permute.xlu0 %6050
      %6052 = vrot.lane.b32.xlu0 %v6005, 112
      %v6053 = vpop.permute.xlu0 %6052
      %v6054 = vsel %vm4654, %v6023, %v6025
      %v6055 = vsel %vm4654, %v6027, %v6029
      %v6056 = vsel %vm4654, %v6031, %v6033
      %v6057 = vsel %vm4654, %v6035, %v6037
      %v6058 = vsel %vm4654, %v6039, %v6041
      %v6059 = vsel %vm4654, %v6043, %v6045
      %v6060 = vsel %vm4654, %v6047, %v6049
      %v6061 = vsel %vm4654, %v6051, %v6053
      %v6078 = vmax.f32 %v5990, %v6054
      %v6079 = vmax.f32 %v5991, %v6025
      %v6080 = vmax.f32 %v5992, %v6055
      %v6081 = vmax.f32 %v5993, %v6029
      %v6082 = vmax.f32 %v5994, %v6056
      %v6083 = vmax.f32 %v5995, %v6033
      %v6084 = vmax.f32 %v5996, %v6057
      %v6085 = vmax.f32 %v5997, %v6037
      %v6086 = vmax.f32 %v5998, %v6058
      %v6087 = vmax.f32 %v5999, %v6041
      %v6088 = vmax.f32 %v6000, %v6059
      %v6089 = vmax.f32 %v6001, %v6045
      %v6090 = vmax.f32 %v6002, %v6060
      %v6091 = vmax.f32 %v6003, %v6049
      %v6092 = vmax.f32 %v6004, %v6061
      %v6093 = vmax.f32 %v6005, %v6053
      %v6094 = vld [vmem:[%s8] sm:$0xff]
      %v6095 = vld [vmem:[%s8 + $0x8] sm:$0xff]
      %v6096 = vld [vmem:[%s8 + $0x10] sm:$0xff]
      %v6097 = vld [vmem:[%s8 + $0x18] sm:$0xff]
      %v6098 = vld [vmem:[%s8 + $0x20] sm:$0xff]
      %v6099 = vld [vmem:[%s8 + $0x28] sm:$0xff]
      %v6100 = vld [vmem:[%s8 + $0x30] sm:$0xff]
      %v6101 = vld [vmem:[%s8 + $0x38] sm:$0xff]
      %v6102 = vld [vmem:[%s8 + $0x40] sm:$0xff]
      %v6103 = vld [vmem:[%s8 + $0x48] sm:$0xff]
      %v6104 = vld [vmem:[%s8 + $0x50] sm:$0xff]
      %v6105 = vld [vmem:[%s8 + $0x58] sm:$0xff]
      %v6106 = vld [vmem:[%s8 + $0x60] sm:$0xff]
      %v6107 = vld [vmem:[%s8 + $0x68] sm:$0xff]
      %v6108 = vld [vmem:[%s8 + $0x70] sm:$0xff]
      %v6109 = vld [vmem:[%s8 + $0x78] sm:$0xff]
      %v6110 = vld [vmem:[%s8 + $0x80] sm:$0xff]
      %v6111 = vld [vmem:[%s8 + $0x88] sm:$0xff]
      %v6112 = vld [vmem:[%s8 + $0x90] sm:$0xff]
      %v6113 = vld [vmem:[%s8 + $0x98] sm:$0xff]
      %v6114 = vld [vmem:[%s8 + $0xa0] sm:$0xff]
      %v6115 = vld [vmem:[%s8 + $0xa8] sm:$0xff]
      %v6116 = vld [vmem:[%s8 + $0xb0] sm:$0xff]
      %v6117 = vld [vmem:[%s8 + $0xb8] sm:$0xff]
      %v6118 = vld [vmem:[%s8 + $0xc0] sm:$0xff]
      %v6119 = vld [vmem:[%s8 + $0xc8] sm:$0xff]
      %v6120 = vld [vmem:[%s8 + $0xd0] sm:$0xff]
      %v6121 = vld [vmem:[%s8 + $0xd8] sm:$0xff]
      %v6122 = vld [vmem:[%s8 + $0xe0] sm:$0xff]
      %v6123 = vld [vmem:[%s8 + $0xe8] sm:$0x7f]
      %v6125 = vsel %vm4857, %v6079, 0
      %v6128 = vsel %vm4857, %v6081, 0
      %v6131 = vsel %vm4857, %v6083, 0
      %v6134 = vsel %vm4857, %v6085, 0
      %v6137 = vsel %vm4857, %v6087, 0
      %v6140 = vsel %vm4857, %v6089, 0
      %v6143 = vsel %vm4857, %v6091, 0
      %v6146 = vsel %vm4857, %v6093, 0
      %vm6148 = vcmask 1046528
      %v6150 = vsel %vm6148, %v6123, 0
      %6152 = vmatprep.subr.mxu0 0.0
      %6153 = vmatpush1.msra.mxu0 %v6094
      %6154 = vmatprep.subr.mxu0 0.0
      %6155 = vmatpush1.msra.mxu0 %v6095
      %6156 = vmatprep.subr.mxu0 0.0
      %6157 = vmatpush1.msra.mxu0 %v6096
      %6158 = vmatprep.subr.mxu0 0.0
      %6159 = vmatpush1.msra.mxu0 %v6097
      %6160 = vmatprep.subr.mxu0 0.0
      %6161 = vmatpush1.msra.mxu0 %v6098
      %6162 = vmatprep.subr.mxu0 0.0
      %6163 = vmatpush1.msra.mxu0 %v6099
      %6164 = vmatprep.subr.mxu0 0.0
      %6165 = vmatpush1.msra.mxu0 %v6100
      %6166 = vmatprep.subr.mxu0 0.0
      %6167 = vmatpush1.msra.mxu0 %v6101
      %6168 = vmatprep.subr.mxu0 0.0
      %6169 = vmatpush1.msra.mxu0 %v6102
      %6170 = vmatprep.subr.mxu0 0.0
      %6171 = vmatpush1.msra.mxu0 %v6103
      %6172 = vmatprep.subr.mxu0 0.0
      %6173 = vmatpush1.msra.mxu0 %v6104
      %6174 = vmatprep.subr.mxu0 0.0
      %6175 = vmatpush1.msra.mxu0 %v6105
      %6176 = vmatprep.subr.mxu0 0.0
      %6177 = vmatpush1.msra.mxu0 %v6106
      %6178 = vmatprep.subr.mxu0 0.0
      %6179 = vmatpush1.msra.mxu0 %v6107
      %6180 = vmatprep.subr.mxu0 0.0
      %6181 = vmatpush1.msra.mxu0 %v6108
      %6182 = vmatprep.subr.mxu0 0.0
      %6183 = vmatpush1.msra.mxu0 %v6109
      %6184 = vmatprep.subr.mxu0 0.0
      %6185 = vmatpush1.msra.mxu0 %v6110
      %6186 = vmatprep.subr.mxu0 0.0
      %6187 = vmatpush1.msra.mxu0 %v6111
      %6188 = vmatprep.subr.mxu0 0.0
      %6189 = vmatpush1.msra.mxu0 %v6112
      %6190 = vmatprep.subr.mxu0 0.0
      %6191 = vmatpush1.msra.mxu0 %v6113
      %6192 = vmatprep.subr.mxu0 0.0
      %6193 = vmatpush1.msra.mxu0 %v6114
      %6194 = vmatprep.subr.mxu0 0.0
      %6195 = vmatpush1.msra.mxu0 %v6115
      %6196 = vmatprep.subr.mxu0 0.0
      %6197 = vmatpush1.msra.mxu0 %v6116
      %6198 = vmatprep.subr.mxu0 0.0
      %6199 = vmatpush1.msra.mxu0 %v6117
      %6200 = vmatprep.subr.mxu0 0.0
      %6201 = vmatpush1.msra.mxu0 %v6118
      %6202 = vmatprep.subr.mxu0 0.0
      %6203 = vmatpush1.msra.mxu0 %v6119
      %6204 = vmatprep.subr.mxu0 0.0
      %6205 = vmatpush1.msra.mxu0 %v6120
      %6206 = vmatprep.subr.mxu0 0.0
      %6207 = vmatpush1.msra.mxu0 %v6121
      %6208 = vmatprep.subr.mxu0 0.0
      %6209 = vmatpush1.msra.mxu0 %v6122
      %6210 = vmatprep.subr.mxu0 0.0
      %6211 = vmatpush1.msra.mxu0 %v6150
      %6212 = vmatprep.subr.mxu0 0.0
      %6213 = vmatpush1.msra.mxu0 0.0
      %6214 = vmatprep.subr.mxu0 0.0
      %6215 = vmatpush1.msra.mxu0 0.0
      %6216 = vmatprep.mubr.f32.mxu0 %v6125
      %6217 = vmatmul.mubr.f32.gmra.mrb[0].mxu0 %v6078
      %v6218 = vpop.f32.mrb[0].mxu0
      %v6219 = vadd.f32 0.0, %v6218
      %v6220 = vpop.f32.mrb[0].mxu0
      %6221 = vmatprep.mubr.f32.mxu0 %v6128
      %6222 = vmatmul.mubr.f32.gmra.mrb[0].mxu0 %v6080
      %v6223 = vpop.f32.mrb[0].mxu0
      %v6224 = vadd.f32 0.0, %v6223
      %v6225 = vpop.f32.mrb[0].mxu0
      %6226 = vmatprep.mubr.f32.mxu0 %v6131
      %6227 = vmatmul.mubr.f32.gmra.mrb[0].mxu0 %v6082
      %v6228 = vpop.f32.mrb[0].mxu0
      %v6229 = vadd.f32 0.0, %v6228
      %v6230 = vpop.f32.mrb[0].mxu0
      %6231 = vmatprep.mubr.f32.mxu0 %v6134
      %6232 = vmatmul.mubr.f32.gmra.mrb[0].mxu0 %v6084
      %v6233 = vpop.f32.mrb[0].mxu0
      %v6234 = vadd.f32 0.0, %v6233
      %v6235 = vpop.f32.mrb[0].mxu0
      %6236 = vmatprep.mubr.f32.mxu0 %v6137
      %6237 = vmatmul.mubr.f32.gmra.mrb[0].mxu0 %v6086
      %v6238 = vpop.f32.mrb[0].mxu0
      %v6239 = vadd.f32 0.0, %v6238
      %v6240 = vpop.f32.mrb[0].mxu0
      %6241 = vmatprep.mubr.f32.mxu0 %v6140
      %6242 = vmatmul.mubr.f32.gmra.mrb[0].mxu0 %v6088
      %v6243 = vpop.f32.mrb[0].mxu0
      %v6244 = vadd.f32 0.0, %v6243
      %v6245 = vpop.f32.mrb[0].mxu0
      %6246 = vmatprep.mubr.f32.mxu0 %v6143
      %6247 = vmatmul.mubr.f32.gmra.mrb[0].mxu0 %v6090
      %v6248 = vpop.f32.mrb[0].mxu0
      %v6249 = vadd.f32 0.0, %v6248
      %v6250 = vpop.f32.mrb[0].mxu0
      %6251 = vmatprep.mubr.f32.mxu0 %v6146
      %6252 = vmatmul.mubr.f32.gmra.mrb[0].mxu0 %v6092
      %v6253 = vpop.f32.mrb[0].mxu0
      %v6254 = vadd.f32 0.0, %v6253
      %v6255 = vpop.f32.mrb[0].mxu0
      %6256 = vdwg.mxu0
      %v6257 = vld [vmem:[%s5] sm:$0xff]
      %v6258 = vld [vmem:[%s5 + $0x8] sm:$0xff]
      %v6259 = vld [vmem:[%s5 + $0x10] sm:$0xff]
      %v6260 = vld [vmem:[%s5 + $0x18] sm:$0xff]
      %v6261 = vld [vmem:[%s5 + $0x20] sm:$0xff]
      %v6262 = vld [vmem:[%s5 + $0x28] sm:$0xff]
      %v6263 = vld [vmem:[%s5 + $0x30] sm:$0xff]
      %v6264 = vld [vmem:[%s5 + $0x38] sm:$0xff]
      %s6265 = scalar_lea.vmem %s5, 64
      %v6266 = vld [vmem:[%s6265] sm:$0xff]
      %v6267 = vld [vmem:[%s6265 + $0x8] sm:$0xff]
      %v6268 = vld [vmem:[%s6265 + $0x10] sm:$0xff]
      %v6269 = vld [vmem:[%s6265 + $0x18] sm:$0xff]
      %v6270 = vld [vmem:[%s6265 + $0x20] sm:$0xff]
      %v6271 = vld [vmem:[%s6265 + $0x28] sm:$0xff]
      %v6272 = vld [vmem:[%s6265 + $0x30] sm:$0xff]
      %v6273 = vld [vmem:[%s6265 + $0x38] sm:$0xff]
      %6282 = vrot.lane.b32.xlu0 %v6219, 127
      %v6283 = vpop.permute.xlu0 %6282
      %6284 = vrot.lane.b32.xlu0 %v6224, 127
      %v6285 = vpop.permute.xlu0 %6284
      %6286 = vrot.lane.b32.xlu0 %v6229, 127
      %v6287 = vpop.permute.xlu0 %6286
      %6288 = vrot.lane.b32.xlu0 %v6234, 127
      %v6289 = vpop.permute.xlu0 %6288
      %6290 = vrot.lane.b32.xlu0 %v6239, 127
      %v6291 = vpop.permute.xlu0 %6290
      %6292 = vrot.lane.b32.xlu0 %v6244, 127
      %v6293 = vpop.permute.xlu0 %6292
      %6294 = vrot.lane.b32.xlu0 %v6249, 127
      %v6295 = vpop.permute.xlu0 %6294
      %6296 = vrot.lane.b32.xlu0 %v6254, 127
      %v6297 = vpop.permute.xlu0 %6296
      %vm6306 = vcmask 523264
      %v6308 = vsel %vm6306, %v6266, 0
      %v6311 = vsel %vm6306, %v6267, 0
      %v6314 = vsel %vm6306, %v6268, 0
      %v6317 = vsel %vm6306, %v6269, 0
      %v6320 = vsel %vm6306, %v6270, 0
      %v6323 = vsel %vm6306, %v6271, 0
      %v6326 = vsel %vm6306, %v6272, 0
      %v6329 = vsel %vm6306, %v6273, 0
      %6331 = vmatprep.subr.mxu0 0.0
      %6332 = vmatpush1.msra.mxu0 %v6283
      %6333 = vmatprep.subr.mxu0 0.0
      %6334 = vmatpush1.msra.mxu0 %v6285
      %6335 = vmatprep.subr.mxu0 0.0
      %6336 = vmatpush1.msra.mxu0 %v6287
      %6337 = vmatprep.subr.mxu0 0.0
      %6338 = vmatpush1.msra.mxu0 %v6289
      %6339 = vmatprep.subr.mxu0 0.0
      %6340 = vmatpush1.msra.mxu0 %v6291
      %6341 = vmatprep.subr.mxu0 0.0
      %6342 = vmatpush1.msra.mxu0 %v6293
      %6343 = vmatprep.subr.mxu0 0.0
      %6344 = vmatpush1.msra.mxu0 %v6295
      %6345 = vmatprep.subr.mxu0 0.0
      %6346 = vmatpush1.msra.mxu0 %v6297
      %6347 = vmatprep.subr.mxu0 0.0
      %6348 = vmatpush1.msra.mxu0 0.0
      %6349 = vmatprep.subr.mxu0 0.0
      %6350 = vmatpush1.msra.mxu0 0.0
      %6351 = vmatprep.subr.mxu0 0.0
      %6352 = vmatpush1.msra.mxu0 0.0
      %6353 = vmatprep.subr.mxu0 0.0
      %6354 = vmatpush1.msra.mxu0 0.0
      %6355 = vmatprep.subr.mxu0 0.0
      %6356 = vmatpush1.msra.mxu0 0.0
      %6357 = vmatprep.subr.mxu0 0.0
      %6358 = vmatpush1.msra.mxu0 0.0
      %6359 = vmatprep.subr.mxu0 0.0
      %6360 = vmatpush1.msra.mxu0 0.0
      %6361 = vmatprep.subr.mxu0 0.0
      %6362 = vmatpush1.msra.mxu0 0.0
      %6363 = vmatprep.subr.mxu0 0.0
      %6364 = vmatpush1.msra.mxu0 0.0
      %6365 = vmatprep.subr.mxu0 0.0
      %6366 = vmatpush1.msra.mxu0 0.0
      %6367 = vmatprep.subr.mxu0 0.0
      %6368 = vmatpush1.msra.mxu0 0.0
      %6369 = vmatprep.subr.mxu0 0.0
      %6370 = vmatpush1.msra.mxu0 0.0
      %6371 = vmatprep.subr.mxu0 0.0
      %6372 = vmatpush1.msra.mxu0 0.0
      %6373 = vmatprep.subr.mxu0 0.0
      %6374 = vmatpush1.msra.mxu0 0.0
      %6375 = vmatprep.subr.mxu0 0.0
      %6376 = vmatpush1.msra.mxu0 0.0
      %6377 = vmatprep.subr.mxu0 0.0
      %6378 = vmatpush1.msra.mxu0 0.0
      %6379 = vmatprep.subr.mxu0 0.0
      %6380 = vmatpush1.msra.mxu0 0.0
      %6381 = vmatprep.subr.mxu0 0.0
      %6382 = vmatpush1.msra.mxu0 0.0
      %6383 = vmatprep.subr.mxu0 0.0
      %6384 = vmatpush1.msra.mxu0 0.0
      %6385 = vmatprep.subr.mxu0 0.0
      %6386 = vmatpush1.msra.mxu0 0.0
      %6387 = vmatprep.subr.mxu0 0.0
      %6388 = vmatpush1.msra.mxu0 0.0
      %6389 = vmatprep.subr.mxu0 0.0
      %6390 = vmatpush1.msra.mxu0 0.0
      %6391 = vmatprep.subr.mxu0 0.0
      %6392 = vmatpush1.msra.mxu0 0.0
      %6393 = vmatprep.subr.mxu0 0.0
      %6394 = vmatpush1.msra.mxu0 0.0
      %6395 = vmatprep.mubr.f32.mxu0 0.0
      %6396 = vmatmul.mubr.f32.gmra.mrb[0].mxu0 %v6308
      %v6397 = vpop.f32.mrb[0].mxu0
      %v6398 = vadd.f32 0.0, %v6397
      %v6399 = vpop.f32.mrb[0].mxu0
      %6400 = vmatprep.mubr.f32.mxu0 0.0
      %6401 = vmatmul.mubr.f32.gmra.mrb[0].mxu0 %v6311
      %v6402 = vpop.f32.mrb[0].mxu0
      %v6403 = vadd.f32 0.0, %v6402
      %v6404 = vpop.f32.mrb[0].mxu0
      %6405 = vmatprep.mubr.f32.mxu0 0.0
      %6406 = vmatmul.mubr.f32.gmra.mrb[0].mxu0 %v6314
      %v6407 = vpop.f32.mrb[0].mxu0
      %v6408 = vadd.f32 0.0, %v6407
      %v6409 = vpop.f32.mrb[0].mxu0
      %6410 = vmatprep.mubr.f32.mxu0 0.0
      %6411 = vmatmul.mubr.f32.gmra.mrb[0].mxu0 %v6317
      %v6412 = vpop.f32.mrb[0].mxu0
      %v6413 = vadd.f32 0.0, %v6412
      %v6414 = vpop.f32.mrb[0].mxu0
      %6415 = vmatprep.mubr.f32.mxu0 0.0
      %6416 = vmatmul.mubr.f32.gmra.mrb[0].mxu0 %v6320
      %v6417 = vpop.f32.mrb[0].mxu0
      %v6418 = vadd.f32 0.0, %v6417
      %v6419 = vpop.f32.mrb[0].mxu0
      %6420 = vmatprep.mubr.f32.mxu0 0.0
      %6421 = vmatmul.mubr.f32.gmra.mrb[0].mxu0 %v6323
      %v6422 = vpop.f32.mrb[0].mxu0
      %v6423 = vadd.f32 0.0, %v6422
      %v6424 = vpop.f32.mrb[0].mxu0
      %6425 = vmatprep.mubr.f32.mxu0 0.0
      %6426 = vmatmul.mubr.f32.gmra.mrb[0].mxu0 %v6326
      %v6427 = vpop.f32.mrb[0].mxu0
      %v6428 = vadd.f32 0.0, %v6427
      %v6429 = vpop.f32.mrb[0].mxu0
      %6430 = vmatprep.mubr.f32.mxu0 0.0
      %6431 = vmatmul.mubr.f32.gmra.mrb[0].mxu0 %v6329
      %v6432 = vpop.f32.mrb[0].mxu0
      %v6433 = vadd.f32 0.0, %v6432
      %v6434 = vpop.f32.mrb[0].mxu0
      %6435 = vdwg.mxu0
      %v6437 = vsel %vm6306, %v6257, 0
      %v6440 = vsel %vm6306, %v6258, 0
      %v6443 = vsel %vm6306, %v6259, 0
      %v6446 = vsel %vm6306, %v6260, 0
      %v6449 = vsel %vm6306, %v6261, 0
      %v6452 = vsel %vm6306, %v6262, 0
      %v6455 = vsel %vm6306, %v6263, 0
      %v6458 = vsel %vm6306, %v6264, 0
      %6460 = vmatprep.subr.mxu0 0.0
      %6461 = vmatpush1.msra.mxu0 %v6219
      %6462 = vmatprep.subr.mxu0 0.0
      %6463 = vmatpush1.msra.mxu0 %v6224
      %6464 = vmatprep.subr.mxu0 0.0
      %6465 = vmatpush1.msra.mxu0 %v6229
      %6466 = vmatprep.subr.mxu0 0.0
      %6467 = vmatpush1.msra.mxu0 %v6234
      %6468 = vmatprep.subr.mxu0 0.0
      %6469 = vmatpush1.msra.mxu0 %v6239
      %6470 = vmatprep.subr.mxu0 0.0
      %6471 = vmatpush1.msra.mxu0 %v6244
      %6472 = vmatprep.subr.mxu0 0.0
      %6473 = vmatpush1.msra.mxu0 %v6249
      %6474 = vmatprep.subr.mxu0 0.0
      %6475 = vmatpush1.msra.mxu0 %v6254
      %6476 = vmatprep.subr.mxu0 0.0
      %6477 = vmatpush1.msra.mxu0 0.0
      %6478 = vmatprep.subr.mxu0 0.0
      %6479 = vmatpush1.msra.mxu0 0.0
      %6480 = vmatprep.subr.mxu0 0.0
      %6481 = vmatpush1.msra.mxu0 0.0
      %6482 = vmatprep.subr.mxu0 0.0
      %6483 = vmatpush1.msra.mxu0 0.0
      %6484 = vmatprep.subr.mxu0 0.0
      %6485 = vmatpush1.msra.mxu0 0.0
      %6486 = vmatprep.subr.mxu0 0.0
      %6487 = vmatpush1.msra.mxu0 0.0
      %6488 = vmatprep.subr.mxu0 0.0
      %6489 = vmatpush1.msra.mxu0 0.0
      %6490 = vmatprep.subr.mxu0 0.0
      %6491 = vmatpush1.msra.mxu0 0.0
      %6492 = vmatprep.subr.mxu0 0.0
      %6493 = vmatpush1.msra.mxu0 0.0
      %6494 = vmatprep.subr.mxu0 0.0
      %6495 = vmatpush1.msra.mxu0 0.0
      %6496 = vmatprep.subr.mxu0 0.0
      %6497 = vmatpush1.msra.mxu0 0.0
      %6498 = vmatprep.subr.mxu0 0.0
      %6499 = vmatpush1.msra.mxu0 0.0
      %6500 = vmatprep.subr.mxu0 0.0
      %6501 = vmatpush1.msra.mxu0 0.0
      %6502 = vmatprep.subr.mxu0 0.0
      %6503 = vmatpush1.msra.mxu0 0.0
      %6504 = vmatprep.subr.mxu0 0.0
      %6505 = vmatpush1.msra.mxu0 0.0
      %6506 = vmatprep.subr.mxu0 0.0
      %6507 = vmatpush1.msra.mxu0 0.0
      %6508 = vmatprep.subr.mxu0 0.0
      %6509 = vmatpush1.msra.mxu0 0.0
      %6510 = vmatprep.subr.mxu0 0.0
      %6511 = vmatpush1.msra.mxu0 0.0
      %6512 = vmatprep.subr.mxu0 0.0
      %6513 = vmatpush1.msra.mxu0 0.0
      %6514 = vmatprep.subr.mxu0 0.0
      %6515 = vmatpush1.msra.mxu0 0.0
      %6516 = vmatprep.subr.mxu0 0.0
      %6517 = vmatpush1.msra.mxu0 0.0
      %6518 = vmatprep.subr.mxu0 0.0
      %6519 = vmatpush1.msra.mxu0 0.0
      %6520 = vmatprep.subr.mxu0 0.0
      %6521 = vmatpush1.msra.mxu0 0.0
      %6522 = vmatprep.subr.mxu0 0.0
      %6523 = vmatpush1.msra.mxu0 0.0
      %6524 = vmatprep.mubr.f32.mxu0 0.0
      %6525 = vmatmul.mubr.f32.gmra.mrb[0].mxu0 %v6437
      %v6526 = vpop.f32.mrb[0].mxu0
      %v6527 = vadd.f32 %v6398, %v6526
      %v6528 = vpop.f32.mrb[0].mxu0
      %6529 = vmatprep.mubr.f32.mxu0 0.0
      %6530 = vmatmul.mubr.f32.gmra.mrb[0].mxu0 %v6440
      %v6531 = vpop.f32.mrb[0].mxu0
      %v6532 = vadd.f32 %v6403, %v6531
      %v6533 = vpop.f32.mrb[0].mxu0
      %6534 = vmatprep.mubr.f32.mxu0 0.0
      %6535 = vmatmul.mubr.f32.gmra.mrb[0].mxu0 %v6443
      %v6536 = vpop.f32.mrb[0].mxu0
      %v6537 = vadd.f32 %v6408, %v6536
      %v6538 = vpop.f32.mrb[0].mxu0
      %6539 = vmatprep.mubr.f32.mxu0 0.0
      %6540 = vmatmul.mubr.f32.gmra.mrb[0].mxu0 %v6446
      %v6541 = vpop.f32.mrb[0].mxu0
      %v6542 = vadd.f32 %v6413, %v6541
      %v6543 = vpop.f32.mrb[0].mxu0
      %6544 = vmatprep.mubr.f32.mxu0 0.0
      %6545 = vmatmul.mubr.f32.gmra.mrb[0].mxu0 %v6449
      %v6546 = vpop.f32.mrb[0].mxu0
      %v6547 = vadd.f32 %v6418, %v6546
      %v6548 = vpop.f32.mrb[0].mxu0
      %6549 = vmatprep.mubr.f32.mxu0 0.0
      %6550 = vmatmul.mubr.f32.gmra.mrb[0].mxu0 %v6452
      %v6551 = vpop.f32.mrb[0].mxu0
      %v6552 = vadd.f32 %v6423, %v6551
      %v6553 = vpop.f32.mrb[0].mxu0
      %6554 = vmatprep.mubr.f32.mxu0 0.0
      %6555 = vmatmul.mubr.f32.gmra.mrb[0].mxu0 %v6455
      %v6556 = vpop.f32.mrb[0].mxu0
      %v6557 = vadd.f32 %v6428, %v6556
      %v6558 = vpop.f32.mrb[0].mxu0
      %6559 = vmatprep.mubr.f32.mxu0 0.0
      %6560 = vmatmul.mubr.f32.gmra.mrb[0].mxu0 %v6458
      %v6561 = vpop.f32.mrb[0].mxu0
      %v6562 = vadd.f32 %v6433, %v6561
      %v6563 = vpop.f32.mrb[0].mxu0
      %6564 = vdwg.mxu0
      %s6565 = scalar_lea.vmem %s5, 128
      %v6566 = vld [vmem:[%s6565] sm:$0xff]
      %v6567 = vld [vmem:[%s6565 + $0x8] sm:$0xff]
      %v6568 = vld [vmem:[%s6565 + $0x10] sm:$0xff]
      %v6569 = vld [vmem:[%s6565 + $0x18] sm:$0xff]
      %v6570 = vld [vmem:[%s6565 + $0x20] sm:$0xff]
      %v6571 = vld [vmem:[%s6565 + $0x28] sm:$0xff]
      %v6572 = vld [vmem:[%s6565 + $0x30] sm:$0xff]
      %v6573 = vld [vmem:[%s6565 + $0x38] sm:$0xff]
      %6574 = vrot.lane.b32.xlu0 %v6219, 126
      %v6575 = vpop.permute.xlu0 %6574
      %6576 = vrot.lane.b32.xlu0 %v6224, 126
      %v6577 = vpop.permute.xlu0 %6576
      %6578 = vrot.lane.b32.xlu0 %v6229, 126
      %v6579 = vpop.permute.xlu0 %6578
      %6580 = vrot.lane.b32.xlu0 %v6234, 126
      %v6581 = vpop.permute.xlu0 %6580
      %6582 = vrot.lane.b32.xlu0 %v6239, 126
      %v6583 = vpop.permute.xlu0 %6582
      %6584 = vrot.lane.b32.xlu0 %v6244, 126
      %v6585 = vpop.permute.xlu0 %6584
      %6586 = vrot.lane.b32.xlu0 %v6249, 126
      %v6587 = vpop.permute.xlu0 %6586
      %6588 = vrot.lane.b32.xlu0 %v6254, 126
      %v6589 = vpop.permute.xlu0 %6588
      %v6599 = vsel %vm6306, %v6566, 0
      %v6602 = vsel %vm6306, %v6567, 0
      %v6605 = vsel %vm6306, %v6568, 0
      %v6608 = vsel %vm6306, %v6569, 0
      %v6611 = vsel %vm6306, %v6570, 0
      %v6614 = vsel %vm6306, %v6571, 0
      %v6617 = vsel %vm6306, %v6572, 0
      %v6620 = vsel %vm6306, %v6573, 0
      %6622 = vmatprep.subr.mxu0 0.0
      %6623 = vmatpush1.msra.mxu0 %v6575
      %6624 = vmatprep.subr.mxu0 0.0
      %6625 = vmatpush1.msra.mxu0 %v6577
      %6626 = vmatprep.subr.mxu0 0.0
      %6627 = vmatpush1.msra.mxu0 %v6579
      %6628 = vmatprep.subr.mxu0 0.0
      %6629 = vmatpush1.msra.mxu0 %v6581
      %6630 = vmatprep.subr.mxu0 0.0
      %6631 = vmatpush1.msra.mxu0 %v6583
      %6632 = vmatprep.subr.mxu0 0.0
      %6633 = vmatpush1.msra.mxu0 %v6585
      %6634 = vmatprep.subr.mxu0 0.0
      %6635 = vmatpush1.msra.mxu0 %v6587
      %6636 = vmatprep.subr.mxu0 0.0
      %6637 = vmatpush1.msra.mxu0 %v6589
      %6638 = vmatprep.subr.mxu0 0.0
      %6639 = vmatpush1.msra.mxu0 0.0
      %6640 = vmatprep.subr.mxu0 0.0
      %6641 = vmatpush1.msra.mxu0 0.0
      %6642 = vmatprep.subr.mxu0 0.0
      %6643 = vmatpush1.msra.mxu0 0.0
      %6644 = vmatprep.subr.mxu0 0.0
      %6645 = vmatpush1.msra.mxu0 0.0
      %6646 = vmatprep.subr.mxu0 0.0
      %6647 = vmatpush1.msra.mxu0 0.0
      %6648 = vmatprep.subr.mxu0 0.0
      %6649 = vmatpush1.msra.mxu0 0.0
      %6650 = vmatprep.subr.mxu0 0.0
      %6651 = vmatpush1.msra.mxu0 0.0
      %6652 = vmatprep.subr.mxu0 0.0
      %6653 = vmatpush1.msra.mxu0 0.0
      %6654 = vmatprep.subr.mxu0 0.0
      %6655 = vmatpush1.msra.mxu0 0.0
      %6656 = vmatprep.subr.mxu0 0.0
      %6657 = vmatpush1.msra.mxu0 0.0
      %6658 = vmatprep.subr.mxu0 0.0
      %6659 = vmatpush1.msra.mxu0 0.0
      %6660 = vmatprep.subr.mxu0 0.0
      %6661 = vmatpush1.msra.mxu0 0.0
      %6662 = vmatprep.subr.mxu0 0.0
      %6663 = vmatpush1.msra.mxu0 0.0
      %6664 = vmatprep.subr.mxu0 0.0
      %6665 = vmatpush1.msra.mxu0 0.0
      %6666 = vmatprep.subr.mxu0 0.0
      %6667 = vmatpush1.msra.mxu0 0.0
      %6668 = vmatprep.subr.mxu0 0.0
      %6669 = vmatpush1.msra.mxu0 0.0
      %6670 = vmatprep.subr.mxu0 0.0
      %6671 = vmatpush1.msra.mxu0 0.0
      %6672 = vmatprep.subr.mxu0 0.0
      %6673 = vmatpush1.msra.mxu0 0.0
      %6674 = vmatprep.subr.mxu0 0.0
      %6675 = vmatpush1.msra.mxu0 0.0
      %6676 = vmatprep.subr.mxu0 0.0
      %6677 = vmatpush1.msra.mxu0 0.0
      %6678 = vmatprep.subr.mxu0 0.0
      %6679 = vmatpush1.msra.mxu0 0.0
      %6680 = vmatprep.subr.mxu0 0.0
      %6681 = vmatpush1.msra.mxu0 0.0
      %6682 = vmatprep.subr.mxu0 0.0
      %6683 = vmatpush1.msra.mxu0 0.0
      %6684 = vmatprep.subr.mxu0 0.0
      %6685 = vmatpush1.msra.mxu0 0.0
      %6686 = vmatprep.mubr.f32.mxu0 0.0
      %6687 = vmatmul.mubr.f32.gmra.mrb[0].mxu0 %v6599
      %v6688 = vpop.f32.mrb[0].mxu0
      %v6689 = vadd.f32 0.0, %v6688
      %v6690 = vpop.f32.mrb[0].mxu0
      %6691 = vmatprep.mubr.f32.mxu0 0.0
      %6692 = vmatmul.mubr.f32.gmra.mrb[0].mxu0 %v6602
      %v6693 = vpop.f32.mrb[0].mxu0
      %v6694 = vadd.f32 0.0, %v6693
      %v6695 = vpop.f32.mrb[0].mxu0
      %6696 = vmatprep.mubr.f32.mxu0 0.0
      %6697 = vmatmul.mubr.f32.gmra.mrb[0].mxu0 %v6605
      %v6698 = vpop.f32.mrb[0].mxu0
      %v6699 = vadd.f32 0.0, %v6698
      %v6700 = vpop.f32.mrb[0].mxu0
      %6701 = vmatprep.mubr.f32.mxu0 0.0
      %6702 = vmatmul.mubr.f32.gmra.mrb[0].mxu0 %v6608
      %v6703 = vpop.f32.mrb[0].mxu0
      %v6704 = vadd.f32 0.0, %v6703
      %v6705 = vpop.f32.mrb[0].mxu0
      %6706 = vmatprep.mubr.f32.mxu0 0.0
      %6707 = vmatmul.mubr.f32.gmra.mrb[0].mxu0 %v6611
      %v6708 = vpop.f32.mrb[0].mxu0
      %v6709 = vadd.f32 0.0, %v6708
      %v6710 = vpop.f32.mrb[0].mxu0
      %6711 = vmatprep.mubr.f32.mxu0 0.0
      %6712 = vmatmul.mubr.f32.gmra.mrb[0].mxu0 %v6614
      %v6713 = vpop.f32.mrb[0].mxu0
      %v6714 = vadd.f32 0.0, %v6713
      %v6715 = vpop.f32.mrb[0].mxu0
      %6716 = vmatprep.mubr.f32.mxu0 0.0
      %6717 = vmatmul.mubr.f32.gmra.mrb[0].mxu0 %v6617
      %v6718 = vpop.f32.mrb[0].mxu0
      %v6719 = vadd.f32 0.0, %v6718
      %v6720 = vpop.f32.mrb[0].mxu0
      %6721 = vmatprep.mubr.f32.mxu0 0.0
      %6722 = vmatmul.mubr.f32.gmra.mrb[0].mxu0 %v6620
      %v6723 = vpop.f32.mrb[0].mxu0
      %v6724 = vadd.f32 0.0, %v6723
      %v6725 = vpop.f32.mrb[0].mxu0
      %6726 = vdwg.mxu0
      %v6727 = vadd.f32 %v6527, %v6689
      %v6728 = vadd.f32 %v6532, %v6694
      %v6729 = vadd.f32 %v6537, %v6699
      %v6730 = vadd.f32 %v6542, %v6704
      %v6731 = vadd.f32 %v6547, %v6709
      %v6732 = vadd.f32 %v6552, %v6714
      %v6733 = vadd.f32 %v6557, %v6719
      %v6734 = vadd.f32 %v6562, %v6724
      %s6735 = scalar_lea.vmem %s5, 192
      %v6736 = vld [vmem:[%s6735] sm:$0xff]
      %v6737 = vld [vmem:[%s6735 + $0x8] sm:$0xff]
      %v6738 = vld [vmem:[%s6735 + $0x10] sm:$0xff]
      %v6739 = vld [vmem:[%s6735 + $0x18] sm:$0xff]
      %v6740 = vld [vmem:[%s6735 + $0x20] sm:$0xff]
      %v6741 = vld [vmem:[%s6735 + $0x28] sm:$0xff]
      %v6742 = vld [vmem:[%s6735 + $0x30] sm:$0xff]
      %v6743 = vld [vmem:[%s6735 + $0x38] sm:$0xff]
      %6744 = vrot.lane.b32.xlu0 %v6219, 119
      %v6745 = vpop.permute.xlu0 %6744
      %6746 = vrot.lane.b32.xlu0 %v6224, 119
      %v6747 = vpop.permute.xlu0 %6746
      %6748 = vrot.lane.b32.xlu0 %v6229, 119
      %v6749 = vpop.permute.xlu0 %6748
      %6750 = vrot.lane.b32.xlu0 %v6234, 119
      %v6751 = vpop.permute.xlu0 %6750
      %6752 = vrot.lane.b32.xlu0 %v6239, 119
      %v6753 = vpop.permute.xlu0 %6752
      %6754 = vrot.lane.b32.xlu0 %v6244, 119
      %v6755 = vpop.permute.xlu0 %6754
      %6756 = vrot.lane.b32.xlu0 %v6249, 119
      %v6757 = vpop.permute.xlu0 %6756
      %6758 = vrot.lane.b32.xlu0 %v6254, 119
      %v6759 = vpop.permute.xlu0 %6758
      %v6769 = vsel %vm6306, %v6736, 0
      %v6772 = vsel %vm6306, %v6737, 0
      %v6775 = vsel %vm6306, %v6738, 0
      %v6778 = vsel %vm6306, %v6739, 0
      %v6781 = vsel %vm6306, %v6740, 0
      %v6784 = vsel %vm6306, %v6741, 0
      %v6787 = vsel %vm6306, %v6742, 0
      %v6790 = vsel %vm6306, %v6743, 0
      %6792 = vmatprep.subr.mxu0 0.0
      %6793 = vmatpush1.msra.mxu0 %v6745
      %6794 = vmatprep.subr.mxu0 0.0
      %6795 = vmatpush1.msra.mxu0 %v6747
      %6796 = vmatprep.subr.mxu0 0.0
      %6797 = vmatpush1.msra.mxu0 %v6749
      %6798 = vmatprep.subr.mxu0 0.0
      %6799 = vmatpush1.msra.mxu0 %v6751
      %6800 = vmatprep.subr.mxu0 0.0
      %6801 = vmatpush1.msra.mxu0 %v6753
      %6802 = vmatprep.subr.mxu0 0.0
      %6803 = vmatpush1.msra.mxu0 %v6755
      %6804 = vmatprep.subr.mxu0 0.0
      %6805 = vmatpush1.msra.mxu0 %v6757
      %6806 = vmatprep.subr.mxu0 0.0
      %6807 = vmatpush1.msra.mxu0 %v6759
      %6808 = vmatprep.subr.mxu0 0.0
      %6809 = vmatpush1.msra.mxu0 0.0
      %6810 = vmatprep.subr.mxu0 0.0
      %6811 = vmatpush1.msra.mxu0 0.0
      %6812 = vmatprep.subr.mxu0 0.0
      %6813 = vmatpush1.msra.mxu0 0.0
      %6814 = vmatprep.subr.mxu0 0.0
      %6815 = vmatpush1.msra.mxu0 0.0
      %6816 = vmatprep.subr.mxu0 0.0
      %6817 = vmatpush1.msra.mxu0 0.0
      %6818 = vmatprep.subr.mxu0 0.0
      %6819 = vmatpush1.msra.mxu0 0.0
      %6820 = vmatprep.subr.mxu0 0.0
      %6821 = vmatpush1.msra.mxu0 0.0
      %6822 = vmatprep.subr.mxu0 0.0
      %6823 = vmatpush1.msra.mxu0 0.0
      %6824 = vmatprep.subr.mxu0 0.0
      %6825 = vmatpush1.msra.mxu0 0.0
      %6826 = vmatprep.subr.mxu0 0.0
      %6827 = vmatpush1.msra.mxu0 0.0
      %6828 = vmatprep.subr.mxu0 0.0
      %6829 = vmatpush1.msra.mxu0 0.0
      %6830 = vmatprep.subr.mxu0 0.0
      %6831 = vmatpush1.msra.mxu0 0.0
      %6832 = vmatprep.subr.mxu0 0.0
      %6833 = vmatpush1.msra.mxu0 0.0
      %6834 = vmatprep.subr.mxu0 0.0
      %6835 = vmatpush1.msra.mxu0 0.0
      %6836 = vmatprep.subr.mxu0 0.0
      %6837 = vmatpush1.msra.mxu0 0.0
      %6838 = vmatprep.subr.mxu0 0.0
      %6839 = vmatpush1.msra.mxu0 0.0
      %6840 = vmatprep.subr.mxu0 0.0
      %6841 = vmatpush1.msra.mxu0 0.0
      %6842 = vmatprep.subr.mxu0 0.0
      %6843 = vmatpush1.msra.mxu0 0.0
      %6844 = vmatprep.subr.mxu0 0.0
      %6845 = vmatpush1.msra.mxu0 0.0
      %6846 = vmatprep.subr.mxu0 0.0
      %6847 = vmatpush1.msra.mxu0 0.0
      %6848 = vmatprep.subr.mxu0 0.0
      %6849 = vmatpush1.msra.mxu0 0.0
      %6850 = vmatprep.subr.mxu0 0.0
      %6851 = vmatpush1.msra.mxu0 0.0
      %6852 = vmatprep.subr.mxu0 0.0
      %6853 = vmatpush1.msra.mxu0 0.0
      %6854 = vmatprep.subr.mxu0 0.0
      %6855 = vmatpush1.msra.mxu0 0.0
      %6856 = vmatprep.mubr.f32.mxu0 0.0
      %6857 = vmatmul.mubr.f32.gmra.mrb[0].mxu0 %v6769
      %v6858 = vpop.f32.mrb[0].mxu0
      %v6859 = vadd.f32 0.0, %v6858
      %v6860 = vpop.f32.mrb[0].mxu0
      %6861 = vmatprep.mubr.f32.mxu0 0.0
      %6862 = vmatmul.mubr.f32.gmra.mrb[0].mxu0 %v6772
      %v6863 = vpop.f32.mrb[0].mxu0
      %v6864 = vadd.f32 0.0, %v6863
      %v6865 = vpop.f32.mrb[0].mxu0
      %6866 = vmatprep.mubr.f32.mxu0 0.0
      %6867 = vmatmul.mubr.f32.gmra.mrb[0].mxu0 %v6775
      %v6868 = vpop.f32.mrb[0].mxu0
      %v6869 = vadd.f32 0.0, %v6868
      %v6870 = vpop.f32.mrb[0].mxu0
      %6871 = vmatprep.mubr.f32.mxu0 0.0
      %6872 = vmatmul.mubr.f32.gmra.mrb[0].mxu0 %v6778
      %v6873 = vpop.f32.mrb[0].mxu0
      %v6874 = vadd.f32 0.0, %v6873
      %v6875 = vpop.f32.mrb[0].mxu0
      %6876 = vmatprep.mubr.f32.mxu0 0.0
      %6877 = vmatmul.mubr.f32.gmra.mrb[0].mxu0 %v6781
      %v6878 = vpop.f32.mrb[0].mxu0
      %v6879 = vadd.f32 0.0, %v6878
      %v6880 = vpop.f32.mrb[0].mxu0
      %6881 = vmatprep.mubr.f32.mxu0 0.0
      %6882 = vmatmul.mubr.f32.gmra.mrb[0].mxu0 %v6784
      %v6883 = vpop.f32.mrb[0].mxu0
      %v6884 = vadd.f32 0.0, %v6883
      %v6885 = vpop.f32.mrb[0].mxu0
      %6886 = vmatprep.mubr.f32.mxu0 0.0
      %6887 = vmatmul.mubr.f32.gmra.mrb[0].mxu0 %v6787
      %v6888 = vpop.f32.mrb[0].mxu0
      %v6889 = vadd.f32 0.0, %v6888
      %v6890 = vpop.f32.mrb[0].mxu0
      %6891 = vmatprep.mubr.f32.mxu0 0.0
      %6892 = vmatmul.mubr.f32.gmra.mrb[0].mxu0 %v6790
      %v6893 = vpop.f32.mrb[0].mxu0
      %v6894 = vadd.f32 0.0, %v6893
      %v6895 = vpop.f32.mrb[0].mxu0
      %6896 = vdwg.mxu0
      %v6897 = vadd.f32 %v6727, %v6859
      %v6898 = vadd.f32 %v6728, %v6864
      %v6899 = vadd.f32 %v6729, %v6869
      %v6900 = vadd.f32 %v6730, %v6874
      %v6901 = vadd.f32 %v6731, %v6879
      %v6902 = vadd.f32 %v6732, %v6884
      %v6903 = vadd.f32 %v6733, %v6889
      %v6904 = vadd.f32 %v6734, %v6894
      %s6905 = scalar_lea.vmem %s5, 256
      %v6906 = vld [vmem:[%s6905] sm:$0xff]
      %v6907 = vld [vmem:[%s6905 + $0x8] sm:$0xff]
      %v6908 = vld [vmem:[%s6905 + $0x10] sm:$0xff]
      %v6909 = vld [vmem:[%s6905 + $0x18] sm:$0xff]
      %v6910 = vld [vmem:[%s6905 + $0x20] sm:$0xff]
      %v6911 = vld [vmem:[%s6905 + $0x28] sm:$0xff]
      %v6912 = vld [vmem:[%s6905 + $0x30] sm:$0xff]
      %v6913 = vld [vmem:[%s6905 + $0x38] sm:$0xff]
      %6914 = vrot.lane.b32.xlu0 %v6219, 118
      %v6915 = vpop.permute.xlu0 %6914
      %6916 = vrot.lane.b32.xlu0 %v6224, 118
      %v6917 = vpop.permute.xlu0 %6916
      %6918 = vrot.lane.b32.xlu0 %v6229, 118
      %v6919 = vpop.permute.xlu0 %6918
      %6920 = vrot.lane.b32.xlu0 %v6234, 118
      %v6921 = vpop.permute.xlu0 %6920
      %6922 = vrot.lane.b32.xlu0 %v6239, 118
      %v6923 = vpop.permute.xlu0 %6922
      %6924 = vrot.lane.b32.xlu0 %v6244, 118
      %v6925 = vpop.permute.xlu0 %6924
      %6926 = vrot.lane.b32.xlu0 %v6249, 118
      %v6927 = vpop.permute.xlu0 %6926
      %6928 = vrot.lane.b32.xlu0 %v6254, 118
      %v6929 = vpop.permute.xlu0 %6928
      %v6939 = vsel %vm6306, %v6906, 0
      %v6942 = vsel %vm6306, %v6907, 0
      %v6945 = vsel %vm6306, %v6908, 0
      %v6948 = vsel %vm6306, %v6909, 0
      %v6951 = vsel %vm6306, %v6910, 0
      %v6954 = vsel %vm6306, %v6911, 0
      %v6957 = vsel %vm6306, %v6912, 0
      %v6960 = vsel %vm6306, %v6913, 0
      %6962 = vmatprep.subr.mxu0 0.0
      %6963 = vmatpush1.msra.mxu0 %v6915
      %6964 = vmatprep.subr.mxu0 0.0
      %6965 = vmatpush1.msra.mxu0 %v6917
      %6966 = vmatprep.subr.mxu0 0.0
      %6967 = vmatpush1.msra.mxu0 %v6919
      %6968 = vmatprep.subr.mxu0 0.0
      %6969 = vmatpush1.msra.mxu0 %v6921
      %6970 = vmatprep.subr.mxu0 0.0
      %6971 = vmatpush1.msra.mxu0 %v6923
      %6972 = vmatprep.subr.mxu0 0.0
      %6973 = vmatpush1.msra.mxu0 %v6925
      %6974 = vmatprep.subr.mxu0 0.0
      %6975 = vmatpush1.msra.mxu0 %v6927
      %6976 = vmatprep.subr.mxu0 0.0
      %6977 = vmatpush1.msra.mxu0 %v6929
      %6978 = vmatprep.subr.mxu0 0.0
      %6979 = vmatpush1.msra.mxu0 0.0
      %6980 = vmatprep.subr.mxu0 0.0
      %6981 = vmatpush1.msra.mxu0 0.0
      %6982 = vmatprep.subr.mxu0 0.0
      %6983 = vmatpush1.msra.mxu0 0.0
      %6984 = vmatprep.subr.mxu0 0.0
      %6985 = vmatpush1.msra.mxu0 0.0
      %6986 = vmatprep.subr.mxu0 0.0
      %6987 = vmatpush1.msra.mxu0 0.0
      %6988 = vmatprep.subr.mxu0 0.0
      %6989 = vmatpush1.msra.mxu0 0.0
      %6990 = vmatprep.subr.mxu0 0.0
      %6991 = vmatpush1.msra.mxu0 0.0
      %6992 = vmatprep.subr.mxu0 0.0
      %6993 = vmatpush1.msra.mxu0 0.0
      %6994 = vmatprep.subr.mxu0 0.0
      %6995 = vmatpush1.msra.mxu0 0.0
      %6996 = vmatprep.subr.mxu0 0.0
      %6997 = vmatpush1.msra.mxu0 0.0
      %6998 = vmatprep.subr.mxu0 0.0
      %6999 = vmatpush1.msra.mxu0 0.0
      %7000 = vmatprep.subr.mxu0 0.0
      %7001 = vmatpush1.msra.mxu0 0.0
      %7002 = vmatprep.subr.mxu0 0.0
      %7003 = vmatpush1.msra.mxu0 0.0
      %7004 = vmatprep.subr.mxu0 0.0
      %7005 = vmatpush1.msra.mxu0 0.0
      %7006 = vmatprep.subr.mxu0 0.0
      %7007 = vmatpush1.msra.mxu0 0.0
      %7008 = vmatprep.subr.mxu0 0.0
      %7009 = vmatpush1.msra.mxu0 0.0
      %7010 = vmatprep.subr.mxu0 0.0
      %7011 = vmatpush1.msra.mxu0 0.0
      %7012 = vmatprep.subr.mxu0 0.0
      %7013 = vmatpush1.msra.mxu0 0.0
      %7014 = vmatprep.subr.mxu0 0.0
      %7015 = vmatpush1.msra.mxu0 0.0
      %7016 = vmatprep.subr.mxu0 0.0
      %7017 = vmatpush1.msra.mxu0 0.0
      %7018 = vmatprep.subr.mxu0 0.0
      %7019 = vmatpush1.msra.mxu0 0.0
      %7020 = vmatprep.subr.mxu0 0.0
      %7021 = vmatpush1.msra.mxu0 0.0
      %7022 = vmatprep.subr.mxu0 0.0
      %7023 = vmatpush1.msra.mxu0 0.0
      %7024 = vmatprep.subr.mxu0 0.0
      %7025 = vmatpush1.msra.mxu0 0.0
      %7026 = vmatprep.mubr.f32.mxu0 0.0
      %7027 = vmatmul.mubr.f32.gmra.mrb[0].mxu0 %v6939
      %v7028 = vpop.f32.mrb[0].mxu0
      %v7029 = vadd.f32 0.0, %v7028
      %v7030 = vpop.f32.mrb[0].mxu0
      %7031 = vmatprep.mubr.f32.mxu0 0.0
      %7032 = vmatmul.mubr.f32.gmra.mrb[0].mxu0 %v6942
      %v7033 = vpop.f32.mrb[0].mxu0
      %v7034 = vadd.f32 0.0, %v7033
      %v7035 = vpop.f32.mrb[0].mxu0
      %7036 = vmatprep.mubr.f32.mxu0 0.0
      %7037 = vmatmul.mubr.f32.gmra.mrb[0].mxu0 %v6945
      %v7038 = vpop.f32.mrb[0].mxu0
      %v7039 = vadd.f32 0.0, %v7038
      %v7040 = vpop.f32.mrb[0].mxu0
      %7041 = vmatprep.mubr.f32.mxu0 0.0
      %7042 = vmatmul.mubr.f32.gmra.mrb[0].mxu0 %v6948
      %v7043 = vpop.f32.mrb[0].mxu0
      %v7044 = vadd.f32 0.0, %v7043
      %v7045 = vpop.f32.mrb[0].mxu0
      %7046 = vmatprep.mubr.f32.mxu0 0.0
      %7047 = vmatmul.mubr.f32.gmra.mrb[0].mxu0 %v6951
      %v7048 = vpop.f32.mrb[0].mxu0
      %v7049 = vadd.f32 0.0, %v7048
      %v7050 = vpop.f32.mrb[0].mxu0
      %7051 = vmatprep.mubr.f32.mxu0 0.0
      %7052 = vmatmul.mubr.f32.gmra.mrb[0].mxu0 %v6954
      %v7053 = vpop.f32.mrb[0].mxu0
      %v7054 = vadd.f32 0.0, %v7053
      %v7055 = vpop.f32.mrb[0].mxu0
      %7056 = vmatprep.mubr.f32.mxu0 0.0
      %7057 = vmatmul.mubr.f32.gmra.mrb[0].mxu0 %v6957
      %v7058 = vpop.f32.mrb[0].mxu0
      %v7059 = vadd.f32 0.0, %v7058
      %v7060 = vpop.f32.mrb[0].mxu0
      %7061 = vmatprep.mubr.f32.mxu0 0.0
      %7062 = vmatmul.mubr.f32.gmra.mrb[0].mxu0 %v6960
      %v7063 = vpop.f32.mrb[0].mxu0
      %v7064 = vadd.f32 0.0, %v7063
      %v7065 = vpop.f32.mrb[0].mxu0
      %7066 = vdwg.mxu0
      %v7067 = vadd.f32 %v6897, %v7029
      %v7068 = vadd.f32 %v6898, %v7034
      %v7069 = vadd.f32 %v6899, %v7039
      %v7070 = vadd.f32 %v6900, %v7044
      %v7071 = vadd.f32 %v6901, %v7049
      %v7072 = vadd.f32 %v6902, %v7054
      %v7073 = vadd.f32 %v6903, %v7059
      %v7074 = vadd.f32 %v6904, %v7064
      %s7075 = scalar_lea.vmem %s5, 320
      %v7076 = vld [vmem:[%s7075] sm:$0xff]
      %v7077 = vld [vmem:[%s7075 + $0x8] sm:$0xff]
      %v7078 = vld [vmem:[%s7075 + $0x10] sm:$0xff]
      %v7079 = vld [vmem:[%s7075 + $0x18] sm:$0xff]
      %v7080 = vld [vmem:[%s7075 + $0x20] sm:$0xff]
      %v7081 = vld [vmem:[%s7075 + $0x28] sm:$0xff]
      %v7082 = vld [vmem:[%s7075 + $0x30] sm:$0xff]
      %v7083 = vld [vmem:[%s7075 + $0x38] sm:$0xff]
      %7084 = vrot.lane.b32.xlu0 %v6219, 117
      %v7085 = vpop.permute.xlu0 %7084
      %7086 = vrot.lane.b32.xlu0 %v6224, 117
      %v7087 = vpop.permute.xlu0 %7086
      %7088 = vrot.lane.b32.xlu0 %v6229, 117
      %v7089 = vpop.permute.xlu0 %7088
      %7090 = vrot.lane.b32.xlu0 %v6234, 117
      %v7091 = vpop.permute.xlu0 %7090
      %7092 = vrot.lane.b32.xlu0 %v6239, 117
      %v7093 = vpop.permute.xlu0 %7092
      %7094 = vrot.lane.b32.xlu0 %v6244, 117
      %v7095 = vpop.permute.xlu0 %7094
      %7096 = vrot.lane.b32.xlu0 %v6249, 117
      %v7097 = vpop.permute.xlu0 %7096
      %7098 = vrot.lane.b32.xlu0 %v6254, 117
      %v7099 = vpop.permute.xlu0 %7098
      %v7109 = vsel %vm6306, %v7076, 0
      %v7112 = vsel %vm6306, %v7077, 0
      %v7115 = vsel %vm6306, %v7078, 0
      %v7118 = vsel %vm6306, %v7079, 0
      %v7121 = vsel %vm6306, %v7080, 0
      %v7124 = vsel %vm6306, %v7081, 0
      %v7127 = vsel %vm6306, %v7082, 0
      %v7130 = vsel %vm6306, %v7083, 0
      %7132 = vmatprep.subr.mxu0 0.0
      %7133 = vmatpush1.msra.mxu0 %v7085
      %7134 = vmatprep.subr.mxu0 0.0
      %7135 = vmatpush1.msra.mxu0 %v7087
      %7136 = vmatprep.subr.mxu0 0.0
      %7137 = vmatpush1.msra.mxu0 %v7089
      %7138 = vmatprep.subr.mxu0 0.0
      %7139 = vmatpush1.msra.mxu0 %v7091
      %7140 = vmatprep.subr.mxu0 0.0
      %7141 = vmatpush1.msra.mxu0 %v7093
      %7142 = vmatprep.subr.mxu0 0.0
      %7143 = vmatpush1.msra.mxu0 %v7095
      %7144 = vmatprep.subr.mxu0 0.0
      %7145 = vmatpush1.msra.mxu0 %v7097
      %7146 = vmatprep.subr.mxu0 0.0
      %7147 = vmatpush1.msra.mxu0 %v7099
      %7148 = vmatprep.subr.mxu0 0.0
      %7149 = vmatpush1.msra.mxu0 0.0
      %7150 = vmatprep.subr.mxu0 0.0
      %7151 = vmatpush1.msra.mxu0 0.0
      %7152 = vmatprep.subr.mxu0 0.0
      %7153 = vmatpush1.msra.mxu0 0.0
      %7154 = vmatprep.subr.mxu0 0.0
      %7155 = vmatpush1.msra.mxu0 0.0
      %7156 = vmatprep.subr.mxu0 0.0
      %7157 = vmatpush1.msra.mxu0 0.0
      %7158 = vmatprep.subr.mxu0 0.0
      %7159 = vmatpush1.msra.mxu0 0.0
      %7160 = vmatprep.subr.mxu0 0.0
      %7161 = vmatpush1.msra.mxu0 0.0
      %7162 = vmatprep.subr.mxu0 0.0
      %7163 = vmatpush1.msra.mxu0 0.0
      %7164 = vmatprep.subr.mxu0 0.0
      %7165 = vmatpush1.msra.mxu0 0.0
      %7166 = vmatprep.subr.mxu0 0.0
      %7167 = vmatpush1.msra.mxu0 0.0
      %7168 = vmatprep.subr.mxu0 0.0
      %7169 = vmatpush1.msra.mxu0 0.0
      %7170 = vmatprep.subr.mxu0 0.0
      %7171 = vmatpush1.msra.mxu0 0.0
      %7172 = vmatprep.subr.mxu0 0.0
      %7173 = vmatpush1.msra.mxu0 0.0
      %7174 = vmatprep.subr.mxu0 0.0
      %7175 = vmatpush1.msra.mxu0 0.0
      %7176 = vmatprep.subr.mxu0 0.0
      %7177 = vmatpush1.msra.mxu0 0.0
      %7178 = vmatprep.subr.mxu0 0.0
      %7179 = vmatpush1.msra.mxu0 0.0
      %7180 = vmatprep.subr.mxu0 0.0
      %7181 = vmatpush1.msra.mxu0 0.0
      %7182 = vmatprep.subr.mxu0 0.0
      %7183 = vmatpush1.msra.mxu0 0.0
      %7184 = vmatprep.subr.mxu0 0.0
      %7185 = vmatpush1.msra.mxu0 0.0
      %7186 = vmatprep.subr.mxu0 0.0
      %7187 = vmatpush1.msra.mxu0 0.0
      %7188 = vmatprep.subr.mxu0 0.0
      %7189 = vmatpush1.msra.mxu0 0.0
      %7190 = vmatprep.subr.mxu0 0.0
      %7191 = vmatpush1.msra.mxu0 0.0
      %7192 = vmatprep.subr.mxu0 0.0
      %7193 = vmatpush1.msra.mxu0 0.0
      %7194 = vmatprep.subr.mxu0 0.0
      %7195 = vmatpush1.msra.mxu0 0.0
      %7196 = vmatprep.mubr.f32.mxu0 0.0
      %7197 = vmatmul.mubr.f32.gmra.mrb[0].mxu0 %v7109
      %v7198 = vpop.f32.mrb[0].mxu0
      %v7199 = vadd.f32 0.0, %v7198
      %v7200 = vpop.f32.mrb[0].mxu0
      %7201 = vmatprep.mubr.f32.mxu0 0.0
      %7202 = vmatmul.mubr.f32.gmra.mrb[0].mxu0 %v7112
      %v7203 = vpop.f32.mrb[0].mxu0
      %v7204 = vadd.f32 0.0, %v7203
      %v7205 = vpop.f32.mrb[0].mxu0
      %7206 = vmatprep.mubr.f32.mxu0 0.0
      %7207 = vmatmul.mubr.f32.gmra.mrb[0].mxu0 %v7115
      %v7208 = vpop.f32.mrb[0].mxu0
      %v7209 = vadd.f32 0.0, %v7208
      %v7210 = vpop.f32.mrb[0].mxu0
      %7211 = vmatprep.mubr.f32.mxu0 0.0
      %7212 = vmatmul.mubr.f32.gmra.mrb[0].mxu0 %v7118
      %v7213 = vpop.f32.mrb[0].mxu0
      %v7214 = vadd.f32 0.0, %v7213
      %v7215 = vpop.f32.mrb[0].mxu0
      %7216 = vmatprep.mubr.f32.mxu0 0.0
      %7217 = vmatmul.mubr.f32.gmra.mrb[0].mxu0 %v7121
      %v7218 = vpop.f32.mrb[0].mxu0
      %v7219 = vadd.f32 0.0, %v7218
      %v7220 = vpop.f32.mrb[0].mxu0
      %7221 = vmatprep.mubr.f32.mxu0 0.0
      %7222 = vmatmul.mubr.f32.gmra.mrb[0].mxu0 %v7124
      %v7223 = vpop.f32.mrb[0].mxu0
      %v7224 = vadd.f32 0.0, %v7223
      %v7225 = vpop.f32.mrb[0].mxu0
      %7226 = vmatprep.mubr.f32.mxu0 0.0
      %7227 = vmatmul.mubr.f32.gmra.mrb[0].mxu0 %v7127
      %v7228 = vpop.f32.mrb[0].mxu0
      %v7229 = vadd.f32 0.0, %v7228
      %v7230 = vpop.f32.mrb[0].mxu0
      %7231 = vmatprep.mubr.f32.mxu0 0.0
      %7232 = vmatmul.mubr.f32.gmra.mrb[0].mxu0 %v7130
      %v7233 = vpop.f32.mrb[0].mxu0
      %v7234 = vadd.f32 0.0, %v7233
      %v7235 = vpop.f32.mrb[0].mxu0
      %7236 = vdwg.mxu0
      %v7237 = vadd.f32 %v7067, %v7199
      %v7238 = vadd.f32 %v7068, %v7204
      %v7239 = vadd.f32 %v7069, %v7209
      %v7240 = vadd.f32 %v7070, %v7214
      %v7241 = vadd.f32 %v7071, %v7219
      %v7242 = vadd.f32 %v7072, %v7224
      %v7243 = vadd.f32 %v7073, %v7229
      %v7244 = vadd.f32 %v7074, %v7234
      %s7245 = scalar_lea.vmem %s5, 384
      %v7246 = vld [vmem:[%s7245] sm:$0xff]
      %v7247 = vld [vmem:[%s7245 + $0x8] sm:$0xff]
      %v7248 = vld [vmem:[%s7245 + $0x10] sm:$0xff]
      %v7249 = vld [vmem:[%s7245 + $0x18] sm:$0xff]
      %v7250 = vld [vmem:[%s7245 + $0x20] sm:$0xff]
      %v7251 = vld [vmem:[%s7245 + $0x28] sm:$0xff]
      %v7252 = vld [vmem:[%s7245 + $0x30] sm:$0xff]
      %v7253 = vld [vmem:[%s7245 + $0x38] sm:$0xff]
      %7254 = vrot.lane.b32.xlu0 %v6219, 110
      %v7255 = vpop.permute.xlu0 %7254
      %7256 = vrot.lane.b32.xlu0 %v6224, 110
      %v7257 = vpop.permute.xlu0 %7256
      %7258 = vrot.lane.b32.xlu0 %v6229, 110
      %v7259 = vpop.permute.xlu0 %7258
      %7260 = vrot.lane.b32.xlu0 %v6234, 110
      %v7261 = vpop.permute.xlu0 %7260
      %7262 = vrot.lane.b32.xlu0 %v6239, 110
      %v7263 = vpop.permute.xlu0 %7262
      %7264 = vrot.lane.b32.xlu0 %v6244, 110
      %v7265 = vpop.permute.xlu0 %7264
      %7266 = vrot.lane.b32.xlu0 %v6249, 110
      %v7267 = vpop.permute.xlu0 %7266
      %7268 = vrot.lane.b32.xlu0 %v6254, 110
      %v7269 = vpop.permute.xlu0 %7268
      %v7279 = vsel %vm6306, %v7246, 0
      %v7282 = vsel %vm6306, %v7247, 0
      %v7285 = vsel %vm6306, %v7248, 0
      %v7288 = vsel %vm6306, %v7249, 0
      %v7291 = vsel %vm6306, %v7250, 0
      %v7294 = vsel %vm6306, %v7251, 0
      %v7297 = vsel %vm6306, %v7252, 0
      %v7300 = vsel %vm6306, %v7253, 0
      %7302 = vmatprep.subr.mxu0 0.0
      %7303 = vmatpush1.msra.mxu0 %v7255
      %7304 = vmatprep.subr.mxu0 0.0
      %7305 = vmatpush1.msra.mxu0 %v7257
      %7306 = vmatprep.subr.mxu0 0.0
      %7307 = vmatpush1.msra.mxu0 %v7259
      %7308 = vmatprep.subr.mxu0 0.0
      %7309 = vmatpush1.msra.mxu0 %v7261
      %7310 = vmatprep.subr.mxu0 0.0
      %7311 = vmatpush1.msra.mxu0 %v7263
      %7312 = vmatprep.subr.mxu0 0.0
      %7313 = vmatpush1.msra.mxu0 %v7265
      %7314 = vmatprep.subr.mxu0 0.0
      %7315 = vmatpush1.msra.mxu0 %v7267
      %7316 = vmatprep.subr.mxu0 0.0
      %7317 = vmatpush1.msra.mxu0 %v7269
      %7318 = vmatprep.subr.mxu0 0.0
      %7319 = vmatpush1.msra.mxu0 0.0
      %7320 = vmatprep.subr.mxu0 0.0
      %7321 = vmatpush1.msra.mxu0 0.0
      %7322 = vmatprep.subr.mxu0 0.0
      %7323 = vmatpush1.msra.mxu0 0.0
      %7324 = vmatprep.subr.mxu0 0.0
      %7325 = vmatpush1.msra.mxu0 0.0
      %7326 = vmatprep.subr.mxu0 0.0
      %7327 = vmatpush1.msra.mxu0 0.0
      %7328 = vmatprep.subr.mxu0 0.0
      %7329 = vmatpush1.msra.mxu0 0.0
      %7330 = vmatprep.subr.mxu0 0.0
      %7331 = vmatpush1.msra.mxu0 0.0
      %7332 = vmatprep.subr.mxu0 0.0
      %7333 = vmatpush1.msra.mxu0 0.0
      %7334 = vmatprep.subr.mxu0 0.0
      %7335 = vmatpush1.msra.mxu0 0.0
      %7336 = vmatprep.subr.mxu0 0.0
      %7337 = vmatpush1.msra.mxu0 0.0
      %7338 = vmatprep.subr.mxu0 0.0
      %7339 = vmatpush1.msra.mxu0 0.0
      %7340 = vmatprep.subr.mxu0 0.0
      %7341 = vmatpush1.msra.mxu0 0.0
      %7342 = vmatprep.subr.mxu0 0.0
      %7343 = vmatpush1.msra.mxu0 0.0
      %7344 = vmatprep.subr.mxu0 0.0
      %7345 = vmatpush1.msra.mxu0 0.0
      %7346 = vmatprep.subr.mxu0 0.0
      %7347 = vmatpush1.msra.mxu0 0.0
      %7348 = vmatprep.subr.mxu0 0.0
      %7349 = vmatpush1.msra.mxu0 0.0
      %7350 = vmatprep.subr.mxu0 0.0
      %7351 = vmatpush1.msra.mxu0 0.0
      %7352 = vmatprep.subr.mxu0 0.0
      %7353 = vmatpush1.msra.mxu0 0.0
      %7354 = vmatprep.subr.mxu0 0.0
      %7355 = vmatpush1.msra.mxu0 0.0
      %7356 = vmatprep.subr.mxu0 0.0
      %7357 = vmatpush1.msra.mxu0 0.0
      %7358 = vmatprep.subr.mxu0 0.0
      %7359 = vmatpush1.msra.mxu0 0.0
      %7360 = vmatprep.subr.mxu0 0.0
      %7361 = vmatpush1.msra.mxu0 0.0
      %7362 = vmatprep.subr.mxu0 0.0
      %7363 = vmatpush1.msra.mxu0 0.0
      %7364 = vmatprep.subr.mxu0 0.0
      %7365 = vmatpush1.msra.mxu0 0.0
      %7366 = vmatprep.mubr.f32.mxu0 0.0
      %7367 = vmatmul.mubr.f32.gmra.mrb[0].mxu0 %v7279
      %v7368 = vpop.f32.mrb[0].mxu0
      %v7369 = vadd.f32 0.0, %v7368
      %v7370 = vpop.f32.mrb[0].mxu0
      %7371 = vmatprep.mubr.f32.mxu0 0.0
      %7372 = vmatmul.mubr.f32.gmra.mrb[0].mxu0 %v7282
      %v7373 = vpop.f32.mrb[0].mxu0
      %v7374 = vadd.f32 0.0, %v7373
      %v7375 = vpop.f32.mrb[0].mxu0
      %7376 = vmatprep.mubr.f32.mxu0 0.0
      %7377 = vmatmul.mubr.f32.gmra.mrb[0].mxu0 %v7285
      %v7378 = vpop.f32.mrb[0].mxu0
      %v7379 = vadd.f32 0.0, %v7378
      %v7380 = vpop.f32.mrb[0].mxu0
      %7381 = vmatprep.mubr.f32.mxu0 0.0
      %7382 = vmatmul.mubr.f32.gmra.mrb[0].mxu0 %v7288
      %v7383 = vpop.f32.mrb[0].mxu0
      %v7384 = vadd.f32 0.0, %v7383
      %v7385 = vpop.f32.mrb[0].mxu0
      %7386 = vmatprep.mubr.f32.mxu0 0.0
      %7387 = vmatmul.mubr.f32.gmra.mrb[0].mxu0 %v7291
      %v7388 = vpop.f32.mrb[0].mxu0
      %v7389 = vadd.f32 0.0, %v7388
      %v7390 = vpop.f32.mrb[0].mxu0
      %7391 = vmatprep.mubr.f32.mxu0 0.0
      %7392 = vmatmul.mubr.f32.gmra.mrb[0].mxu0 %v7294
      %v7393 = vpop.f32.mrb[0].mxu0
      %v7394 = vadd.f32 0.0, %v7393
      %v7395 = vpop.f32.mrb[0].mxu0
      %7396 = vmatprep.mubr.f32.mxu0 0.0
      %7397 = vmatmul.mubr.f32.gmra.mrb[0].mxu0 %v7297
      %v7398 = vpop.f32.mrb[0].mxu0
      %v7399 = vadd.f32 0.0, %v7398
      %v7400 = vpop.f32.mrb[0].mxu0
      %7401 = vmatprep.mubr.f32.mxu0 0.0
      %7402 = vmatmul.mubr.f32.gmra.mrb[0].mxu0 %v7300
      %v7403 = vpop.f32.mrb[0].mxu0
      %v7404 = vadd.f32 0.0, %v7403
      %v7405 = vpop.f32.mrb[0].mxu0
      %7406 = vdwg.mxu0
      %v7407 = vadd.f32 %v7237, %v7369
      %v7408 = vadd.f32 %v7238, %v7374
      %v7409 = vadd.f32 %v7239, %v7379
      %v7410 = vadd.f32 %v7240, %v7384
      %v7411 = vadd.f32 %v7241, %v7389
      %v7412 = vadd.f32 %v7242, %v7394
      %v7413 = vadd.f32 %v7243, %v7399
      %v7414 = vadd.f32 %v7244, %v7404
      %s7415 = scalar_lea.vmem %s5, 448
      %v7416 = vld [vmem:[%s7415] sm:$0xff]
      %v7417 = vld [vmem:[%s7415 + $0x8] sm:$0xff]
      %v7418 = vld [vmem:[%s7415 + $0x10] sm:$0xff]
      %v7419 = vld [vmem:[%s7415 + $0x18] sm:$0xff]
      %v7420 = vld [vmem:[%s7415 + $0x20] sm:$0xff]
      %v7421 = vld [vmem:[%s7415 + $0x28] sm:$0xff]
      %v7422 = vld [vmem:[%s7415 + $0x30] sm:$0xff]
      %v7423 = vld [vmem:[%s7415 + $0x38] sm:$0xff]
      %7424 = vrot.lane.b32.xlu0 %v6219, 109
      %v7425 = vpop.permute.xlu0 %7424
      %7426 = vrot.lane.b32.xlu0 %v6224, 109
      %v7427 = vpop.permute.xlu0 %7426
      %7428 = vrot.lane.b32.xlu0 %v6229, 109
      %v7429 = vpop.permute.xlu0 %7428
      %7430 = vrot.lane.b32.xlu0 %v6234, 109
      %v7431 = vpop.permute.xlu0 %7430
      %7432 = vrot.lane.b32.xlu0 %v6239, 109
      %v7433 = vpop.permute.xlu0 %7432
      %7434 = vrot.lane.b32.xlu0 %v6244, 109
      %v7435 = vpop.permute.xlu0 %7434
      %7436 = vrot.lane.b32.xlu0 %v6249, 109
      %v7437 = vpop.permute.xlu0 %7436
      %7438 = vrot.lane.b32.xlu0 %v6254, 109
      %v7439 = vpop.permute.xlu0 %7438
      %v7449 = vsel %vm6306, %v7416, 0
      %v7452 = vsel %vm6306, %v7417, 0
      %v7455 = vsel %vm6306, %v7418, 0
      %v7458 = vsel %vm6306, %v7419, 0
      %v7461 = vsel %vm6306, %v7420, 0
      %v7464 = vsel %vm6306, %v7421, 0
      %v7467 = vsel %vm6306, %v7422, 0
      %v7470 = vsel %vm6306, %v7423, 0
      %7472 = vmatprep.subr.mxu0 0.0
      %7473 = vmatpush1.msra.mxu0 %v7425
      %7474 = vmatprep.subr.mxu0 0.0
      %7475 = vmatpush1.msra.mxu0 %v7427
      %7476 = vmatprep.subr.mxu0 0.0
      %7477 = vmatpush1.msra.mxu0 %v7429
      %7478 = vmatprep.subr.mxu0 0.0
      %7479 = vmatpush1.msra.mxu0 %v7431
      %7480 = vmatprep.subr.mxu0 0.0
      %7481 = vmatpush1.msra.mxu0 %v7433
      %7482 = vmatprep.subr.mxu0 0.0
      %7483 = vmatpush1.msra.mxu0 %v7435
      %7484 = vmatprep.subr.mxu0 0.0
      %7485 = vmatpush1.msra.mxu0 %v7437
      %7486 = vmatprep.subr.mxu0 0.0
      %7487 = vmatpush1.msra.mxu0 %v7439
      %7488 = vmatprep.subr.mxu0 0.0
      %7489 = vmatpush1.msra.mxu0 0.0
      %7490 = vmatprep.subr.mxu0 0.0
      %7491 = vmatpush1.msra.mxu0 0.0
      %7492 = vmatprep.subr.mxu0 0.0
      %7493 = vmatpush1.msra.mxu0 0.0
      %7494 = vmatprep.subr.mxu0 0.0
      %7495 = vmatpush1.msra.mxu0 0.0
      %7496 = vmatprep.subr.mxu0 0.0
      %7497 = vmatpush1.msra.mxu0 0.0
      %7498 = vmatprep.subr.mxu0 0.0
      %7499 = vmatpush1.msra.mxu0 0.0
      %7500 = vmatprep.subr.mxu0 0.0
      %7501 = vmatpush1.msra.mxu0 0.0
      %7502 = vmatprep.subr.mxu0 0.0
      %7503 = vmatpush1.msra.mxu0 0.0
      %7504 = vmatprep.subr.mxu0 0.0
      %7505 = vmatpush1.msra.mxu0 0.0
      %7506 = vmatprep.subr.mxu0 0.0
      %7507 = vmatpush1.msra.mxu0 0.0
      %7508 = vmatprep.subr.mxu0 0.0
      %7509 = vmatpush1.msra.mxu0 0.0
      %7510 = vmatprep.subr.mxu0 0.0
      %7511 = vmatpush1.msra.mxu0 0.0
      %7512 = vmatprep.subr.mxu0 0.0
      %7513 = vmatpush1.msra.mxu0 0.0
      %7514 = vmatprep.subr.mxu0 0.0
      %7515 = vmatpush1.msra.mxu0 0.0
      %7516 = vmatprep.subr.mxu0 0.0
      %7517 = vmatpush1.msra.mxu0 0.0
      %7518 = vmatprep.subr.mxu0 0.0
      %7519 = vmatpush1.msra.mxu0 0.0
      %7520 = vmatprep.subr.mxu0 0.0
      %7521 = vmatpush1.msra.mxu0 0.0
      %7522 = vmatprep.subr.mxu0 0.0
      %7523 = vmatpush1.msra.mxu0 0.0
      %7524 = vmatprep.subr.mxu0 0.0
      %7525 = vmatpush1.msra.mxu0 0.0
      %7526 = vmatprep.subr.mxu0 0.0
      %7527 = vmatpush1.msra.mxu0 0.0
      %7528 = vmatprep.subr.mxu0 0.0
      %7529 = vmatpush1.msra.mxu0 0.0
      %7530 = vmatprep.subr.mxu0 0.0
      %7531 = vmatpush1.msra.mxu0 0.0
      %7532 = vmatprep.subr.mxu0 0.0
      %7533 = vmatpush1.msra.mxu0 0.0
      %7534 = vmatprep.subr.mxu0 0.0
      %7535 = vmatpush1.msra.mxu0 0.0
      %7536 = vmatprep.mubr.f32.mxu0 0.0
      %7537 = vmatmul.mubr.f32.gmra.mrb[0].mxu0 %v7449
      %v7538 = vpop.f32.mrb[0].mxu0
      %v7539 = vadd.f32 0.0, %v7538
      %v7540 = vpop.f32.mrb[0].mxu0
      %7541 = vmatprep.mubr.f32.mxu0 0.0
      %7542 = vmatmul.mubr.f32.gmra.mrb[0].mxu0 %v7452
      %v7543 = vpop.f32.mrb[0].mxu0
      %v7544 = vadd.f32 0.0, %v7543
      %v7545 = vpop.f32.mrb[0].mxu0
      %7546 = vmatprep.mubr.f32.mxu0 0.0
      %7547 = vmatmul.mubr.f32.gmra.mrb[0].mxu0 %v7455
      %v7548 = vpop.f32.mrb[0].mxu0
      %v7549 = vadd.f32 0.0, %v7548
      %v7550 = vpop.f32.mrb[0].mxu0
      %7551 = vmatprep.mubr.f32.mxu0 0.0
      %7552 = vmatmul.mubr.f32.gmra.mrb[0].mxu0 %v7458
      %v7553 = vpop.f32.mrb[0].mxu0
      %v7554 = vadd.f32 0.0, %v7553
      %v7555 = vpop.f32.mrb[0].mxu0
      %7556 = vmatprep.mubr.f32.mxu0 0.0
      %7557 = vmatmul.mubr.f32.gmra.mrb[0].mxu0 %v7461
      %v7558 = vpop.f32.mrb[0].mxu0
      %v7559 = vadd.f32 0.0, %v7558
      %v7560 = vpop.f32.mrb[0].mxu0
      %7561 = vmatprep.mubr.f32.mxu0 0.0
      %7562 = vmatmul.mubr.f32.gmra.mrb[0].mxu0 %v7464
      %v7563 = vpop.f32.mrb[0].mxu0
      %v7564 = vadd.f32 0.0, %v7563
      %v7565 = vpop.f32.mrb[0].mxu0
      %7566 = vmatprep.mubr.f32.mxu0 0.0
      %7567 = vmatmul.mubr.f32.gmra.mrb[0].mxu0 %v7467
      %v7568 = vpop.f32.mrb[0].mxu0
      %v7569 = vadd.f32 0.0, %v7568
      %v7570 = vpop.f32.mrb[0].mxu0
      %7571 = vmatprep.mubr.f32.mxu0 0.0
      %7572 = vmatmul.mubr.f32.gmra.mrb[0].mxu0 %v7470
      %v7573 = vpop.f32.mrb[0].mxu0
      %v7574 = vadd.f32 0.0, %v7573
      %v7575 = vpop.f32.mrb[0].mxu0
      %7576 = vdwg.mxu0
      %v7577 = vadd.f32 %v7407, %v7539
      %v7578 = vadd.f32 %v7408, %v7544
      %v7579 = vadd.f32 %v7409, %v7549
      %v7580 = vadd.f32 %v7410, %v7554
      %v7581 = vadd.f32 %v7411, %v7559
      %v7582 = vadd.f32 %v7412, %v7564
      %v7583 = vadd.f32 %v7413, %v7569
      %v7584 = vadd.f32 %v7414, %v7574
      %s7585 = scalar_lea.vmem %s5, 512
      %v7586 = vld [vmem:[%s7585] sm:$0xff]
      %v7587 = vld [vmem:[%s7585 + $0x8] sm:$0xff]
      %v7588 = vld [vmem:[%s7585 + $0x10] sm:$0xff]
      %v7589 = vld [vmem:[%s7585 + $0x18] sm:$0xff]
      %v7590 = vld [vmem:[%s7585 + $0x20] sm:$0xff]
      %v7591 = vld [vmem:[%s7585 + $0x28] sm:$0xff]
      %v7592 = vld [vmem:[%s7585 + $0x30] sm:$0xff]
      %v7593 = vld [vmem:[%s7585 + $0x38] sm:$0xff]
      %7594 = vrot.lane.b32.xlu0 %v6219, 108
      %v7595 = vpop.permute.xlu0 %7594
      %7596 = vrot.lane.b32.xlu0 %v6224, 108
      %v7597 = vpop.permute.xlu0 %7596
      %7598 = vrot.lane.b32.xlu0 %v6229, 108
      %v7599 = vpop.permute.xlu0 %7598
      %7600 = vrot.lane.b32.xlu0 %v6234, 108
      %v7601 = vpop.permute.xlu0 %7600
      %7602 = vrot.lane.b32.xlu0 %v6239, 108
      %v7603 = vpop.permute.xlu0 %7602
      %7604 = vrot.lane.b32.xlu0 %v6244, 108
      %v7605 = vpop.permute.xlu0 %7604
      %7606 = vrot.lane.b32.xlu0 %v6249, 108
      %v7607 = vpop.permute.xlu0 %7606
      %7608 = vrot.lane.b32.xlu0 %v6254, 108
      %v7609 = vpop.permute.xlu0 %7608
      %v7619 = vsel %vm6306, %v7586, 0
      %v7622 = vsel %vm6306, %v7587, 0
      %v7625 = vsel %vm6306, %v7588, 0
      %v7628 = vsel %vm6306, %v7589, 0
      %v7631 = vsel %vm6306, %v7590, 0
      %v7634 = vsel %vm6306, %v7591, 0
      %v7637 = vsel %vm6306, %v7592, 0
      %v7640 = vsel %vm6306, %v7593, 0
      %7642 = vmatprep.subr.mxu0 0.0
      %7643 = vmatpush1.msra.mxu0 %v7595
      %7644 = vmatprep.subr.mxu0 0.0
      %7645 = vmatpush1.msra.mxu0 %v7597
      %7646 = vmatprep.subr.mxu0 0.0
      %7647 = vmatpush1.msra.mxu0 %v7599
      %7648 = vmatprep.subr.mxu0 0.0
      %7649 = vmatpush1.msra.mxu0 %v7601
      %7650 = vmatprep.subr.mxu0 0.0
      %7651 = vmatpush1.msra.mxu0 %v7603
      %7652 = vmatprep.subr.mxu0 0.0
      %7653 = vmatpush1.msra.mxu0 %v7605
      %7654 = vmatprep.subr.mxu0 0.0
      %7655 = vmatpush1.msra.mxu0 %v7607
      %7656 = vmatprep.subr.mxu0 0.0
      %7657 = vmatpush1.msra.mxu0 %v7609
      %7658 = vmatprep.subr.mxu0 0.0
      %7659 = vmatpush1.msra.mxu0 0.0
      %7660 = vmatprep.subr.mxu0 0.0
      %7661 = vmatpush1.msra.mxu0 0.0
      %7662 = vmatprep.subr.mxu0 0.0
      %7663 = vmatpush1.msra.mxu0 0.0
      %7664 = vmatprep.subr.mxu0 0.0
      %7665 = vmatpush1.msra.mxu0 0.0
      %7666 = vmatprep.subr.mxu0 0.0
      %7667 = vmatpush1.msra.mxu0 0.0
      %7668 = vmatprep.subr.mxu0 0.0
      %7669 = vmatpush1.msra.mxu0 0.0
      %7670 = vmatprep.subr.mxu0 0.0
      %7671 = vmatpush1.msra.mxu0 0.0
      %7672 = vmatprep.subr.mxu0 0.0
      %7673 = vmatpush1.msra.mxu0 0.0
      %7674 = vmatprep.subr.mxu0 0.0
      %7675 = vmatpush1.msra.mxu0 0.0
      %7676 = vmatprep.subr.mxu0 0.0
      %7677 = vmatpush1.msra.mxu0 0.0
      %7678 = vmatprep.subr.mxu0 0.0
      %7679 = vmatpush1.msra.mxu0 0.0
      %7680 = vmatprep.subr.mxu0 0.0
      %7681 = vmatpush1.msra.mxu0 0.0
      %7682 = vmatprep.subr.mxu0 0.0
      %7683 = vmatpush1.msra.mxu0 0.0
      %7684 = vmatprep.subr.mxu0 0.0
      %7685 = vmatpush1.msra.mxu0 0.0
      %7686 = vmatprep.subr.mxu0 0.0
      %7687 = vmatpush1.msra.mxu0 0.0
      %7688 = vmatprep.subr.mxu0 0.0
      %7689 = vmatpush1.msra.mxu0 0.0
      %7690 = vmatprep.subr.mxu0 0.0
      %7691 = vmatpush1.msra.mxu0 0.0
      %7692 = vmatprep.subr.mxu0 0.0
      %7693 = vmatpush1.msra.mxu0 0.0
      %7694 = vmatprep.subr.mxu0 0.0
      %7695 = vmatpush1.msra.mxu0 0.0
      %7696 = vmatprep.subr.mxu0 0.0
      %7697 = vmatpush1.msra.mxu0 0.0
      %7698 = vmatprep.subr.mxu0 0.0
      %7699 = vmatpush1.msra.mxu0 0.0
      %7700 = vmatprep.subr.mxu0 0.0
      %7701 = vmatpush1.msra.mxu0 0.0
      %7702 = vmatprep.subr.mxu0 0.0
      %7703 = vmatpush1.msra.mxu0 0.0
      %7704 = vmatprep.subr.mxu0 0.0
      %7705 = vmatpush1.msra.mxu0 0.0
      %7706 = vmatprep.mubr.f32.mxu0 0.0
      %7707 = vmatmul.mubr.f32.gmra.mrb[0].mxu0 %v7619
      %v7708 = vpop.f32.mrb[0].mxu0
      %v7709 = vadd.f32 0.0, %v7708
      %v7710 = vpop.f32.mrb[0].mxu0
      %7711 = vmatprep.mubr.f32.mxu0 0.0
      %7712 = vmatmul.mubr.f32.gmra.mrb[0].mxu0 %v7622
      %v7713 = vpop.f32.mrb[0].mxu0
      %v7714 = vadd.f32 0.0, %v7713
      %v7715 = vpop.f32.mrb[0].mxu0
      %7716 = vmatprep.mubr.f32.mxu0 0.0
      %7717 = vmatmul.mubr.f32.gmra.mrb[0].mxu0 %v7625
      %v7718 = vpop.f32.mrb[0].mxu0
      %v7719 = vadd.f32 0.0, %v7718
      %v7720 = vpop.f32.mrb[0].mxu0
      %7721 = vmatprep.mubr.f32.mxu0 0.0
      %7722 = vmatmul.mubr.f32.gmra.mrb[0].mxu0 %v7628
      %v7723 = vpop.f32.mrb[0].mxu0
      %v7724 = vadd.f32 0.0, %v7723
      %v7725 = vpop.f32.mrb[0].mxu0
      %7726 = vmatprep.mubr.f32.mxu0 0.0
      %7727 = vmatmul.mubr.f32.gmra.mrb[0].mxu0 %v7631
      %v7728 = vpop.f32.mrb[0].mxu0
      %v7729 = vadd.f32 0.0, %v7728
      %v7730 = vpop.f32.mrb[0].mxu0
      %7731 = vmatprep.mubr.f32.mxu0 0.0
      %7732 = vmatmul.mubr.f32.gmra.mrb[0].mxu0 %v7634
      %v7733 = vpop.f32.mrb[0].mxu0
      %v7734 = vadd.f32 0.0, %v7733
      %v7735 = vpop.f32.mrb[0].mxu0
      %7736 = vmatprep.mubr.f32.mxu0 0.0
      %7737 = vmatmul.mubr.f32.gmra.mrb[0].mxu0 %v7637
      %v7738 = vpop.f32.mrb[0].mxu0
      %v7739 = vadd.f32 0.0, %v7738
      %v7740 = vpop.f32.mrb[0].mxu0
      %7741 = vmatprep.mubr.f32.mxu0 0.0
      %7742 = vmatmul.mubr.f32.gmra.mrb[0].mxu0 %v7640
      %v7743 = vpop.f32.mrb[0].mxu0
      %v7744 = vadd.f32 0.0, %v7743
      %v7745 = vpop.f32.mrb[0].mxu0
      %7746 = vdwg.mxu0
      %v7747 = vadd.f32 %v7577, %v7709
      %v7748 = vadd.f32 %v7578, %v7714
      %v7749 = vadd.f32 %v7579, %v7719
      %v7750 = vadd.f32 %v7580, %v7724
      %v7751 = vadd.f32 %v7581, %v7729
      %v7752 = vadd.f32 %v7582, %v7734
      %v7753 = vadd.f32 %v7583, %v7739
      %v7754 = vadd.f32 %v7584, %v7744
      %v7755 = vld [vmem:[%s6] sm:$0xff]
      %v7756 = vld [vmem:[%s6 + $0x8] sm:$0xff]
      %v7757 = vld [vmem:[%s6 + $0x10] sm:$0xff]
      %v7758 = vld [vmem:[%s6 + $0x18] sm:$0xff]
      %v7759 = vld [vmem:[%s6 + $0x20] sm:$0xff]
      %v7760 = vld [vmem:[%s6 + $0x28] sm:$0xff]
      %v7761 = vld [vmem:[%s6 + $0x30] sm:$0xff]
      %v7762 = vld [vmem:[%s6 + $0x38] sm:$0xff]
      %7764 = vset.pattern.permute.xlu0 0
      %7765 = vperm.xlu0 %7764, %v7755
      %v7766 = vpop.permute.xlu0 %7765
      %7769 = vset.pattern.permute.xlu0 0
      %7770 = vperm.xlu0 %7769, %v7756
      %v7771 = vpop.permute.xlu0 %7770
      %7774 = vset.pattern.permute.xlu0 0
      %7775 = vperm.xlu0 %7774, %v7757
      %v7776 = vpop.permute.xlu0 %7775
      %7779 = vset.pattern.permute.xlu0 0
      %7780 = vperm.xlu0 %7779, %v7758
      %v7781 = vpop.permute.xlu0 %7780
      %7784 = vset.pattern.permute.xlu0 0
      %7785 = vperm.xlu0 %7784, %v7759
      %v7786 = vpop.permute.xlu0 %7785
      %7789 = vset.pattern.permute.xlu0 0
      %7790 = vperm.xlu0 %7789, %v7760
      %v7791 = vpop.permute.xlu0 %7790
      %7794 = vset.pattern.permute.xlu0 0
      %7795 = vperm.xlu0 %7794, %v7761
      %v7796 = vpop.permute.xlu0 %7795
      %7799 = vset.pattern.permute.xlu0 0
      %7800 = vperm.xlu0 %7799, %v7762
      %v7801 = vpop.permute.xlu0 %7800
      %v7803 = vadd.f32 %v7747, %v7766
      %v7804 = vadd.f32 %v7748, %v7771
      %v7805 = vadd.f32 %v7749, %v7776
      %v7806 = vadd.f32 %v7750, %v7781
      %v7807 = vadd.f32 %v7751, %v7786
      %v7808 = vadd.f32 %v7752, %v7791
      %v7809 = vadd.f32 %v7753, %v7796
      %v7810 = vadd.f32 %v7754, %v7801
      %v7811 = vmax.f32 %v7803, 0.0
      %v7812 = vmax.f32 %v7804, 0.0
      %v7813 = vmax.f32 %v7805, 0.0
      %v7814 = vmax.f32 %v7806, 0.0
      %v7815 = vmax.f32 %v7807, 0.0
      %v7816 = vmax.f32 %v7808, 0.0
      %v7817 = vmax.f32 %v7809, 0.0
      %v7818 = vmax.f32 %v7810, 0.0
      %7827 = vrot.lane.b32.xlu0 %v7811, 127
      %v7828 = vpop.permute.xlu0 %7827
      %7829 = vrot.lane.b32.xlu0 %v7812, 127
      %v7830 = vpop.permute.xlu0 %7829
      %7831 = vrot.lane.b32.xlu0 %v7813, 127
      %v7832 = vpop.permute.xlu0 %7831
      %7833 = vrot.lane.b32.xlu0 %v7814, 127
      %v7834 = vpop.permute.xlu0 %7833
      %7835 = vrot.lane.b32.xlu0 %v7815, 127
      %v7836 = vpop.permute.xlu0 %7835
      %7837 = vrot.lane.b32.xlu0 %v7816, 127
      %v7838 = vpop.permute.xlu0 %7837
      %7839 = vrot.lane.b32.xlu0 %v7817, 127
      %v7840 = vpop.permute.xlu0 %7839
      %7841 = vrot.lane.b32.xlu0 %v7818, 127
      %v7842 = vpop.permute.xlu0 %7841
      %v7851 = vmax.f32 %v7811, %v7828
      %v7852 = vmax.f32 %v7812, %v7830
      %v7853 = vmax.f32 %v7813, %v7832
      %v7854 = vmax.f32 %v7814, %v7834
      %v7855 = vmax.f32 %v7815, %v7836
      %v7856 = vmax.f32 %v7816, %v7838
      %v7857 = vmax.f32 %v7817, %v7840
      %v7858 = vmax.f32 %v7818, %v7842
      %7867 = vrot.lane.b32.xlu0 %v7851, 119
      %v7868 = vpop.permute.xlu0 %7867
      %7869 = vrot.lane.b32.xlu0 %v7852, 119
      %v7870 = vpop.permute.xlu0 %7869
      %7871 = vrot.lane.b32.xlu0 %v7853, 119
      %v7872 = vpop.permute.xlu0 %7871
      %7873 = vrot.lane.b32.xlu0 %v7854, 119
      %v7874 = vpop.permute.xlu0 %7873
      %7875 = vrot.lane.b32.xlu0 %v7855, 119
      %v7876 = vpop.permute.xlu0 %7875
      %7877 = vrot.lane.b32.xlu0 %v7856, 119
      %v7878 = vpop.permute.xlu0 %7877
      %7879 = vrot.lane.b32.xlu0 %v7857, 119
      %v7880 = vpop.permute.xlu0 %7879
      %7881 = vrot.lane.b32.xlu0 %v7858, 119
      %v7882 = vpop.permute.xlu0 %7881
      %v7891 = vmax.f32 %v7851, %v7868
      %v7892 = vmax.f32 %v7852, %v7870
      %v7893 = vmax.f32 %v7853, %v7872
      %v7894 = vmax.f32 %v7854, %v7874
      %v7895 = vmax.f32 %v7855, %v7876
      %v7896 = vmax.f32 %v7856, %v7878
      %v7897 = vmax.f32 %v7857, %v7880
      %v7898 = vmax.f32 %v7858, %v7882
      %v7899 = vld [vmem:[%s9] sm:$0xff]
      %v7900 = vld [vmem:[%s9 + $0x8] sm:$0xff]
      %v7901 = vld [vmem:[%s9 + $0x10] sm:$0xff]
      %v7902 = vld [vmem:[%s9 + $0x18] sm:$0xff]
      %v7903 = vld [vmem:[%s9 + $0x20] sm:$0xff]
      %v7904 = vld [vmem:[%s9 + $0x28] sm:$0xff]
      %v7905 = vld [vmem:[%s9 + $0x30] sm:$0xff]
      %v7906 = vld [vmem:[%s9 + $0x38] sm:$0xff]
      %v7907 = vld [vmem:[%s9 + $0x40] sm:$0x7f]
      %vm7908 = vcmask 580608
      %v7910 = vsel %vm7908, %v7891, 0
      %v7913 = vsel %vm7908, %v7892, 0
      %v7916 = vsel %vm7908, %v7893, 0
      %v7919 = vsel %vm7908, %v7894, 0
      %v7922 = vsel %vm7908, %v7895, 0
      %v7925 = vsel %vm7908, %v7896, 0
      %v7928 = vsel %vm7908, %v7897, 0
      %v7931 = vsel %vm7908, %v7898, 0
      %v7934 = vsel %vm6148, %v7907, 0
      %7936 = vmatprep.subr.mxu0 0.0
      %7937 = vmatpush1.msra.mxu0 %v7899
      %7938 = vmatprep.subr.mxu0 0.0
      %7939 = vmatpush1.msra.mxu0 %v7900
      %7940 = vmatprep.subr.mxu0 0.0
      %7941 = vmatpush1.msra.mxu0 %v7901
      %7942 = vmatprep.subr.mxu0 0.0
      %7943 = vmatpush1.msra.mxu0 %v7902
      %7944 = vmatprep.subr.mxu0 0.0
      %7945 = vmatpush1.msra.mxu0 %v7903
      %7946 = vmatprep.subr.mxu0 0.0
      %7947 = vmatpush1.msra.mxu0 %v7904
      %7948 = vmatprep.subr.mxu0 0.0
      %7949 = vmatpush1.msra.mxu0 %v7905
      %7950 = vmatprep.subr.mxu0 0.0
      %7951 = vmatpush1.msra.mxu0 %v7906
      %7952 = vmatprep.subr.mxu0 0.0
      %7953 = vmatpush1.msra.mxu0 %v7934
      %7954 = vmatprep.subr.mxu0 0.0
      %7955 = vmatpush1.msra.mxu0 0.0
      %7956 = vmatprep.subr.mxu0 0.0
      %7957 = vmatpush1.msra.mxu0 0.0
      %7958 = vmatprep.subr.mxu0 0.0
      %7959 = vmatpush1.msra.mxu0 0.0
      %7960 = vmatprep.subr.mxu0 0.0
      %7961 = vmatpush1.msra.mxu0 0.0
      %7962 = vmatprep.subr.mxu0 0.0
      %7963 = vmatpush1.msra.mxu0 0.0
      %7964 = vmatprep.subr.mxu0 0.0
      %7965 = vmatpush1.msra.mxu0 0.0
      %7966 = vmatprep.subr.mxu0 0.0
      %7967 = vmatpush1.msra.mxu0 0.0
      %7968 = vmatprep.subr.mxu0 0.0
      %7969 = vmatpush1.msra.mxu0 0.0
      %7970 = vmatprep.subr.mxu0 0.0
      %7971 = vmatpush1.msra.mxu0 0.0
      %7972 = vmatprep.subr.mxu0 0.0
      %7973 = vmatpush1.msra.mxu0 0.0
      %7974 = vmatprep.subr.mxu0 0.0
      %7975 = vmatpush1.msra.mxu0 0.0
      %7976 = vmatprep.subr.mxu0 0.0
      %7977 = vmatpush1.msra.mxu0 0.0
      %7978 = vmatprep.subr.mxu0 0.0
      %7979 = vmatpush1.msra.mxu0 0.0
      %7980 = vmatprep.subr.mxu0 0.0
      %7981 = vmatpush1.msra.mxu0 0.0
      %7982 = vmatprep.subr.mxu0 0.0
      %7983 = vmatpush1.msra.mxu0 0.0
      %7984 = vmatprep.subr.mxu0 0.0
      %7985 = vmatpush1.msra.mxu0 0.0
      %7986 = vmatprep.subr.mxu0 0.0
      %7987 = vmatpush1.msra.mxu0 0.0
      %7988 = vmatprep.subr.mxu0 0.0
      %7989 = vmatpush1.msra.mxu0 0.0
      %7990 = vmatprep.subr.mxu0 0.0
      %7991 = vmatpush1.msra.mxu0 0.0
      %7992 = vmatprep.subr.mxu0 0.0
      %7993 = vmatpush1.msra.mxu0 0.0
      %7994 = vmatprep.subr.mxu0 0.0
      %7995 = vmatpush1.msra.mxu0 0.0
      %7996 = vmatprep.subr.mxu0 0.0
      %7997 = vmatpush1.msra.mxu0 0.0
      %7998 = vmatprep.subr.mxu0 0.0
      %7999 = vmatpush1.msra.mxu0 0.0
      %8000 = vmatprep.mubr.f32.mxu0 0.0
      %8001 = vmatmul.mubr.f32.gmra.mrb[0].mxu0 %v7910
      %v8002 = vpop.f32.mrb[0].mxu0
      %v8003 = vadd.f32 0.0, %v8002
      %v8004 = vpop.f32.mrb[0].mxu0
      %8005 = vmatprep.mubr.f32.mxu0 0.0
      %8006 = vmatmul.mubr.f32.gmra.mrb[0].mxu0 %v7913
      %v8007 = vpop.f32.mrb[0].mxu0
      %v8008 = vadd.f32 0.0, %v8007
      %v8009 = vpop.f32.mrb[0].mxu0
      %8010 = vmatprep.mubr.f32.mxu0 0.0
      %8011 = vmatmul.mubr.f32.gmra.mrb[0].mxu0 %v7916
      %v8012 = vpop.f32.mrb[0].mxu0
      %v8013 = vadd.f32 0.0, %v8012
      %v8014 = vpop.f32.mrb[0].mxu0
      %8015 = vmatprep.mubr.f32.mxu0 0.0
      %8016 = vmatmul.mubr.f32.gmra.mrb[0].mxu0 %v7919
      %v8017 = vpop.f32.mrb[0].mxu0
      %v8018 = vadd.f32 0.0, %v8017
      %v8019 = vpop.f32.mrb[0].mxu0
      %8020 = vmatprep.mubr.f32.mxu0 0.0
      %8021 = vmatmul.mubr.f32.gmra.mrb[0].mxu0 %v7922
      %v8022 = vpop.f32.mrb[0].mxu0
      %v8023 = vadd.f32 0.0, %v8022
      %v8024 = vpop.f32.mrb[0].mxu0
      %8025 = vmatprep.mubr.f32.mxu0 0.0
      %8026 = vmatmul.mubr.f32.gmra.mrb[0].mxu0 %v7925
      %v8027 = vpop.f32.mrb[0].mxu0
      %v8028 = vadd.f32 0.0, %v8027
      %v8029 = vpop.f32.mrb[0].mxu0
      %8030 = vmatprep.mubr.f32.mxu0 0.0
      %8031 = vmatmul.mubr.f32.gmra.mrb[0].mxu0 %v7928
      %v8032 = vpop.f32.mrb[0].mxu0
      %v8033 = vadd.f32 0.0, %v8032
      %v8034 = vpop.f32.mrb[0].mxu0
      %8035 = vmatprep.mubr.f32.mxu0 0.0
      %8036 = vmatmul.mubr.f32.gmra.mrb[0].mxu0 %v7931
      %v8037 = vpop.f32.mrb[0].mxu0
      %v8038 = vadd.f32 0.0, %v8037
      %v8039 = vpop.f32.mrb[0].mxu0
      %8040 = vdwg.mxu0
      %v8041 = vld [vmem:[%s11] sm:$0xff]
      %v8042 = vld [vmem:[%s11 + $0x8] sm:$0xff]
      %v8043 = vld [vmem:[%s11 + $0x10] sm:$0xff]
      %v8044 = vld [vmem:[%s11 + $0x18] sm:$0xff]
      %v8045 = vld [vmem:[%s11 + $0x20] sm:$0xff]
      %v8046 = vld [vmem:[%s11 + $0x28] sm:$0xff]
      %v8047 = vld [vmem:[%s11 + $0x30] sm:$0xff]
      %v8048 = vld [vmem:[%s11 + $0x38] sm:$0xff]
      %v8049 = vld [vmem:[%s11 + $0x40] sm:$0xff]
      %v8050 = vld [vmem:[%s11 + $0x48] sm:$0xff]
      %v8051 = vld [vmem:[%s11 + $0x50] sm:$0xff]
      %v8052 = vld [vmem:[%s11 + $0x58] sm:$0xff]
      %v8053 = vld [vmem:[%s11 + $0x60] sm:$0xff]
      %v8054 = vld [vmem:[%s11 + $0x68] sm:$0xff]
      %v8055 = vld [vmem:[%s11 + $0x70] sm:$0xff]
      %v8056 = vld [vmem:[%s11 + $0x78] sm:$0xff]
      %v8057 = vld [vmem:[%s10] sm:$0xff]
      %v8058 = vld [vmem:[%s10 + $0x8] sm:$0xff]
      %v8059 = vld [vmem:[%s10 + $0x10] sm:$0xff]
      %v8060 = vld [vmem:[%s10 + $0x18] sm:$0xff]
      %v8061 = vld [vmem:[%s10 + $0x20] sm:$0xff]
      %v8062 = vld [vmem:[%s10 + $0x28] sm:$0xff]
      %v8063 = vld [vmem:[%s10 + $0x30] sm:$0xff]
      %v8064 = vld [vmem:[%s10 + $0x38] sm:$0xff]
      %v8065 = vld [vmem:[%s10 + $0x40] sm:$0xff]
      %v8066 = vld [vmem:[%s10 + $0x48] sm:$0xff]
      %v8067 = vld [vmem:[%s10 + $0x50] sm:$0xff]
      %v8068 = vld [vmem:[%s10 + $0x58] sm:$0xff]
      %v8069 = vld [vmem:[%s10 + $0x60] sm:$0xff]
      %v8070 = vld [vmem:[%s10 + $0x68] sm:$0xff]
      %v8071 = vld [vmem:[%s10 + $0x70] sm:$0xff]
      %v8072 = vld [vmem:[%s10 + $0x78] sm:$0xff]
      %v8074 = vsel %vm6306, %v8057, 0
      %v8077 = vsel %vm6306, %v8058, 0
      %v8080 = vsel %vm6306, %v8059, 0
      %v8083 = vsel %vm6306, %v8060, 0
      %v8086 = vsel %vm6306, %v8061, 0
      %v8089 = vsel %vm6306, %v8062, 0
      %v8092 = vsel %vm6306, %v8063, 0
      %v8095 = vsel %vm6306, %v8064, 0
      %v8098 = vsel %vm6306, %v8065, 0
      %v8101 = vsel %vm6306, %v8066, 0
      %v8104 = vsel %vm6306, %v8067, 0
      %v8107 = vsel %vm6306, %v8068, 0
      %v8110 = vsel %vm6306, %v8069, 0
      %v8113 = vsel %vm6306, %v8070, 0
      %v8116 = vsel %vm6306, %v8071, 0
      %v8119 = vsel %vm6306, %v8072, 0
      %8121 = vmatprep.subr.mxu0 0.0
      %8122 = vmatpush1.msra.mxu0 %v8003
      %8123 = vmatprep.subr.mxu0 0.0
      %8124 = vmatpush1.msra.mxu0 %v8008
      %8125 = vmatprep.subr.mxu0 0.0
      %8126 = vmatpush1.msra.mxu0 %v8013
      %8127 = vmatprep.subr.mxu0 0.0
      %8128 = vmatpush1.msra.mxu0 %v8018
      %8129 = vmatprep.subr.mxu0 0.0
      %8130 = vmatpush1.msra.mxu0 %v8023
      %8131 = vmatprep.subr.mxu0 0.0
      %8132 = vmatpush1.msra.mxu0 %v8028
      %8133 = vmatprep.subr.mxu0 0.0
      %8134 = vmatpush1.msra.mxu0 %v8033
      %8135 = vmatprep.subr.mxu0 0.0
      %8136 = vmatpush1.msra.mxu0 %v8038
      %8137 = vmatprep.subr.mxu0 0.0
      %8138 = vmatpush1.msra.mxu0 0.0
      %8139 = vmatprep.subr.mxu0 0.0
      %8140 = vmatpush1.msra.mxu0 0.0
      %8141 = vmatprep.subr.mxu0 0.0
      %8142 = vmatpush1.msra.mxu0 0.0
      %8143 = vmatprep.subr.mxu0 0.0
      %8144 = vmatpush1.msra.mxu0 0.0
      %8145 = vmatprep.subr.mxu0 0.0
      %8146 = vmatpush1.msra.mxu0 0.0
      %8147 = vmatprep.subr.mxu0 0.0
      %8148 = vmatpush1.msra.mxu0 0.0
      %8149 = vmatprep.subr.mxu0 0.0
      %8150 = vmatpush1.msra.mxu0 0.0
      %8151 = vmatprep.subr.mxu0 0.0
      %8152 = vmatpush1.msra.mxu0 0.0
      %8153 = vmatprep.subr.mxu0 0.0
      %8154 = vmatpush1.msra.mxu0 0.0
      %8155 = vmatprep.subr.mxu0 0.0
      %8156 = vmatpush1.msra.mxu0 0.0
      %8157 = vmatprep.subr.mxu0 0.0
      %8158 = vmatpush1.msra.mxu0 0.0
      %8159 = vmatprep.subr.mxu0 0.0
      %8160 = vmatpush1.msra.mxu0 0.0
      %8161 = vmatprep.subr.mxu0 0.0
      %8162 = vmatpush1.msra.mxu0 0.0
      %8163 = vmatprep.subr.mxu0 0.0
      %8164 = vmatpush1.msra.mxu0 0.0
      %8165 = vmatprep.subr.mxu0 0.0
      %8166 = vmatpush1.msra.mxu0 0.0
      %8167 = vmatprep.subr.mxu0 0.0
      %8168 = vmatpush1.msra.mxu0 0.0
      %8169 = vmatprep.subr.mxu0 0.0
      %8170 = vmatpush1.msra.mxu0 0.0
      %8171 = vmatprep.subr.mxu0 0.0
      %8172 = vmatpush1.msra.mxu0 0.0
      %8173 = vmatprep.subr.mxu0 0.0
      %8174 = vmatpush1.msra.mxu0 0.0
      %8175 = vmatprep.subr.mxu0 0.0
      %8176 = vmatpush1.msra.mxu0 0.0
      %8177 = vmatprep.subr.mxu0 0.0
      %8178 = vmatpush1.msra.mxu0 0.0
      %8179 = vmatprep.subr.mxu0 0.0
      %8180 = vmatpush1.msra.mxu0 0.0
      %8181 = vmatprep.subr.mxu0 0.0
      %8182 = vmatpush1.msra.mxu0 0.0
      %8183 = vmatprep.subr.mxu0 0.0
      %8184 = vmatpush1.msra.mxu0 0.0
      %8185 = vmatprep.mubr.f32.mxu0 0.0
      %8186 = vmatmul.mubr.f32.gmra.mrb[0].mxu0 %v8074
      %v8187 = vpop.f32.mrb[0].mxu0
      %v8188 = vadd.f32 0.0, %v8187
      %v8189 = vpop.f32.mrb[0].mxu0
      %8190 = vmatprep.mubr.f32.mxu0 0.0
      %8191 = vmatmul.mubr.f32.gmra.mrb[0].mxu0 %v8077
      %v8192 = vpop.f32.mrb[0].mxu0
      %v8193 = vadd.f32 0.0, %v8192
      %v8194 = vpop.f32.mrb[0].mxu0
      %8195 = vmatprep.mubr.f32.mxu0 0.0
      %8196 = vmatmul.mubr.f32.gmra.mrb[0].mxu0 %v8080
      %v8197 = vpop.f32.mrb[0].mxu0
      %v8198 = vadd.f32 0.0, %v8197
      %v8199 = vpop.f32.mrb[0].mxu0
      %8200 = vmatprep.mubr.f32.mxu0 0.0
      %8201 = vmatmul.mubr.f32.gmra.mrb[0].mxu0 %v8083
      %v8202 = vpop.f32.mrb[0].mxu0
      %v8203 = vadd.f32 0.0, %v8202
      %v8204 = vpop.f32.mrb[0].mxu0
      %8205 = vmatprep.mubr.f32.mxu0 0.0
      %8206 = vmatmul.mubr.f32.gmra.mrb[0].mxu0 %v8086
      %v8207 = vpop.f32.mrb[0].mxu0
      %v8208 = vadd.f32 0.0, %v8207
      %v8209 = vpop.f32.mrb[0].mxu0
      %8210 = vmatprep.mubr.f32.mxu0 0.0
      %8211 = vmatmul.mubr.f32.gmra.mrb[0].mxu0 %v8089
      %v8212 = vpop.f32.mrb[0].mxu0
      %v8213 = vadd.f32 0.0, %v8212
      %v8214 = vpop.f32.mrb[0].mxu0
      %8215 = vmatprep.mubr.f32.mxu0 0.0
      %8216 = vmatmul.mubr.f32.gmra.mrb[0].mxu0 %v8092
      %v8217 = vpop.f32.mrb[0].mxu0
      %v8218 = vadd.f32 0.0, %v8217
      %v8219 = vpop.f32.mrb[0].mxu0
      %8220 = vmatprep.mubr.f32.mxu0 0.0
      %8221 = vmatmul.mubr.f32.gmra.mrb[0].mxu0 %v8095
      %v8222 = vpop.f32.mrb[0].mxu0
      %v8223 = vadd.f32 0.0, %v8222
      %v8224 = vpop.f32.mrb[0].mxu0
      %8225 = vmatprep.mubr.f32.mxu0 0.0
      %8226 = vmatmul.mubr.f32.gmra.mrb[0].mxu0 %v8098
      %v8227 = vpop.f32.mrb[0].mxu0
      %v8228 = vadd.f32 0.0, %v8227
      %v8229 = vpop.f32.mrb[0].mxu0
      %8230 = vmatprep.mubr.f32.mxu0 0.0
      %8231 = vmatmul.mubr.f32.gmra.mrb[0].mxu0 %v8101
      %v8232 = vpop.f32.mrb[0].mxu0
      %v8233 = vadd.f32 0.0, %v8232
      %v8234 = vpop.f32.mrb[0].mxu0
      %8235 = vmatprep.mubr.f32.mxu0 0.0
      %8236 = vmatmul.mubr.f32.gmra.mrb[0].mxu0 %v8104
      %v8237 = vpop.f32.mrb[0].mxu0
      %v8238 = vadd.f32 0.0, %v8237
      %v8239 = vpop.f32.mrb[0].mxu0
      %8240 = vmatprep.mubr.f32.mxu0 0.0
      %8241 = vmatmul.mubr.f32.gmra.mrb[0].mxu0 %v8107
      %v8242 = vpop.f32.mrb[0].mxu0
      %v8243 = vadd.f32 0.0, %v8242
      %v8244 = vpop.f32.mrb[0].mxu0
      %8245 = vmatprep.mubr.f32.mxu0 0.0
      %8246 = vmatmul.mubr.f32.gmra.mrb[0].mxu0 %v8110
      %v8247 = vpop.f32.mrb[0].mxu0
      %v8248 = vadd.f32 0.0, %v8247
      %v8249 = vpop.f32.mrb[0].mxu0
      %8250 = vmatprep.mubr.f32.mxu0 0.0
      %8251 = vmatmul.mubr.f32.gmra.mrb[0].mxu0 %v8113
      %v8252 = vpop.f32.mrb[0].mxu0
      %v8253 = vadd.f32 0.0, %v8252
      %v8254 = vpop.f32.mrb[0].mxu0
      %8255 = vmatprep.mubr.f32.mxu0 0.0
      %8256 = vmatmul.mubr.f32.gmra.mrb[0].mxu0 %v8116
      %v8257 = vpop.f32.mrb[0].mxu0
      %v8258 = vadd.f32 0.0, %v8257
      %v8259 = vpop.f32.mrb[0].mxu0
      %8260 = vmatprep.mubr.f32.mxu0 0.0
      %8261 = vmatmul.mubr.f32.gmra.mrb[0].mxu0 %v8119
      %v8262 = vpop.f32.mrb[0].mxu0
      %v8263 = vadd.f32 0.0, %v8262
      %v8264 = vpop.f32.mrb[0].mxu0
      %8265 = vdwg.mxu0
      %v8266 = vadd.f32 %v8041, %v8188
      %v8267 = vadd.f32 %v8042, %v8193
      %v8268 = vadd.f32 %v8043, %v8198
      %v8269 = vadd.f32 %v8044, %v8203
      %v8270 = vadd.f32 %v8045, %v8208
      %v8271 = vadd.f32 %v8046, %v8213
      %v8272 = vadd.f32 %v8047, %v8218
      %v8273 = vadd.f32 %v8048, %v8223
      %v8274 = vadd.f32 %v8049, %v8228
      %v8275 = vadd.f32 %v8050, %v8233
      %v8276 = vadd.f32 %v8051, %v8238
      %v8277 = vadd.f32 %v8052, %v8243
      %v8278 = vadd.f32 %v8053, %v8248
      %v8279 = vadd.f32 %v8054, %v8253
      %v8280 = vadd.f32 %v8055, %v8258
      %v8281 = vadd.f32 %v8056, %v8263
      %s8282 = scalar_lea.vmem %s10, 128
      %v8283 = vld [vmem:[%s8282] sm:$0xff]
      %v8284 = vld [vmem:[%s8282 + $0x8] sm:$0xff]
      %v8285 = vld [vmem:[%s8282 + $0x10] sm:$0xff]
      %v8286 = vld [vmem:[%s8282 + $0x18] sm:$0xff]
      %v8287 = vld [vmem:[%s8282 + $0x20] sm:$0xff]
      %v8288 = vld [vmem:[%s8282 + $0x28] sm:$0xff]
      %v8289 = vld [vmem:[%s8282 + $0x30] sm:$0xff]
      %v8290 = vld [vmem:[%s8282 + $0x38] sm:$0xff]
      %v8291 = vld [vmem:[%s8282 + $0x40] sm:$0xff]
      %v8292 = vld [vmem:[%s8282 + $0x48] sm:$0xff]
      %v8293 = vld [vmem:[%s8282 + $0x50] sm:$0xff]
      %v8294 = vld [vmem:[%s8282 + $0x58] sm:$0xff]
      %v8295 = vld [vmem:[%s8282 + $0x60] sm:$0xff]
      %v8296 = vld [vmem:[%s8282 + $0x68] sm:$0xff]
      %v8297 = vld [vmem:[%s8282 + $0x70] sm:$0xff]
      %v8298 = vld [vmem:[%s8282 + $0x78] sm:$0xff]
      %8307 = vrot.lane.b32.xlu0 %v8003, 127
      %v8308 = vpop.permute.xlu0 %8307
      %8309 = vrot.lane.b32.xlu0 %v8008, 127
      %v8310 = vpop.permute.xlu0 %8309
      %8311 = vrot.lane.b32.xlu0 %v8013, 127
      %v8312 = vpop.permute.xlu0 %8311
      %8313 = vrot.lane.b32.xlu0 %v8018, 127
      %v8314 = vpop.permute.xlu0 %8313
      %8315 = vrot.lane.b32.xlu0 %v8023, 127
      %v8316 = vpop.permute.xlu0 %8315
      %8317 = vrot.lane.b32.xlu0 %v8028, 127
      %v8318 = vpop.permute.xlu0 %8317
      %8319 = vrot.lane.b32.xlu0 %v8033, 127
      %v8320 = vpop.permute.xlu0 %8319
      %8321 = vrot.lane.b32.xlu0 %v8038, 127
      %v8322 = vpop.permute.xlu0 %8321
      %v8332 = vsel %vm6306, %v8283, 0
      %v8335 = vsel %vm6306, %v8284, 0
      %v8338 = vsel %vm6306, %v8285, 0
      %v8341 = vsel %vm6306, %v8286, 0
      %v8344 = vsel %vm6306, %v8287, 0
      %v8347 = vsel %vm6306, %v8288, 0
      %v8350 = vsel %vm6306, %v8289, 0
      %v8353 = vsel %vm6306, %v8290, 0
      %v8356 = vsel %vm6306, %v8291, 0
      %v8359 = vsel %vm6306, %v8292, 0
      %v8362 = vsel %vm6306, %v8293, 0
      %v8365 = vsel %vm6306, %v8294, 0
      %v8368 = vsel %vm6306, %v8295, 0
      %v8371 = vsel %vm6306, %v8296, 0
      %v8374 = vsel %vm6306, %v8297, 0
      %v8377 = vsel %vm6306, %v8298, 0
      %8379 = vmatprep.subr.mxu0 0.0
      %8380 = vmatpush1.msra.mxu0 %v8308
      %8381 = vmatprep.subr.mxu0 0.0
      %8382 = vmatpush1.msra.mxu0 %v8310
      %8383 = vmatprep.subr.mxu0 0.0
      %8384 = vmatpush1.msra.mxu0 %v8312
      %8385 = vmatprep.subr.mxu0 0.0
      %8386 = vmatpush1.msra.mxu0 %v8314
      %8387 = vmatprep.subr.mxu0 0.0
      %8388 = vmatpush1.msra.mxu0 %v8316
      %8389 = vmatprep.subr.mxu0 0.0
      %8390 = vmatpush1.msra.mxu0 %v8318
      %8391 = vmatprep.subr.mxu0 0.0
      %8392 = vmatpush1.msra.mxu0 %v8320
      %8393 = vmatprep.subr.mxu0 0.0
      %8394 = vmatpush1.msra.mxu0 %v8322
      %8395 = vmatprep.subr.mxu0 0.0
      %8396 = vmatpush1.msra.mxu0 0.0
      %8397 = vmatprep.subr.mxu0 0.0
      %8398 = vmatpush1.msra.mxu0 0.0
      %8399 = vmatprep.subr.mxu0 0.0
      %8400 = vmatpush1.msra.mxu0 0.0
      %8401 = vmatprep.subr.mxu0 0.0
      %8402 = vmatpush1.msra.mxu0 0.0
      %8403 = vmatprep.subr.mxu0 0.0
      %8404 = vmatpush1.msra.mxu0 0.0
      %8405 = vmatprep.subr.mxu0 0.0
      %8406 = vmatpush1.msra.mxu0 0.0
      %8407 = vmatprep.subr.mxu0 0.0
      %8408 = vmatpush1.msra.mxu0 0.0
      %8409 = vmatprep.subr.mxu0 0.0
      %8410 = vmatpush1.msra.mxu0 0.0
      %8411 = vmatprep.subr.mxu0 0.0
      %8412 = vmatpush1.msra.mxu0 0.0
      %8413 = vmatprep.subr.mxu0 0.0
      %8414 = vmatpush1.msra.mxu0 0.0
      %8415 = vmatprep.subr.mxu0 0.0
      %8416 = vmatpush1.msra.mxu0 0.0
      %8417 = vmatprep.subr.mxu0 0.0
      %8418 = vmatpush1.msra.mxu0 0.0
      %8419 = vmatprep.subr.mxu0 0.0
      %8420 = vmatpush1.msra.mxu0 0.0
      %8421 = vmatprep.subr.mxu0 0.0
      %8422 = vmatpush1.msra.mxu0 0.0
      %8423 = vmatprep.subr.mxu0 0.0
      %8424 = vmatpush1.msra.mxu0 0.0
      %8425 = vmatprep.subr.mxu0 0.0
      %8426 = vmatpush1.msra.mxu0 0.0
      %8427 = vmatprep.subr.mxu0 0.0
      %8428 = vmatpush1.msra.mxu0 0.0
      %8429 = vmatprep.subr.mxu0 0.0
      %8430 = vmatpush1.msra.mxu0 0.0
      %8431 = vmatprep.subr.mxu0 0.0
      %8432 = vmatpush1.msra.mxu0 0.0
      %8433 = vmatprep.subr.mxu0 0.0
      %8434 = vmatpush1.msra.mxu0 0.0
      %8435 = vmatprep.subr.mxu0 0.0
      %8436 = vmatpush1.msra.mxu0 0.0
      %8437 = vmatprep.subr.mxu0 0.0
      %8438 = vmatpush1.msra.mxu0 0.0
      %8439 = vmatprep.subr.mxu0 0.0
      %8440 = vmatpush1.msra.mxu0 0.0
      %8441 = vmatprep.subr.mxu0 0.0
      %8442 = vmatpush1.msra.mxu0 0.0
      %8443 = vmatprep.mubr.f32.mxu0 0.0
      %8444 = vmatmul.mubr.f32.gmra.mrb[0].mxu0 %v8332
      %v8445 = vpop.f32.mrb[0].mxu0
      %v8446 = vadd.f32 0.0, %v8445
      %v8447 = vpop.f32.mrb[0].mxu0
      %8448 = vmatprep.mubr.f32.mxu0 0.0
      %8449 = vmatmul.mubr.f32.gmra.mrb[0].mxu0 %v8335
      %v8450 = vpop.f32.mrb[0].mxu0
      %v8451 = vadd.f32 0.0, %v8450
      %v8452 = vpop.f32.mrb[0].mxu0
      %8453 = vmatprep.mubr.f32.mxu0 0.0
      %8454 = vmatmul.mubr.f32.gmra.mrb[0].mxu0 %v8338
      %v8455 = vpop.f32.mrb[0].mxu0
      %v8456 = vadd.f32 0.0, %v8455
      %v8457 = vpop.f32.mrb[0].mxu0
      %8458 = vmatprep.mubr.f32.mxu0 0.0
      %8459 = vmatmul.mubr.f32.gmra.mrb[0].mxu0 %v8341
      %v8460 = vpop.f32.mrb[0].mxu0
      %v8461 = vadd.f32 0.0, %v8460
      %v8462 = vpop.f32.mrb[0].mxu0
      %8463 = vmatprep.mubr.f32.mxu0 0.0
      %8464 = vmatmul.mubr.f32.gmra.mrb[0].mxu0 %v8344
      %v8465 = vpop.f32.mrb[0].mxu0
      %v8466 = vadd.f32 0.0, %v8465
      %v8467 = vpop.f32.mrb[0].mxu0
      %8468 = vmatprep.mubr.f32.mxu0 0.0
      %8469 = vmatmul.mubr.f32.gmra.mrb[0].mxu0 %v8347
      %v8470 = vpop.f32.mrb[0].mxu0
      %v8471 = vadd.f32 0.0, %v8470
      %v8472 = vpop.f32.mrb[0].mxu0
      %8473 = vmatprep.mubr.f32.mxu0 0.0
      %8474 = vmatmul.mubr.f32.gmra.mrb[0].mxu0 %v8350
      %v8475 = vpop.f32.mrb[0].mxu0
      %v8476 = vadd.f32 0.0, %v8475
      %v8477 = vpop.f32.mrb[0].mxu0
      %8478 = vmatprep.mubr.f32.mxu0 0.0
      %8479 = vmatmul.mubr.f32.gmra.mrb[0].mxu0 %v8353
      %v8480 = vpop.f32.mrb[0].mxu0
      %v8481 = vadd.f32 0.0, %v8480
      %v8482 = vpop.f32.mrb[0].mxu0
      %8483 = vmatprep.mubr.f32.mxu0 0.0
      %8484 = vmatmul.mubr.f32.gmra.mrb[0].mxu0 %v8356
      %v8485 = vpop.f32.mrb[0].mxu0
      %v8486 = vadd.f32 0.0, %v8485
      %v8487 = vpop.f32.mrb[0].mxu0
      %8488 = vmatprep.mubr.f32.mxu0 0.0
      %8489 = vmatmul.mubr.f32.gmra.mrb[0].mxu0 %v8359
      %v8490 = vpop.f32.mrb[0].mxu0
      %v8491 = vadd.f32 0.0, %v8490
      %v8492 = vpop.f32.mrb[0].mxu0
      %8493 = vmatprep.mubr.f32.mxu0 0.0
      %8494 = vmatmul.mubr.f32.gmra.mrb[0].mxu0 %v8362
      %v8495 = vpop.f32.mrb[0].mxu0
      %v8496 = vadd.f32 0.0, %v8495
      %v8497 = vpop.f32.mrb[0].mxu0
      %8498 = vmatprep.mubr.f32.mxu0 0.0
      %8499 = vmatmul.mubr.f32.gmra.mrb[0].mxu0 %v8365
      %v8500 = vpop.f32.mrb[0].mxu0
      %v8501 = vadd.f32 0.0, %v8500
      %v8502 = vpop.f32.mrb[0].mxu0
      %8503 = vmatprep.mubr.f32.mxu0 0.0
      %8504 = vmatmul.mubr.f32.gmra.mrb[0].mxu0 %v8368
      %v8505 = vpop.f32.mrb[0].mxu0
      %v8506 = vadd.f32 0.0, %v8505
      %v8507 = vpop.f32.mrb[0].mxu0
      %8508 = vmatprep.mubr.f32.mxu0 0.0
      %8509 = vmatmul.mubr.f32.gmra.mrb[0].mxu0 %v8371
      %v8510 = vpop.f32.mrb[0].mxu0
      %v8511 = vadd.f32 0.0, %v8510
      %v8512 = vpop.f32.mrb[0].mxu0
      %8513 = vmatprep.mubr.f32.mxu0 0.0
      %8514 = vmatmul.mubr.f32.gmra.mrb[0].mxu0 %v8374
      %v8515 = vpop.f32.mrb[0].mxu0
      %v8516 = vadd.f32 0.0, %v8515
      %v8517 = vpop.f32.mrb[0].mxu0
      %8518 = vmatprep.mubr.f32.mxu0 0.0
      %8519 = vmatmul.mubr.f32.gmra.mrb[0].mxu0 %v8377
      %v8520 = vpop.f32.mrb[0].mxu0
      %v8521 = vadd.f32 0.0, %v8520
      %v8522 = vpop.f32.mrb[0].mxu0
      %8523 = vdwg.mxu0
      %v8524 = vadd.f32 %v8266, %v8446
      %v8525 = vadd.f32 %v8267, %v8451
      %v8526 = vadd.f32 %v8268, %v8456
      %v8527 = vadd.f32 %v8269, %v8461
      %v8528 = vadd.f32 %v8270, %v8466
      %v8529 = vadd.f32 %v8271, %v8471
      %v8530 = vadd.f32 %v8272, %v8476
      %v8531 = vadd.f32 %v8273, %v8481
      %v8532 = vadd.f32 %v8274, %v8486
      %v8533 = vadd.f32 %v8275, %v8491
      %v8534 = vadd.f32 %v8276, %v8496
      %v8535 = vadd.f32 %v8277, %v8501
      %v8536 = vadd.f32 %v8278, %v8506
      %v8537 = vadd.f32 %v8279, %v8511
      %v8538 = vadd.f32 %v8280, %v8516
      %v8539 = vadd.f32 %v8281, %v8521
      %s8540 = scalar_lea.vmem %s10, 256
      %v8541 = vld [vmem:[%s8540] sm:$0xff]
      %v8542 = vld [vmem:[%s8540 + $0x8] sm:$0xff]
      %v8543 = vld [vmem:[%s8540 + $0x10] sm:$0xff]
      %v8544 = vld [vmem:[%s8540 + $0x18] sm:$0xff]
      %v8545 = vld [vmem:[%s8540 + $0x20] sm:$0xff]
      %v8546 = vld [vmem:[%s8540 + $0x28] sm:$0xff]
      %v8547 = vld [vmem:[%s8540 + $0x30] sm:$0xff]
      %v8548 = vld [vmem:[%s8540 + $0x38] sm:$0xff]
      %v8549 = vld [vmem:[%s8540 + $0x40] sm:$0xff]
      %v8550 = vld [vmem:[%s8540 + $0x48] sm:$0xff]
      %v8551 = vld [vmem:[%s8540 + $0x50] sm:$0xff]
      %v8552 = vld [vmem:[%s8540 + $0x58] sm:$0xff]
      %v8553 = vld [vmem:[%s8540 + $0x60] sm:$0xff]
      %v8554 = vld [vmem:[%s8540 + $0x68] sm:$0xff]
      %v8555 = vld [vmem:[%s8540 + $0x70] sm:$0xff]
      %v8556 = vld [vmem:[%s8540 + $0x78] sm:$0xff]
      %8557 = vrot.lane.b32.xlu0 %v8003, 126
      %v8558 = vpop.permute.xlu0 %8557
      %8559 = vrot.lane.b32.xlu0 %v8008, 126
      %v8560 = vpop.permute.xlu0 %8559
      %8561 = vrot.lane.b32.xlu0 %v8013, 126
      %v8562 = vpop.permute.xlu0 %8561
      %8563 = vrot.lane.b32.xlu0 %v8018, 126
      %v8564 = vpop.permute.xlu0 %8563
      %8565 = vrot.lane.b32.xlu0 %v8023, 126
      %v8566 = vpop.permute.xlu0 %8565
      %8567 = vrot.lane.b32.xlu0 %v8028, 126
      %v8568 = vpop.permute.xlu0 %8567
      %8569 = vrot.lane.b32.xlu0 %v8033, 126
      %v8570 = vpop.permute.xlu0 %8569
      %8571 = vrot.lane.b32.xlu0 %v8038, 126
      %v8572 = vpop.permute.xlu0 %8571
      %v8582 = vsel %vm6306, %v8541, 0
      %v8585 = vsel %vm6306, %v8542, 0
      %v8588 = vsel %vm6306, %v8543, 0
      %v8591 = vsel %vm6306, %v8544, 0
      %v8594 = vsel %vm6306, %v8545, 0
      %v8597 = vsel %vm6306, %v8546, 0
      %v8600 = vsel %vm6306, %v8547, 0
      %v8603 = vsel %vm6306, %v8548, 0
      %v8606 = vsel %vm6306, %v8549, 0
      %v8609 = vsel %vm6306, %v8550, 0
      %v8612 = vsel %vm6306, %v8551, 0
      %v8615 = vsel %vm6306, %v8552, 0
      %v8618 = vsel %vm6306, %v8553, 0
      %v8621 = vsel %vm6306, %v8554, 0
      %v8624 = vsel %vm6306, %v8555, 0
      %v8627 = vsel %vm6306, %v8556, 0
      %8629 = vmatprep.subr.mxu0 0.0
      %8630 = vmatpush1.msra.mxu0 %v8558
      %8631 = vmatprep.subr.mxu0 0.0
      %8632 = vmatpush1.msra.mxu0 %v8560
      %8633 = vmatprep.subr.mxu0 0.0
      %8634 = vmatpush1.msra.mxu0 %v8562
      %8635 = vmatprep.subr.mxu0 0.0
      %8636 = vmatpush1.msra.mxu0 %v8564
      %8637 = vmatprep.subr.mxu0 0.0
      %8638 = vmatpush1.msra.mxu0 %v8566
      %8639 = vmatprep.subr.mxu0 0.0
      %8640 = vmatpush1.msra.mxu0 %v8568
      %8641 = vmatprep.subr.mxu0 0.0
      %8642 = vmatpush1.msra.mxu0 %v8570
      %8643 = vmatprep.subr.mxu0 0.0
      %8644 = vmatpush1.msra.mxu0 %v8572
      %8645 = vmatprep.subr.mxu0 0.0
      %8646 = vmatpush1.msra.mxu0 0.0
      %8647 = vmatprep.subr.mxu0 0.0
      %8648 = vmatpush1.msra.mxu0 0.0
      %8649 = vmatprep.subr.mxu0 0.0
      %8650 = vmatpush1.msra.mxu0 0.0
      %8651 = vmatprep.subr.mxu0 0.0
      %8652 = vmatpush1.msra.mxu0 0.0
      %8653 = vmatprep.subr.mxu0 0.0
      %8654 = vmatpush1.msra.mxu0 0.0
      %8655 = vmatprep.subr.mxu0 0.0
      %8656 = vmatpush1.msra.mxu0 0.0
      %8657 = vmatprep.subr.mxu0 0.0
      %8658 = vmatpush1.msra.mxu0 0.0
      %8659 = vmatprep.subr.mxu0 0.0
      %8660 = vmatpush1.msra.mxu0 0.0
      %8661 = vmatprep.subr.mxu0 0.0
      %8662 = vmatpush1.msra.mxu0 0.0
      %8663 = vmatprep.subr.mxu0 0.0
      %8664 = vmatpush1.msra.mxu0 0.0
      %8665 = vmatprep.subr.mxu0 0.0
      %8666 = vmatpush1.msra.mxu0 0.0
      %8667 = vmatprep.subr.mxu0 0.0
      %8668 = vmatpush1.msra.mxu0 0.0
      %8669 = vmatprep.subr.mxu0 0.0
      %8670 = vmatpush1.msra.mxu0 0.0
      %8671 = vmatprep.subr.mxu0 0.0
      %8672 = vmatpush1.msra.mxu0 0.0
      %8673 = vmatprep.subr.mxu0 0.0
      %8674 = vmatpush1.msra.mxu0 0.0
      %8675 = vmatprep.subr.mxu0 0.0
      %8676 = vmatpush1.msra.mxu0 0.0
      %8677 = vmatprep.subr.mxu0 0.0
      %8678 = vmatpush1.msra.mxu0 0.0
      %8679 = vmatprep.subr.mxu0 0.0
      %8680 = vmatpush1.msra.mxu0 0.0
      %8681 = vmatprep.subr.mxu0 0.0
      %8682 = vmatpush1.msra.mxu0 0.0
      %8683 = vmatprep.subr.mxu0 0.0
      %8684 = vmatpush1.msra.mxu0 0.0
      %8685 = vmatprep.subr.mxu0 0.0
      %8686 = vmatpush1.msra.mxu0 0.0
      %8687 = vmatprep.subr.mxu0 0.0
      %8688 = vmatpush1.msra.mxu0 0.0
      %8689 = vmatprep.subr.mxu0 0.0
      %8690 = vmatpush1.msra.mxu0 0.0
      %8691 = vmatprep.subr.mxu0 0.0
      %8692 = vmatpush1.msra.mxu0 0.0
      %8693 = vmatprep.mubr.f32.mxu0 0.0
      %8694 = vmatmul.mubr.f32.gmra.mrb[0].mxu0 %v8582
      %v8695 = vpop.f32.mrb[0].mxu0
      %v8696 = vadd.f32 0.0, %v8695
      %v8697 = vpop.f32.mrb[0].mxu0
      %8698 = vmatprep.mubr.f32.mxu0 0.0
      %8699 = vmatmul.mubr.f32.gmra.mrb[0].mxu0 %v8585
      %v8700 = vpop.f32.mrb[0].mxu0
      %v8701 = vadd.f32 0.0, %v8700
      %v8702 = vpop.f32.mrb[0].mxu0
      %8703 = vmatprep.mubr.f32.mxu0 0.0
      %8704 = vmatmul.mubr.f32.gmra.mrb[0].mxu0 %v8588
      %v8705 = vpop.f32.mrb[0].mxu0
      %v8706 = vadd.f32 0.0, %v8705
      %v8707 = vpop.f32.mrb[0].mxu0
      %8708 = vmatprep.mubr.f32.mxu0 0.0
      %8709 = vmatmul.mubr.f32.gmra.mrb[0].mxu0 %v8591
      %v8710 = vpop.f32.mrb[0].mxu0
      %v8711 = vadd.f32 0.0, %v8710
      %v8712 = vpop.f32.mrb[0].mxu0
      %8713 = vmatprep.mubr.f32.mxu0 0.0
      %8714 = vmatmul.mubr.f32.gmra.mrb[0].mxu0 %v8594
      %v8715 = vpop.f32.mrb[0].mxu0
      %v8716 = vadd.f32 0.0, %v8715
      %v8717 = vpop.f32.mrb[0].mxu0
      %8718 = vmatprep.mubr.f32.mxu0 0.0
      %8719 = vmatmul.mubr.f32.gmra.mrb[0].mxu0 %v8597
      %v8720 = vpop.f32.mrb[0].mxu0
      %v8721 = vadd.f32 0.0, %v8720
      %v8722 = vpop.f32.mrb[0].mxu0
      %8723 = vmatprep.mubr.f32.mxu0 0.0
      %8724 = vmatmul.mubr.f32.gmra.mrb[0].mxu0 %v8600
      %v8725 = vpop.f32.mrb[0].mxu0
      %v8726 = vadd.f32 0.0, %v8725
      %v8727 = vpop.f32.mrb[0].mxu0
      %8728 = vmatprep.mubr.f32.mxu0 0.0
      %8729 = vmatmul.mubr.f32.gmra.mrb[0].mxu0 %v8603
      %v8730 = vpop.f32.mrb[0].mxu0
      %v8731 = vadd.f32 0.0, %v8730
      %v8732 = vpop.f32.mrb[0].mxu0
      %8733 = vmatprep.mubr.f32.mxu0 0.0
      %8734 = vmatmul.mubr.f32.gmra.mrb[0].mxu0 %v8606
      %v8735 = vpop.f32.mrb[0].mxu0
      %v8736 = vadd.f32 0.0, %v8735
      %v8737 = vpop.f32.mrb[0].mxu0
      %8738 = vmatprep.mubr.f32.mxu0 0.0
      %8739 = vmatmul.mubr.f32.gmra.mrb[0].mxu0 %v8609
      %v8740 = vpop.f32.mrb[0].mxu0
      %v8741 = vadd.f32 0.0, %v8740
      %v8742 = vpop.f32.mrb[0].mxu0
      %8743 = vmatprep.mubr.f32.mxu0 0.0
      %8744 = vmatmul.mubr.f32.gmra.mrb[0].mxu0 %v8612
      %v8745 = vpop.f32.mrb[0].mxu0
      %v8746 = vadd.f32 0.0, %v8745
      %v8747 = vpop.f32.mrb[0].mxu0
      %8748 = vmatprep.mubr.f32.mxu0 0.0
      %8749 = vmatmul.mubr.f32.gmra.mrb[0].mxu0 %v8615
      %v8750 = vpop.f32.mrb[0].mxu0
      %v8751 = vadd.f32 0.0, %v8750
      %v8752 = vpop.f32.mrb[0].mxu0
      %8753 = vmatprep.mubr.f32.mxu0 0.0
      %8754 = vmatmul.mubr.f32.gmra.mrb[0].mxu0 %v8618
      %v8755 = vpop.f32.mrb[0].mxu0
      %v8756 = vadd.f32 0.0, %v8755
      %v8757 = vpop.f32.mrb[0].mxu0
      %8758 = vmatprep.mubr.f32.mxu0 0.0
      %8759 = vmatmul.mubr.f32.gmra.mrb[0].mxu0 %v8621
      %v8760 = vpop.f32.mrb[0].mxu0
      %v8761 = vadd.f32 0.0, %v8760
      %v8762 = vpop.f32.mrb[0].mxu0
      %8763 = vmatprep.mubr.f32.mxu0 0.0
      %8764 = vmatmul.mubr.f32.gmra.mrb[0].mxu0 %v8624
      %v8765 = vpop.f32.mrb[0].mxu0
      %v8766 = vadd.f32 0.0, %v8765
      %v8767 = vpop.f32.mrb[0].mxu0
      %8768 = vmatprep.mubr.f32.mxu0 0.0
      %8769 = vmatmul.mubr.f32.gmra.mrb[0].mxu0 %v8627
      %v8770 = vpop.f32.mrb[0].mxu0
      %v8771 = vadd.f32 0.0, %v8770
      %v8772 = vpop.f32.mrb[0].mxu0
      %8773 = vdwg.mxu0
      %v8774 = vadd.f32 %v8524, %v8696
      %v8775 = vadd.f32 %v8525, %v8701
      %v8776 = vadd.f32 %v8526, %v8706
      %v8777 = vadd.f32 %v8527, %v8711
      %v8778 = vadd.f32 %v8528, %v8716
      %v8779 = vadd.f32 %v8529, %v8721
      %v8780 = vadd.f32 %v8530, %v8726
      %v8781 = vadd.f32 %v8531, %v8731
      %v8782 = vadd.f32 %v8532, %v8736
      %v8783 = vadd.f32 %v8533, %v8741
      %v8784 = vadd.f32 %v8534, %v8746
      %v8785 = vadd.f32 %v8535, %v8751
      %v8786 = vadd.f32 %v8536, %v8756
      %v8787 = vadd.f32 %v8537, %v8761
      %v8788 = vadd.f32 %v8538, %v8766
      %v8789 = vadd.f32 %v8539, %v8771
      %s8790 = scalar_lea.vmem %s10, 384
      %v8791 = vld [vmem:[%s8790] sm:$0xff]
      %v8792 = vld [vmem:[%s8790 + $0x8] sm:$0xff]
      %v8793 = vld [vmem:[%s8790 + $0x10] sm:$0xff]
      %v8794 = vld [vmem:[%s8790 + $0x18] sm:$0xff]
      %v8795 = vld [vmem:[%s8790 + $0x20] sm:$0xff]
      %v8796 = vld [vmem:[%s8790 + $0x28] sm:$0xff]
      %v8797 = vld [vmem:[%s8790 + $0x30] sm:$0xff]
      %v8798 = vld [vmem:[%s8790 + $0x38] sm:$0xff]
      %v8799 = vld [vmem:[%s8790 + $0x40] sm:$0xff]
      %v8800 = vld [vmem:[%s8790 + $0x48] sm:$0xff]
      %v8801 = vld [vmem:[%s8790 + $0x50] sm:$0xff]
      %v8802 = vld [vmem:[%s8790 + $0x58] sm:$0xff]
      %v8803 = vld [vmem:[%s8790 + $0x60] sm:$0xff]
      %v8804 = vld [vmem:[%s8790 + $0x68] sm:$0xff]
      %v8805 = vld [vmem:[%s8790 + $0x70] sm:$0xff]
      %v8806 = vld [vmem:[%s8790 + $0x78] sm:$0xff]
      %8807 = vrot.lane.b32.xlu0 %v8003, 125
      %v8808 = vpop.permute.xlu0 %8807
      %8809 = vrot.lane.b32.xlu0 %v8008, 125
      %v8810 = vpop.permute.xlu0 %8809
      %8811 = vrot.lane.b32.xlu0 %v8013, 125
      %v8812 = vpop.permute.xlu0 %8811
      %8813 = vrot.lane.b32.xlu0 %v8018, 125
      %v8814 = vpop.permute.xlu0 %8813
      %8815 = vrot.lane.b32.xlu0 %v8023, 125
      %v8816 = vpop.permute.xlu0 %8815
      %8817 = vrot.lane.b32.xlu0 %v8028, 125
      %v8818 = vpop.permute.xlu0 %8817
      %8819 = vrot.lane.b32.xlu0 %v8033, 125
      %v8820 = vpop.permute.xlu0 %8819
      %8821 = vrot.lane.b32.xlu0 %v8038, 125
      %v8822 = vpop.permute.xlu0 %8821
      %v8832 = vsel %vm6306, %v8791, 0
      %v8835 = vsel %vm6306, %v8792, 0
      %v8838 = vsel %vm6306, %v8793, 0
      %v8841 = vsel %vm6306, %v8794, 0
      %v8844 = vsel %vm6306, %v8795, 0
      %v8847 = vsel %vm6306, %v8796, 0
      %v8850 = vsel %vm6306, %v8797, 0
      %v8853 = vsel %vm6306, %v8798, 0
      %v8856 = vsel %vm6306, %v8799, 0
      %v8859 = vsel %vm6306, %v8800, 0
      %v8862 = vsel %vm6306, %v8801, 0
      %v8865 = vsel %vm6306, %v8802, 0
      %v8868 = vsel %vm6306, %v8803, 0
      %v8871 = vsel %vm6306, %v8804, 0
      %v8874 = vsel %vm6306, %v8805, 0
      %v8877 = vsel %vm6306, %v8806, 0
      %8879 = vmatprep.subr.mxu0 0.0
      %8880 = vmatpush1.msra.mxu0 %v8808
      %8881 = vmatprep.subr.mxu0 0.0
      %8882 = vmatpush1.msra.mxu0 %v8810
      %8883 = vmatprep.subr.mxu0 0.0
      %8884 = vmatpush1.msra.mxu0 %v8812
      %8885 = vmatprep.subr.mxu0 0.0
      %8886 = vmatpush1.msra.mxu0 %v8814
      %8887 = vmatprep.subr.mxu0 0.0
      %8888 = vmatpush1.msra.mxu0 %v8816
      %8889 = vmatprep.subr.mxu0 0.0
      %8890 = vmatpush1.msra.mxu0 %v8818
      %8891 = vmatprep.subr.mxu0 0.0
      %8892 = vmatpush1.msra.mxu0 %v8820
      %8893 = vmatprep.subr.mxu0 0.0
      %8894 = vmatpush1.msra.mxu0 %v8822
      %8895 = vmatprep.subr.mxu0 0.0
      %8896 = vmatpush1.msra.mxu0 0.0
      %8897 = vmatprep.subr.mxu0 0.0
      %8898 = vmatpush1.msra.mxu0 0.0
      %8899 = vmatprep.subr.mxu0 0.0
      %8900 = vmatpush1.msra.mxu0 0.0
      %8901 = vmatprep.subr.mxu0 0.0
      %8902 = vmatpush1.msra.mxu0 0.0
      %8903 = vmatprep.subr.mxu0 0.0
      %8904 = vmatpush1.msra.mxu0 0.0
      %8905 = vmatprep.subr.mxu0 0.0
      %8906 = vmatpush1.msra.mxu0 0.0
      %8907 = vmatprep.subr.mxu0 0.0
      %8908 = vmatpush1.msra.mxu0 0.0
      %8909 = vmatprep.subr.mxu0 0.0
      %8910 = vmatpush1.msra.mxu0 0.0
      %8911 = vmatprep.subr.mxu0 0.0
      %8912 = vmatpush1.msra.mxu0 0.0
      %8913 = vmatprep.subr.mxu0 0.0
      %8914 = vmatpush1.msra.mxu0 0.0
      %8915 = vmatprep.subr.mxu0 0.0
      %8916 = vmatpush1.msra.mxu0 0.0
      %8917 = vmatprep.subr.mxu0 0.0
      %8918 = vmatpush1.msra.mxu0 0.0
      %8919 = vmatprep.subr.mxu0 0.0
      %8920 = vmatpush1.msra.mxu0 0.0
      %8921 = vmatprep.subr.mxu0 0.0
      %8922 = vmatpush1.msra.mxu0 0.0
      %8923 = vmatprep.subr.mxu0 0.0
      %8924 = vmatpush1.msra.mxu0 0.0
      %8925 = vmatprep.subr.mxu0 0.0
      %8926 = vmatpush1.msra.mxu0 0.0
      %8927 = vmatprep.subr.mxu0 0.0
      %8928 = vmatpush1.msra.mxu0 0.0
      %8929 = vmatprep.subr.mxu0 0.0
      %8930 = vmatpush1.msra.mxu0 0.0
      %8931 = vmatprep.subr.mxu0 0.0
      %8932 = vmatpush1.msra.mxu0 0.0
      %8933 = vmatprep.subr.mxu0 0.0
      %8934 = vmatpush1.msra.mxu0 0.0
      %8935 = vmatprep.subr.mxu0 0.0
      %8936 = vmatpush1.msra.mxu0 0.0
      %8937 = vmatprep.subr.mxu0 0.0
      %8938 = vmatpush1.msra.mxu0 0.0
      %8939 = vmatprep.subr.mxu0 0.0
      %8940 = vmatpush1.msra.mxu0 0.0
      %8941 = vmatprep.subr.mxu0 0.0
      %8942 = vmatpush1.msra.mxu0 0.0
      %8943 = vmatprep.mubr.f32.mxu0 0.0
      %8944 = vmatmul.mubr.f32.gmra.mrb[0].mxu0 %v8832
      %v8945 = vpop.f32.mrb[0].mxu0
      %v8946 = vadd.f32 0.0, %v8945
      %v8947 = vpop.f32.mrb[0].mxu0
      %8948 = vmatprep.mubr.f32.mxu0 0.0
      %8949 = vmatmul.mubr.f32.gmra.mrb[0].mxu0 %v8835
      %v8950 = vpop.f32.mrb[0].mxu0
      %v8951 = vadd.f32 0.0, %v8950
      %v8952 = vpop.f32.mrb[0].mxu0
      %8953 = vmatprep.mubr.f32.mxu0 0.0
      %8954 = vmatmul.mubr.f32.gmra.mrb[0].mxu0 %v8838
      %v8955 = vpop.f32.mrb[0].mxu0
      %v8956 = vadd.f32 0.0, %v8955
      %v8957 = vpop.f32.mrb[0].mxu0
      %8958 = vmatprep.mubr.f32.mxu0 0.0
      %8959 = vmatmul.mubr.f32.gmra.mrb[0].mxu0 %v8841
      %v8960 = vpop.f32.mrb[0].mxu0
      %v8961 = vadd.f32 0.0, %v8960
      %v8962 = vpop.f32.mrb[0].mxu0
      %8963 = vmatprep.mubr.f32.mxu0 0.0
      %8964 = vmatmul.mubr.f32.gmra.mrb[0].mxu0 %v8844
      %v8965 = vpop.f32.mrb[0].mxu0
      %v8966 = vadd.f32 0.0, %v8965
      %v8967 = vpop.f32.mrb[0].mxu0
      %8968 = vmatprep.mubr.f32.mxu0 0.0
      %8969 = vmatmul.mubr.f32.gmra.mrb[0].mxu0 %v8847
      %v8970 = vpop.f32.mrb[0].mxu0
      %v8971 = vadd.f32 0.0, %v8970
      %v8972 = vpop.f32.mrb[0].mxu0
      %8973 = vmatprep.mubr.f32.mxu0 0.0
      %8974 = vmatmul.mubr.f32.gmra.mrb[0].mxu0 %v8850
      %v8975 = vpop.f32.mrb[0].mxu0
      %v8976 = vadd.f32 0.0, %v8975
      %v8977 = vpop.f32.mrb[0].mxu0
      %8978 = vmatprep.mubr.f32.mxu0 0.0
      %8979 = vmatmul.mubr.f32.gmra.mrb[0].mxu0 %v8853
      %v8980 = vpop.f32.mrb[0].mxu0
      %v8981 = vadd.f32 0.0, %v8980
      %v8982 = vpop.f32.mrb[0].mxu0
      %8983 = vmatprep.mubr.f32.mxu0 0.0
      %8984 = vmatmul.mubr.f32.gmra.mrb[0].mxu0 %v8856
      %v8985 = vpop.f32.mrb[0].mxu0
      %v8986 = vadd.f32 0.0, %v8985
      %v8987 = vpop.f32.mrb[0].mxu0
      %8988 = vmatprep.mubr.f32.mxu0 0.0
      %8989 = vmatmul.mubr.f32.gmra.mrb[0].mxu0 %v8859
      %v8990 = vpop.f32.mrb[0].mxu0
      %v8991 = vadd.f32 0.0, %v8990
      %v8992 = vpop.f32.mrb[0].mxu0
      %8993 = vmatprep.mubr.f32.mxu0 0.0
      %8994 = vmatmul.mubr.f32.gmra.mrb[0].mxu0 %v8862
      %v8995 = vpop.f32.mrb[0].mxu0
      %v8996 = vadd.f32 0.0, %v8995
      %v8997 = vpop.f32.mrb[0].mxu0
      %8998 = vmatprep.mubr.f32.mxu0 0.0
      %8999 = vmatmul.mubr.f32.gmra.mrb[0].mxu0 %v8865
      %v9000 = vpop.f32.mrb[0].mxu0
      %v9001 = vadd.f32 0.0, %v9000
      %v9002 = vpop.f32.mrb[0].mxu0
      %9003 = vmatprep.mubr.f32.mxu0 0.0
      %9004 = vmatmul.mubr.f32.gmra.mrb[0].mxu0 %v8868
      %v9005 = vpop.f32.mrb[0].mxu0
      %v9006 = vadd.f32 0.0, %v9005
      %v9007 = vpop.f32.mrb[0].mxu0
      %9008 = vmatprep.mubr.f32.mxu0 0.0
      %9009 = vmatmul.mubr.f32.gmra.mrb[0].mxu0 %v8871
      %v9010 = vpop.f32.mrb[0].mxu0
      %v9011 = vadd.f32 0.0, %v9010
      %v9012 = vpop.f32.mrb[0].mxu0
      %9013 = vmatprep.mubr.f32.mxu0 0.0
      %9014 = vmatmul.mubr.f32.gmra.mrb[0].mxu0 %v8874
      %v9015 = vpop.f32.mrb[0].mxu0
      %v9016 = vadd.f32 0.0, %v9015
      %v9017 = vpop.f32.mrb[0].mxu0
      %9018 = vmatprep.mubr.f32.mxu0 0.0
      %9019 = vmatmul.mubr.f32.gmra.mrb[0].mxu0 %v8877
      %v9020 = vpop.f32.mrb[0].mxu0
      %v9021 = vadd.f32 0.0, %v9020
      %v9022 = vpop.f32.mrb[0].mxu0
      %9023 = vdwg.mxu0
      %v9024 = vadd.f32 %v8774, %v8946
      %v9025 = vadd.f32 %v8775, %v8951
      %v9026 = vadd.f32 %v8776, %v8956
      %v9027 = vadd.f32 %v8777, %v8961
      %v9028 = vadd.f32 %v8778, %v8966
      %v9029 = vadd.f32 %v8779, %v8971
      %v9030 = vadd.f32 %v8780, %v8976
      %v9031 = vadd.f32 %v8781, %v8981
      %v9032 = vadd.f32 %v8782, %v8986
      %v9033 = vadd.f32 %v8783, %v8991
      %v9034 = vadd.f32 %v8784, %v8996
      %v9035 = vadd.f32 %v8785, %v9001
      %v9036 = vadd.f32 %v8786, %v9006
      %v9037 = vadd.f32 %v8787, %v9011
      %v9038 = vadd.f32 %v8788, %v9016
      %v9039 = vadd.f32 %v8789, %v9021
      %s9040 = scalar_lea.vmem %s10, 512
      %v9041 = vld [vmem:[%s9040] sm:$0xff]
      %v9042 = vld [vmem:[%s9040 + $0x8] sm:$0xff]
      %v9043 = vld [vmem:[%s9040 + $0x10] sm:$0xff]
      %v9044 = vld [vmem:[%s9040 + $0x18] sm:$0xff]
      %v9045 = vld [vmem:[%s9040 + $0x20] sm:$0xff]
      %v9046 = vld [vmem:[%s9040 + $0x28] sm:$0xff]
      %v9047 = vld [vmem:[%s9040 + $0x30] sm:$0xff]
      %v9048 = vld [vmem:[%s9040 + $0x38] sm:$0xff]
      %v9049 = vld [vmem:[%s9040 + $0x40] sm:$0xff]
      %v9050 = vld [vmem:[%s9040 + $0x48] sm:$0xff]
      %v9051 = vld [vmem:[%s9040 + $0x50] sm:$0xff]
      %v9052 = vld [vmem:[%s9040 + $0x58] sm:$0xff]
      %v9053 = vld [vmem:[%s9040 + $0x60] sm:$0xff]
      %v9054 = vld [vmem:[%s9040 + $0x68] sm:$0xff]
      %v9055 = vld [vmem:[%s9040 + $0x70] sm:$0xff]
      %v9056 = vld [vmem:[%s9040 + $0x78] sm:$0xff]
      %9057 = vrot.lane.b32.xlu0 %v8003, 124
      %v9058 = vpop.permute.xlu0 %9057
      %9059 = vrot.lane.b32.xlu0 %v8008, 124
      %v9060 = vpop.permute.xlu0 %9059
      %9061 = vrot.lane.b32.xlu0 %v8013, 124
      %v9062 = vpop.permute.xlu0 %9061
      %9063 = vrot.lane.b32.xlu0 %v8018, 124
      %v9064 = vpop.permute.xlu0 %9063
      %9065 = vrot.lane.b32.xlu0 %v8023, 124
      %v9066 = vpop.permute.xlu0 %9065
      %9067 = vrot.lane.b32.xlu0 %v8028, 124
      %v9068 = vpop.permute.xlu0 %9067
      %9069 = vrot.lane.b32.xlu0 %v8033, 124
      %v9070 = vpop.permute.xlu0 %9069
      %9071 = vrot.lane.b32.xlu0 %v8038, 124
      %v9072 = vpop.permute.xlu0 %9071
      %v9082 = vsel %vm6306, %v9041, 0
      %v9085 = vsel %vm6306, %v9042, 0
      %v9088 = vsel %vm6306, %v9043, 0
      %v9091 = vsel %vm6306, %v9044, 0
      %v9094 = vsel %vm6306, %v9045, 0
      %v9097 = vsel %vm6306, %v9046, 0
      %v9100 = vsel %vm6306, %v9047, 0
      %v9103 = vsel %vm6306, %v9048, 0
      %v9106 = vsel %vm6306, %v9049, 0
      %v9109 = vsel %vm6306, %v9050, 0
      %v9112 = vsel %vm6306, %v9051, 0
      %v9115 = vsel %vm6306, %v9052, 0
      %v9118 = vsel %vm6306, %v9053, 0
      %v9121 = vsel %vm6306, %v9054, 0
      %v9124 = vsel %vm6306, %v9055, 0
      %v9127 = vsel %vm6306, %v9056, 0
      %9129 = vmatprep.subr.mxu0 0.0
      %9130 = vmatpush1.msra.mxu0 %v9058
      %9131 = vmatprep.subr.mxu0 0.0
      %9132 = vmatpush1.msra.mxu0 %v9060
      %9133 = vmatprep.subr.mxu0 0.0
      %9134 = vmatpush1.msra.mxu0 %v9062
      %9135 = vmatprep.subr.mxu0 0.0
      %9136 = vmatpush1.msra.mxu0 %v9064
      %9137 = vmatprep.subr.mxu0 0.0
      %9138 = vmatpush1.msra.mxu0 %v9066
      %9139 = vmatprep.subr.mxu0 0.0
      %9140 = vmatpush1.msra.mxu0 %v9068
      %9141 = vmatprep.subr.mxu0 0.0
      %9142 = vmatpush1.msra.mxu0 %v9070
      %9143 = vmatprep.subr.mxu0 0.0
      %9144 = vmatpush1.msra.mxu0 %v9072
      %9145 = vmatprep.subr.mxu0 0.0
      %9146 = vmatpush1.msra.mxu0 0.0
      %9147 = vmatprep.subr.mxu0 0.0
      %9148 = vmatpush1.msra.mxu0 0.0
      %9149 = vmatprep.subr.mxu0 0.0
      %9150 = vmatpush1.msra.mxu0 0.0
      %9151 = vmatprep.subr.mxu0 0.0
      %9152 = vmatpush1.msra.mxu0 0.0
      %9153 = vmatprep.subr.mxu0 0.0
      %9154 = vmatpush1.msra.mxu0 0.0
      %9155 = vmatprep.subr.mxu0 0.0
      %9156 = vmatpush1.msra.mxu0 0.0
      %9157 = vmatprep.subr.mxu0 0.0
      %9158 = vmatpush1.msra.mxu0 0.0
      %9159 = vmatprep.subr.mxu0 0.0
      %9160 = vmatpush1.msra.mxu0 0.0
      %9161 = vmatprep.subr.mxu0 0.0
      %9162 = vmatpush1.msra.mxu0 0.0
      %9163 = vmatprep.subr.mxu0 0.0
      %9164 = vmatpush1.msra.mxu0 0.0
      %9165 = vmatprep.subr.mxu0 0.0
      %9166 = vmatpush1.msra.mxu0 0.0
      %9167 = vmatprep.subr.mxu0 0.0
      %9168 = vmatpush1.msra.mxu0 0.0
      %9169 = vmatprep.subr.mxu0 0.0
      %9170 = vmatpush1.msra.mxu0 0.0
      %9171 = vmatprep.subr.mxu0 0.0
      %9172 = vmatpush1.msra.mxu0 0.0
      %9173 = vmatprep.subr.mxu0 0.0
      %9174 = vmatpush1.msra.mxu0 0.0
      %9175 = vmatprep.subr.mxu0 0.0
      %9176 = vmatpush1.msra.mxu0 0.0
      %9177 = vmatprep.subr.mxu0 0.0
      %9178 = vmatpush1.msra.mxu0 0.0
      %9179 = vmatprep.subr.mxu0 0.0
      %9180 = vmatpush1.msra.mxu0 0.0
      %9181 = vmatprep.subr.mxu0 0.0
      %9182 = vmatpush1.msra.mxu0 0.0
      %9183 = vmatprep.subr.mxu0 0.0
      %9184 = vmatpush1.msra.mxu0 0.0
      %9185 = vmatprep.subr.mxu0 0.0
      %9186 = vmatpush1.msra.mxu0 0.0
      %9187 = vmatprep.subr.mxu0 0.0
      %9188 = vmatpush1.msra.mxu0 0.0
      %9189 = vmatprep.subr.mxu0 0.0
      %9190 = vmatpush1.msra.mxu0 0.0
      %9191 = vmatprep.subr.mxu0 0.0
      %9192 = vmatpush1.msra.mxu0 0.0
      %9193 = vmatprep.mubr.f32.mxu0 0.0
      %9194 = vmatmul.mubr.f32.gmra.mrb[0].mxu0 %v9082
      %v9195 = vpop.f32.mrb[0].mxu0
      %v9196 = vadd.f32 0.0, %v9195
      %v9197 = vpop.f32.mrb[0].mxu0
      %9198 = vmatprep.mubr.f32.mxu0 0.0
      %9199 = vmatmul.mubr.f32.gmra.mrb[0].mxu0 %v9085
      %v9200 = vpop.f32.mrb[0].mxu0
      %v9201 = vadd.f32 0.0, %v9200
      %v9202 = vpop.f32.mrb[0].mxu0
      %9203 = vmatprep.mubr.f32.mxu0 0.0
      %9204 = vmatmul.mubr.f32.gmra.mrb[0].mxu0 %v9088
      %v9205 = vpop.f32.mrb[0].mxu0
      %v9206 = vadd.f32 0.0, %v9205
      %v9207 = vpop.f32.mrb[0].mxu0
      %9208 = vmatprep.mubr.f32.mxu0 0.0
      %9209 = vmatmul.mubr.f32.gmra.mrb[0].mxu0 %v9091
      %v9210 = vpop.f32.mrb[0].mxu0
      %v9211 = vadd.f32 0.0, %v9210
      %v9212 = vpop.f32.mrb[0].mxu0
      %9213 = vmatprep.mubr.f32.mxu0 0.0
      %9214 = vmatmul.mubr.f32.gmra.mrb[0].mxu0 %v9094
      %v9215 = vpop.f32.mrb[0].mxu0
      %v9216 = vadd.f32 0.0, %v9215
      %v9217 = vpop.f32.mrb[0].mxu0
      %9218 = vmatprep.mubr.f32.mxu0 0.0
      %9219 = vmatmul.mubr.f32.gmra.mrb[0].mxu0 %v9097
      %v9220 = vpop.f32.mrb[0].mxu0
      %v9221 = vadd.f32 0.0, %v9220
      %v9222 = vpop.f32.mrb[0].mxu0
      %9223 = vmatprep.mubr.f32.mxu0 0.0
      %9224 = vmatmul.mubr.f32.gmra.mrb[0].mxu0 %v9100
      %v9225 = vpop.f32.mrb[0].mxu0
      %v9226 = vadd.f32 0.0, %v9225
      %v9227 = vpop.f32.mrb[0].mxu0
      %9228 = vmatprep.mubr.f32.mxu0 0.0
      %9229 = vmatmul.mubr.f32.gmra.mrb[0].mxu0 %v9103
      %v9230 = vpop.f32.mrb[0].mxu0
      %v9231 = vadd.f32 0.0, %v9230
      %v9232 = vpop.f32.mrb[0].mxu0
      %9233 = vmatprep.mubr.f32.mxu0 0.0
      %9234 = vmatmul.mubr.f32.gmra.mrb[0].mxu0 %v9106
      %v9235 = vpop.f32.mrb[0].mxu0
      %v9236 = vadd.f32 0.0, %v9235
      %v9237 = vpop.f32.mrb[0].mxu0
      %9238 = vmatprep.mubr.f32.mxu0 0.0
      %9239 = vmatmul.mubr.f32.gmra.mrb[0].mxu0 %v9109
      %v9240 = vpop.f32.mrb[0].mxu0
      %v9241 = vadd.f32 0.0, %v9240
      %v9242 = vpop.f32.mrb[0].mxu0
      %9243 = vmatprep.mubr.f32.mxu0 0.0
      %9244 = vmatmul.mubr.f32.gmra.mrb[0].mxu0 %v9112
      %v9245 = vpop.f32.mrb[0].mxu0
      %v9246 = vadd.f32 0.0, %v9245
      %v9247 = vpop.f32.mrb[0].mxu0
      %9248 = vmatprep.mubr.f32.mxu0 0.0
      %9249 = vmatmul.mubr.f32.gmra.mrb[0].mxu0 %v9115
      %v9250 = vpop.f32.mrb[0].mxu0
      %v9251 = vadd.f32 0.0, %v9250
      %v9252 = vpop.f32.mrb[0].mxu0
      %9253 = vmatprep.mubr.f32.mxu0 0.0
      %9254 = vmatmul.mubr.f32.gmra.mrb[0].mxu0 %v9118
      %v9255 = vpop.f32.mrb[0].mxu0
      %v9256 = vadd.f32 0.0, %v9255
      %v9257 = vpop.f32.mrb[0].mxu0
      %9258 = vmatprep.mubr.f32.mxu0 0.0
      %9259 = vmatmul.mubr.f32.gmra.mrb[0].mxu0 %v9121
      %v9260 = vpop.f32.mrb[0].mxu0
      %v9261 = vadd.f32 0.0, %v9260
      %v9262 = vpop.f32.mrb[0].mxu0
      %9263 = vmatprep.mubr.f32.mxu0 0.0
      %9264 = vmatmul.mubr.f32.gmra.mrb[0].mxu0 %v9124
      %v9265 = vpop.f32.mrb[0].mxu0
      %v9266 = vadd.f32 0.0, %v9265
      %v9267 = vpop.f32.mrb[0].mxu0
      %9268 = vmatprep.mubr.f32.mxu0 0.0
      %9269 = vmatmul.mubr.f32.gmra.mrb[0].mxu0 %v9127
      %v9270 = vpop.f32.mrb[0].mxu0
      %v9271 = vadd.f32 0.0, %v9270
      %v9272 = vpop.f32.mrb[0].mxu0
      %9273 = vdwg.mxu0
      %v9274 = vadd.f32 %v9024, %v9196
      %v9275 = vadd.f32 %v9025, %v9201
      %v9276 = vadd.f32 %v9026, %v9206
      %v9277 = vadd.f32 %v9027, %v9211
      %v9278 = vadd.f32 %v9028, %v9216
      %v9279 = vadd.f32 %v9029, %v9221
      %v9280 = vadd.f32 %v9030, %v9226
      %v9281 = vadd.f32 %v9031, %v9231
      %v9282 = vadd.f32 %v9032, %v9236
      %v9283 = vadd.f32 %v9033, %v9241
      %v9284 = vadd.f32 %v9034, %v9246
      %v9285 = vadd.f32 %v9035, %v9251
      %v9286 = vadd.f32 %v9036, %v9256
      %v9287 = vadd.f32 %v9037, %v9261
      %v9288 = vadd.f32 %v9038, %v9266
      %v9289 = vadd.f32 %v9039, %v9271
      %s9290 = scalar_lea.vmem %s10, 640
      %v9291 = vld [vmem:[%s9290] sm:$0xff]
      %v9292 = vld [vmem:[%s9290 + $0x8] sm:$0xff]
      %v9293 = vld [vmem:[%s9290 + $0x10] sm:$0xff]
      %v9294 = vld [vmem:[%s9290 + $0x18] sm:$0xff]
      %v9295 = vld [vmem:[%s9290 + $0x20] sm:$0xff]
      %v9296 = vld [vmem:[%s9290 + $0x28] sm:$0xff]
      %v9297 = vld [vmem:[%s9290 + $0x30] sm:$0xff]
      %v9298 = vld [vmem:[%s9290 + $0x38] sm:$0xff]
      %v9299 = vld [vmem:[%s9290 + $0x40] sm:$0xff]
      %v9300 = vld [vmem:[%s9290 + $0x48] sm:$0xff]
      %v9301 = vld [vmem:[%s9290 + $0x50] sm:$0xff]
      %v9302 = vld [vmem:[%s9290 + $0x58] sm:$0xff]
      %v9303 = vld [vmem:[%s9290 + $0x60] sm:$0xff]
      %v9304 = vld [vmem:[%s9290 + $0x68] sm:$0xff]
      %v9305 = vld [vmem:[%s9290 + $0x70] sm:$0xff]
      %v9306 = vld [vmem:[%s9290 + $0x78] sm:$0xff]
      %9307 = vrot.lane.b32.xlu0 %v8003, 123
      %v9308 = vpop.permute.xlu0 %9307
      %9309 = vrot.lane.b32.xlu0 %v8008, 123
      %v9310 = vpop.permute.xlu0 %9309
      %9311 = vrot.lane.b32.xlu0 %v8013, 123
      %v9312 = vpop.permute.xlu0 %9311
      %9313 = vrot.lane.b32.xlu0 %v8018, 123
      %v9314 = vpop.permute.xlu0 %9313
      %9315 = vrot.lane.b32.xlu0 %v8023, 123
      %v9316 = vpop.permute.xlu0 %9315
      %9317 = vrot.lane.b32.xlu0 %v8028, 123
      %v9318 = vpop.permute.xlu0 %9317
      %9319 = vrot.lane.b32.xlu0 %v8033, 123
      %v9320 = vpop.permute.xlu0 %9319
      %9321 = vrot.lane.b32.xlu0 %v8038, 123
      %v9322 = vpop.permute.xlu0 %9321
      %v9332 = vsel %vm6306, %v9291, 0
      %v9335 = vsel %vm6306, %v9292, 0
      %v9338 = vsel %vm6306, %v9293, 0
      %v9341 = vsel %vm6306, %v9294, 0
      %v9344 = vsel %vm6306, %v9295, 0
      %v9347 = vsel %vm6306, %v9296, 0
      %v9350 = vsel %vm6306, %v9297, 0
      %v9353 = vsel %vm6306, %v9298, 0
      %v9356 = vsel %vm6306, %v9299, 0
      %v9359 = vsel %vm6306, %v9300, 0
      %v9362 = vsel %vm6306, %v9301, 0
      %v9365 = vsel %vm6306, %v9302, 0
      %v9368 = vsel %vm6306, %v9303, 0
      %v9371 = vsel %vm6306, %v9304, 0
      %v9374 = vsel %vm6306, %v9305, 0
      %v9377 = vsel %vm6306, %v9306, 0
      %9379 = vmatprep.subr.mxu0 0.0
      %9380 = vmatpush1.msra.mxu0 %v9308
      %9381 = vmatprep.subr.mxu0 0.0
      %9382 = vmatpush1.msra.mxu0 %v9310
      %9383 = vmatprep.subr.mxu0 0.0
      %9384 = vmatpush1.msra.mxu0 %v9312
      %9385 = vmatprep.subr.mxu0 0.0
      %9386 = vmatpush1.msra.mxu0 %v9314
      %9387 = vmatprep.subr.mxu0 0.0
      %9388 = vmatpush1.msra.mxu0 %v9316
      %9389 = vmatprep.subr.mxu0 0.0
      %9390 = vmatpush1.msra.mxu0 %v9318
      %9391 = vmatprep.subr.mxu0 0.0
      %9392 = vmatpush1.msra.mxu0 %v9320
      %9393 = vmatprep.subr.mxu0 0.0
      %9394 = vmatpush1.msra.mxu0 %v9322
      %9395 = vmatprep.subr.mxu0 0.0
      %9396 = vmatpush1.msra.mxu0 0.0
      %9397 = vmatprep.subr.mxu0 0.0
      %9398 = vmatpush1.msra.mxu0 0.0
      %9399 = vmatprep.subr.mxu0 0.0
      %9400 = vmatpush1.msra.mxu0 0.0
      %9401 = vmatprep.subr.mxu0 0.0
      %9402 = vmatpush1.msra.mxu0 0.0
      %9403 = vmatprep.subr.mxu0 0.0
      %9404 = vmatpush1.msra.mxu0 0.0
      %9405 = vmatprep.subr.mxu0 0.0
      %9406 = vmatpush1.msra.mxu0 0.0
      %9407 = vmatprep.subr.mxu0 0.0
      %9408 = vmatpush1.msra.mxu0 0.0
      %9409 = vmatprep.subr.mxu0 0.0
      %9410 = vmatpush1.msra.mxu0 0.0
      %9411 = vmatprep.subr.mxu0 0.0
      %9412 = vmatpush1.msra.mxu0 0.0
      %9413 = vmatprep.subr.mxu0 0.0
      %9414 = vmatpush1.msra.mxu0 0.0
      %9415 = vmatprep.subr.mxu0 0.0
      %9416 = vmatpush1.msra.mxu0 0.0
      %9417 = vmatprep.subr.mxu0 0.0
      %9418 = vmatpush1.msra.mxu0 0.0
      %9419 = vmatprep.subr.mxu0 0.0
      %9420 = vmatpush1.msra.mxu0 0.0
      %9421 = vmatprep.subr.mxu0 0.0
      %9422 = vmatpush1.msra.mxu0 0.0
      %9423 = vmatprep.subr.mxu0 0.0
      %9424 = vmatpush1.msra.mxu0 0.0
      %9425 = vmatprep.subr.mxu0 0.0
      %9426 = vmatpush1.msra.mxu0 0.0
      %9427 = vmatprep.subr.mxu0 0.0
      %9428 = vmatpush1.msra.mxu0 0.0
      %9429 = vmatprep.subr.mxu0 0.0
      %9430 = vmatpush1.msra.mxu0 0.0
      %9431 = vmatprep.subr.mxu0 0.0
      %9432 = vmatpush1.msra.mxu0 0.0
      %9433 = vmatprep.subr.mxu0 0.0
      %9434 = vmatpush1.msra.mxu0 0.0
      %9435 = vmatprep.subr.mxu0 0.0
      %9436 = vmatpush1.msra.mxu0 0.0
      %9437 = vmatprep.subr.mxu0 0.0
      %9438 = vmatpush1.msra.mxu0 0.0
      %9439 = vmatprep.subr.mxu0 0.0
      %9440 = vmatpush1.msra.mxu0 0.0
      %9441 = vmatprep.subr.mxu0 0.0
      %9442 = vmatpush1.msra.mxu0 0.0
      %9443 = vmatprep.mubr.f32.mxu0 0.0
      %9444 = vmatmul.mubr.f32.gmra.mrb[0].mxu0 %v9332
      %v9445 = vpop.f32.mrb[0].mxu0
      %v9446 = vadd.f32 0.0, %v9445
      %v9447 = vpop.f32.mrb[0].mxu0
      %9448 = vmatprep.mubr.f32.mxu0 0.0
      %9449 = vmatmul.mubr.f32.gmra.mrb[0].mxu0 %v9335
      %v9450 = vpop.f32.mrb[0].mxu0
      %v9451 = vadd.f32 0.0, %v9450
      %v9452 = vpop.f32.mrb[0].mxu0
      %9453 = vmatprep.mubr.f32.mxu0 0.0
      %9454 = vmatmul.mubr.f32.gmra.mrb[0].mxu0 %v9338
      %v9455 = vpop.f32.mrb[0].mxu0
      %v9456 = vadd.f32 0.0, %v9455
      %v9457 = vpop.f32.mrb[0].mxu0
      %9458 = vmatprep.mubr.f32.mxu0 0.0
      %9459 = vmatmul.mubr.f32.gmra.mrb[0].mxu0 %v9341
      %v9460 = vpop.f32.mrb[0].mxu0
      %v9461 = vadd.f32 0.0, %v9460
      %v9462 = vpop.f32.mrb[0].mxu0
      %9463 = vmatprep.mubr.f32.mxu0 0.0
      %9464 = vmatmul.mubr.f32.gmra.mrb[0].mxu0 %v9344
      %v9465 = vpop.f32.mrb[0].mxu0
      %v9466 = vadd.f32 0.0, %v9465
      %v9467 = vpop.f32.mrb[0].mxu0
      %9468 = vmatprep.mubr.f32.mxu0 0.0
      %9469 = vmatmul.mubr.f32.gmra.mrb[0].mxu0 %v9347
      %v9470 = vpop.f32.mrb[0].mxu0
      %v9471 = vadd.f32 0.0, %v9470
      %v9472 = vpop.f32.mrb[0].mxu0
      %9473 = vmatprep.mubr.f32.mxu0 0.0
      %9474 = vmatmul.mubr.f32.gmra.mrb[0].mxu0 %v9350
      %v9475 = vpop.f32.mrb[0].mxu0
      %v9476 = vadd.f32 0.0, %v9475
      %v9477 = vpop.f32.mrb[0].mxu0
      %9478 = vmatprep.mubr.f32.mxu0 0.0
      %9479 = vmatmul.mubr.f32.gmra.mrb[0].mxu0 %v9353
      %v9480 = vpop.f32.mrb[0].mxu0
      %v9481 = vadd.f32 0.0, %v9480
      %v9482 = vpop.f32.mrb[0].mxu0
      %9483 = vmatprep.mubr.f32.mxu0 0.0
      %9484 = vmatmul.mubr.f32.gmra.mrb[0].mxu0 %v9356
      %v9485 = vpop.f32.mrb[0].mxu0
      %v9486 = vadd.f32 0.0, %v9485
      %v9487 = vpop.f32.mrb[0].mxu0
      %9488 = vmatprep.mubr.f32.mxu0 0.0
      %9489 = vmatmul.mubr.f32.gmra.mrb[0].mxu0 %v9359
      %v9490 = vpop.f32.mrb[0].mxu0
      %v9491 = vadd.f32 0.0, %v9490
      %v9492 = vpop.f32.mrb[0].mxu0
      %9493 = vmatprep.mubr.f32.mxu0 0.0
      %9494 = vmatmul.mubr.f32.gmra.mrb[0].mxu0 %v9362
      %v9495 = vpop.f32.mrb[0].mxu0
      %v9496 = vadd.f32 0.0, %v9495
      %v9497 = vpop.f32.mrb[0].mxu0
      %9498 = vmatprep.mubr.f32.mxu0 0.0
      %9499 = vmatmul.mubr.f32.gmra.mrb[0].mxu0 %v9365
      %v9500 = vpop.f32.mrb[0].mxu0
      %v9501 = vadd.f32 0.0, %v9500
      %v9502 = vpop.f32.mrb[0].mxu0
      %9503 = vmatprep.mubr.f32.mxu0 0.0
      %9504 = vmatmul.mubr.f32.gmra.mrb[0].mxu0 %v9368
      %v9505 = vpop.f32.mrb[0].mxu0
      %v9506 = vadd.f32 0.0, %v9505
      %v9507 = vpop.f32.mrb[0].mxu0
      %9508 = vmatprep.mubr.f32.mxu0 0.0
      %9509 = vmatmul.mubr.f32.gmra.mrb[0].mxu0 %v9371
      %v9510 = vpop.f32.mrb[0].mxu0
      %v9511 = vadd.f32 0.0, %v9510
      %v9512 = vpop.f32.mrb[0].mxu0
      %9513 = vmatprep.mubr.f32.mxu0 0.0
      %9514 = vmatmul.mubr.f32.gmra.mrb[0].mxu0 %v9374
      %v9515 = vpop.f32.mrb[0].mxu0
      %v9516 = vadd.f32 0.0, %v9515
      %v9517 = vpop.f32.mrb[0].mxu0
      %9518 = vmatprep.mubr.f32.mxu0 0.0
      %9519 = vmatmul.mubr.f32.gmra.mrb[0].mxu0 %v9377
      %v9520 = vpop.f32.mrb[0].mxu0
      %v9521 = vadd.f32 0.0, %v9520
      %v9522 = vpop.f32.mrb[0].mxu0
      %9523 = vdwg.mxu0
      %v9524 = vadd.f32 %v9274, %v9446
      %v9525 = vadd.f32 %v9275, %v9451
      %v9526 = vadd.f32 %v9276, %v9456
      %v9527 = vadd.f32 %v9277, %v9461
      %v9528 = vadd.f32 %v9278, %v9466
      %v9529 = vadd.f32 %v9279, %v9471
      %v9530 = vadd.f32 %v9280, %v9476
      %v9531 = vadd.f32 %v9281, %v9481
      %v9532 = vadd.f32 %v9282, %v9486
      %v9533 = vadd.f32 %v9283, %v9491
      %v9534 = vadd.f32 %v9284, %v9496
      %v9535 = vadd.f32 %v9285, %v9501
      %v9536 = vadd.f32 %v9286, %v9506
      %v9537 = vadd.f32 %v9287, %v9511
      %v9538 = vadd.f32 %v9288, %v9516
      %v9539 = vadd.f32 %v9289, %v9521
      %s9540 = scalar_lea.vmem %s10, 768
      %v9541 = vld [vmem:[%s9540] sm:$0xff]
      %v9542 = vld [vmem:[%s9540 + $0x8] sm:$0xff]
      %v9543 = vld [vmem:[%s9540 + $0x10] sm:$0xff]
      %v9544 = vld [vmem:[%s9540 + $0x18] sm:$0xff]
      %v9545 = vld [vmem:[%s9540 + $0x20] sm:$0xff]
      %v9546 = vld [vmem:[%s9540 + $0x28] sm:$0xff]
      %v9547 = vld [vmem:[%s9540 + $0x30] sm:$0xff]
      %v9548 = vld [vmem:[%s9540 + $0x38] sm:$0xff]
      %v9549 = vld [vmem:[%s9540 + $0x40] sm:$0xff]
      %v9550 = vld [vmem:[%s9540 + $0x48] sm:$0xff]
      %v9551 = vld [vmem:[%s9540 + $0x50] sm:$0xff]
      %v9552 = vld [vmem:[%s9540 + $0x58] sm:$0xff]
      %v9553 = vld [vmem:[%s9540 + $0x60] sm:$0xff]
      %v9554 = vld [vmem:[%s9540 + $0x68] sm:$0xff]
      %v9555 = vld [vmem:[%s9540 + $0x70] sm:$0xff]
      %v9556 = vld [vmem:[%s9540 + $0x78] sm:$0xff]
      %9557 = vrot.lane.b32.xlu0 %v8003, 122
      %v9558 = vpop.permute.xlu0 %9557
      %9559 = vrot.lane.b32.xlu0 %v8008, 122
      %v9560 = vpop.permute.xlu0 %9559
      %9561 = vrot.lane.b32.xlu0 %v8013, 122
      %v9562 = vpop.permute.xlu0 %9561
      %9563 = vrot.lane.b32.xlu0 %v8018, 122
      %v9564 = vpop.permute.xlu0 %9563
      %9565 = vrot.lane.b32.xlu0 %v8023, 122
      %v9566 = vpop.permute.xlu0 %9565
      %9567 = vrot.lane.b32.xlu0 %v8028, 122
      %v9568 = vpop.permute.xlu0 %9567
      %9569 = vrot.lane.b32.xlu0 %v8033, 122
      %v9570 = vpop.permute.xlu0 %9569
      %9571 = vrot.lane.b32.xlu0 %v8038, 122
      %v9572 = vpop.permute.xlu0 %9571
      %v9582 = vsel %vm6306, %v9541, 0
      %v9585 = vsel %vm6306, %v9542, 0
      %v9588 = vsel %vm6306, %v9543, 0
      %v9591 = vsel %vm6306, %v9544, 0
      %v9594 = vsel %vm6306, %v9545, 0
      %v9597 = vsel %vm6306, %v9546, 0
      %v9600 = vsel %vm6306, %v9547, 0
      %v9603 = vsel %vm6306, %v9548, 0
      %v9606 = vsel %vm6306, %v9549, 0
      %v9609 = vsel %vm6306, %v9550, 0
      %v9612 = vsel %vm6306, %v9551, 0
      %v9615 = vsel %vm6306, %v9552, 0
      %v9618 = vsel %vm6306, %v9553, 0
      %v9621 = vsel %vm6306, %v9554, 0
      %v9624 = vsel %vm6306, %v9555, 0
      %v9627 = vsel %vm6306, %v9556, 0
      %9629 = vmatprep.subr.mxu0 0.0
      %9630 = vmatpush1.msra.mxu0 %v9558
      %9631 = vmatprep.subr.mxu0 0.0
      %9632 = vmatpush1.msra.mxu0 %v9560
      %9633 = vmatprep.subr.mxu0 0.0
      %9634 = vmatpush1.msra.mxu0 %v9562
      %9635 = vmatprep.subr.mxu0 0.0
      %9636 = vmatpush1.msra.mxu0 %v9564
      %9637 = vmatprep.subr.mxu0 0.0
      %9638 = vmatpush1.msra.mxu0 %v9566
      %9639 = vmatprep.subr.mxu0 0.0
      %9640 = vmatpush1.msra.mxu0 %v9568
      %9641 = vmatprep.subr.mxu0 0.0
      %9642 = vmatpush1.msra.mxu0 %v9570
      %9643 = vmatprep.subr.mxu0 0.0
      %9644 = vmatpush1.msra.mxu0 %v9572
      %9645 = vmatprep.subr.mxu0 0.0
      %9646 = vmatpush1.msra.mxu0 0.0
      %9647 = vmatprep.subr.mxu0 0.0
      %9648 = vmatpush1.msra.mxu0 0.0
      %9649 = vmatprep.subr.mxu0 0.0
      %9650 = vmatpush1.msra.mxu0 0.0
      %9651 = vmatprep.subr.mxu0 0.0
      %9652 = vmatpush1.msra.mxu0 0.0
      %9653 = vmatprep.subr.mxu0 0.0
      %9654 = vmatpush1.msra.mxu0 0.0
      %9655 = vmatprep.subr.mxu0 0.0
      %9656 = vmatpush1.msra.mxu0 0.0
      %9657 = vmatprep.subr.mxu0 0.0
      %9658 = vmatpush1.msra.mxu0 0.0
      %9659 = vmatprep.subr.mxu0 0.0
      %9660 = vmatpush1.msra.mxu0 0.0
      %9661 = vmatprep.subr.mxu0 0.0
      %9662 = vmatpush1.msra.mxu0 0.0
      %9663 = vmatprep.subr.mxu0 0.0
      %9664 = vmatpush1.msra.mxu0 0.0
      %9665 = vmatprep.subr.mxu0 0.0
      %9666 = vmatpush1.msra.mxu0 0.0
      %9667 = vmatprep.subr.mxu0 0.0
      %9668 = vmatpush1.msra.mxu0 0.0
      %9669 = vmatprep.subr.mxu0 0.0
      %9670 = vmatpush1.msra.mxu0 0.0
      %9671 = vmatprep.subr.mxu0 0.0
      %9672 = vmatpush1.msra.mxu0 0.0
      %9673 = vmatprep.subr.mxu0 0.0
      %9674 = vmatpush1.msra.mxu0 0.0
      %9675 = vmatprep.subr.mxu0 0.0
      %9676 = vmatpush1.msra.mxu0 0.0
      %9677 = vmatprep.subr.mxu0 0.0
      %9678 = vmatpush1.msra.mxu0 0.0
      %9679 = vmatprep.subr.mxu0 0.0
      %9680 = vmatpush1.msra.mxu0 0.0
      %9681 = vmatprep.subr.mxu0 0.0
      %9682 = vmatpush1.msra.mxu0 0.0
      %9683 = vmatprep.subr.mxu0 0.0
      %9684 = vmatpush1.msra.mxu0 0.0
      %9685 = vmatprep.subr.mxu0 0.0
      %9686 = vmatpush1.msra.mxu0 0.0
      %9687 = vmatprep.subr.mxu0 0.0
      %9688 = vmatpush1.msra.mxu0 0.0
      %9689 = vmatprep.subr.mxu0 0.0
      %9690 = vmatpush1.msra.mxu0 0.0
      %9691 = vmatprep.subr.mxu0 0.0
      %9692 = vmatpush1.msra.mxu0 0.0
      %9693 = vmatprep.mubr.f32.mxu0 0.0
      %9694 = vmatmul.mubr.f32.gmra.mrb[0].mxu0 %v9582
      %v9695 = vpop.f32.mrb[0].mxu0
      %v9696 = vadd.f32 0.0, %v9695
      %v9697 = vpop.f32.mrb[0].mxu0
      %9698 = vmatprep.mubr.f32.mxu0 0.0
      %9699 = vmatmul.mubr.f32.gmra.mrb[0].mxu0 %v9585
      %v9700 = vpop.f32.mrb[0].mxu0
      %v9701 = vadd.f32 0.0, %v9700
      %v9702 = vpop.f32.mrb[0].mxu0
      %9703 = vmatprep.mubr.f32.mxu0 0.0
      %9704 = vmatmul.mubr.f32.gmra.mrb[0].mxu0 %v9588
      %v9705 = vpop.f32.mrb[0].mxu0
      %v9706 = vadd.f32 0.0, %v9705
      %v9707 = vpop.f32.mrb[0].mxu0
      %9708 = vmatprep.mubr.f32.mxu0 0.0
      %9709 = vmatmul.mubr.f32.gmra.mrb[0].mxu0 %v9591
      %v9710 = vpop.f32.mrb[0].mxu0
      %v9711 = vadd.f32 0.0, %v9710
      %v9712 = vpop.f32.mrb[0].mxu0
      %9713 = vmatprep.mubr.f32.mxu0 0.0
      %9714 = vmatmul.mubr.f32.gmra.mrb[0].mxu0 %v9594
      %v9715 = vpop.f32.mrb[0].mxu0
      %v9716 = vadd.f32 0.0, %v9715
      %v9717 = vpop.f32.mrb[0].mxu0
      %9718 = vmatprep.mubr.f32.mxu0 0.0
      %9719 = vmatmul.mubr.f32.gmra.mrb[0].mxu0 %v9597
      %v9720 = vpop.f32.mrb[0].mxu0
      %v9721 = vadd.f32 0.0, %v9720
      %v9722 = vpop.f32.mrb[0].mxu0
      %9723 = vmatprep.mubr.f32.mxu0 0.0
      %9724 = vmatmul.mubr.f32.gmra.mrb[0].mxu0 %v9600
      %v9725 = vpop.f32.mrb[0].mxu0
      %v9726 = vadd.f32 0.0, %v9725
      %v9727 = vpop.f32.mrb[0].mxu0
      %9728 = vmatprep.mubr.f32.mxu0 0.0
      %9729 = vmatmul.mubr.f32.gmra.mrb[0].mxu0 %v9603
      %v9730 = vpop.f32.mrb[0].mxu0
      %v9731 = vadd.f32 0.0, %v9730
      %v9732 = vpop.f32.mrb[0].mxu0
      %9733 = vmatprep.mubr.f32.mxu0 0.0
      %9734 = vmatmul.mubr.f32.gmra.mrb[0].mxu0 %v9606
      %v9735 = vpop.f32.mrb[0].mxu0
      %v9736 = vadd.f32 0.0, %v9735
      %v9737 = vpop.f32.mrb[0].mxu0
      %9738 = vmatprep.mubr.f32.mxu0 0.0
      %9739 = vmatmul.mubr.f32.gmra.mrb[0].mxu0 %v9609
      %v9740 = vpop.f32.mrb[0].mxu0
      %v9741 = vadd.f32 0.0, %v9740
      %v9742 = vpop.f32.mrb[0].mxu0
      %9743 = vmatprep.mubr.f32.mxu0 0.0
      %9744 = vmatmul.mubr.f32.gmra.mrb[0].mxu0 %v9612
      %v9745 = vpop.f32.mrb[0].mxu0
      %v9746 = vadd.f32 0.0, %v9745
      %v9747 = vpop.f32.mrb[0].mxu0
      %9748 = vmatprep.mubr.f32.mxu0 0.0
      %9749 = vmatmul.mubr.f32.gmra.mrb[0].mxu0 %v9615
      %v9750 = vpop.f32.mrb[0].mxu0
      %v9751 = vadd.f32 0.0, %v9750
      %v9752 = vpop.f32.mrb[0].mxu0
      %9753 = vmatprep.mubr.f32.mxu0 0.0
      %9754 = vmatmul.mubr.f32.gmra.mrb[0].mxu0 %v9618
      %v9755 = vpop.f32.mrb[0].mxu0
      %v9756 = vadd.f32 0.0, %v9755
      %v9757 = vpop.f32.mrb[0].mxu0
      %9758 = vmatprep.mubr.f32.mxu0 0.0
      %9759 = vmatmul.mubr.f32.gmra.mrb[0].mxu0 %v9621
      %v9760 = vpop.f32.mrb[0].mxu0
      %v9761 = vadd.f32 0.0, %v9760
      %v9762 = vpop.f32.mrb[0].mxu0
      %9763 = vmatprep.mubr.f32.mxu0 0.0
      %9764 = vmatmul.mubr.f32.gmra.mrb[0].mxu0 %v9624
      %v9765 = vpop.f32.mrb[0].mxu0
      %v9766 = vadd.f32 0.0, %v9765
      %v9767 = vpop.f32.mrb[0].mxu0
      %9768 = vmatprep.mubr.f32.mxu0 0.0
      %9769 = vmatmul.mubr.f32.gmra.mrb[0].mxu0 %v9627
      %v9770 = vpop.f32.mrb[0].mxu0
      %v9771 = vadd.f32 0.0, %v9770
      %v9772 = vpop.f32.mrb[0].mxu0
      %9773 = vdwg.mxu0
      %v9774 = vadd.f32 %v9524, %v9696
      %v9775 = vadd.f32 %v9525, %v9701
      %v9776 = vadd.f32 %v9526, %v9706
      %v9777 = vadd.f32 %v9527, %v9711
      %v9778 = vadd.f32 %v9528, %v9716
      %v9779 = vadd.f32 %v9529, %v9721
      %v9780 = vadd.f32 %v9530, %v9726
      %v9781 = vadd.f32 %v9531, %v9731
      %v9782 = vadd.f32 %v9532, %v9736
      %v9783 = vadd.f32 %v9533, %v9741
      %v9784 = vadd.f32 %v9534, %v9746
      %v9785 = vadd.f32 %v9535, %v9751
      %v9786 = vadd.f32 %v9536, %v9756
      %v9787 = vadd.f32 %v9537, %v9761
      %v9788 = vadd.f32 %v9538, %v9766
      %v9789 = vadd.f32 %v9539, %v9771
      %s9790 = scalar_lea.vmem %s10, 896
      %v9791 = vld [vmem:[%s9790] sm:$0xff]
      %v9792 = vld [vmem:[%s9790 + $0x8] sm:$0xff]
      %v9793 = vld [vmem:[%s9790 + $0x10] sm:$0xff]
      %v9794 = vld [vmem:[%s9790 + $0x18] sm:$0xff]
      %v9795 = vld [vmem:[%s9790 + $0x20] sm:$0xff]
      %v9796 = vld [vmem:[%s9790 + $0x28] sm:$0xff]
      %v9797 = vld [vmem:[%s9790 + $0x30] sm:$0xff]
      %v9798 = vld [vmem:[%s9790 + $0x38] sm:$0xff]
      %v9799 = vld [vmem:[%s9790 + $0x40] sm:$0xff]
      %v9800 = vld [vmem:[%s9790 + $0x48] sm:$0xff]
      %v9801 = vld [vmem:[%s9790 + $0x50] sm:$0xff]
      %v9802 = vld [vmem:[%s9790 + $0x58] sm:$0xff]
      %v9803 = vld [vmem:[%s9790 + $0x60] sm:$0xff]
      %v9804 = vld [vmem:[%s9790 + $0x68] sm:$0xff]
      %v9805 = vld [vmem:[%s9790 + $0x70] sm:$0xff]
      %v9806 = vld [vmem:[%s9790 + $0x78] sm:$0xff]
      %9807 = vrot.lane.b32.xlu0 %v8003, 121
      %v9808 = vpop.permute.xlu0 %9807
      %9809 = vrot.lane.b32.xlu0 %v8008, 121
      %v9810 = vpop.permute.xlu0 %9809
      %9811 = vrot.lane.b32.xlu0 %v8013, 121
      %v9812 = vpop.permute.xlu0 %9811
      %9813 = vrot.lane.b32.xlu0 %v8018, 121
      %v9814 = vpop.permute.xlu0 %9813
      %9815 = vrot.lane.b32.xlu0 %v8023, 121
      %v9816 = vpop.permute.xlu0 %9815
      %9817 = vrot.lane.b32.xlu0 %v8028, 121
      %v9818 = vpop.permute.xlu0 %9817
      %9819 = vrot.lane.b32.xlu0 %v8033, 121
      %v9820 = vpop.permute.xlu0 %9819
      %9821 = vrot.lane.b32.xlu0 %v8038, 121
      %v9822 = vpop.permute.xlu0 %9821
      %v9832 = vsel %vm6306, %v9791, 0
      %v9835 = vsel %vm6306, %v9792, 0
      %v9838 = vsel %vm6306, %v9793, 0
      %v9841 = vsel %vm6306, %v9794, 0
      %v9844 = vsel %vm6306, %v9795, 0
      %v9847 = vsel %vm6306, %v9796, 0
      %v9850 = vsel %vm6306, %v9797, 0
      %v9853 = vsel %vm6306, %v9798, 0
      %v9856 = vsel %vm6306, %v9799, 0
      %v9859 = vsel %vm6306, %v9800, 0
      %v9862 = vsel %vm6306, %v9801, 0
      %v9865 = vsel %vm6306, %v9802, 0
      %v9868 = vsel %vm6306, %v9803, 0
      %v9871 = vsel %vm6306, %v9804, 0
      %v9874 = vsel %vm6306, %v9805, 0
      %v9877 = vsel %vm6306, %v9806, 0
      %9879 = vmatprep.subr.mxu0 0.0
      %9880 = vmatpush1.msra.mxu0 %v9808
      %9881 = vmatprep.subr.mxu0 0.0
      %9882 = vmatpush1.msra.mxu0 %v9810
      %9883 = vmatprep.subr.mxu0 0.0
      %9884 = vmatpush1.msra.mxu0 %v9812
      %9885 = vmatprep.subr.mxu0 0.0
      %9886 = vmatpush1.msra.mxu0 %v9814
      %9887 = vmatprep.subr.mxu0 0.0
      %9888 = vmatpush1.msra.mxu0 %v9816
      %9889 = vmatprep.subr.mxu0 0.0
      %9890 = vmatpush1.msra.mxu0 %v9818
      %9891 = vmatprep.subr.mxu0 0.0
      %9892 = vmatpush1.msra.mxu0 %v9820
      %9893 = vmatprep.subr.mxu0 0.0
      %9894 = vmatpush1.msra.mxu0 %v9822
      %9895 = vmatprep.subr.mxu0 0.0
      %9896 = vmatpush1.msra.mxu0 0.0
      %9897 = vmatprep.subr.mxu0 0.0
      %9898 = vmatpush1.msra.mxu0 0.0
      %9899 = vmatprep.subr.mxu0 0.0
      %9900 = vmatpush1.msra.mxu0 0.0
      %9901 = vmatprep.subr.mxu0 0.0
      %9902 = vmatpush1.msra.mxu0 0.0
      %9903 = vmatprep.subr.mxu0 0.0
      %9904 = vmatpush1.msra.mxu0 0.0
      %9905 = vmatprep.subr.mxu0 0.0
      %9906 = vmatpush1.msra.mxu0 0.0
      %9907 = vmatprep.subr.mxu0 0.0
      %9908 = vmatpush1.msra.mxu0 0.0
      %9909 = vmatprep.subr.mxu0 0.0
      %9910 = vmatpush1.msra.mxu0 0.0
      %9911 = vmatprep.subr.mxu0 0.0
      %9912 = vmatpush1.msra.mxu0 0.0
      %9913 = vmatprep.subr.mxu0 0.0
      %9914 = vmatpush1.msra.mxu0 0.0
      %9915 = vmatprep.subr.mxu0 0.0
      %9916 = vmatpush1.msra.mxu0 0.0
      %9917 = vmatprep.subr.mxu0 0.0
      %9918 = vmatpush1.msra.mxu0 0.0
      %9919 = vmatprep.subr.mxu0 0.0
      %9920 = vmatpush1.msra.mxu0 0.0
      %9921 = vmatprep.subr.mxu0 0.0
      %9922 = vmatpush1.msra.mxu0 0.0
      %9923 = vmatprep.subr.mxu0 0.0
      %9924 = vmatpush1.msra.mxu0 0.0
      %9925 = vmatprep.subr.mxu0 0.0
      %9926 = vmatpush1.msra.mxu0 0.0
      %9927 = vmatprep.subr.mxu0 0.0
      %9928 = vmatpush1.msra.mxu0 0.0
      %9929 = vmatprep.subr.mxu0 0.0
      %9930 = vmatpush1.msra.mxu0 0.0
      %9931 = vmatprep.subr.mxu0 0.0
      %9932 = vmatpush1.msra.mxu0 0.0
      %9933 = vmatprep.subr.mxu0 0.0
      %9934 = vmatpush1.msra.mxu0 0.0
      %9935 = vmatprep.subr.mxu0 0.0
      %9936 = vmatpush1.msra.mxu0 0.0
      %9937 = vmatprep.subr.mxu0 0.0
      %9938 = vmatpush1.msra.mxu0 0.0
      %9939 = vmatprep.subr.mxu0 0.0
      %9940 = vmatpush1.msra.mxu0 0.0
      %9941 = vmatprep.subr.mxu0 0.0
      %9942 = vmatpush1.msra.mxu0 0.0
      %9943 = vmatprep.mubr.f32.mxu0 0.0
      %9944 = vmatmul.mubr.f32.gmra.mrb[0].mxu0 %v9832
      %v9945 = vpop.f32.mrb[0].mxu0
      %v9946 = vadd.f32 0.0, %v9945
      %v9947 = vpop.f32.mrb[0].mxu0
      %9948 = vmatprep.mubr.f32.mxu0 0.0
      %9949 = vmatmul.mubr.f32.gmra.mrb[0].mxu0 %v9835
      %v9950 = vpop.f32.mrb[0].mxu0
      %v9951 = vadd.f32 0.0, %v9950
      %v9952 = vpop.f32.mrb[0].mxu0
      %9953 = vmatprep.mubr.f32.mxu0 0.0
      %9954 = vmatmul.mubr.f32.gmra.mrb[0].mxu0 %v9838
      %v9955 = vpop.f32.mrb[0].mxu0
      %v9956 = vadd.f32 0.0, %v9955
      %v9957 = vpop.f32.mrb[0].mxu0
      %9958 = vmatprep.mubr.f32.mxu0 0.0
      %9959 = vmatmul.mubr.f32.gmra.mrb[0].mxu0 %v9841
      %v9960 = vpop.f32.mrb[0].mxu0
      %v9961 = vadd.f32 0.0, %v9960
      %v9962 = vpop.f32.mrb[0].mxu0
      %9963 = vmatprep.mubr.f32.mxu0 0.0
      %9964 = vmatmul.mubr.f32.gmra.mrb[0].mxu0 %v9844
      %v9965 = vpop.f32.mrb[0].mxu0
      %v9966 = vadd.f32 0.0, %v9965
      %v9967 = vpop.f32.mrb[0].mxu0
      %9968 = vmatprep.mubr.f32.mxu0 0.0
      %9969 = vmatmul.mubr.f32.gmra.mrb[0].mxu0 %v9847
      %v9970 = vpop.f32.mrb[0].mxu0
      %v9971 = vadd.f32 0.0, %v9970
      %v9972 = vpop.f32.mrb[0].mxu0
      %9973 = vmatprep.mubr.f32.mxu0 0.0
      %9974 = vmatmul.mubr.f32.gmra.mrb[0].mxu0 %v9850
      %v9975 = vpop.f32.mrb[0].mxu0
      %v9976 = vadd.f32 0.0, %v9975
      %v9977 = vpop.f32.mrb[0].mxu0
      %9978 = vmatprep.mubr.f32.mxu0 0.0
      %9979 = vmatmul.mubr.f32.gmra.mrb[0].mxu0 %v9853
      %v9980 = vpop.f32.mrb[0].mxu0
      %v9981 = vadd.f32 0.0, %v9980
      %v9982 = vpop.f32.mrb[0].mxu0
      %9983 = vmatprep.mubr.f32.mxu0 0.0
      %9984 = vmatmul.mubr.f32.gmra.mrb[0].mxu0 %v9856
      %v9985 = vpop.f32.mrb[0].mxu0
      %v9986 = vadd.f32 0.0, %v9985
      %v9987 = vpop.f32.mrb[0].mxu0
      %9988 = vmatprep.mubr.f32.mxu0 0.0
      %9989 = vmatmul.mubr.f32.gmra.mrb[0].mxu0 %v9859
      %v9990 = vpop.f32.mrb[0].mxu0
      %v9991 = vadd.f32 0.0, %v9990
      %v9992 = vpop.f32.mrb[0].mxu0
      %9993 = vmatprep.mubr.f32.mxu0 0.0
      %9994 = vmatmul.mubr.f32.gmra.mrb[0].mxu0 %v9862
      %v9995 = vpop.f32.mrb[0].mxu0
      %v9996 = vadd.f32 0.0, %v9995
      %v9997 = vpop.f32.mrb[0].mxu0
      %9998 = vmatprep.mubr.f32.mxu0 0.0
      %9999 = vmatmul.mubr.f32.gmra.mrb[0].mxu0 %v9865
      %v10000 = vpop.f32.mrb[0].mxu0
      %v10001 = vadd.f32 0.0, %v10000
      %v10002 = vpop.f32.mrb[0].mxu0
      %10003 = vmatprep.mubr.f32.mxu0 0.0
      %10004 = vmatmul.mubr.f32.gmra.mrb[0].mxu0 %v9868
      %v10005 = vpop.f32.mrb[0].mxu0
      %v10006 = vadd.f32 0.0, %v10005
      %v10007 = vpop.f32.mrb[0].mxu0
      %10008 = vmatprep.mubr.f32.mxu0 0.0
      %10009 = vmatmul.mubr.f32.gmra.mrb[0].mxu0 %v9871
      %v10010 = vpop.f32.mrb[0].mxu0
      %v10011 = vadd.f32 0.0, %v10010
      %v10012 = vpop.f32.mrb[0].mxu0
      %10013 = vmatprep.mubr.f32.mxu0 0.0
      %10014 = vmatmul.mubr.f32.gmra.mrb[0].mxu0 %v9874
      %v10015 = vpop.f32.mrb[0].mxu0
      %v10016 = vadd.f32 0.0, %v10015
      %v10017 = vpop.f32.mrb[0].mxu0
      %10018 = vmatprep.mubr.f32.mxu0 0.0
      %10019 = vmatmul.mubr.f32.gmra.mrb[0].mxu0 %v9877
      %v10020 = vpop.f32.mrb[0].mxu0
      %v10021 = vadd.f32 0.0, %v10020
      %v10022 = vpop.f32.mrb[0].mxu0
      %10023 = vdwg.mxu0
      %v10024 = vadd.f32 %v9774, %v9946
      %v10025 = vadd.f32 %v9775, %v9951
      %v10026 = vadd.f32 %v9776, %v9956
      %v10027 = vadd.f32 %v9777, %v9961
      %v10028 = vadd.f32 %v9778, %v9966
      %v10029 = vadd.f32 %v9779, %v9971
      %v10030 = vadd.f32 %v9780, %v9976
      %v10031 = vadd.f32 %v9781, %v9981
      %v10032 = vadd.f32 %v9782, %v9986
      %v10033 = vadd.f32 %v9783, %v9991
      %v10034 = vadd.f32 %v9784, %v9996
      %v10035 = vadd.f32 %v9785, %v10001
      %v10036 = vadd.f32 %v9786, %v10006
      %v10037 = vadd.f32 %v9787, %v10011
      %v10038 = vadd.f32 %v9788, %v10016
      %v10039 = vadd.f32 %v9789, %v10021
      %s10040 = scalar_lea.vmem %s10, 1024
      %v10041 = vld [vmem:[%s10040] sm:$0xff]
      %v10042 = vld [vmem:[%s10040 + $0x8] sm:$0xff]
      %v10043 = vld [vmem:[%s10040 + $0x10] sm:$0xff]
      %v10044 = vld [vmem:[%s10040 + $0x18] sm:$0xff]
      %v10045 = vld [vmem:[%s10040 + $0x20] sm:$0xff]
      %v10046 = vld [vmem:[%s10040 + $0x28] sm:$0xff]
      %v10047 = vld [vmem:[%s10040 + $0x30] sm:$0xff]
      %v10048 = vld [vmem:[%s10040 + $0x38] sm:$0xff]
      %v10049 = vld [vmem:[%s10040 + $0x40] sm:$0xff]
      %v10050 = vld [vmem:[%s10040 + $0x48] sm:$0xff]
      %v10051 = vld [vmem:[%s10040 + $0x50] sm:$0xff]
      %v10052 = vld [vmem:[%s10040 + $0x58] sm:$0xff]
      %v10053 = vld [vmem:[%s10040 + $0x60] sm:$0xff]
      %v10054 = vld [vmem:[%s10040 + $0x68] sm:$0xff]
      %v10055 = vld [vmem:[%s10040 + $0x70] sm:$0xff]
      %v10056 = vld [vmem:[%s10040 + $0x78] sm:$0xff]
      %10057 = vrot.lane.b32.xlu0 %v8003, 120
      %v10058 = vpop.permute.xlu0 %10057
      %10059 = vrot.lane.b32.xlu0 %v8008, 120
      %v10060 = vpop.permute.xlu0 %10059
      %10061 = vrot.lane.b32.xlu0 %v8013, 120
      %v10062 = vpop.permute.xlu0 %10061
      %10063 = vrot.lane.b32.xlu0 %v8018, 120
      %v10064 = vpop.permute.xlu0 %10063
      %10065 = vrot.lane.b32.xlu0 %v8023, 120
      %v10066 = vpop.permute.xlu0 %10065
      %10067 = vrot.lane.b32.xlu0 %v8028, 120
      %v10068 = vpop.permute.xlu0 %10067
      %10069 = vrot.lane.b32.xlu0 %v8033, 120
      %v10070 = vpop.permute.xlu0 %10069
      %10071 = vrot.lane.b32.xlu0 %v8038, 120
      %v10072 = vpop.permute.xlu0 %10071
      %v10082 = vsel %vm6306, %v10041, 0
      %v10085 = vsel %vm6306, %v10042, 0
      %v10088 = vsel %vm6306, %v10043, 0
      %v10091 = vsel %vm6306, %v10044, 0
      %v10094 = vsel %vm6306, %v10045, 0
      %v10097 = vsel %vm6306, %v10046, 0
      %v10100 = vsel %vm6306, %v10047, 0
      %v10103 = vsel %vm6306, %v10048, 0
      %v10106 = vsel %vm6306, %v10049, 0
      %v10109 = vsel %vm6306, %v10050, 0
      %v10112 = vsel %vm6306, %v10051, 0
      %v10115 = vsel %vm6306, %v10052, 0
      %v10118 = vsel %vm6306, %v10053, 0
      %v10121 = vsel %vm6306, %v10054, 0
      %v10124 = vsel %vm6306, %v10055, 0
      %v10127 = vsel %vm6306, %v10056, 0
      %10129 = vmatprep.subr.mxu0 0.0
      %10130 = vmatpush1.msra.mxu0 %v10058
      %10131 = vmatprep.subr.mxu0 0.0
      %10132 = vmatpush1.msra.mxu0 %v10060
      %10133 = vmatprep.subr.mxu0 0.0
      %10134 = vmatpush1.msra.mxu0 %v10062
      %10135 = vmatprep.subr.mxu0 0.0
      %10136 = vmatpush1.msra.mxu0 %v10064
      %10137 = vmatprep.subr.mxu0 0.0
      %10138 = vmatpush1.msra.mxu0 %v10066
      %10139 = vmatprep.subr.mxu0 0.0
      %10140 = vmatpush1.msra.mxu0 %v10068
      %10141 = vmatprep.subr.mxu0 0.0
      %10142 = vmatpush1.msra.mxu0 %v10070
      %10143 = vmatprep.subr.mxu0 0.0
      %10144 = vmatpush1.msra.mxu0 %v10072
      %10145 = vmatprep.subr.mxu0 0.0
      %10146 = vmatpush1.msra.mxu0 0.0
      %10147 = vmatprep.subr.mxu0 0.0
      %10148 = vmatpush1.msra.mxu0 0.0
      %10149 = vmatprep.subr.mxu0 0.0
      %10150 = vmatpush1.msra.mxu0 0.0
      %10151 = vmatprep.subr.mxu0 0.0
      %10152 = vmatpush1.msra.mxu0 0.0
      %10153 = vmatprep.subr.mxu0 0.0
      %10154 = vmatpush1.msra.mxu0 0.0
      %10155 = vmatprep.subr.mxu0 0.0
      %10156 = vmatpush1.msra.mxu0 0.0
      %10157 = vmatprep.subr.mxu0 0.0
      %10158 = vmatpush1.msra.mxu0 0.0
      %10159 = vmatprep.subr.mxu0 0.0
      %10160 = vmatpush1.msra.mxu0 0.0
      %10161 = vmatprep.subr.mxu0 0.0
      %10162 = vmatpush1.msra.mxu0 0.0
      %10163 = vmatprep.subr.mxu0 0.0
      %10164 = vmatpush1.msra.mxu0 0.0
      %10165 = vmatprep.subr.mxu0 0.0
      %10166 = vmatpush1.msra.mxu0 0.0
      %10167 = vmatprep.subr.mxu0 0.0
      %10168 = vmatpush1.msra.mxu0 0.0
      %10169 = vmatprep.subr.mxu0 0.0
      %10170 = vmatpush1.msra.mxu0 0.0
      %10171 = vmatprep.subr.mxu0 0.0
      %10172 = vmatpush1.msra.mxu0 0.0
      %10173 = vmatprep.subr.mxu0 0.0
      %10174 = vmatpush1.msra.mxu0 0.0
      %10175 = vmatprep.subr.mxu0 0.0
      %10176 = vmatpush1.msra.mxu0 0.0
      %10177 = vmatprep.subr.mxu0 0.0
      %10178 = vmatpush1.msra.mxu0 0.0
      %10179 = vmatprep.subr.mxu0 0.0
      %10180 = vmatpush1.msra.mxu0 0.0
      %10181 = vmatprep.subr.mxu0 0.0
      %10182 = vmatpush1.msra.mxu0 0.0
      %10183 = vmatprep.subr.mxu0 0.0
      %10184 = vmatpush1.msra.mxu0 0.0
      %10185 = vmatprep.subr.mxu0 0.0
      %10186 = vmatpush1.msra.mxu0 0.0
      %10187 = vmatprep.subr.mxu0 0.0
      %10188 = vmatpush1.msra.mxu0 0.0
      %10189 = vmatprep.subr.mxu0 0.0
      %10190 = vmatpush1.msra.mxu0 0.0
      %10191 = vmatprep.subr.mxu0 0.0
      %10192 = vmatpush1.msra.mxu0 0.0
      %10193 = vmatprep.mubr.f32.mxu0 0.0
      %10194 = vmatmul.mubr.f32.gmra.mrb[0].mxu0 %v10082
      %v10195 = vpop.f32.mrb[0].mxu0
      %v10196 = vadd.f32 0.0, %v10195
      %v10197 = vpop.f32.mrb[0].mxu0
      %10198 = vmatprep.mubr.f32.mxu0 0.0
      %10199 = vmatmul.mubr.f32.gmra.mrb[0].mxu0 %v10085
      %v10200 = vpop.f32.mrb[0].mxu0
      %v10201 = vadd.f32 0.0, %v10200
      %v10202 = vpop.f32.mrb[0].mxu0
      %10203 = vmatprep.mubr.f32.mxu0 0.0
      %10204 = vmatmul.mubr.f32.gmra.mrb[0].mxu0 %v10088
      %v10205 = vpop.f32.mrb[0].mxu0
      %v10206 = vadd.f32 0.0, %v10205
      %v10207 = vpop.f32.mrb[0].mxu0
      %10208 = vmatprep.mubr.f32.mxu0 0.0
      %10209 = vmatmul.mubr.f32.gmra.mrb[0].mxu0 %v10091
      %v10210 = vpop.f32.mrb[0].mxu0
      %v10211 = vadd.f32 0.0, %v10210
      %v10212 = vpop.f32.mrb[0].mxu0
      %10213 = vmatprep.mubr.f32.mxu0 0.0
      %10214 = vmatmul.mubr.f32.gmra.mrb[0].mxu0 %v10094
      %v10215 = vpop.f32.mrb[0].mxu0
      %v10216 = vadd.f32 0.0, %v10215
      %v10217 = vpop.f32.mrb[0].mxu0
      %10218 = vmatprep.mubr.f32.mxu0 0.0
      %10219 = vmatmul.mubr.f32.gmra.mrb[0].mxu0 %v10097
      %v10220 = vpop.f32.mrb[0].mxu0
      %v10221 = vadd.f32 0.0, %v10220
      %v10222 = vpop.f32.mrb[0].mxu0
      %10223 = vmatprep.mubr.f32.mxu0 0.0
      %10224 = vmatmul.mubr.f32.gmra.mrb[0].mxu0 %v10100
      %v10225 = vpop.f32.mrb[0].mxu0
      %v10226 = vadd.f32 0.0, %v10225
      %v10227 = vpop.f32.mrb[0].mxu0
      %10228 = vmatprep.mubr.f32.mxu0 0.0
      %10229 = vmatmul.mubr.f32.gmra.mrb[0].mxu0 %v10103
      %v10230 = vpop.f32.mrb[0].mxu0
      %v10231 = vadd.f32 0.0, %v10230
      %v10232 = vpop.f32.mrb[0].mxu0
      %10233 = vmatprep.mubr.f32.mxu0 0.0
      %10234 = vmatmul.mubr.f32.gmra.mrb[0].mxu0 %v10106
      %v10235 = vpop.f32.mrb[0].mxu0
      %v10236 = vadd.f32 0.0, %v10235
      %v10237 = vpop.f32.mrb[0].mxu0
      %10238 = vmatprep.mubr.f32.mxu0 0.0
      %10239 = vmatmul.mubr.f32.gmra.mrb[0].mxu0 %v10109
      %v10240 = vpop.f32.mrb[0].mxu0
      %v10241 = vadd.f32 0.0, %v10240
      %v10242 = vpop.f32.mrb[0].mxu0
      %10243 = vmatprep.mubr.f32.mxu0 0.0
      %10244 = vmatmul.mubr.f32.gmra.mrb[0].mxu0 %v10112
      %v10245 = vpop.f32.mrb[0].mxu0
      %v10246 = vadd.f32 0.0, %v10245
      %v10247 = vpop.f32.mrb[0].mxu0
      %10248 = vmatprep.mubr.f32.mxu0 0.0
      %10249 = vmatmul.mubr.f32.gmra.mrb[0].mxu0 %v10115
      %v10250 = vpop.f32.mrb[0].mxu0
      %v10251 = vadd.f32 0.0, %v10250
      %v10252 = vpop.f32.mrb[0].mxu0
      %10253 = vmatprep.mubr.f32.mxu0 0.0
      %10254 = vmatmul.mubr.f32.gmra.mrb[0].mxu0 %v10118
      %v10255 = vpop.f32.mrb[0].mxu0
      %v10256 = vadd.f32 0.0, %v10255
      %v10257 = vpop.f32.mrb[0].mxu0
      %10258 = vmatprep.mubr.f32.mxu0 0.0
      %10259 = vmatmul.mubr.f32.gmra.mrb[0].mxu0 %v10121
      %v10260 = vpop.f32.mrb[0].mxu0
      %v10261 = vadd.f32 0.0, %v10260
      %v10262 = vpop.f32.mrb[0].mxu0
      %10263 = vmatprep.mubr.f32.mxu0 0.0
      %10264 = vmatmul.mubr.f32.gmra.mrb[0].mxu0 %v10124
      %v10265 = vpop.f32.mrb[0].mxu0
      %v10266 = vadd.f32 0.0, %v10265
      %v10267 = vpop.f32.mrb[0].mxu0
      %10268 = vmatprep.mubr.f32.mxu0 0.0
      %10269 = vmatmul.mubr.f32.gmra.mrb[0].mxu0 %v10127
      %v10270 = vpop.f32.mrb[0].mxu0
      %v10271 = vadd.f32 0.0, %v10270
      %v10272 = vpop.f32.mrb[0].mxu0
      %10273 = vdwg.mxu0
      %v10274 = vadd.f32 %v10024, %v10196
      %v10275 = vadd.f32 %v10025, %v10201
      %v10276 = vadd.f32 %v10026, %v10206
      %v10277 = vadd.f32 %v10027, %v10211
      %v10278 = vadd.f32 %v10028, %v10216
      %v10279 = vadd.f32 %v10029, %v10221
      %v10280 = vadd.f32 %v10030, %v10226
      %v10281 = vadd.f32 %v10031, %v10231
      %v10282 = vadd.f32 %v10032, %v10236
      %v10283 = vadd.f32 %v10033, %v10241
      %v10284 = vadd.f32 %v10034, %v10246
      %v10285 = vadd.f32 %v10035, %v10251
      %v10286 = vadd.f32 %v10036, %v10256
      %v10287 = vadd.f32 %v10037, %v10261
      %v10288 = vadd.f32 %v10038, %v10266
      %v10289 = vadd.f32 %v10039, %v10271
      %v10290 = vmax.f32 %v10274, 0.0
      %v10291 = vmax.f32 %v10275, 0.0
      %v10292 = vmax.f32 %v10276, 0.0
      %v10293 = vmax.f32 %v10277, 0.0
      %v10294 = vmax.f32 %v10278, 0.0
      %v10295 = vmax.f32 %v10279, 0.0
      %v10296 = vmax.f32 %v10280, 0.0
      %v10297 = vmax.f32 %v10281, 0.0
      %v10298 = vmax.f32 %v10282, 0.0
      %v10299 = vmax.f32 %v10283, 0.0
      %v10300 = vmax.f32 %v10284, 0.0
      %v10301 = vmax.f32 %v10285, 0.0
      %v10302 = vmax.f32 %v10286, 0.0
      %v10303 = vmax.f32 %v10287, 0.0
      %v10304 = vmax.f32 %v10288, 0.0
      %v10305 = vmax.f32 %v10289, 0.0
      %v10306 = vld [vmem:[%s12] sm:$0xff]
      %v10307 = vld [vmem:[%s12 + $0x8] sm:$0xff]
      %v10308 = vld [vmem:[%s12 + $0x10] sm:$0xff]
      %v10309 = vld [vmem:[%s12 + $0x18] sm:$0xff]
      %v10310 = vld [vmem:[%s12 + $0x20] sm:$0xff]
      %v10311 = vld [vmem:[%s12 + $0x28] sm:$0xff]
      %v10312 = vld [vmem:[%s12 + $0x30] sm:$0xff]
      %v10313 = vld [vmem:[%s12 + $0x38] sm:$0xff]
      %v10314 = vld [vmem:[%s13] sm:$0xff]
      %v10315 = vld [vmem:[%s13 + $0x8] sm:$0xff]
      %v10316 = vld [vmem:[%s13 + $0x10] sm:$0xff]
      %v10317 = vld [vmem:[%s13 + $0x18] sm:$0xff]
      %v10318 = vld [vmem:[%s13 + $0x20] sm:$0xff]
      %v10319 = vld [vmem:[%s13 + $0x28] sm:$0xff]
      %v10320 = vld [vmem:[%s13 + $0x30] sm:$0xff]
      %v10321 = vld [vmem:[%s13 + $0x38] sm:$0xff]
      %10322 = vmatprep.subr.mxu0 0.0
      %10323 = vmatpush1.msra.mxu0 %v10290
      %10324 = vmatprep.subr.mxu0 0.0
      %10325 = vmatpush1.msra.mxu0 %v10291
      %10326 = vmatprep.subr.mxu0 0.0
      %10327 = vmatpush1.msra.mxu0 %v10292
      %10328 = vmatprep.subr.mxu0 0.0
      %10329 = vmatpush1.msra.mxu0 %v10293
      %10330 = vmatprep.subr.mxu0 0.0
      %10331 = vmatpush1.msra.mxu0 %v10294
      %10332 = vmatprep.subr.mxu0 0.0
      %10333 = vmatpush1.msra.mxu0 %v10295
      %10334 = vmatprep.subr.mxu0 0.0
      %10335 = vmatpush1.msra.mxu0 %v10296
      %10336 = vmatprep.subr.mxu0 0.0
      %10337 = vmatpush1.msra.mxu0 %v10297
      %10338 = vmatprep.subr.mxu0 0.0
      %10339 = vmatpush1.msra.mxu0 %v10298
      %10340 = vmatprep.subr.mxu0 0.0
      %10341 = vmatpush1.msra.mxu0 %v10299
      %10342 = vmatprep.subr.mxu0 0.0
      %10343 = vmatpush1.msra.mxu0 %v10300
      %10344 = vmatprep.subr.mxu0 0.0
      %10345 = vmatpush1.msra.mxu0 %v10301
      %10346 = vmatprep.subr.mxu0 0.0
      %10347 = vmatpush1.msra.mxu0 %v10302
      %10348 = vmatprep.subr.mxu0 0.0
      %10349 = vmatpush1.msra.mxu0 %v10303
      %10350 = vmatprep.subr.mxu0 0.0
      %10351 = vmatpush1.msra.mxu0 %v10304
      %10352 = vmatprep.subr.mxu0 0.0
      %10353 = vmatpush1.msra.mxu0 %v10305
      %10354 = vmatprep.subr.mxu0 0.0
      %10355 = vmatpush1.msra.mxu0 0.0
      %10356 = vmatprep.subr.mxu0 0.0
      %10357 = vmatpush1.msra.mxu0 0.0
      %10358 = vmatprep.subr.mxu0 0.0
      %10359 = vmatpush1.msra.mxu0 0.0
      %10360 = vmatprep.subr.mxu0 0.0
      %10361 = vmatpush1.msra.mxu0 0.0
      %10362 = vmatprep.subr.mxu0 0.0
      %10363 = vmatpush1.msra.mxu0 0.0
      %10364 = vmatprep.subr.mxu0 0.0
      %10365 = vmatpush1.msra.mxu0 0.0
      %10366 = vmatprep.subr.mxu0 0.0
      %10367 = vmatpush1.msra.mxu0 0.0
      %10368 = vmatprep.subr.mxu0 0.0
      %10369 = vmatpush1.msra.mxu0 0.0
      %10370 = vmatprep.subr.mxu0 0.0
      %10371 = vmatpush1.msra.mxu0 0.0
      %10372 = vmatprep.subr.mxu0 0.0
      %10373 = vmatpush1.msra.mxu0 0.0
      %10374 = vmatprep.subr.mxu0 0.0
      %10375 = vmatpush1.msra.mxu0 0.0
      %10376 = vmatprep.subr.mxu0 0.0
      %10377 = vmatpush1.msra.mxu0 0.0
      %10378 = vmatprep.subr.mxu0 0.0
      %10379 = vmatpush1.msra.mxu0 0.0
      %10380 = vmatprep.subr.mxu0 0.0
      %10381 = vmatpush1.msra.mxu0 0.0
      %10382 = vmatprep.subr.mxu0 0.0
      %10383 = vmatpush1.msra.mxu0 0.0
      %10384 = vmatprep.subr.mxu0 0.0
      %10385 = vmatpush1.msra.mxu0 0.0
      %10386 = vmatprep.mubr.f32.mxu0 0.0
      %10387 = vmatmul.mubr.f32.gmra.mrb[0].mxu0 %v10306
      %v10388 = vpop.f32.mrb[0].mxu0
      %v10389 = vadd.f32 %v10314, %v10388
      %v10390 = vpop.f32.mrb[0].mxu0
      %10391 = vmatprep.mubr.f32.mxu0 0.0
      %10392 = vmatmul.mubr.f32.gmra.mrb[0].mxu0 %v10307
      %v10393 = vpop.f32.mrb[0].mxu0
      %v10394 = vadd.f32 %v10315, %v10393
      %v10395 = vpop.f32.mrb[0].mxu0
      %10396 = vmatprep.mubr.f32.mxu0 0.0
      %10397 = vmatmul.mubr.f32.gmra.mrb[0].mxu0 %v10308
      %v10398 = vpop.f32.mrb[0].mxu0
      %v10399 = vadd.f32 %v10316, %v10398
      %v10400 = vpop.f32.mrb[0].mxu0
      %10401 = vmatprep.mubr.f32.mxu0 0.0
      %10402 = vmatmul.mubr.f32.gmra.mrb[0].mxu0 %v10309
      %v10403 = vpop.f32.mrb[0].mxu0
      %v10404 = vadd.f32 %v10317, %v10403
      %v10405 = vpop.f32.mrb[0].mxu0
      %10406 = vmatprep.mubr.f32.mxu0 0.0
      %10407 = vmatmul.mubr.f32.gmra.mrb[0].mxu0 %v10310
      %v10408 = vpop.f32.mrb[0].mxu0
      %v10409 = vadd.f32 %v10318, %v10408
      %v10410 = vpop.f32.mrb[0].mxu0
      %10411 = vmatprep.mubr.f32.mxu0 0.0
      %10412 = vmatmul.mubr.f32.gmra.mrb[0].mxu0 %v10311
      %v10413 = vpop.f32.mrb[0].mxu0
      %v10414 = vadd.f32 %v10319, %v10413
      %v10415 = vpop.f32.mrb[0].mxu0
      %10416 = vmatprep.mubr.f32.mxu0 0.0
      %10417 = vmatmul.mubr.f32.gmra.mrb[0].mxu0 %v10312
      %v10418 = vpop.f32.mrb[0].mxu0
      %v10419 = vadd.f32 %v10320, %v10418
      %v10420 = vpop.f32.mrb[0].mxu0
      %10421 = vmatprep.mubr.f32.mxu0 0.0
      %10422 = vmatmul.mubr.f32.gmra.mrb[0].mxu0 %v10313
      %v10423 = vpop.f32.mrb[0].mxu0
      %v10424 = vadd.f32 %v10321, %v10423
      %v10425 = vpop.f32.mrb[0].mxu0
      %10426 = vdwg.mxu0
      %v10427 = vmax.f32 %v10389, 0.0
      %v10428 = vmax.f32 %v10394, 0.0
      %v10429 = vmax.f32 %v10399, 0.0
      %v10430 = vmax.f32 %v10404, 0.0
      %v10431 = vmax.f32 %v10409, 0.0
      %v10432 = vmax.f32 %v10414, 0.0
      %v10433 = vmax.f32 %v10419, 0.0
      %v10434 = vmax.f32 %v10424, 0.0
      %v10435 = vld [vmem:[%s14] sm:$0xff]
      %v10436 = vld [vmem:[%s14 + $0x8] sm:$0x3]
      %v10437 = vld [vmem:[%s15] sm:$0xff]
      %v10438 = vld [vmem:[%s15 + $0x8] sm:$0x3]
      %v10440 = vsel %vm6306, %v10435, 0
      %v10443 = vsel %vm6306, %v10436, 0
      %10445 = vmatprep.subr.mxu0 0.0
      %10446 = vmatpush1.msra.mxu0 %v10427
      %10447 = vmatprep.subr.mxu0 0.0
      %10448 = vmatpush1.msra.mxu0 %v10428
      %10449 = vmatprep.subr.mxu0 0.0
      %10450 = vmatpush1.msra.mxu0 %v10429
      %10451 = vmatprep.subr.mxu0 0.0
      %10452 = vmatpush1.msra.mxu0 %v10430
      %10453 = vmatprep.subr.mxu0 0.0
      %10454 = vmatpush1.msra.mxu0 %v10431
      %10455 = vmatprep.subr.mxu0 0.0
      %10456 = vmatpush1.msra.mxu0 %v10432
      %10457 = vmatprep.subr.mxu0 0.0
      %10458 = vmatpush1.msra.mxu0 %v10433
      %10459 = vmatprep.subr.mxu0 0.0
      %10460 = vmatpush1.msra.mxu0 %v10434
      %10461 = vmatprep.subr.mxu0 0.0
      %10462 = vmatpush1.msra.mxu0 0.0
      %10463 = vmatprep.subr.mxu0 0.0
      %10464 = vmatpush1.msra.mxu0 0.0
      %10465 = vmatprep.subr.mxu0 0.0
      %10466 = vmatpush1.msra.mxu0 0.0
      %10467 = vmatprep.subr.mxu0 0.0
      %10468 = vmatpush1.msra.mxu0 0.0
      %10469 = vmatprep.subr.mxu0 0.0
      %10470 = vmatpush1.msra.mxu0 0.0
      %10471 = vmatprep.subr.mxu0 0.0
      %10472 = vmatpush1.msra.mxu0 0.0
      %10473 = vmatprep.subr.mxu0 0.0
      %10474 = vmatpush1.msra.mxu0 0.0
      %10475 = vmatprep.subr.mxu0 0.0
      %10476 = vmatpush1.msra.mxu0 0.0
      %10477 = vmatprep.subr.mxu0 0.0
      %10478 = vmatpush1.msra.mxu0 0.0
      %10479 = vmatprep.subr.mxu0 0.0
      %10480 = vmatpush1.msra.mxu0 0.0
      %10481 = vmatprep.subr.mxu0 0.0
      %10482 = vmatpush1.msra.mxu0 0.0
      %10483 = vmatprep.subr.mxu0 0.0
      %10484 = vmatpush1.msra.mxu0 0.0
      %10485 = vmatprep.subr.mxu0 0.0
      %10486 = vmatpush1.msra.mxu0 0.0
      %10487 = vmatprep.subr.mxu0 0.0
      %10488 = vmatpush1.msra.mxu0 0.0
      %10489 = vmatprep.subr.mxu0 0.0
      %10490 = vmatpush1.msra.mxu0 0.0
      %10491 = vmatprep.subr.mxu0 0.0
      %10492 = vmatpush1.msra.mxu0 0.0
      %10493 = vmatprep.subr.mxu0 0.0
      %10494 = vmatpush1.msra.mxu0 0.0
      %10495 = vmatprep.subr.mxu0 0.0
      %10496 = vmatpush1.msra.mxu0 0.0
      %10497 = vmatprep.subr.mxu0 0.0
      %10498 = vmatpush1.msra.mxu0 0.0
      %10499 = vmatprep.subr.mxu0 0.0
      %10500 = vmatpush1.msra.mxu0 0.0
      %10501 = vmatprep.subr.mxu0 0.0
      %10502 = vmatpush1.msra.mxu0 0.0
      %10503 = vmatprep.subr.mxu0 0.0
      %10504 = vmatpush1.msra.mxu0 0.0
      %10505 = vmatprep.subr.mxu0 0.0
      %10506 = vmatpush1.msra.mxu0 0.0
      %10507 = vmatprep.subr.mxu0 0.0
      %10508 = vmatpush1.msra.mxu0 0.0
      %10509 = vmatprep.mubr.f32.mxu0 0.0
      %10510 = vmatmul.mubr.f32.gmra.mrb[0].mxu0 %v10440
      %v10511 = vpop.f32.mrb[0].mxu0
      %v10512 = vadd.f32 %v10437, %v10511
      %v10513 = vpop.f32.mrb[0].mxu0
      %10514 = vmatprep.mubr.f32.mxu0 0.0
      %10515 = vmatmul.mubr.f32.gmra.mrb[0].mxu0 %v10443
      %v10516 = vpop.f32.mrb[0].mxu0
      %v10517 = vadd.f32 %v10438, %v10516
      %v10518 = vpop.f32.mrb[0].mxu0
      %10519 = vdwg.mxu0
      %vm10520 = vcmask 7168
      %10521 = vst.msk [vmem:[%s518] sm:$0xff] %vm10520, %v10512
      %vm10522 = vcmask 1024
      %10523 = vst.msk [vmem:[%s518 + $0x8] sm:$0x3] %vm10522, %v10517
      %p10524 = scmp.lt.s32.totalorder %s27, 1
      %s10525 = scalar_select %p10524, %s27, 1
      %s10526 = smul.addr %s10525, 2
      %s10527 = smul.addr %s10526, 8
      %s10528 = scalar_lea.vmem %s16, %s10527
      // Predicated region
      $region85: #{conv_net_forward.1} parent=83 // pred_check
        %p10529 = pneg %p386
      $region86: #{conv_net_forward.1} parent=83 // pred_check_branch
        %10531 = sbr.rel (%p10529) target = $region88
      $region87: #{conv_net_forward.1} parent=83 // pred_region
        _
      $region88: #{conv_net_forward.1} parent=83 // pred_fallthru
        _
    $region84: #{conv_net_forward.1} parent=5 // pred_fallthru
      _
    %p10532 = scmp.le.s32.totalorder 2, %s22
    // Predicated region
    $region89: #{conv_net_forward.1} parent=5 // pred_check
      %p10533 = pneg %p10532
    $region90: #{conv_net_forward.1} parent=5 // pred_check_branch
      %10535 = sbr.rel (%p10533) target = $region92
    $region91: #{conv_net_forward.1} parent=5 // pred_region
      %s10536 = ssub.s32 %s22, 2
      // Predicated region
      $region93: #{conv_net_forward.1} parent=91 // pred_check
        %p10537 = pneg %p392
      $region94: #{conv_net_forward.1} parent=91 // pred_check_branch
        %10539 = sbr.rel (%p10537) target = $region96
      $region95: #{conv_net_forward.1} parent=91 // pred_region
        %p10540 = scmp.lt.s32.totalorder %s28, 1
        %s10541 = scalar_select %p10540, %s28, 1
        %s10542 = smul.addr %s10541, 2
        %s10543 = smul.addr %s10542, 8
        %s10544 = scalar_lea.vmem %s16, %s10543
      $region96: #{conv_net_forward.1} parent=91 // pred_fallthru
        _
    $region92: #{conv_net_forward.1} parent=5 // pred_fallthru
      _
  $region6: #{conv_net_forward.1} parent=0 // loop_footer
    %s26 = sadd.s32 1, %s22
  $region7: #{conv_net_forward.1} parent=0 // loop_footer_branch
    %21 = sbr.rel target = $region3
  $region8: #{conv_net_forward.1} parent=0 // loop_exit
    _

</llo_original>
